<compile_context>
chip_gen: v7x
topology: tpu7x:2x2x1
jax: 0.10.0
libtpu: 0.0.40
codegen_flags: <defaults>
</compile_context>

<pallas_src>
import jax
import jax.numpy as jnp
from jax.experimental import pallas as pl
from jax.experimental.pallas import tpu as pltpu

NEG_SLOPE = 0.01                       # nn.LeakyReLU default
BN_EPS = 1e-5                          # nn.BatchNorm2d default
LANE = 128                             # TPU vreg lane width
VMEM_LIMIT_BYTES = 32 * 1024 * 1024    # fits scoped VMEM on v5e/v6e/v7x
TARGET_TILE_PX = 4096                  # ~pixels per row tile (bounds im2col slab)
MIN_ROW_BLOCKS = 4                     # keep the DMA pipeline busy when possible


def _rup(v, m):
    return (v + m - 1) // m * m


def _pick_rows(nrows, width):
    """Largest divisor of nrows giving ~TARGET_TILE_PX pixels per tile and, when
    possible, at least MIN_ROW_BLOCKS grid steps (pipelining + v7x VMEM budget)."""
    rb = max(1, min(nrows, max(1, TARGET_TILE_PX // max(width, 1))))
    if nrows >= MIN_ROW_BLOCKS:
        rb = min(rb, nrows // MIN_ROW_BLOCKS)
    while nrows % rb:
        rb -= 1
    return rb


# ----------------------------- in-kernel helpers -----------------------------

def _leaky(v):
    return jnp.where(v > 0, v, NEG_SLOPE * v)


def _sigmoid(z):
    # tanh runs on the EUP slot and is overflow-safe (vs. 1/(1+exp(-z))).
    return 0.5 * (jnp.tanh(0.5 * z) + 1.0)


# ------------------------------- Pallas kernels -------------------------------

def _upsample_gate_stats_kernel(x_ref, br_ref, wup_ref, bup_ref,
                                wl_ref, bl_ref, wg_ref, bg_ref,
                                out_ref, gst_ref):
    # ConvTranspose2d(k=2, s=2): each low-res pixel emits a 2x2 block; the pixel
    # shuffle is done in-register and written straight to the final NHWC layout.
    r = pl.program_id(1)
    _, rlr, w, cinp = x_ref.shape
    _, hr, w2, cp = out_ref.shape                       # hr = 2*rlr, w2 = 2*w

    xs = x_ref[0].reshape(rlr * w, cinp).astype(jnp.bfloat16)
    y = [jnp.dot(xs, wup_ref[t], preferred_element_type=jnp.float32)
             .reshape(rlr, w, cp) for t in range(4)]    # tap t = ki*2 + kj
    even = jnp.stack([y[0], y[1]], axis=2).reshape(rlr, w2, cp)   # ki = 0 rows
    odd = jnp.stack([y[2], y[3]], axis=2).reshape(rlr, w2, cp)    # ki = 1 rows
    ob = (jnp.stack([even, odd], axis=1).reshape(hr, w2, cp)
          + bup_ref[...].reshape(1, 1, cp))
    out_ref[...] = ob[None]

    # single-pass (sum, sum-of-squares) stats of both gate 1x1 pre-activations
    o2 = ob.reshape(hr * w2, cp).astype(jnp.bfloat16)
    g2 = br_ref[0].reshape(hr * w2, cp).astype(jnp.bfloat16)
    ax = jnp.dot(o2, wl_ref[...], preferred_element_type=jnp.float32) + bl_ref[...]
    ag = jnp.dot(g2, wg_ref[...], preferred_element_type=jnp.float32) + bg_ref[...]
    part = jnp.concatenate(
        [jnp.sum(ax, axis=0, keepdims=True),
         jnp.sum(ax * ax, axis=0, keepdims=True),
         jnp.sum(ag, axis=0, keepdims=True),
         jnp.sum(ag * ag, axis=0, keepdims=True)], axis=0)        # (4, fp)

    @pl.when(r == 0)
    def _():
        gst_ref[...] = jnp.zeros_like(gst_ref)
    gst_ref[...] = gst_ref[...] + part[None]


def _gate_conv1_kernel(oc_ref, ou_ref, od_ref, bc_ref, bu_ref, bd_ref,
                       wl_ref, wg_ref, gv_ref, bpsi_ref, w1_ref, b1_ref,
                       h1_ref, st_ref):
    # AttentionGate (with global BN stats) fused with the channel concat and the
    # first 3x3 conv of ConvBlock; the concat never touches HBM.
    r = pl.program_id(1)
    last = pl.num_programs(1) - 1
    _, rb, w2, cp = h1_ref.shape
    rr = rb + 2

    gv = gv_ref[...]                                    # (8, fp)
    b_l, s_x, t_x = gv[0:1], gv[1:2], gv[2:3]
    b_g, s_g, t_g = gv[3:4], gv[4:5], gv[5:6]
    w_px, w_pg = gv[6:7], gv[7:8]

    # tile + 1-row halo above/below (clamped at the image border, masked below)
    out_reg = jnp.concatenate([ou_ref[0], oc_ref[0], od_ref[0]], axis=0)
    br_reg = jnp.concatenate([bu_ref[0], bc_ref[0], bd_ref[0]], axis=0)
    o2 = out_reg.reshape(rr * w2, cp)
    g2 = br_reg.reshape(rr * w2, cp)

    # AG(g=bridge, x=out): out * sigmoid(psi(leaky(cat(BN(Wl x), BN(Wg g)))))
    ix = (jnp.dot(o2.astype(jnp.bfloat16), wl_ref[...],
                  preferred_element_type=jnp.float32) + b_l) * s_x + t_x
    ig = (jnp.dot(g2.astype(jnp.bfloat16), wg_ref[...],
                  preferred_element_type=jnp.float32) + b_g) * s_g + t_g
    lx, lg = _leaky(ix), _leaky(ig)
    z = (jnp.sum(lx * w_px, axis=1, keepdims=True)
         + jnp.sum(lg * w_pg, axis=1, keepdims=True) + bpsi_ref[...])
    att = _sigmoid(z)

    # ConvBlock input: [out | out*att] built directly in lanes (no HBM concat)
    cb = jnp.concatenate([o2, o2 * att], axis=1).reshape(rr, w2, 2 * cp)

    # 3x3 conv zero padding: mask halo rows outside the image, pad W in-register
    rows = jax.lax.broadcasted_iota(jnp.int32, (rr, 1, 1), 0)
    outside = jnp.logical_or(jnp.logical_and(rows == 0, r == 0),
                             jnp.logical_and(rows == rr - 1, r == last))
    cb = jnp.where(outside, 0.0, cb)
    zcol = jnp.zeros((rr, 1, 2 * cp), cb.dtype)
    cbw = jnp.concatenate([zcol, cb, zcol], axis=1)     # (rr, w2+2, 2cp)

    # im2col -> a single lane-dense MXU matmul (K = 9 * 2 * cp)
    cols = [cbw[di:di + rb, dj:dj + w2, :].reshape(rb * w2, 2 * cp)
            for di in range(3) for dj in range(3)]
    slab = jnp.concatenate(cols, axis=-1).astype(jnp.bfloat16)
    h1 = _leaky(jnp.dot(slab, w1_ref[...], preferred_element_type=jnp.float32)
                + b1_ref[...])
    h1_ref[...] = h1.reshape(1, rb, w2, cp)

    part = jnp.concatenate([jnp.sum(h1, axis=0, keepdims=True),
                            jnp.sum(h1 * h1, axis=0, keepdims=True)], axis=0)

    @pl.when(r == 0)
    def _():
        st_ref[...] = jnp.zeros_like(st_ref)
    st_ref[...] = st_ref[...] + part[None]


def _bn_conv2_kernel(hc_ref, hu_ref, hd_ref, bn_ref, w2_ref, b2_ref,
                     h2_ref, st_ref):
    # BN1 (global stats, affine form) + second 3x3 conv + LeakyReLU + BN2 stats.
    r = pl.program_id(1)
    last = pl.num_programs(1) - 1
    _, rb, w2, cp = h2_ref.shape
    rr = rb + 2

    bn = bn_ref[...]
    scale = bn[0:1].reshape(1, 1, cp)
    shift = bn[1:2].reshape(1, 1, cp)

    reg = jnp.concatenate([hu_ref[0], hc_ref[0], hd_ref[0]], axis=0)
    xn = reg * scale + shift
    rows = jax.lax.broadcasted_iota(jnp.int32, (rr, 1, 1), 0)
    outside = jnp.logical_or(jnp.logical_and(rows == 0, r == 0),
                             jnp.logical_and(rows == rr - 1, r == last))
    xn = jnp.where(outside, 0.0, xn)
    zcol = jnp.zeros((rr, 1, cp), xn.dtype)
    xw = jnp.concatenate([zcol, xn, zcol], axis=1)

    cols = [xw[di:di + rb, dj:dj + w2, :].reshape(rb * w2, cp)
            for di in range(3) for dj in range(3)]
    slab = jnp.concatenate(cols, axis=-1).astype(jnp.bfloat16)
    h2 = _leaky(jnp.dot(slab, w2_ref[...], preferred_element_type=jnp.float32)
                + b2_ref[...])
    h2_ref[...] = h2.reshape(1, rb, w2, cp)

    part = jnp.concatenate([jnp.sum(h2, axis=0, keepdims=True),
                            jnp.sum(h2 * h2, axis=0, keepdims=True)], axis=0)

    @pl.when(r == 0)
    def _():
        st_ref[...] = jnp.zeros_like(st_ref)
    st_ref[...] = st_ref[...] + part[None]


def _bn_apply_kernel(h_ref, bn_ref, o_ref):
    cp = o_ref.shape[-1]
    bn = bn_ref[...]
    o_ref[...] = (h_ref[...] * bn[0:1].reshape(1, 1, 1, cp)
                  + bn[1:2].reshape(1, 1, 1, cp))


# --------------------------- one-time param preparation ---------------------------

def prepare_params(p, cin, cout):
    """Hoisted weight reformatting: channel padding to LANE multiples, im2col
    layouts for the 3x3 convs, bf16 casts for all MXU operands."""
    assert cin == 2 * cout, "AttentionBlock requires in_features == 2*out_features"
    fint = cout // 2
    cinp, cp, fp = _rup(cin, LANE), _rup(cout, LANE), _rup(fint, LANE)
    c2p = 2 * cp
    f32, bf16 = jnp.float32, jnp.bfloat16

    def vec(v, n):
        return jnp.zeros((1, n), f32).at[0, :v.shape[0]].set(v.astype(f32))

    # ConvTranspose2d weight (cin, cout, kH, kW) -> (4, cinp, cp), tap t = ki*2+kj
    wup = jnp.transpose(p['w_up'], (2, 3, 0, 1)).reshape(4, cin, cout)
    wup = jnp.zeros((4, cinp, cp), f32).at[:, :cin, :cout].set(wup).astype(bf16)

    def one_by_one(w):                                   # (fint, cout, 1, 1) -> (cp, fp)
        return (jnp.zeros((cp, fp), f32)
                .at[:cout, :fint].set(w[:, :, 0, 0].T).astype(bf16))

    wpsi = p['w_psi'][0, :, 0, 0]                        # (2*fint,)

    # 3x3 convs -> im2col layout (9*Cin_pad, Cout_pad).  conv1's input is
    # cat([out, gated]): torch channels [0,cout) -> lanes [0,cp),
    # [cout,2cout) -> lanes [cp, cp+cout).
    w1 = jnp.transpose(p['w_c1'], (2, 3, 1, 0))          # (3,3,2cout,cout)
    w1p = jnp.zeros((3, 3, c2p, cp), f32)
    w1p = w1p.at[:, :, :cout, :cout].set(w1[:, :, :cout, :])
    w1p = w1p.at[:, :, cp:cp + cout, :cout].set(w1[:, :, cout:, :])
    w1p = w1p.reshape(9 * c2p, cp).astype(bf16)

    w2 = jnp.transpose(p['w_c2'], (2, 3, 1, 0))          # (3,3,cout,cout)
    w2p = (jnp.zeros((3, 3, cp, cp), f32).at[:, :, :cout, :cout].set(w2)
           .reshape(9 * cp, cp).astype(bf16))

    return dict(
        w_up=wup, b_up=vec(p['b_up'], cp),
        w_l=one_by_one(p['w_l']), b_l=vec(p['b_l'], fp),
        gamma_l=vec(p['gamma_l'], fp), beta_l=vec(p['beta_l'], fp),
        w_g=one_by_one(p['w_g']), b_g=vec(p['b_g'], fp),
        gamma_g=vec(p['gamma_g'], fp), beta_g=vec(p['beta_g'], fp),
        w_px=vec(wpsi[:fint], fp), w_pg=vec(wpsi[fint:], fp),
        b_psi=p['b_psi'].reshape(1, 1).astype(f32),
        w_c1=w1p, b_c1=vec(p['b_c1'], cp),
        gamma_1=vec(p['gamma_1'], cp), beta_1=vec(p['beta_1'], cp),
        w_c2=w2p, b_c2=vec(p['b_c2'], cp),
        gamma_2=vec(p['gamma_2'], cp), beta_2=vec(p['beta_2'], cp),
    )


# ------------------------------------ forward ------------------------------------

def attention_block_forward(x, bridge, prep, cout):
    """x: (N, 2*cout, H, W) NCHW, bridge: (N, cout, 2H, 2W) NCHW -> (N, cout, 2H, 2W)."""
    N, cin, H, W = x.shape
    H2, W2 = 2 * H, 2 * W
    S = N * H2 * W2
    cinp = prep['w_up'].shape[1]
    cp = prep['w_up'].shape[2]
    fp = prep['w_l'].shape[1]
    f32 = jnp.float32

    rlr = _pick_rows(H, W)              # low-res rows / tile (kernel 1)
    rb = _pick_rows(H2, W2)             # high-res rows / tile (kernels 2-4)
    n_r1, n_rb = H // rlr, H2 // rb

    def nhwc_pad(a, c_to):
        a = jnp.transpose(a, (0, 2, 3, 1))
        if a.shape[-1] != c_to:
            a = jnp.pad(a, ((0, 0),) * 3 + ((0, c_to - a.shape[-1]),))
        return a

    xh = nhwc_pad(x, cinp)              # (N, H, W, cinp)
    bh = nhwc_pad(bridge, cp)           # (N, H2, W2, cp)

    def const_spec(a):
        nd = a.ndim
        return pl.BlockSpec(a.shape, lambda n, r: (0,) * nd)

    def cur_spec(c):
        return pl.BlockSpec((1, rb, W2, c), lambda n, r: (n, r, 0, 0))

    def up_spec(c):                     # 1-row halo above (clamped at the border)
        return pl.BlockSpec((1, 1, W2, c),
                            lambda n, r: (n, jnp.maximum(r * rb - 1, 0), 0, 0))

    def dn_spec(c):                     # 1-row halo below (clamped at the border)
        return pl.BlockSpec((1, 1, W2, c),
                            lambda n, r: (n, jnp.minimum(r * rb + rb, H2 - 1), 0, 0))

    def cparams(sem):
        return pltpu.CompilerParams(dimension_semantics=sem,
                                    vmem_limit_bytes=VMEM_LIMIT_BYTES)

    # ---- kernel 1: upsample (pixel shuffle folded in) + gate 1x1 stats ----
    out_hr, gstats = pl.pallas_call(
        _upsample_gate_stats_kernel,
        grid_spec=pltpu.PrefetchScalarGridSpec(
            num_scalar_prefetch=0,
            grid=(N, n_r1),
            in_specs=[
                pl.BlockSpec((1, rlr, W, cinp), lambda n, r: (n, r, 0, 0)),
                pl.BlockSpec((1, 2 * rlr, W2, cp), lambda n, r: (n, r, 0, 0)),
                const_spec(prep['w_up']), const_spec(prep['b_up']),
                const_spec(prep['w_l']), const_spec(prep['b_l']),
                const_spec(prep['w_g']), const_spec(prep['b_g']),
            ],
            out_specs=[
                pl.BlockSpec((1, 2 * rlr, W2, cp), lambda n, r: (n, r, 0, 0)),
                pl.BlockSpec((1, 4, fp), lambda n, r: (n, 0, 0)),
            ]),
        out_shape=[jax.ShapeDtypeStruct((N, H2, W2, cp), f32),
                   jax.ShapeDtypeStruct((N, 4, fp), f32)],
        compiler_params=cparams(("parallel", "arbitrary")),
    )(xh, bh, prep['w_up'], prep['b_up'], prep['w_l'], prep['b_l'],
      prep['w_g'], prep['b_g'])

    def bn_affine(s, ssq, gamma, beta):
        mean = s / S
        var = jnp.maximum(ssq / S - mean * mean, 0.0)    # biased (training) variance
        scale = gamma[0] * jax.lax.rsqrt(var + BN_EPS)
        return scale, beta[0] - mean * scale

    g = jnp.sum(gstats, axis=0)                          # (4, fp)
    s_x, t_x = bn_affine(g[0], g[1], prep['gamma_l'], prep['beta_l'])
    s_g, t_g = bn_affine(g[2], g[3], prep['gamma_g'], prep['beta_g'])
    gate_vecs = jnp.stack([prep['b_l'][0], s_x, t_x,
                           prep['b_g'][0], s_g, t_g,
                           prep['w_px'][0], prep['w_pg'][0]], axis=0)   # (8, fp)

    # ---- kernel 2: attention gate + concat + conv3x3 #1 + LeakyReLU + BN1 stats ----
    h1_pre, st1 = pl.pallas_call(
        _gate_conv1_kernel,
        grid_spec=pltpu.PrefetchScalarGridSpec(
            num_scalar_prefetch=0,
            grid=(N, n_rb),
            in_specs=[
                cur_spec(cp), up_spec(cp), dn_spec(cp),      # out  (with halo views)
                cur_spec(cp), up_spec(cp), dn_spec(cp),      # bridge
                const_spec(prep['w_l']), const_spec(prep['w_g']),
                const_spec(gate_vecs), const_spec(prep['b_psi']),
                const_spec(prep['w_c1']), const_spec(prep['b_c1']),
            ],
            out_specs=[
                cur_spec(cp),
                pl.BlockSpec((1, 2, cp), lambda n, r: (n, 0, 0)),
            ]),
        out_shape=[jax.ShapeDtypeStruct((N, H2, W2, cp), f32),
                   jax.ShapeDtypeStruct((N, 2, cp), f32)],
        compiler_params=cparams(("parallel", "arbitrary")),
    )(out_hr, out_hr, out_hr, bh, bh, bh,
      prep['w_l'], prep['w_g'], gate_vecs, prep['b_psi'],
      prep['w_c1'], prep['b_c1'])

    s1 = jnp.sum(st1, axis=0)
    sc1, sh1 = bn_affine(s1[0], s1[1], prep['gamma_1'], prep['beta_1'])
    bn1 = jnp.stack([sc1, sh1], axis=0)                  # (2, cp)

    # ---- kernel 3: BN1 + conv3x3 #2 + LeakyReLU + BN2 stats ----
    h2_pre, st2 = pl.pallas_call(
        _bn_conv2_kernel,
        grid_spec=pltpu.PrefetchScalarGridSpec(
            num_scalar_prefetch=0,
            grid=(N, n_rb),
            in_specs=[
                cur_spec(cp), up_spec(cp), dn_spec(cp),
                const_spec(bn1), const_spec(prep['w_c2']), const_spec(prep['b_c2']),
            ],
            out_specs=[
                cur_spec(cp),
                pl.BlockSpec((1, 2, cp), lambda n, r: (n, 0, 0)),
            ]),
        out_shape=[jax.ShapeDtypeStruct((N, H2, W2, cp), f32),
                   jax.ShapeDtypeStruct((N, 2, cp), f32)],
        compiler_params=cparams(("parallel", "arbitrary")),
    )(h1_pre, h1_pre, h1_pre, bn1, prep['w_c2'], prep['b_c2'])

    s2 = jnp.sum(st2, axis=0)
    sc2, sh2 = bn_affine(s2[0], s2[1], prep['gamma_2'], prep['beta_2'])
    bn2 = jnp.stack([sc2, sh2], axis=0)

    # ---- kernel 4: BN2 normalize ----
    y = pl.pallas_call(
        _bn_apply_kernel,
        grid_spec=pltpu.PrefetchScalarGridSpec(
            num_scalar_prefetch=0,
            grid=(N, n_rb),
            in_specs=[cur_spec(cp), const_spec(bn2)],
            out_specs=cur_spec(cp)),
        out_shape=jax.ShapeDtypeStruct((N, H2, W2, cp), f32),
        compiler_params=cparams(("parallel", "parallel")),
    )(h2_pre, bn2)

    return jnp.transpose(y[:, :, :, :cout], (0, 3, 1, 2))    # back to NCHW


# ----------------------------- pure-JAX reference -----------------------------

def ref_attention_block(x, bridge, p, mm_dtype=jnp.float32):
    """f32 spec reference; with mm_dtype=bf16 it quantizes the same matmul inputs
    the kernel quantizes (f32 accumulation), for a tight structural check."""
    N, cin, H, W = x.shape
    cout = p['w_up'].shape[1]

    def c(a):
        return a.astype(mm_dtype)

    def leaky(v):
        return jnp.where(v > 0, v, NEG_SLOPE * v)

    def bn(v, gamma, beta):
        mean = v.mean(axis=(0, 2, 3), keepdims=True)
        var = jnp.square(v - mean).mean(axis=(0, 2, 3), keepdims=True)
        return ((v - mean) * jax.lax.rsqrt(var + BN_EPS)
                * gamma[None, :, None, None] + beta[None, :, None, None])

    def conv1x1(v, w, b, cast=True):
        vv, ww = (c(v), c(w[:, :, 0, 0])) if cast else (v, w[:, :, 0, 0])
        return (jnp.einsum('nchw,fc->nfhw', vv, ww,
                           preferred_element_type=jnp.float32)
                + b[None, :, None, None])

    def conv3x3(v, w, b):
        y = jax.lax.conv_general_dilated(
            c(v), c(w), window_strides=(1, 1), padding=((1, 1), (1, 1)),
            dimension_numbers=('NCHW', 'OIHW', 'NCHW'),
            preferred_element_type=jnp.float32)
        return y + b[None, :, None, None]

    out = (jnp.einsum('ncij,cokl->noikjl', c(x), c(p['w_up']),
                      preferred_element_type=jnp.float32)
             .reshape(N, cout, 2 * H, 2 * W) + p['b_up'][None, :, None, None])
    int_x = bn(conv1x1(out, p['w_l'], p['b_l']), p['gamma_l'], p['beta_l'])
    int_g = bn(conv1x1(bridge, p['w_g'], p['b_g']), p['gamma_g'], p['beta_g'])
    cat = jnp.concatenate([int_x, int_g], axis=1)
    att = jax.nn.sigmoid(conv1x1(leaky(cat), p['w_psi'], p['b_psi'], cast=False))
    gated = out * att
    cb_in = jnp.concatenate([out, gated], axis=1)
    h1 = bn(leaky(conv3x3(cb_in, p['w_c1'], p['b_c1'])), p['gamma_1'], p['beta_1'])
    h2 = bn(leaky(conv3x3(h1, p['w_c2'], p['b_c2'])), p['gamma_2'], p['beta_2'])
    return h2


# --------------------------------- parameters ---------------------------------

def init_params(key, cin, cout):
    fint = cout // 2
    ks = jax.random.split(key, 20)

    def nrm(k, shape, scale=0.2):
        return scale * jax.random.normal(k, shape, dtype=jnp.float32)

    return dict(
        # ConvTranspose2d(cin, cout, k=2, s=2): weight (in, out, kH, kW)
        w_up=nrm(ks[0], (cin, cout, 2, 2)), b_up=nrm(ks[1], (cout,), 0.1),
        # AG.W_l: Conv2d(cout, fint, 1) + BN(fint)
        w_l=nrm(ks[2], (fint, cout, 1, 1)), b_l=nrm(ks[3], (fint,), 0.1),
        gamma_l=1.0 + nrm(ks[4], (fint,), 0.1), beta_l=nrm(ks[5], (fint,), 0.1),
        # AG.W_g: Conv2d(cout, fint, 1) + BN(fint)
        w_g=nrm(ks[6], (fint, cout, 1, 1)), b_g=nrm(ks[7], (fint,), 0.1),
        gamma_g=1.0 + nrm(ks[8], (fint,), 0.1), beta_g=nrm(ks[9], (fint,), 0.1),
        # AG.psi: Conv2d(2*fint, 1, 1)
        w_psi=nrm(ks[10], (1, 2 * fint, 1, 1)), b_psi=nrm(ks[11], (1,), 0.1),
        # ConvBlock conv1: Conv2d(2*cout, cout, 3, pad=1) + BN(cout)
        w_c1=nrm(ks[12], (cout, cin, 3, 3)), b_c1=nrm(ks[13], (cout,), 0.1),
        gamma_1=1.0 + nrm(ks[14], (cout,), 0.1), beta_1=nrm(ks[15], (cout,), 0.1),
        # ConvBlock conv2: Conv2d(cout, cout, 3, pad=1) + BN(cout)
        w_c2=nrm(ks[16], (cout, cout, 3, 3)), b_c2=nrm(ks[17], (cout,), 0.1),
        gamma_2=1.0 + nrm(ks[18], (cout,), 0.1), beta_2=nrm(ks[19], (cout,), 0.1),
    )


# ------------------------------------ main ------------------------------------

if __name__ == "__main__":
    # AttentionBlock(in_features=8, out_features=4); U-Net skip shapes require
    # in_features == 2 * out_features.
    N, C_IN, C_OUT, H, W = 2, 8, 4, 8, 8

    key = jax.random.PRNGKey(0)
    kp, kx, kb = jax.random.split(key, 3)
    params = init_params(kp, C_IN, C_OUT)
    x = jax.random.normal(kx, (N, C_IN, H, W), dtype=jnp.float32)            # NCHW
    bridge = jax.random.normal(kb, (N, C_OUT, 2 * H, 2 * W), dtype=jnp.float32)

    prep = prepare_params(params, C_IN, C_OUT)          # one-time weight prep
    fwd = jax.jit(attention_block_forward, static_argnums=(3,))
    out = jax.block_until_ready(fwd(x, bridge, prep, C_OUT))

    assert out.shape == (N, C_OUT, 2 * H, 2 * W), out.shape

    # Strict structural check vs. a reference that quantizes matmul inputs to bf16
    # at the same points the kernel does (f32 accumulation everywhere).
    ref_bf16 = ref_attention_block(x, bridge, params, mm_dtype=jnp.bfloat16)
    err_strict = float(jnp.max(jnp.abs(out - ref_bf16)))
    if err_strict > 5e-3:
        raise AssertionError(f"mismatch vs bf16-matmul reference: {err_strict}")

    # Loose sanity check vs. the pure-f32 PyTorch-equivalent spec (bf16 MXU inputs
    # introduce a few-percent deviation through two chained convs + three BNs).
    ref_f32 = ref_attention_block(x, bridge, params, mm_dtype=jnp.float32)
    err_spec = float(jnp.max(jnp.abs(out - ref_f32)))
    if err_spec > 0.25:
        raise AssertionError(f"mismatch vs f32 spec reference: {err_spec}")

    print("KERNEL_OK")
</pallas_src>

<mosaic_0001>
module attributes {stable_mosaic.version = 11 : i64} {
  func.func @_gate_conv1_kernel(%arg0: i32, %arg1: i32, %arg2: memref<1x4x16x128xf32, #tpu.memory_space<vmem>>, %arg3: memref<1x1x16x128xf32, #tpu.memory_space<vmem>>, %arg4: memref<1x1x16x128xf32, #tpu.memory_space<vmem>>, %arg5: memref<1x4x16x128xf32, #tpu.memory_space<vmem>>, %arg6: memref<1x1x16x128xf32, #tpu.memory_space<vmem>>, %arg7: memref<1x1x16x128xf32, #tpu.memory_space<vmem>>, %arg8: memref<128x128xbf16, #tpu.memory_space<vmem>>, %arg9: memref<128x128xbf16, #tpu.memory_space<vmem>>, %arg10: memref<8x128xf32, #tpu.memory_space<vmem>>, %arg11: memref<1x1xf32, #tpu.memory_space<vmem>>, %arg12: memref<2304x128xbf16, #tpu.memory_space<vmem>>, %arg13: memref<1x128xf32, #tpu.memory_space<vmem>>, %arg14: memref<1x4x16x128xf32, #tpu.memory_space<vmem>>, %arg15: memref<1x2x128xf32, #tpu.memory_space<vmem>>) attributes {dimension_semantics = [#tpu.dimension_semantics<parallel>, #tpu.dimension_semantics<arbitrary>], iteration_bounds = array<i64: 2, 4>, scalar_prefetch = 0 : i64, scratch_operands = 0 : i64, tpu.core_type = #tpu.core_type<tc>, window_params = [{transform_indices = @transform_0, window_bounds = array<i64: 1, 4, 16, 128>}, {transform_indices = @transform_1, window_bounds = array<i64: 1, 1, 16, 128>}, {transform_indices = @transform_2, window_bounds = array<i64: 1, 1, 16, 128>}, {transform_indices = @transform_3, window_bounds = array<i64: 1, 4, 16, 128>}, {transform_indices = @transform_4, window_bounds = array<i64: 1, 1, 16, 128>}, {transform_indices = @transform_5, window_bounds = array<i64: 1, 1, 16, 128>}, {pipeline_mode = #tpu.pipeline_mode<synchronous>, transform_indices = @transform_6, window_bounds = array<i64: 128, 128>}, {pipeline_mode = #tpu.pipeline_mode<synchronous>, transform_indices = @transform_7, window_bounds = array<i64: 128, 128>}, {pipeline_mode = #tpu.pipeline_mode<synchronous>, transform_indices = @transform_8, window_bounds = array<i64: 8, 128>}, {pipeline_mode = #tpu.pipeline_mode<synchronous>, transform_indices = @transform_9, window_bounds = array<i64: 1, 1>}, {pipeline_mode = #tpu.pipeline_mode<synchronous>, transform_indices = @transform_10, window_bounds = array<i64: 2304, 128>}, {pipeline_mode = #tpu.pipeline_mode<synchronous>, transform_indices = @transform_11, window_bounds = array<i64: 1, 128>}, {transform_indices = @transform_12, window_bounds = array<i64: 1, 4, 16, 128>}, {transform_indices = @transform_13, window_bounds = array<i64: 1, 2, 128>}]} {
    %c0 = arith.constant 0 : index
    %c0_0 = arith.constant 0 : index
    %0 = vector.load %arg10[%c0, %c0_0] : memref<8x128xf32, #tpu.memory_space<vmem>>, vector<8x128xf32>
    %1 = vector.extract_strided_slice %0 {offsets = [0, 0], sizes = [1, 128], strides = [1, 1]} : vector<8x128xf32> to vector<1x128xf32>
    %2 = vector.extract_strided_slice %0 {offsets = [1, 0], sizes = [1, 128], strides = [1, 1]} : vector<8x128xf32> to vector<1x128xf32>
    %3 = vector.extract_strided_slice %0 {offsets = [2, 0], sizes = [1, 128], strides = [1, 1]} : vector<8x128xf32> to vector<1x128xf32>
    %4 = vector.extract_strided_slice %0 {offsets = [3, 0], sizes = [1, 128], strides = [1, 1]} : vector<8x128xf32> to vector<1x128xf32>
    %5 = vector.extract_strided_slice %0 {offsets = [4, 0], sizes = [1, 128], strides = [1, 1]} : vector<8x128xf32> to vector<1x128xf32>
    %6 = vector.extract_strided_slice %0 {offsets = [5, 0], sizes = [1, 128], strides = [1, 1]} : vector<8x128xf32> to vector<1x128xf32>
    %7 = vector.extract_strided_slice %0 {offsets = [6, 0], sizes = [1, 128], strides = [1, 1]} : vector<8x128xf32> to vector<1x128xf32>
    %8 = vector.extract_strided_slice %0 {offsets = [7, 0], sizes = [1, 128], strides = [1, 1]} : vector<8x128xf32> to vector<1x128xf32>
    %c0_1 = arith.constant 0 : index
    %c0_2 = arith.constant 0 : index
    %c0_3 = arith.constant 0 : index
    %c0_4 = arith.constant 0 : index
    %9 = vector.load %arg3[%c0_1, %c0_2, %c0_3, %c0_4] : memref<1x1x16x128xf32, #tpu.memory_space<vmem>>, vector<1x1x16x128xf32>
    %10 = vector.shape_cast %9 : vector<1x1x16x128xf32> to vector<1x16x128xf32>
    %c0_5 = arith.constant 0 : index
    %c0_6 = arith.constant 0 : index
    %c0_7 = arith.constant 0 : index
    %c0_8 = arith.constant 0 : index
    %11 = vector.load %arg2[%c0_5, %c0_6, %c0_7, %c0_8] : memref<1x4x16x128xf32, #tpu.memory_space<vmem>>, vector<1x4x16x128xf32>
    %12 = vector.shape_cast %11 : vector<1x4x16x128xf32> to vector<4x16x128xf32>
    %c0_9 = arith.constant 0 : index
    %c0_10 = arith.constant 0 : index
    %c0_11 = arith.constant 0 : index
    %c0_12 = arith.constant 0 : index
    %13 = vector.load %arg4[%c0_9, %c0_10, %c0_11, %c0_12] : memref<1x1x16x128xf32, #tpu.memory_space<vmem>>, vector<1x1x16x128xf32>
    %14 = vector.shape_cast %13 : vector<1x1x16x128xf32> to vector<1x16x128xf32>
    %15 = tpu.concatenate %10, %12, %14 in 0 : vector<1x16x128xf32>, vector<4x16x128xf32>, vector<1x16x128xf32> -> vector<6x16x128xf32>
    %c0_13 = arith.constant 0 : index
    %c0_14 = arith.constant 0 : index
    %c0_15 = arith.constant 0 : index
    %c0_16 = arith.constant 0 : index
    %16 = vector.load %arg6[%c0_13, %c0_14, %c0_15, %c0_16] : memref<1x1x16x128xf32, #tpu.memory_space<vmem>>, vector<1x1x16x128xf32>
    %17 = vector.shape_cast %16 : vector<1x1x16x128xf32> to vector<1x16x128xf32>
    %c0_17 = arith.constant 0 : index
    %c0_18 = arith.constant 0 : index
    %c0_19 = arith.constant 0 : index
    %c0_20 = arith.constant 0 : index
    %18 = vector.load %arg5[%c0_17, %c0_18, %c0_19, %c0_20] : memref<1x4x16x128xf32, #tpu.memory_space<vmem>>, vector<1x4x16x128xf32>
    %19 = vector.shape_cast %18 : vector<1x4x16x128xf32> to vector<4x16x128xf32>
    %c0_21 = arith.constant 0 : index
    %c0_22 = arith.constant 0 : index
    %c0_23 = arith.constant 0 : index
    %c0_24 = arith.constant 0 : index
    %20 = vector.load %arg7[%c0_21, %c0_22, %c0_23, %c0_24] : memref<1x1x16x128xf32, #tpu.memory_space<vmem>>, vector<1x1x16x128xf32>
    %21 = vector.shape_cast %20 : vector<1x1x16x128xf32> to vector<1x16x128xf32>
    %22 = tpu.concatenate %17, %19, %21 in 0 : vector<1x16x128xf32>, vector<4x16x128xf32>, vector<1x16x128xf32> -> vector<6x16x128xf32>
    %23 = vector.shape_cast %15 : vector<6x16x128xf32> to vector<96x128xf32>
    %24 = vector.shape_cast %22 : vector<6x16x128xf32> to vector<96x128xf32>
    %25 = arith.truncf %23 : vector<96x128xf32> to vector<96x128xbf16>
    %c0_25 = arith.constant 0 : index
    %c0_26 = arith.constant 0 : index
    %26 = vector.load %arg8[%c0_25, %c0_26] : memref<128x128xbf16, #tpu.memory_space<vmem>>, vector<128x128xbf16>
    %cst = arith.constant dense<0.000000e+00> : vector<96x128xf32>
    %27 = tpu.matmul %25, %26, %cst {dimension_numbers = #tpu.dot_dimension_numbers<[1], [0], [0], [1], [0, 0, 1, 1], [], []>} : vector<96x128xbf16>, vector<128x128xbf16>, vector<96x128xf32> -> vector<96x128xf32>
    %28 = vector.broadcast %1 : vector<1x128xf32> to vector<96x128xf32>
    %29 = arith.addf %27, %28 : vector<96x128xf32>
    %30 = vector.broadcast %2 : vector<1x128xf32> to vector<96x128xf32>
    %31 = arith.mulf %29, %30 : vector<96x128xf32>
    %32 = vector.broadcast %3 : vector<1x128xf32> to vector<96x128xf32>
    %33 = arith.addf %31, %32 : vector<96x128xf32>
    %34 = arith.truncf %24 : vector<96x128xf32> to vector<96x128xbf16>
    %c0_27 = arith.constant 0 : index
    %c0_28 = arith.constant 0 : index
    %35 = vector.load %arg9[%c0_27, %c0_28] : memref<128x128xbf16, #tpu.memory_space<vmem>>, vector<128x128xbf16>
    %cst_29 = arith.constant dense<0.000000e+00> : vector<96x128xf32>
    %36 = tpu.matmul %34, %35, %cst_29 {dimension_numbers = #tpu.dot_dimension_numbers<[1], [0], [0], [1], [0, 0, 1, 1], [], []>} : vector<96x128xbf16>, vector<128x128xbf16>, vector<96x128xf32> -> vector<96x128xf32>
    %37 = vector.broadcast %4 : vector<1x128xf32> to vector<96x128xf32>
    %38 = arith.addf %36, %37 : vector<96x128xf32>
    %39 = vector.broadcast %5 : vector<1x128xf32> to vector<96x128xf32>
    %40 = arith.mulf %38, %39 : vector<96x128xf32>
    %41 = vector.broadcast %6 : vector<1x128xf32> to vector<96x128xf32>
    %42 = arith.addf %40, %41 : vector<96x128xf32>
    %cst_30 = arith.constant 0.000000e+00 : f32
    %43 = vector.broadcast %cst_30 : f32 to vector<96x128xf32>
    %44 = arith.cmpf ogt, %33, %43 : vector<96x128xf32>
    %cst_31 = arith.constant 0.00999999977 : f32
    %45 = vector.broadcast %cst_31 : f32 to vector<96x128xf32>
    %46 = arith.mulf %45, %33 : vector<96x128xf32>
    %47 = arith.select %44, %33, %46 : vector<96x128xi1>, vector<96x128xf32>
    %cst_32 = arith.constant 0.000000e+00 : f32
    %48 = vector.broadcast %cst_32 : f32 to vector<96x128xf32>
    %49 = arith.cmpf ogt, %42, %48 : vector<96x128xf32>
    %cst_33 = arith.constant 0.00999999977 : f32
    %50 = vector.broadcast %cst_33 : f32 to vector<96x128xf32>
    %51 = arith.mulf %50, %42 : vector<96x128xf32>
    %52 = arith.select %49, %42, %51 : vector<96x128xi1>, vector<96x128xf32>
    %53 = vector.broadcast %7 : vector<1x128xf32> to vector<96x128xf32>
    %54 = arith.mulf %47, %53 : vector<96x128xf32>
    %cst_34 = arith.constant dense<0.000000e+00> : vector<96xf32>
    %55 = vector.multi_reduction <add>, %54, %cst_34 [1] : vector<96x128xf32> to vector<96xf32>
    %56 = vector.shape_cast %55 : vector<96xf32> to vector<96x1xf32>
    %57 = vector.broadcast %8 : vector<1x128xf32> to vector<96x128xf32>
    %58 = arith.mulf %52, %57 : vector<96x128xf32>
    %cst_35 = arith.constant dense<0.000000e+00> : vector<96xf32>
    %59 = vector.multi_reduction <add>, %58, %cst_35 [1] : vector<96x128xf32> to vector<96xf32>
    %60 = vector.shape_cast %59 : vector<96xf32> to vector<96x1xf32>
    %61 = arith.addf %56, %60 : vector<96x1xf32>
    %c0_36 = arith.constant 0 : index
    %c0_37 = arith.constant 0 : index
    %62 = vector.load %arg11[%c0_36, %c0_37] : memref<1x1xf32, #tpu.memory_space<vmem>>, vector<1x1xf32>
    %63 = vector.broadcast %62 : vector<1x1xf32> to vector<96x1xf32>
    %64 = arith.addf %61, %63 : vector<96x1xf32>
    %cst_38 = arith.constant 5.000000e-01 : f32
    %65 = vector.broadcast %cst_38 : f32 to vector<96x1xf32>
    %66 = arith.mulf %65, %64 : vector<96x1xf32>
    %67 = math.tanh %66 : vector<96x1xf32>
    %cst_39 = arith.constant 1.000000e+00 : f32
    %68 = vector.broadcast %cst_39 : f32 to vector<96x1xf32>
    %69 = arith.addf %67, %68 : vector<96x1xf32>
    %cst_40 = arith.constant 5.000000e-01 : f32
    %70 = vector.broadcast %cst_40 : f32 to vector<96x1xf32>
    %71 = arith.mulf %70, %69 : vector<96x1xf32>
    %72 = vector.broadcast %71 : vector<96x1xf32> to vector<96x128xf32>
    %73 = arith.mulf %23, %72 : vector<96x128xf32>
    %74 = tpu.concatenate %23, %73 in 1 : vector<96x128xf32>, vector<96x128xf32> -> vector<96x256xf32>
    %75 = vector.shape_cast %74 : vector<96x256xf32> to vector<6x16x256xf32>
    %76 = tpu.iota {dimensions = array<i32: 0>} : vector<6x1x1xi32>
    %c0_i32 = arith.constant 0 : i32
    %77 = vector.broadcast %c0_i32 : i32 to vector<6x1x1xi32>
    %78 = arith.cmpi eq, %76, %77 : vector<6x1x1xi32>
    %c0_i32_41 = arith.constant 0 : i32
    %79 = arith.cmpi eq, %arg1, %c0_i32_41 : i32
    %80 = vector.broadcast %79 : i1 to vector<6x1x1xi1>
    %81 = arith.andi %78, %80 : vector<6x1x1xi1>
    %c5_i32 = arith.constant 5 : i32
    %82 = vector.broadcast %c5_i32 : i32 to vector<6x1x1xi32>
    %83 = arith.cmpi eq, %76, %82 : vector<6x1x1xi32>
    %c3_i32 = arith.constant 3 : i32
    %84 = arith.cmpi eq, %arg1, %c3_i32 : i32
    %85 = vector.broadcast %84 : i1 to vector<6x1x1xi1>
    %86 = arith.andi %83, %85 : vector<6x1x1xi1>
    %87 = arith.ori %81, %86 : vector<6x1x1xi1>
    %cst_42 = arith.constant 0.000000e+00 : f32
    %88 = vector.shape_cast %87 : vector<6x1x1xi1> to vector<6x1x1xi1>
    %89 = vector.broadcast %88 : vector<6x1x1xi1> to vector<6x16x256xi1>
    %90 = vector.broadcast %cst_42 : f32 to vector<6x16x256xf32>
    %91 = arith.select %89, %90, %75 : vector<6x16x256xi1>, vector<6x16x256xf32>
    %cst_43 = arith.constant 0.000000e+00 : f32
    %92 = vector.broadcast %cst_43 : f32 to vector<6x1x256xf32>
    %93 = tpu.concatenate %92, %91, %92 in 1 : vector<6x1x256xf32>, vector<6x16x256xf32>, vector<6x1x256xf32> -> vector<6x18x256xf32>
    %94 = vector.extract_strided_slice %93 {offsets = [0, 0, 0], sizes = [4, 16, 256], strides = [1, 1, 1]} : vector<6x18x256xf32> to vector<4x16x256xf32>
    %95 = vector.shape_cast %94 : vector<4x16x256xf32> to vector<64x256xf32>
    %96 = vector.extract_strided_slice %93 {offsets = [0, 1, 0], sizes = [4, 16, 256], strides = [1, 1, 1]} : vector<6x18x256xf32> to vector<4x16x256xf32>
    %97 = vector.shape_cast %96 : vector<4x16x256xf32> to vector<64x256xf32>
    %98 = vector.extract_strided_slice %93 {offsets = [0, 2, 0], sizes = [4, 16, 256], strides = [1, 1, 1]} : vector<6x18x256xf32> to vector<4x16x256xf32>
    %99 = vector.shape_cast %98 : vector<4x16x256xf32> to vector<64x256xf32>
    %100 = vector.extract_strided_slice %93 {offsets = [1, 0, 0], sizes = [4, 16, 256], strides = [1, 1, 1]} : vector<6x18x256xf32> to vector<4x16x256xf32>
    %101 = vector.shape_cast %100 : vector<4x16x256xf32> to vector<64x256xf32>
    %102 = vector.extract_strided_slice %93 {offsets = [1, 1, 0], sizes = [4, 16, 256], strides = [1, 1, 1]} : vector<6x18x256xf32> to vector<4x16x256xf32>
    %103 = vector.shape_cast %102 : vector<4x16x256xf32> to vector<64x256xf32>
    %104 = vector.extract_strided_slice %93 {offsets = [1, 2, 0], sizes = [4, 16, 256], strides = [1, 1, 1]} : vector<6x18x256xf32> to vector<4x16x256xf32>
    %105 = vector.shape_cast %104 : vector<4x16x256xf32> to vector<64x256xf32>
    %106 = vector.extract_strided_slice %93 {offsets = [2, 0, 0], sizes = [4, 16, 256], strides = [1, 1, 1]} : vector<6x18x256xf32> to vector<4x16x256xf32>
    %107 = vector.shape_cast %106 : vector<4x16x256xf32> to vector<64x256xf32>
    %108 = vector.extract_strided_slice %93 {offsets = [2, 1, 0], sizes = [4, 16, 256], strides = [1, 1, 1]} : vector<6x18x256xf32> to vector<4x16x256xf32>
    %109 = vector.shape_cast %108 : vector<4x16x256xf32> to vector<64x256xf32>
    %110 = vector.extract_strided_slice %93 {offsets = [2, 2, 0], sizes = [4, 16, 256], strides = [1, 1, 1]} : vector<6x18x256xf32> to vector<4x16x256xf32>
    %111 = vector.shape_cast %110 : vector<4x16x256xf32> to vector<64x256xf32>
    %112 = tpu.concatenate %95, %97, %99, %101, %103, %105, %107, %109, %111 in 1 : vector<64x256xf32>, vector<64x256xf32>, vector<64x256xf32>, vector<64x256xf32>, vector<64x256xf32>, vector<64x256xf32>, vector<64x256xf32>, vector<64x256xf32>, vector<64x256xf32> -> vector<64x2304xf32>
    %113 = arith.truncf %112 : vector<64x2304xf32> to vector<64x2304xbf16>
    %c0_44 = arith.constant 0 : index
    %c0_45 = arith.constant 0 : index
    %114 = vector.load %arg12[%c0_44, %c0_45] : memref<2304x128xbf16, #tpu.memory_space<vmem>>, vector<2304x128xbf16>
    %cst_46 = arith.constant dense<0.000000e+00> : vector<64x128xf32>
    %115 = tpu.matmul %113, %114, %cst_46 {dimension_numbers = #tpu.dot_dimension_numbers<[1], [0], [0], [1], [0, 0, 1, 1], [], []>} : vector<64x2304xbf16>, vector<2304x128xbf16>, vector<64x128xf32> -> vector<64x128xf32>
    %c0_47 = arith.constant 0 : index
    %c0_48 = arith.constant 0 : index
    %116 = vector.load %arg13[%c0_47, %c0_48] : memref<1x128xf32, #tpu.memory_space<vmem>>, vector<1x128xf32>
    %117 = vector.broadcast %116 : vector<1x128xf32> to vector<64x128xf32>
    %118 = arith.addf %115, %117 : vector<64x128xf32>
    %cst_49 = arith.constant 0.000000e+00 : f32
    %119 = vector.broadcast %cst_49 : f32 to vector<64x128xf32>
    %120 = arith.cmpf ogt, %118, %119 : vector<64x128xf32>
    %cst_50 = arith.constant 0.00999999977 : f32
    %121 = vector.broadcast %cst_50 : f32 to vector<64x128xf32>
    %122 = arith.mulf %121, %118 : vector<64x128xf32>
    %123 = arith.select %120, %118, %122 : vector<64x128xi1>, vector<64x128xf32>
    %124 = vector.shape_cast %123 : vector<64x128xf32> to vector<1x4x16x128xf32>
    %c0_51 = arith.constant 0 : index
    %c0_52 = arith.constant 0 : index
    %c0_53 = arith.constant 0 : index
    %c0_54 = arith.constant 0 : index
    %125 = vector.load %arg14[%c0_51, %c0_52, %c0_53, %c0_54] : memref<1x4x16x128xf32, #tpu.memory_space<vmem>>, vector<1x4x16x128xf32>
    tpu.vector_store %arg14[%c0_51, %c0_52, %c0_53, %c0_54], %124 {strides = array<i32>} : memref<1x4x16x128xf32, #tpu.memory_space<vmem>>, vector<1x4x16x128xf32>,
    %cst_55 = arith.constant dense<0.000000e+00> : vector<128xf32>
    %126 = vector.multi_reduction <add>, %123, %cst_55 [0] : vector<64x128xf32> to vector<128xf32>
    %127 = vector.shape_cast %126 : vector<128xf32> to vector<1x128xf32>
    %128 = arith.mulf %123, %123 : vector<64x128xf32>
    %cst_56 = arith.constant dense<0.000000e+00> : vector<128xf32>
    %129 = vector.multi_reduction <add>, %128, %cst_56 [0] : vector<64x128xf32> to vector<128xf32>
    %130 = vector.shape_cast %129 : vector<128xf32> to vector<1x128xf32>
    %131 = tpu.concatenate %127, %130 in 0 : vector<1x128xf32>, vector<1x128xf32> -> vector<2x128xf32>
    %c0_i32_57 = arith.constant 0 : i32
    %132 = arith.cmpi eq, %arg1, %c0_i32_57 : i32
    %133 = arith.extui %132 : i1 to i32
    %c0_i32_58 = arith.constant 0 : i32
    %134 = arith.cmpi ne, %133, %c0_i32_58 : i32
    scf.if %134 {
      %cst_65 = arith.constant 0.000000e+00 : f32
      %139 = vector.broadcast %cst_65 : f32 to vector<1x2x128xf32>
      %c0_66 = arith.constant 0 : index
      %c0_67 = arith.constant 0 : index
      %c0_68 = arith.constant 0 : index
      %140 = vector.load %arg15[%c0_66, %c0_67, %c0_68] : memref<1x2x128xf32, #tpu.memory_space<vmem>>, vector<1x2x128xf32>
      tpu.vector_store %arg15[%c0_66, %c0_67, %c0_68], %139 {strides = array<i32>} : memref<1x2x128xf32, #tpu.memory_space<vmem>>, vector<1x2x128xf32>,
    } else {
    }
    %c0_59 = arith.constant 0 : index
    %c0_60 = arith.constant 0 : index
    %c0_61 = arith.constant 0 : index
    %135 = vector.load %arg15[%c0_59, %c0_60, %c0_61] : memref<1x2x128xf32, #tpu.memory_space<vmem>>, vector<1x2x128xf32>
    %136 = vector.shape_cast %131 : vector<2x128xf32> to vector<1x2x128xf32>
    %137 = arith.addf %135, %136 : vector<1x2x128xf32>
    %c0_62 = arith.constant 0 : index
    %c0_63 = arith.constant 0 : index
    %c0_64 = arith.constant 0 : index
    %138 = vector.load %arg15[%c0_62, %c0_63, %c0_64] : memref<1x2x128xf32, #tpu.memory_space<vmem>>, vector<1x2x128xf32>
    tpu.vector_store %arg15[%c0_62, %c0_63, %c0_64], %137 {strides = array<i32>} : memref<1x2x128xf32, #tpu.memory_space<vmem>>, vector<1x2x128xf32>,
    return
  }
  func.func @transform_0(%arg0: i32, %arg1: i32) -> (i32, i32, i32, i32) {
    %c0_i32 = arith.constant 0 : i32
    %c0_i32_0 = arith.constant 0 : i32
    %c0_i32_1 = arith.constant 0 : i32
    return %arg0, %arg1, %c0_i32, %c0_i32_0 : i32, i32, i32, i32
  }
  func.func @transform_1(%arg0: i32, %arg1: i32) -> (i32, i32, i32, i32) {
    %c4_i32 = arith.constant 4 : i32
    %0 = arith.muli %arg1, %c4_i32 : i32
    %c1_i32 = arith.constant 1 : i32
    %1 = arith.subi %0, %c1_i32 : i32
    %c0_i32 = arith.constant 0 : i32
    %2 = arith.maxsi %1, %c0_i32 : i32
    %c0_i32_0 = arith.constant 0 : i32
    %c0_i32_1 = arith.constant 0 : i32
    %c0_i32_2 = arith.constant 0 : i32
    return %arg0, %2, %c0_i32_0, %c0_i32_1 : i32, i32, i32, i32
  }
  func.func @transform_2(%arg0: i32, %arg1: i32) -> (i32, i32, i32, i32) {
    %c4_i32 = arith.constant 4 : i32
    %0 = arith.muli %arg1, %c4_i32 : i32
    %c4_i32_0 = arith.constant 4 : i32
    %1 = arith.addi %0, %c4_i32_0 : i32
    %c15_i32 = arith.constant 15 : i32
    %2 = arith.minsi %1, %c15_i32 : i32
    %c0_i32 = arith.constant 0 : i32
    %c0_i32_1 = arith.constant 0 : i32
    %c0_i32_2 = arith.constant 0 : i32
    return %arg0, %2, %c0_i32, %c0_i32_1 : i32, i32, i32, i32
  }
  func.func @transform_3(%arg0: i32, %arg1: i32) -> (i32, i32, i32, i32) {
    %c0_i32 = arith.constant 0 : i32
    %c0_i32_0 = arith.constant 0 : i32
    %c0_i32_1 = arith.constant 0 : i32
    return %arg0, %arg1, %c0_i32, %c0_i32_0 : i32, i32, i32, i32
  }
  func.func @transform_4(%arg0: i32, %arg1: i32) -> (i32, i32, i32, i32) {
    %c4_i32 = arith.constant 4 : i32
    %0 = arith.muli %arg1, %c4_i32 : i32
    %c1_i32 = arith.constant 1 : i32
    %1 = arith.subi %0, %c1_i32 : i32
    %c0_i32 = arith.constant 0 : i32
    %2 = arith.maxsi %1, %c0_i32 : i32
    %c0_i32_0 = arith.constant 0 : i32
    %c0_i32_1 = arith.constant 0 : i32
    %c0_i32_2 = arith.constant 0 : i32
    return %arg0, %2, %c0_i32_0, %c0_i32_1 : i32, i32, i32, i32
  }
  func.func @transform_5(%arg0: i32, %arg1: i32) -> (i32, i32, i32, i32) {
    %c4_i32 = arith.constant 4 : i32
    %0 = arith.muli %arg1, %c4_i32 : i32
    %c4_i32_0 = arith.constant 4 : i32
    %1 = arith.addi %0, %c4_i32_0 : i32
    %c15_i32 = arith.constant 15 : i32
    %2 = arith.minsi %1, %c15_i32 : i32
    %c0_i32 = arith.constant 0 : i32
    %c0_i32_1 = arith.constant 0 : i32
    %c0_i32_2 = arith.constant 0 : i32
    return %arg0, %2, %c0_i32, %c0_i32_1 : i32, i32, i32, i32
  }
  func.func @transform_6(%arg0: i32, %arg1: i32) -> (i32, i32) {
    %c0_i32 = arith.constant 0 : i32
    %c0_i32_0 = arith.constant 0 : i32
    %c0_i32_1 = arith.constant 0 : i32
    return %c0_i32, %c0_i32_0 : i32, i32
  }
  func.func @transform_7(%arg0: i32, %arg1: i32) -> (i32, i32) {
    %c0_i32 = arith.constant 0 : i32
    %c0_i32_0 = arith.constant 0 : i32
    %c0_i32_1 = arith.constant 0 : i32
    return %c0_i32, %c0_i32_0 : i32, i32
  }
  func.func @transform_8(%arg0: i32, %arg1: i32) -> (i32, i32) {
    %c0_i32 = arith.constant 0 : i32
    %c0_i32_0 = arith.constant 0 : i32
    %c0_i32_1 = arith.constant 0 : i32
    return %c0_i32, %c0_i32_0 : i32, i32
  }
  func.func @transform_9(%arg0: i32, %arg1: i32) -> (i32, i32) {
    %c0_i32 = arith.constant 0 : i32
    %c0_i32_0 = arith.constant 0 : i32
    %c0_i32_1 = arith.constant 0 : i32
    return %c0_i32, %c0_i32_0 : i32, i32
  }
  func.func @transform_10(%arg0: i32, %arg1: i32) -> (i32, i32) {
    %c0_i32 = arith.constant 0 : i32
    %c0_i32_0 = arith.constant 0 : i32
    %c0_i32_1 = arith.constant 0 : i32
    return %c0_i32, %c0_i32_0 : i32, i32
  }
  func.func @transform_11(%arg0: i32, %arg1: i32) -> (i32, i32) {
    %c0_i32 = arith.constant 0 : i32
    %c0_i32_0 = arith.constant 0 : i32
    %c0_i32_1 = arith.constant 0 : i32
    return %c0_i32, %c0_i32_0 : i32, i32
  }
  func.func @transform_12(%arg0: i32, %arg1: i32) -> (i32, i32, i32, i32) {
    %c0_i32 = arith.constant 0 : i32
    %c0_i32_0 = arith.constant 0 : i32
    %c0_i32_1 = arith.constant 0 : i32
    return %arg0, %arg1, %c0_i32, %c0_i32_0 : i32, i32, i32, i32
  }
  func.func @transform_13(%arg0: i32, %arg1: i32) -> (i32, i32, i32) {
    %c0_i32 = arith.constant 0 : i32
    %c0_i32_0 = arith.constant 0 : i32
    %c0_i32_1 = arith.constant 0 : i32
    return %arg0, %c0_i32, %c0_i32_0 : i32, i32, i32
  }
}

module attributes {stable_mosaic.version = 11 : i64} {
  func.func @_upsample_gate_stats_kernel(%arg0: i32, %arg1: i32, %arg2: memref<1x2x8x128xf32, #tpu.memory_space<vmem>>, %arg3: memref<1x4x16x128xf32, #tpu.memory_space<vmem>>, %arg4: memref<4x128x128xbf16, #tpu.memory_space<vmem>>, %arg5: memref<1x128xf32, #tpu.memory_space<vmem>>, %arg6: memref<128x128xbf16, #tpu.memory_space<vmem>>, %arg7: memref<1x128xf32, #tpu.memory_space<vmem>>, %arg8: memref<128x128xbf16, #tpu.memory_space<vmem>>, %arg9: memref<1x128xf32, #tpu.memory_space<vmem>>, %arg10: memref<1x4x16x128xf32, #tpu.memory_space<vmem>>, %arg11: memref<1x4x128xf32, #tpu.memory_space<vmem>>) attributes {dimension_semantics = [#tpu.dimension_semantics<parallel>, #tpu.dimension_semantics<arbitrary>], iteration_bounds = array<i64: 2, 4>, scalar_prefetch = 0 : i64, scratch_operands = 0 : i64, tpu.core_type = #tpu.core_type<tc>, window_params = [{transform_indices = @transform_0, window_bounds = array<i64: 1, 2, 8, 128>}, {transform_indices = @transform_1, window_bounds = array<i64: 1, 4, 16, 128>}, {pipeline_mode = #tpu.pipeline_mode<synchronous>, transform_indices = @transform_2, window_bounds = array<i64: 4, 128, 128>}, {pipeline_mode = #tpu.pipeline_mode<synchronous>, transform_indices = @transform_3, window_bounds = array<i64: 1, 128>}, {pipeline_mode = #tpu.pipeline_mode<synchronous>, transform_indices = @transform_4, window_bounds = array<i64: 128, 128>}, {pipeline_mode = #tpu.pipeline_mode<synchronous>, transform_indices = @transform_5, window_bounds = array<i64: 1, 128>}, {pipeline_mode = #tpu.pipeline_mode<synchronous>, transform_indices = @transform_6, window_bounds = array<i64: 128, 128>}, {pipeline_mode = #tpu.pipeline_mode<synchronous>, transform_indices = @transform_7, window_bounds = array<i64: 1, 128>}, {transform_indices = @transform_8, window_bounds = array<i64: 1, 4, 16, 128>}, {transform_indices = @transform_9, window_bounds = array<i64: 1, 4, 128>}]} {
    %c0 = arith.constant 0 : index
    %c0_0 = arith.constant 0 : index
    %c0_1 = arith.constant 0 : index
    %c0_2 = arith.constant 0 : index
    %0 = vector.load %arg2[%c0, %c0_0, %c0_1, %c0_2] : memref<1x2x8x128xf32, #tpu.memory_space<vmem>>, vector<1x2x8x128xf32>
    %1 = vector.shape_cast %0 : vector<1x2x8x128xf32> to vector<2x8x128xf32>
    %2 = vector.shape_cast %1 : vector<2x8x128xf32> to vector<16x128xf32>
    %3 = arith.truncf %2 : vector<16x128xf32> to vector<16x128xbf16>
    %c0_3 = arith.constant 0 : index
    %c0_4 = arith.constant 0 : index
    %c0_5 = arith.constant 0 : index
    %4 = vector.load %arg4[%c0_3, %c0_4, %c0_5] : memref<4x128x128xbf16, #tpu.memory_space<vmem>>, vector<1x128x128xbf16>
    %5 = vector.shape_cast %4 : vector<1x128x128xbf16> to vector<128x128xbf16>
    %cst = arith.constant dense<0.000000e+00> : vector<16x128xf32>
    %6 = tpu.matmul %3, %5, %cst {dimension_numbers = #tpu.dot_dimension_numbers<[1], [0], [0], [1], [0, 0, 1, 1], [], []>} : vector<16x128xbf16>, vector<128x128xbf16>, vector<16x128xf32> -> vector<16x128xf32>
    %7 = vector.shape_cast %6 : vector<16x128xf32> to vector<2x8x128xf32>
    %c1 = arith.constant 1 : index
    %c0_6 = arith.constant 0 : index
    %c0_7 = arith.constant 0 : index
    %8 = vector.load %arg4[%c1, %c0_6, %c0_7] : memref<4x128x128xbf16, #tpu.memory_space<vmem>>, vector<1x128x128xbf16>
    %9 = vector.shape_cast %8 : vector<1x128x128xbf16> to vector<128x128xbf16>
    %cst_8 = arith.constant dense<0.000000e+00> : vector<16x128xf32>
    %10 = tpu.matmul %3, %9, %cst_8 {dimension_numbers = #tpu.dot_dimension_numbers<[1], [0], [0], [1], [0, 0, 1, 1], [], []>} : vector<16x128xbf16>, vector<128x128xbf16>, vector<16x128xf32> -> vector<16x128xf32>
    %11 = vector.shape_cast %10 : vector<16x128xf32> to vector<2x8x128xf32>
    %c2 = arith.constant 2 : index
    %c0_9 = arith.constant 0 : index
    %c0_10 = arith.constant 0 : index
    %12 = vector.load %arg4[%c2, %c0_9, %c0_10] : memref<4x128x128xbf16, #tpu.memory_space<vmem>>, vector<1x128x128xbf16>
    %13 = vector.shape_cast %12 : vector<1x128x128xbf16> to vector<128x128xbf16>
    %cst_11 = arith.constant dense<0.000000e+00> : vector<16x128xf32>
    %14 = tpu.matmul %3, %13, %cst_11 {dimension_numbers = #tpu.dot_dimension_numbers<[1], [0], [0], [1], [0, 0, 1, 1], [], []>} : vector<16x128xbf16>, vector<128x128xbf16>, vector<16x128xf32> -> vector<16x128xf32>
    %15 = vector.shape_cast %14 : vector<16x128xf32> to vector<2x8x128xf32>
    %c3 = arith.constant 3 : index
    %c0_12 = arith.constant 0 : index
    %c0_13 = arith.constant 0 : index
    %16 = vector.load %arg4[%c3, %c0_12, %c0_13] : memref<4x128x128xbf16, #tpu.memory_space<vmem>>, vector<1x128x128xbf16>
    %17 = vector.shape_cast %16 : vector<1x128x128xbf16> to vector<128x128xbf16>
    %cst_14 = arith.constant dense<0.000000e+00> : vector<16x128xf32>
    %18 = tpu.matmul %3, %17, %cst_14 {dimension_numbers = #tpu.dot_dimension_numbers<[1], [0], [0], [1], [0, 0, 1, 1], [], []>} : vector<16x128xbf16>, vector<128x128xbf16>, vector<16x128xf32> -> vector<16x128xf32>
    %19 = vector.shape_cast %18 : vector<16x128xf32> to vector<2x8x128xf32>
    %20 = vector.shape_cast %7 : vector<2x8x128xf32> to vector<2x8x1x128xf32>
    %21 = vector.shape_cast %11 : vector<2x8x128xf32> to vector<2x8x1x128xf32>
    %22 = tpu.concatenate %20, %21 in 2 : vector<2x8x1x128xf32>, vector<2x8x1x128xf32> -> vector<2x8x2x128xf32>
    %23 = vector.shape_cast %22 : vector<2x8x2x128xf32> to vector<2x16x128xf32>
    %24 = vector.shape_cast %15 : vector<2x8x128xf32> to vector<2x8x1x128xf32>
    %25 = vector.shape_cast %19 : vector<2x8x128xf32> to vector<2x8x1x128xf32>
    %26 = tpu.concatenate %24, %25 in 2 : vector<2x8x1x128xf32>, vector<2x8x1x128xf32> -> vector<2x8x2x128xf32>
    %27 = vector.shape_cast %26 : vector<2x8x2x128xf32> to vector<2x16x128xf32>
    %28 = vector.shape_cast %23 : vector<2x16x128xf32> to vector<2x1x16x128xf32>
    %29 = vector.shape_cast %27 : vector<2x16x128xf32> to vector<2x1x16x128xf32>
    %30 = tpu.concatenate %28, %29 in 1 : vector<2x1x16x128xf32>, vector<2x1x16x128xf32> -> vector<2x2x16x128xf32>
    %31 = vector.shape_cast %30 : vector<2x2x16x128xf32> to vector<4x16x128xf32>
    %c0_15 = arith.constant 0 : index
    %c0_16 = arith.constant 0 : index
    %32 = vector.load %arg5[%c0_15, %c0_16] : memref<1x128xf32, #tpu.memory_space<vmem>>, vector<1x128xf32>
    %33 = vector.shape_cast %32 : vector<1x128xf32> to vector<1x1x128xf32>
    %34 = vector.broadcast %33 : vector<1x1x128xf32> to vector<4x16x128xf32>
    %35 = arith.addf %31, %34 : vector<4x16x128xf32>
    %36 = vector.shape_cast %35 : vector<4x16x128xf32> to vector<1x4x16x128xf32>
    %c0_17 = arith.constant 0 : index
    %c0_18 = arith.constant 0 : index
    %c0_19 = arith.constant 0 : index
    %c0_20 = arith.constant 0 : index
    %37 = vector.load %arg10[%c0_17, %c0_18, %c0_19, %c0_20] : memref<1x4x16x128xf32, #tpu.memory_space<vmem>>, vector<1x4x16x128xf32>
    tpu.vector_store %arg10[%c0_17, %c0_18, %c0_19, %c0_20], %36 {strides = array<i32>} : memref<1x4x16x128xf32, #tpu.memory_space<vmem>>, vector<1x4x16x128xf32>,
    %38 = vector.shape_cast %35 : vector<4x16x128xf32> to vector<64x128xf32>
    %39 = arith.truncf %38 : vector<64x128xf32> to vector<64x128xbf16>
    %c0_21 = arith.constant 0 : index
    %c0_22 = arith.constant 0 : index
    %c0_23 = arith.constant 0 : index
    %c0_24 = arith.constant 0 : index
    %40 = vector.load %arg3[%c0_21, %c0_22, %c0_23, %c0_24] : memref<1x4x16x128xf32, #tpu.memory_space<vmem>>, vector<1x4x16x128xf32>
    %41 = vector.shape_cast %40 : vector<1x4x16x128xf32> to vector<4x16x128xf32>
    %42 = vector.shape_cast %41 : vector<4x16x128xf32> to vector<64x128xf32>
    %43 = arith.truncf %42 : vector<64x128xf32> to vector<64x128xbf16>
    %c0_25 = arith.constant 0 : index
    %c0_26 = arith.constant 0 : index
    %44 = vector.load %arg6[%c0_25, %c0_26] : memref<128x128xbf16, #tpu.memory_space<vmem>>, vector<128x128xbf16>
    %cst_27 = arith.constant dense<0.000000e+00> : vector<64x128xf32>
    %45 = tpu.matmul %39, %44, %cst_27 {dimension_numbers = #tpu.dot_dimension_numbers<[1], [0], [0], [1], [0, 0, 1, 1], [], []>} : vector<64x128xbf16>, vector<128x128xbf16>, vector<64x128xf32> -> vector<64x128xf32>
    %c0_28 = arith.constant 0 : index
    %c0_29 = arith.constant 0 : index
    %46 = vector.load %arg7[%c0_28, %c0_29] : memref<1x128xf32, #tpu.memory_space<vmem>>, vector<1x128xf32>
    %47 = vector.broadcast %46 : vector<1x128xf32> to vector<64x128xf32>
    %48 = arith.addf %45, %47 : vector<64x128xf32>
    %c0_30 = arith.constant 0 : index
    %c0_31 = arith.constant 0 : index
    %49 = vector.load %arg8[%c0_30, %c0_31] : memref<128x128xbf16, #tpu.memory_space<vmem>>, vector<128x128xbf16>
    %cst_32 = arith.constant dense<0.000000e+00> : vector<64x128xf32>
    %50 = tpu.matmul %43, %49, %cst_32 {dimension_numbers = #tpu.dot_dimension_numbers<[1], [0], [0], [1], [0, 0, 1, 1], [], []>} : vector<64x128xbf16>, vector<128x128xbf16>, vector<64x128xf32> -> vector<64x128xf32>
    %c0_33 = arith.constant 0 : index
    %c0_34 = arith.constant 0 : index
    %51 = vector.load %arg9[%c0_33, %c0_34] : memref<1x128xf32, #tpu.memory_space<vmem>>, vector<1x128xf32>
    %52 = vector.broadcast %51 : vector<1x128xf32> to vector<64x128xf32>
    %53 = arith.addf %50, %52 : vector<64x128xf32>
    %cst_35 = arith.constant dense<0.000000e+00> : vector<128xf32>
    %54 = vector.multi_reduction <add>, %48, %cst_35 [0] : vector<64x128xf32> to vector<128xf32>
    %55 = vector.shape_cast %54 : vector<128xf32> to vector<1x128xf32>
    %56 = arith.mulf %48, %48 : vector<64x128xf32>
    %cst_36 = arith.constant dense<0.000000e+00> : vector<128xf32>
    %57 = vector.multi_reduction <add>, %56, %cst_36 [0] : vector<64x128xf32> to vector<128xf32>
    %58 = vector.shape_cast %57 : vector<128xf32> to vector<1x128xf32>
    %cst_37 = arith.constant dense<0.000000e+00> : vector<128xf32>
    %59 = vector.multi_reduction <add>, %53, %cst_37 [0] : vector<64x128xf32> to vector<128xf32>
    %60 = vector.shape_cast %59 : vector<128xf32> to vector<1x128xf32>
    %61 = arith.mulf %53, %53 : vector<64x128xf32>
    %cst_38 = arith.constant dense<0.000000e+00> : vector<128xf32>
    %62 = vector.multi_reduction <add>, %61, %cst_38 [0] : vector<64x128xf32> to vector<128xf32>
    %63 = vector.shape_cast %62 : vector<128xf32> to vector<1x128xf32>
    %64 = tpu.concatenate %55, %58, %60, %63 in 0 : vector<1x128xf32>, vector<1x128xf32>, vector<1x128xf32>, vector<1x128xf32> -> vector<4x128xf32>
    %c0_i32 = arith.constant 0 : i32
    %65 = arith.cmpi eq, %arg1, %c0_i32 : i32
    %66 = arith.extui %65 : i1 to i32
    %c0_i32_39 = arith.constant 0 : i32
    %67 = arith.cmpi ne, %66, %c0_i32_39 : i32
    scf.if %67 {
      %cst_46 = arith.constant 0.000000e+00 : f32
      %72 = vector.broadcast %cst_46 : f32 to vector<1x4x128xf32>
      %c0_47 = arith.constant 0 : index
      %c0_48 = arith.constant 0 : index
      %c0_49 = arith.constant 0 : index
      %73 = vector.load %arg11[%c0_47, %c0_48, %c0_49] : memref<1x4x128xf32, #tpu.memory_space<vmem>>, vector<1x4x128xf32>
      tpu.vector_store %arg11[%c0_47, %c0_48, %c0_49], %72 {strides = array<i32>} : memref<1x4x128xf32, #tpu.memory_space<vmem>>, vector<1x4x128xf32>,
    } else {
    }
    %c0_40 = arith.constant 0 : index
    %c0_41 = arith.constant 0 : index
    %c0_42 = arith.constant 0 : index
    %68 = vector.load %arg11[%c0_40, %c0_41, %c0_42] : memref<1x4x128xf32, #tpu.memory_space<vmem>>, vector<1x4x128xf32>
    %69 = vector.shape_cast %64 : vector<4x128xf32> to vector<1x4x128xf32>
    %70 = arith.addf %68, %69 : vector<1x4x128xf32>
    %c0_43 = arith.constant 0 : index
    %c0_44 = arith.constant 0 : index
    %c0_45 = arith.constant 0 : index
    %71 = vector.load %arg11[%c0_43, %c0_44, %c0_45] : memref<1x4x128xf32, #tpu.memory_space<vmem>>, vector<1x4x128xf32>
    tpu.vector_store %arg11[%c0_43, %c0_44, %c0_45], %70 {strides = array<i32>} : memref<1x4x128xf32, #tpu.memory_space<vmem>>, vector<1x4x128xf32>,
    return
  }
  func.func @transform_0(%arg0: i32, %arg1: i32) -> (i32, i32, i32, i32) {
    %c0_i32 = arith.constant 0 : i32
    %c0_i32_0 = arith.constant 0 : i32
    %c0_i32_1 = arith.constant 0 : i32
    return %arg0, %arg1, %c0_i32, %c0_i32_0 : i32, i32, i32, i32
  }
  func.func @transform_1(%arg0: i32, %arg1: i32) -> (i32, i32, i32, i32) {
    %c0_i32 = arith.constant 0 : i32
    %c0_i32_0 = arith.constant 0 : i32
    %c0_i32_1 = arith.constant 0 : i32
    return %arg0, %arg1, %c0_i32, %c0_i32_0 : i32, i32, i32, i32
  }
  func.func @transform_2(%arg0: i32, %arg1: i32) -> (i32, i32, i32) {
    %c0_i32 = arith.constant 0 : i32
    %c0_i32_0 = arith.constant 0 : i32
    %c0_i32_1 = arith.constant 0 : i32
    %c0_i32_2 = arith.constant 0 : i32
    return %c0_i32, %c0_i32_0, %c0_i32_1 : i32, i32, i32
  }
  func.func @transform_3(%arg0: i32, %arg1: i32) -> (i32, i32) {
    %c0_i32 = arith.constant 0 : i32
    %c0_i32_0 = arith.constant 0 : i32
    %c0_i32_1 = arith.constant 0 : i32
    return %c0_i32, %c0_i32_0 : i32, i32
  }
  func.func @transform_4(%arg0: i32, %arg1: i32) -> (i32, i32) {
    %c0_i32 = arith.constant 0 : i32
    %c0_i32_0 = arith.constant 0 : i32
    %c0_i32_1 = arith.constant 0 : i32
    return %c0_i32, %c0_i32_0 : i32, i32
  }
  func.func @transform_5(%arg0: i32, %arg1: i32) -> (i32, i32) {
    %c0_i32 = arith.constant 0 : i32
    %c0_i32_0 = arith.constant 0 : i32
    %c0_i32_1 = arith.constant 0 : i32
    return %c0_i32, %c0_i32_0 : i32, i32
  }
  func.func @transform_6(%arg0: i32, %arg1: i32) -> (i32, i32) {
    %c0_i32 = arith.constant 0 : i32
    %c0_i32_0 = arith.constant 0 : i32
    %c0_i32_1 = arith.constant 0 : i32
    return %c0_i32, %c0_i32_0 : i32, i32
  }
  func.func @transform_7(%arg0: i32, %arg1: i32) -> (i32, i32) {
    %c0_i32 = arith.constant 0 : i32
    %c0_i32_0 = arith.constant 0 : i32
    %c0_i32_1 = arith.constant 0 : i32
    return %c0_i32, %c0_i32_0 : i32, i32
  }
  func.func @transform_8(%arg0: i32, %arg1: i32) -> (i32, i32, i32, i32) {
    %c0_i32 = arith.constant 0 : i32
    %c0_i32_0 = arith.constant 0 : i32
    %c0_i32_1 = arith.constant 0 : i32
    return %arg0, %arg1, %c0_i32, %c0_i32_0 : i32, i32, i32, i32
  }
  func.func @transform_9(%arg0: i32, %arg1: i32) -> (i32, i32, i32) {
    %c0_i32 = arith.constant 0 : i32
    %c0_i32_0 = arith.constant 0 : i32
    %c0_i32_1 = arith.constant 0 : i32
    return %arg0, %c0_i32, %c0_i32_0 : i32, i32, i32
  }
}

module attributes {stable_mosaic.version = 11 : i64} {
  func.func @_bn_conv2_kernel(%arg0: i32, %arg1: i32, %arg2: memref<1x4x16x128xf32, #tpu.memory_space<vmem>>, %arg3: memref<1x1x16x128xf32, #tpu.memory_space<vmem>>, %arg4: memref<1x1x16x128xf32, #tpu.memory_space<vmem>>, %arg5: memref<2x128xf32, #tpu.memory_space<vmem>>, %arg6: memref<1152x128xbf16, #tpu.memory_space<vmem>>, %arg7: memref<1x128xf32, #tpu.memory_space<vmem>>, %arg8: memref<1x4x16x128xf32, #tpu.memory_space<vmem>>, %arg9: memref<1x2x128xf32, #tpu.memory_space<vmem>>) attributes {dimension_semantics = [#tpu.dimension_semantics<parallel>, #tpu.dimension_semantics<arbitrary>], iteration_bounds = array<i64: 2, 4>, scalar_prefetch = 0 : i64, scratch_operands = 0 : i64, tpu.core_type = #tpu.core_type<tc>, window_params = [{transform_indices = @transform_0, window_bounds = array<i64: 1, 4, 16, 128>}, {transform_indices = @transform_1, window_bounds = array<i64: 1, 1, 16, 128>}, {transform_indices = @transform_2, window_bounds = array<i64: 1, 1, 16, 128>}, {pipeline_mode = #tpu.pipeline_mode<synchronous>, transform_indices = @transform_3, window_bounds = array<i64: 2, 128>}, {pipeline_mode = #tpu.pipeline_mode<synchronous>, transform_indices = @transform_4, window_bounds = array<i64: 1152, 128>}, {pipeline_mode = #tpu.pipeline_mode<synchronous>, transform_indices = @transform_5, window_bounds = array<i64: 1, 128>}, {transform_indices = @transform_6, window_bounds = array<i64: 1, 4, 16, 128>}, {transform_indices = @transform_7, window_bounds = array<i64: 1, 2, 128>}]} {
    %c0 = arith.constant 0 : index
    %c0_0 = arith.constant 0 : index
    %0 = vector.load %arg5[%c0, %c0_0] : memref<2x128xf32, #tpu.memory_space<vmem>>, vector<2x128xf32>
    %1 = vector.extract_strided_slice %0 {offsets = [0, 0], sizes = [1, 128], strides = [1, 1]} : vector<2x128xf32> to vector<1x128xf32>
    %2 = vector.shape_cast %1 : vector<1x128xf32> to vector<1x1x128xf32>
    %3 = vector.extract_strided_slice %0 {offsets = [1, 0], sizes = [1, 128], strides = [1, 1]} : vector<2x128xf32> to vector<1x128xf32>
    %4 = vector.shape_cast %3 : vector<1x128xf32> to vector<1x1x128xf32>
    %c0_1 = arith.constant 0 : index
    %c0_2 = arith.constant 0 : index
    %c0_3 = arith.constant 0 : index
    %c0_4 = arith.constant 0 : index
    %5 = vector.load %arg3[%c0_1, %c0_2, %c0_3, %c0_4] : memref<1x1x16x128xf32, #tpu.memory_space<vmem>>, vector<1x1x16x128xf32>
    %6 = vector.shape_cast %5 : vector<1x1x16x128xf32> to vector<1x16x128xf32>
    %c0_5 = arith.constant 0 : index
    %c0_6 = arith.constant 0 : index
    %c0_7 = arith.constant 0 : index
    %c0_8 = arith.constant 0 : index
    %7 = vector.load %arg2[%c0_5, %c0_6, %c0_7, %c0_8] : memref<1x4x16x128xf32, #tpu.memory_space<vmem>>, vector<1x4x16x128xf32>
    %8 = vector.shape_cast %7 : vector<1x4x16x128xf32> to vector<4x16x128xf32>
    %c0_9 = arith.constant 0 : index
    %c0_10 = arith.constant 0 : index
    %c0_11 = arith.constant 0 : index
    %c0_12 = arith.constant 0 : index
    %9 = vector.load %arg4[%c0_9, %c0_10, %c0_11, %c0_12] : memref<1x1x16x128xf32, #tpu.memory_space<vmem>>, vector<1x1x16x128xf32>
    %10 = vector.shape_cast %9 : vector<1x1x16x128xf32> to vector<1x16x128xf32>
    %11 = tpu.concatenate %6, %8, %10 in 0 : vector<1x16x128xf32>, vector<4x16x128xf32>, vector<1x16x128xf32> -> vector<6x16x128xf32>
    %12 = vector.broadcast %2 : vector<1x1x128xf32> to vector<6x16x128xf32>
    %13 = arith.mulf %11, %12 : vector<6x16x128xf32>
    %14 = vector.broadcast %4 : vector<1x1x128xf32> to vector<6x16x128xf32>
    %15 = arith.addf %13, %14 : vector<6x16x128xf32>
    %16 = tpu.iota {dimensions = array<i32: 0>} : vector<6x1x1xi32>
    %c0_i32 = arith.constant 0 : i32
    %17 = vector.broadcast %c0_i32 : i32 to vector<6x1x1xi32>
    %18 = arith.cmpi eq, %16, %17 : vector<6x1x1xi32>
    %c0_i32_13 = arith.constant 0 : i32
    %19 = arith.cmpi eq, %arg1, %c0_i32_13 : i32
    %20 = vector.broadcast %19 : i1 to vector<6x1x1xi1>
    %21 = arith.andi %18, %20 : vector<6x1x1xi1>
    %c5_i32 = arith.constant 5 : i32
    %22 = vector.broadcast %c5_i32 : i32 to vector<6x1x1xi32>
    %23 = arith.cmpi eq, %16, %22 : vector<6x1x1xi32>
    %c3_i32 = arith.constant 3 : i32
    %24 = arith.cmpi eq, %arg1, %c3_i32 : i32
    %25 = vector.broadcast %24 : i1 to vector<6x1x1xi1>
    %26 = arith.andi %23, %25 : vector<6x1x1xi1>
    %27 = arith.ori %21, %26 : vector<6x1x1xi1>
    %cst = arith.constant 0.000000e+00 : f32
    %28 = vector.shape_cast %27 : vector<6x1x1xi1> to vector<6x1x1xi1>
    %29 = vector.broadcast %28 : vector<6x1x1xi1> to vector<6x16x128xi1>
    %30 = vector.broadcast %cst : f32 to vector<6x16x128xf32>
    %31 = arith.select %29, %30, %15 : vector<6x16x128xi1>, vector<6x16x128xf32>
    %cst_14 = arith.constant 0.000000e+00 : f32
    %32 = vector.broadcast %cst_14 : f32 to vector<6x1x128xf32>
    %33 = tpu.concatenate %32, %31, %32 in 1 : vector<6x1x128xf32>, vector<6x16x128xf32>, vector<6x1x128xf32> -> vector<6x18x128xf32>
    %34 = vector.extract_strided_slice %33 {offsets = [0, 0, 0], sizes = [4, 16, 128], strides = [1, 1, 1]} : vector<6x18x128xf32> to vector<4x16x128xf32>
    %35 = vector.shape_cast %34 : vector<4x16x128xf32> to vector<64x128xf32>
    %36 = vector.extract_strided_slice %33 {offsets = [0, 1, 0], sizes = [4, 16, 128], strides = [1, 1, 1]} : vector<6x18x128xf32> to vector<4x16x128xf32>
    %37 = vector.shape_cast %36 : vector<4x16x128xf32> to vector<64x128xf32>
    %38 = vector.extract_strided_slice %33 {offsets = [0, 2, 0], sizes = [4, 16, 128], strides = [1, 1, 1]} : vector<6x18x128xf32> to vector<4x16x128xf32>
    %39 = vector.shape_cast %38 : vector<4x16x128xf32> to vector<64x128xf32>
    %40 = vector.extract_strided_slice %33 {offsets = [1, 0, 0], sizes = [4, 16, 128], strides = [1, 1, 1]} : vector<6x18x128xf32> to vector<4x16x128xf32>
    %41 = vector.shape_cast %40 : vector<4x16x128xf32> to vector<64x128xf32>
    %42 = vector.extract_strided_slice %33 {offsets = [1, 1, 0], sizes = [4, 16, 128], strides = [1, 1, 1]} : vector<6x18x128xf32> to vector<4x16x128xf32>
    %43 = vector.shape_cast %42 : vector<4x16x128xf32> to vector<64x128xf32>
    %44 = vector.extract_strided_slice %33 {offsets = [1, 2, 0], sizes = [4, 16, 128], strides = [1, 1, 1]} : vector<6x18x128xf32> to vector<4x16x128xf32>
    %45 = vector.shape_cast %44 : vector<4x16x128xf32> to vector<64x128xf32>
    %46 = vector.extract_strided_slice %33 {offsets = [2, 0, 0], sizes = [4, 16, 128], strides = [1, 1, 1]} : vector<6x18x128xf32> to vector<4x16x128xf32>
    %47 = vector.shape_cast %46 : vector<4x16x128xf32> to vector<64x128xf32>
    %48 = vector.extract_strided_slice %33 {offsets = [2, 1, 0], sizes = [4, 16, 128], strides = [1, 1, 1]} : vector<6x18x128xf32> to vector<4x16x128xf32>
    %49 = vector.shape_cast %48 : vector<4x16x128xf32> to vector<64x128xf32>
    %50 = vector.extract_strided_slice %33 {offsets = [2, 2, 0], sizes = [4, 16, 128], strides = [1, 1, 1]} : vector<6x18x128xf32> to vector<4x16x128xf32>
    %51 = vector.shape_cast %50 : vector<4x16x128xf32> to vector<64x128xf32>
    %52 = tpu.concatenate %35, %37, %39, %41, %43, %45, %47, %49, %51 in 1 : vector<64x128xf32>, vector<64x128xf32>, vector<64x128xf32>, vector<64x128xf32>, vector<64x128xf32>, vector<64x128xf32>, vector<64x128xf32>, vector<64x128xf32>, vector<64x128xf32> -> vector<64x1152xf32>
    %53 = arith.truncf %52 : vector<64x1152xf32> to vector<64x1152xbf16>
    %c0_15 = arith.constant 0 : index
    %c0_16 = arith.constant 0 : index
    %54 = vector.load %arg6[%c0_15, %c0_16] : memref<1152x128xbf16, #tpu.memory_space<vmem>>, vector<1152x128xbf16>
    %cst_17 = arith.constant dense<0.000000e+00> : vector<64x128xf32>
    %55 = tpu.matmul %53, %54, %cst_17 {dimension_numbers = #tpu.dot_dimension_numbers<[1], [0], [0], [1], [0, 0, 1, 1], [], []>} : vector<64x1152xbf16>, vector<1152x128xbf16>, vector<64x128xf32> -> vector<64x128xf32>
    %c0_18 = arith.constant 0 : index
    %c0_19 = arith.constant 0 : index
    %56 = vector.load %arg7[%c0_18, %c0_19] : memref<1x128xf32, #tpu.memory_space<vmem>>, vector<1x128xf32>
    %57 = vector.broadcast %56 : vector<1x128xf32> to vector<64x128xf32>
    %58 = arith.addf %55, %57 : vector<64x128xf32>
    %cst_20 = arith.constant 0.000000e+00 : f32
    %59 = vector.broadcast %cst_20 : f32 to vector<64x128xf32>
    %60 = arith.cmpf ogt, %58, %59 : vector<64x128xf32>
    %cst_21 = arith.constant 0.00999999977 : f32
    %61 = vector.broadcast %cst_21 : f32 to vector<64x128xf32>
    %62 = arith.mulf %61, %58 : vector<64x128xf32>
    %63 = arith.select %60, %58, %62 : vector<64x128xi1>, vector<64x128xf32>
    %64 = vector.shape_cast %63 : vector<64x128xf32> to vector<1x4x16x128xf32>
    %c0_22 = arith.constant 0 : index
    %c0_23 = arith.constant 0 : index
    %c0_24 = arith.constant 0 : index
    %c0_25 = arith.constant 0 : index
    %65 = vector.load %arg8[%c0_22, %c0_23, %c0_24, %c0_25] : memref<1x4x16x128xf32, #tpu.memory_space<vmem>>, vector<1x4x16x128xf32>
    tpu.vector_store %arg8[%c0_22, %c0_23, %c0_24, %c0_25], %64 {strides = array<i32>} : memref<1x4x16x128xf32, #tpu.memory_space<vmem>>, vector<1x4x16x128xf32>,
    %cst_26 = arith.constant dense<0.000000e+00> : vector<128xf32>
    %66 = vector.multi_reduction <add>, %63, %cst_26 [0] : vector<64x128xf32> to vector<128xf32>
    %67 = vector.shape_cast %66 : vector<128xf32> to vector<1x128xf32>
    %68 = arith.mulf %63, %63 : vector<64x128xf32>
    %cst_27 = arith.constant dense<0.000000e+00> : vector<128xf32>
    %69 = vector.multi_reduction <add>, %68, %cst_27 [0] : vector<64x128xf32> to vector<128xf32>
    %70 = vector.shape_cast %69 : vector<128xf32> to vector<1x128xf32>
    %71 = tpu.concatenate %67, %70 in 0 : vector<1x128xf32>, vector<1x128xf32> -> vector<2x128xf32>
    %c0_i32_28 = arith.constant 0 : i32
    %72 = arith.cmpi eq, %arg1, %c0_i32_28 : i32
    %73 = arith.extui %72 : i1 to i32
    %c0_i32_29 = arith.constant 0 : i32
    %74 = arith.cmpi ne, %73, %c0_i32_29 : i32
    scf.if %74 {
      %cst_36 = arith.constant 0.000000e+00 : f32
      %79 = vector.broadcast %cst_36 : f32 to vector<1x2x128xf32>
      %c0_37 = arith.constant 0 : index
      %c0_38 = arith.constant 0 : index
      %c0_39 = arith.constant 0 : index
      %80 = vector.load %arg9[%c0_37, %c0_38, %c0_39] : memref<1x2x128xf32, #tpu.memory_space<vmem>>, vector<1x2x128xf32>
      tpu.vector_store %arg9[%c0_37, %c0_38, %c0_39], %79 {strides = array<i32>} : memref<1x2x128xf32, #tpu.memory_space<vmem>>, vector<1x2x128xf32>,
    } else {
    }
    %c0_30 = arith.constant 0 : index
    %c0_31 = arith.constant 0 : index
    %c0_32 = arith.constant 0 : index
    %75 = vector.load %arg9[%c0_30, %c0_31, %c0_32] : memref<1x2x128xf32, #tpu.memory_space<vmem>>, vector<1x2x128xf32>
    %76 = vector.shape_cast %71 : vector<2x128xf32> to vector<1x2x128xf32>
    %77 = arith.addf %75, %76 : vector<1x2x128xf32>
    %c0_33 = arith.constant 0 : index
    %c0_34 = arith.constant 0 : index
    %c0_35 = arith.constant 0 : index
    %78 = vector.load %arg9[%c0_33, %c0_34, %c0_35] : memref<1x2x128xf32, #tpu.memory_space<vmem>>, vector<1x2x128xf32>
    tpu.vector_store %arg9[%c0_33, %c0_34, %c0_35], %77 {strides = array<i32>} : memref<1x2x128xf32, #tpu.memory_space<vmem>>, vector<1x2x128xf32>,
    return
  }
  func.func @transform_0(%arg0: i32, %arg1: i32) -> (i32, i32, i32, i32) {
    %c0_i32 = arith.constant 0 : i32
    %c0_i32_0 = arith.constant 0 : i32
    %c0_i32_1 = arith.constant 0 : i32
    return %arg0, %arg1, %c0_i32, %c0_i32_0 : i32, i32, i32, i32
  }
  func.func @transform_1(%arg0: i32, %arg1: i32) -> (i32, i32, i32, i32) {
    %c4_i32 = arith.constant 4 : i32
    %0 = arith.muli %arg1, %c4_i32 : i32
    %c1_i32 = arith.constant 1 : i32
    %1 = arith.subi %0, %c1_i32 : i32
    %c0_i32 = arith.constant 0 : i32
    %2 = arith.maxsi %1, %c0_i32 : i32
    %c0_i32_0 = arith.constant 0 : i32
    %c0_i32_1 = arith.constant 0 : i32
    %c0_i32_2 = arith.constant 0 : i32
    return %arg0, %2, %c0_i32_0, %c0_i32_1 : i32, i32, i32, i32
  }
  func.func @transform_2(%arg0: i32, %arg1: i32) -> (i32, i32, i32, i32) {
    %c4_i32 = arith.constant 4 : i32
    %0 = arith.muli %arg1, %c4_i32 : i32
    %c4_i32_0 = arith.constant 4 : i32
    %1 = arith.addi %0, %c4_i32_0 : i32
    %c15_i32 = arith.constant 15 : i32
    %2 = arith.minsi %1, %c15_i32 : i32
    %c0_i32 = arith.constant 0 : i32
    %c0_i32_1 = arith.constant 0 : i32
    %c0_i32_2 = arith.constant 0 : i32
    return %arg0, %2, %c0_i32, %c0_i32_1 : i32, i32, i32, i32
  }
  func.func @transform_3(%arg0: i32, %arg1: i32) -> (i32, i32) {
    %c0_i32 = arith.constant 0 : i32
    %c0_i32_0 = arith.constant 0 : i32
    %c0_i32_1 = arith.constant 0 : i32
    return %c0_i32, %c0_i32_0 : i32, i32
  }
  func.func @transform_4(%arg0: i32, %arg1: i32) -> (i32, i32) {
    %c0_i32 = arith.constant 0 : i32
    %c0_i32_0 = arith.constant 0 : i32
    %c0_i32_1 = arith.constant 0 : i32
    return %c0_i32, %c0_i32_0 : i32, i32
  }
  func.func @transform_5(%arg0: i32, %arg1: i32) -> (i32, i32) {
    %c0_i32 = arith.constant 0 : i32
    %c0_i32_0 = arith.constant 0 : i32
    %c0_i32_1 = arith.constant 0 : i32
    return %c0_i32, %c0_i32_0 : i32, i32
  }
  func.func @transform_6(%arg0: i32, %arg1: i32) -> (i32, i32, i32, i32) {
    %c0_i32 = arith.constant 0 : i32
    %c0_i32_0 = arith.constant 0 : i32
    %c0_i32_1 = arith.constant 0 : i32
    return %arg0, %arg1, %c0_i32, %c0_i32_0 : i32, i32, i32, i32
  }
  func.func @transform_7(%arg0: i32, %arg1: i32) -> (i32, i32, i32) {
    %c0_i32 = arith.constant 0 : i32
    %c0_i32_0 = arith.constant 0 : i32
    %c0_i32_1 = arith.constant 0 : i32
    return %arg0, %c0_i32, %c0_i32_0 : i32, i32, i32
  }
}

module attributes {stable_mosaic.version = 11 : i64} {
  func.func @_bn_apply_kernel(%arg0: i32, %arg1: i32, %arg2: memref<1x4x16x128xf32, #tpu.memory_space<vmem>>, %arg3: memref<2x128xf32, #tpu.memory_space<vmem>>, %arg4: memref<1x4x16x128xf32, #tpu.memory_space<vmem>>) attributes {dimension_semantics = [#tpu.dimension_semantics<parallel>, #tpu.dimension_semantics<parallel>], iteration_bounds = array<i64: 2, 4>, scalar_prefetch = 0 : i64, scratch_operands = 0 : i64, tpu.core_type = #tpu.core_type<tc>, window_params = [{transform_indices = @transform_0, window_bounds = array<i64: 1, 4, 16, 128>}, {pipeline_mode = #tpu.pipeline_mode<synchronous>, transform_indices = @transform_1, window_bounds = array<i64: 2, 128>}, {transform_indices = @transform_2, window_bounds = array<i64: 1, 4, 16, 128>}]} {
    %c0 = arith.constant 0 : index
    %c0_0 = arith.constant 0 : index
    %0 = vector.load %arg3[%c0, %c0_0] : memref<2x128xf32, #tpu.memory_space<vmem>>, vector<2x128xf32>
    %c0_1 = arith.constant 0 : index
    %c0_2 = arith.constant 0 : index
    %c0_3 = arith.constant 0 : index
    %c0_4 = arith.constant 0 : index
    %1 = vector.load %arg2[%c0_1, %c0_2, %c0_3, %c0_4] : memref<1x4x16x128xf32, #tpu.memory_space<vmem>>, vector<1x4x16x128xf32>
    %2 = vector.extract_strided_slice %0 {offsets = [0, 0], sizes = [1, 128], strides = [1, 1]} : vector<2x128xf32> to vector<1x128xf32>
    %3 = vector.shape_cast %2 : vector<1x128xf32> to vector<1x1x1x128xf32>
    %4 = vector.broadcast %3 : vector<1x1x1x128xf32> to vector<1x4x16x128xf32>
    %5 = arith.mulf %1, %4 : vector<1x4x16x128xf32>
    %6 = vector.extract_strided_slice %0 {offsets = [1, 0], sizes = [1, 128], strides = [1, 1]} : vector<2x128xf32> to vector<1x128xf32>
    %7 = vector.shape_cast %6 : vector<1x128xf32> to vector<1x1x1x128xf32>
    %8 = vector.broadcast %7 : vector<1x1x1x128xf32> to vector<1x4x16x128xf32>
    %9 = arith.addf %5, %8 : vector<1x4x16x128xf32>
    %c0_5 = arith.constant 0 : index
    %c0_6 = arith.constant 0 : index
    %c0_7 = arith.constant 0 : index
    %c0_8 = arith.constant 0 : index
    %10 = vector.load %arg4[%c0_5, %c0_6, %c0_7, %c0_8] : memref<1x4x16x128xf32, #tpu.memory_space<vmem>>, vector<1x4x16x128xf32>
    tpu.vector_store %arg4[%c0_5, %c0_6, %c0_7, %c0_8], %9 {strides = array<i32>} : memref<1x4x16x128xf32, #tpu.memory_space<vmem>>, vector<1x4x16x128xf32>,
    return
  }
  func.func @transform_0(%arg0: i32, %arg1: i32) -> (i32, i32, i32, i32) {
    %c0_i32 = arith.constant 0 : i32
    %c0_i32_0 = arith.constant 0 : i32
    %c0_i32_1 = arith.constant 0 : i32
    return %arg0, %arg1, %c0_i32, %c0_i32_0 : i32, i32, i32, i32
  }
  func.func @transform_1(%arg0: i32, %arg1: i32) -> (i32, i32) {
    %c0_i32 = arith.constant 0 : i32
    %c0_i32_0 = arith.constant 0 : i32
    %c0_i32_1 = arith.constant 0 : i32
    return %c0_i32, %c0_i32_0 : i32, i32
  }
  func.func @transform_2(%arg0: i32, %arg1: i32) -> (i32, i32, i32, i32) {
    %c0_i32 = arith.constant 0 : i32
    %c0_i32_0 = arith.constant 0 : i32
    %c0_i32_1 = arith.constant 0 : i32
    return %arg0, %arg1, %c0_i32, %c0_i32_0 : i32, i32, i32, i32
  }
}

</mosaic_0001>

<llo_original>
// kernel: attention_block_forward.7
$region0: #{attention_block_forward.7}
  #allocation0 [shape = 'u32[]', space=smem, size = 0x4, offset = 0x4, fixed_abs, tag = 'smem constant byte address 0x4 - core index']
  #allocation1 [shape = 'u32[144,128]{1,0:T(1,128)}', space=vmem, size = 0x12000, scoped, tag = 'internal scratch']
  %s0 = inlined_call_operand.vmem [shape: f32[2,16,16,128], index: 0, kind: input, shape index: {}]
  %s1 = inlined_call_operand.vmem [shape: f32[2,128], index: 1, kind: input, shape index: {}]
  %s2 = inlined_call_operand.vmem [shape: f32[2,16,16,128], index: 2, kind: output, shape index: {}]
  %s3 = sld [smem:[#allocation0]]
  $region41: #{attention_block_forward.7} parent=0
    _
  %s5 = ssub.s32 1, %s3
  %s6 = scalar_select 0, %s5, %s3
  loop: start=0, step=1, limit=10
  $region2: #{attention_block_forward.7} parent=0 // loop_pre_header
    _
  $region3: #{attention_block_forward.7} parent=0 // loop_header
    %s8 = sphi 0, %s12
    %p9 = scmp.ge.s32.totalorder %s8, 10
    %s15 = sphi 0, %s27
    %s16 = sphi 0, %s23
    %s17 = sphi 0, %s15
    %s18 = sphi 0, %s16
    %s19 = sphi 0, %s17
    %s20 = sphi 0, %s18
    %s32 = sphi 0, %s34
    %s35 = sphi 0, %s32
    %s36 = sphi 0, %s35
    %s52 = sphi 0, %s36
    %s56 = sphi 0, %s56
    %s58 = sphi 0, %s56
    %s59 = sphi 0, %s58
    %s73 = sphi 0, %s59
    %s81 = sphi 0, %s83
    %s84 = sphi 0, %s81
    %s85 = sphi 0, %s84
    %s101 = sphi 0, %s85
  $region4: #{attention_block_forward.7} parent=0 // loop_header_branch
    %11 = sbr.rel (%p9) target = $region8
  $region5: #{attention_block_forward.7} parent=0 // loop_body
    %s13 = ssub.s32 %s8, 1
    %s14 = ssub.s32 %s8, 2
    %s21 = sadd.s32 1, %s16
    %p22 = scmp.ge.s32.totalorder %s21, 4
    %s23 = scalar_select %p22, 0, %s21
    %s24 = sadd.s32 1, %s15
    %s25 = scalar_select %p22, %s24, %s15
    %p26 = scmp.ge.s32.totalorder %s25, 2
    %s27 = scalar_select %p26, 0, %s25
    %s28 = ssub.s32 %s15, %s27
    %s29 = ssub.s32 %s16, %s23
    %s30 = sor.u32 %s28, %s29
    %p31 = scmp.eq.s32.totalorder %s30, 0
    %s33 = sadd.s32 %s32, 1
    %s34 = scalar_select %p31, %s32, %s33
    %p37 = pneg %p31
    %p38 = scmp.eq.s32.totalorder %s8, 7
    %p39 = por %p37, %p38
    %p40 = scmp.ne.s32.totalorder %s32, %s35
    %p41 = scmp.eq.s32.totalorder %s8, 0
    %p42 = por %p40, %p41
    %p43 = scmp.ne.s32.totalorder %s32, %s35
    %p44 = scmp.eq.s32.totalorder %s13, 7
    %p45 = por %p43, %p44
    %p46 = scmp.ne.s32.totalorder %s35, %s36
    %p47 = scmp.eq.s32.totalorder %s13, 0
    %p48 = por %p46, %p47
    %p49 = scmp.ne.s32.totalorder %s35, %s36
    %p50 = scmp.eq.s32.totalorder %s14, 7
    %p51 = por %p49, %p50
    %p53 = scmp.ne.s32.totalorder %s36, %s52
    %p54 = scmp.eq.s32.totalorder %s14, 0
    %p55 = por %p53, %p54
    %s57 = sadd.s32 %s56, 1
    %p60 = scmp.eq.s32.totalorder %s8, 7
    %p61 = scmp.ne.s32.totalorder %s56, %s58
    %p62 = scmp.eq.s32.totalorder %s8, 0
    %p63 = por %p61, %p62
    %p64 = scmp.ne.s32.totalorder %s56, %s58
    %p65 = scmp.eq.s32.totalorder %s13, 7
    %p66 = por %p64, %p65
    %p67 = scmp.ne.s32.totalorder %s58, %s59
    %p68 = scmp.eq.s32.totalorder %s13, 0
    %p69 = por %p67, %p68
    %p70 = scmp.ne.s32.totalorder %s58, %s59
    %p71 = scmp.eq.s32.totalorder %s14, 7
    %p72 = por %p70, %p71
    %p74 = scmp.ne.s32.totalorder %s59, %s73
    %p75 = scmp.eq.s32.totalorder %s14, 0
    %p76 = por %p74, %p75
    %s77 = ssub.s32 %s15, %s27
    %s78 = ssub.s32 %s16, %s23
    %s79 = sor.u32 %s77, %s78
    %p80 = scmp.eq.s32.totalorder %s79, 0
    %s82 = sadd.s32 %s81, 1
    %s83 = scalar_select %p80, %s81, %s82
    %p86 = pneg %p80
    %p87 = scmp.eq.s32.totalorder %s8, 7
    %p88 = por %p86, %p87
    %p89 = scmp.ne.s32.totalorder %s81, %s84
    %p90 = scmp.eq.s32.totalorder %s8, 0
    %p91 = por %p89, %p90
    %p92 = scmp.ne.s32.totalorder %s81, %s84
    %p93 = scmp.eq.s32.totalorder %s13, 7
    %p94 = por %p92, %p93
    %p95 = scmp.ne.s32.totalorder %s84, %s85
    %p96 = scmp.eq.s32.totalorder %s13, 0
    %p97 = por %p95, %p96
    %p98 = scmp.ne.s32.totalorder %s84, %s85
    %p99 = scmp.eq.s32.totalorder %s14, 7
    %p100 = por %p98, %p99
    %p102 = scmp.ne.s32.totalorder %s85, %s101
    %p103 = scmp.eq.s32.totalorder %s14, 0
    %p104 = por %p102, %p103
    %p105 = scmp.le.s32.totalorder 1, %s8
    %p106 = scmp.lt.s32.totalorder %s8, 9
    %p107 = pnand %p105, %p106
    %p108 = pneg %p107
    // Predicated region
    $region9: #{attention_block_forward.7} parent=5 // pred_check
      _
    $region10: #{attention_block_forward.7} parent=5 // pred_check_branch
      %110 = sbr.rel (%p107) target = $region12
    $region11: #{attention_block_forward.7} parent=5 // pred_region
      %s111 = ssub.s32 %s8, 1
      // Predicated region
      $region13: #{attention_block_forward.7} parent=11 // pred_check
        %p112 = pneg %p69
      $region14: #{attention_block_forward.7} parent=11 // pred_check_branch
        %114 = sbr.rel (%p112) target = $region16
      $region15: #{attention_block_forward.7} parent=11 // pred_region
        _
      $region16: #{attention_block_forward.7} parent=11 // pred_fallthru
        _
    $region12: #{attention_block_forward.7} parent=5 // pred_fallthru
      _
    %p115 = scmp.lt.s32.totalorder %s8, 8
    // Predicated region
    $region17: #{attention_block_forward.7} parent=5 // pred_check
      %p116 = pneg %p115
    $region18: #{attention_block_forward.7} parent=5 // pred_check_branch
      %118 = sbr.rel (%p116) target = $region20
    $region19: #{attention_block_forward.7} parent=5 // pred_region
      // Predicated region
      $region21: #{attention_block_forward.7} parent=19 // pred_check
        %p119 = pneg %p42
      $region22: #{attention_block_forward.7} parent=19 // pred_check_branch
        %121 = sbr.rel (%p119) target = $region24
      $region23: #{attention_block_forward.7} parent=19 // pred_region
        %s122 = smul.u32 4, %s16
        %p123 = scmp.lt.s32.totalorder %s15, 1
        %s124 = scalar_select %p123, %s15, 1
        %p125 = scmp.lt.s32.totalorder %s122, 15
        %s126 = scalar_select %p125, %s122, 15
        %s127 = smul.addr %s126, 2
        %s128 = smul.addr %s124, 32
        %s129 = sadd.s32 %s127, %s128
        %s130 = smul.addr %s129, 8
        %s131 = scalar_lea.vmem %s0, %s130
        %s132 = smul.u32 4, %s16
      $region24: #{attention_block_forward.7} parent=19 // pred_fallthru
        _
    $region20: #{attention_block_forward.7} parent=5 // pred_fallthru
      _
    %p133 = scmp.le.s32.totalorder 1, %s8
    %p134 = scmp.lt.s32.totalorder %s8, 9
    %p135 = pnand %p133, %p134
    %p136 = pneg %p135
    // Predicated region
    $region25: #{attention_block_forward.7} parent=5 // pred_check
      _
    $region26: #{attention_block_forward.7} parent=5 // pred_check_branch
      %138 = sbr.rel (%p135) target = $region28
    $region27: #{attention_block_forward.7} parent=5 // pred_region
      %s139 = ssub.s32 %s8, 1
      %s140 = smul.u32 4, %s18
      %p141 = scmp.lt.s32.totalorder %s17, 1
      %s142 = scalar_select %p141, %s17, 1
      %p143 = scmp.lt.s32.totalorder %s140, 15
      %s144 = scalar_select %p143, %s140, 15
      %s145 = smul.addr %s144, 2
      %s146 = smul.addr %s142, 32
      %s147 = sadd.s32 %s145, %s146
      %s148 = smul.addr %s147, 8
      %s149 = scalar_lea.vmem %s0, %s148
      %p150 = pneg %p48
      %p151 = pneg %p45
      %p152 = pneg %p69
      %p153 = pneg %p66
      %p154 = pneg %p97
      %p155 = pneg %p94
      %s156 = smul.u32 4, %s18
      %p157 = scmp.lt.s32.totalorder %s17, 1
      %s158 = scalar_select %p157, %s17, 1
      %p159 = scmp.lt.s32.totalorder %s156, 15
      %s160 = scalar_select %p159, %s156, 15
      %s161 = smul.addr %s160, 2
      %s162 = smul.addr %s158, 32
      %s163 = sadd.s32 %s161, %s162
      %s164 = smul.addr %s163, 8
      %s165 = scalar_lea.vmem %s2, %s164
      %s166 = smul.u32 4, %s18
      %p167 = scmp.lt.s32.totalorder %s17, 1
      %s168 = scalar_select %p167, %s17, 1
      %p169 = scmp.lt.s32.totalorder %s166, 15
      %s170 = scalar_select %p169, %s166, 15
      %s171 = smul.addr %s170, 2
      %s172 = smul.addr %s168, 32
      %s173 = sadd.s32 %s171, %s172
      %s174 = smul.addr %s173, 8
      %s175 = scalar_lea.vmem %s0, %s174
      %s176 = smul.u32 4, %s18
      %s177 = smul.u32 4, %s18
      %p178 = scmp.lt.s32.totalorder %s17, 1
      %s179 = scalar_select %p178, %s17, 1
      %p180 = scmp.lt.s32.totalorder %s177, 15
      %s181 = scalar_select %p180, %s177, 15
      %s182 = smul.addr %s181, 2
      %s183 = smul.addr %s179, 32
      %s184 = sadd.s32 %s182, %s183
      %s185 = smul.addr %s184, 8
      %s186 = scalar_lea.vmem %s2, %s185
      %s187 = smul.u32 4, %s18
      %v188 = vld [vmem:[%s1] sm:$0x3]
      %v189 = vld [vmem:[%s175] sm:$0xff]
      %v190 = vld [vmem:[%s175 + $0x8] sm:$0xff]
      %v191 = vld [vmem:[%s175 + $0x10] sm:$0xff]
      %v192 = vld [vmem:[%s175 + $0x18] sm:$0xff]
      %v193 = vld [vmem:[%s175 + $0x20] sm:$0xff]
      %v194 = vld [vmem:[%s175 + $0x28] sm:$0xff]
      %v195 = vld [vmem:[%s175 + $0x30] sm:$0xff]
      %v196 = vld [vmem:[%s175 + $0x38] sm:$0xff]
      %v197 = vlaneseq
      %v198 = vshrl.u32 %v197, 7
      %v199 = vsub.s32 0, %v198
      %v200 = vrot.slane %v188, %v199
      %v201 = vmul.f32 %v189, %v200
      %v202 = vmul.f32 %v190, %v200
      %v203 = vmul.f32 %v191, %v200
      %v204 = vmul.f32 %v192, %v200
      %v205 = vmul.f32 %v193, %v200
      %v206 = vmul.f32 %v194, %v200
      %v207 = vmul.f32 %v195, %v200
      %v208 = vmul.f32 %v196, %v200
      %v209 = vlaneseq
      %v210 = vshrl.u32 %v209, 7
      %v211 = vsub.s32 1, %v210
      %v212 = vrot.slane %v188, %v211
      %v213 = vadd.f32 %v201, %v212
      %v214 = vadd.f32 %v202, %v212
      %v215 = vadd.f32 %v203, %v212
      %v216 = vadd.f32 %v204, %v212
      %v217 = vadd.f32 %v205, %v212
      %v218 = vadd.f32 %v206, %v212
      %v219 = vadd.f32 %v207, %v212
      %v220 = vadd.f32 %v208, %v212
      %221 = vst [vmem:[%s186] sm:$0xff] %v213
      %222 = vst [vmem:[%s186 + $0x8] sm:$0xff] %v214
      %223 = vst [vmem:[%s186 + $0x10] sm:$0xff] %v215
      %224 = vst [vmem:[%s186 + $0x18] sm:$0xff] %v216
      %225 = vst [vmem:[%s186 + $0x20] sm:$0xff] %v217
      %226 = vst [vmem:[%s186 + $0x28] sm:$0xff] %v218
      %227 = vst [vmem:[%s186 + $0x30] sm:$0xff] %v219
      %228 = vst [vmem:[%s186 + $0x38] sm:$0xff] %v220
      %s229 = smul.u32 4, %s18
      %p230 = scmp.lt.s32.totalorder %s17, 1
      %s231 = scalar_select %p230, %s17, 1
      %p232 = scmp.lt.s32.totalorder %s229, 15
      %s233 = scalar_select %p232, %s229, 15
      %s234 = smul.addr %s233, 2
      %s235 = smul.addr %s231, 32
      %s236 = sadd.s32 %s234, %s235
      %s237 = smul.addr %s236, 8
      %s238 = scalar_lea.vmem %s2, %s237
      // Predicated region
      $region29: #{attention_block_forward.7} parent=27 // pred_check
        %p239 = pneg %p94
      $region30: #{attention_block_forward.7} parent=27 // pred_check_branch
        %241 = sbr.rel (%p239) target = $region32
      $region31: #{attention_block_forward.7} parent=27 // pred_region
        %s242 = smul.u32 4, %s18
      $region32: #{attention_block_forward.7} parent=27 // pred_fallthru
        _
    $region28: #{attention_block_forward.7} parent=5 // pred_fallthru
      _
    %p243 = scmp.le.s32.totalorder 2, %s8
    // Predicated region
    $region33: #{attention_block_forward.7} parent=5 // pred_check
      %p244 = pneg %p243
    $region34: #{attention_block_forward.7} parent=5 // pred_check_branch
      %246 = sbr.rel (%p244) target = $region36
    $region35: #{attention_block_forward.7} parent=5 // pred_region
      %s247 = ssub.s32 %s8, 2
      // Predicated region
      $region37: #{attention_block_forward.7} parent=35 // pred_check
        %p248 = pneg %p100
      $region38: #{attention_block_forward.7} parent=35 // pred_check_branch
        %250 = sbr.rel (%p248) target = $region40
      $region39: #{attention_block_forward.7} parent=35 // pred_region
        %s251 = smul.u32 4, %s20
        %p252 = scmp.lt.s32.totalorder %s19, 1
        %s253 = scalar_select %p252, %s19, 1
        %p254 = scmp.lt.s32.totalorder %s251, 15
        %s255 = scalar_select %p254, %s251, 15
        %s256 = smul.addr %s255, 2
        %s257 = smul.addr %s253, 32
        %s258 = sadd.s32 %s256, %s257
        %s259 = smul.addr %s258, 8
        %s260 = scalar_lea.vmem %s2, %s259
      $region40: #{attention_block_forward.7} parent=35 // pred_fallthru
        _
    $region36: #{attention_block_forward.7} parent=5 // pred_fallthru
      _
  $region6: #{attention_block_forward.7} parent=0 // loop_footer
    %s12 = sadd.s32 1, %s8
  $region7: #{attention_block_forward.7} parent=0 // loop_footer_branch
    %7 = sbr.rel target = $region3
  $region8: #{attention_block_forward.7} parent=0 // loop_exit
    _

// kernel: attention_block_forward.4
$region0: #{attention_block_forward.4}
  #allocation0 [shape = 'u32[]', space=smem, size = 0x4, offset = 0x4, fixed_abs, tag = 'smem constant byte address 0x4 - core index']
  #allocation1 [shape = 'u32[144,128]{1,0:T(1,128)}', space=vmem, size = 0x12000, scoped, tag = 'internal scratch']
  %s0 = inlined_call_operand.vmem [shape: f32[2,8,8,128], index: 0, kind: input, shape index: {}]
  %s1 = inlined_call_operand.vmem [shape: f32[2,16,16,128], index: 1, kind: input, shape index: {}]
  %s2 = inlined_call_operand.vmem [shape: bf16[4,128,128], index: 2, kind: input, shape index: {}]
  %s3 = inlined_call_operand.vmem [shape: f32[1,128], index: 3, kind: input, shape index: {}]
  %s4 = inlined_call_operand.vmem [shape: bf16[128,128], index: 4, kind: input, shape index: {}]
  %s5 = inlined_call_operand.vmem [shape: f32[1,128], index: 5, kind: input, shape index: {}]
  %s6 = inlined_call_operand.vmem [shape: bf16[128,128], index: 6, kind: input, shape index: {}]
  %s7 = inlined_call_operand.vmem [shape: f32[1,128], index: 7, kind: input, shape index: {}]
  %s8 = inlined_call_operand.vmem [shape: f32[2,16,16,128], index: 8, kind: output, shape index: {0}]
  %s9 = inlined_call_operand.vmem [shape: f32[2,4,128], index: 9, kind: output, shape index: {1}]
  %10 = xla_tuple %s8, %s9
  %s11 = sld [smem:[#allocation0]]
  $region77: #{attention_block_forward.4} parent=0
    _
  %s13 = ssub.s32 1, %s11
  %s14 = scalar_select 0, %s13, %s11
  loop: start=0, step=1, limit=10
  $region2: #{attention_block_forward.4} parent=0 // loop_pre_header
    _
  $region3: #{attention_block_forward.4} parent=0 // loop_header
    %s16 = sphi 0, %s20
    %p17 = scmp.ge.s32.totalorder %s16, 10
    %s23 = sphi 0, %s35
    %s24 = sphi 0, %s31
    %s25 = sphi 0, %s23
    %s26 = sphi 0, %s24
    %s27 = sphi 0, %s25
    %s28 = sphi 0, %s26
    %s40 = sphi 0, %s42
    %s43 = sphi 0, %s40
    %s44 = sphi 0, %s43
    %s60 = sphi 0, %s44
    %s68 = sphi 0, %s70
    %s71 = sphi 0, %s68
    %s72 = sphi 0, %s71
    %s88 = sphi 0, %s72
    %s92 = sphi 0, %s92
    %s94 = sphi 0, %s92
    %s95 = sphi 0, %s94
    %s109 = sphi 0, %s95
    %s113 = sphi 0, %s113
    %s115 = sphi 0, %s113
    %s116 = sphi 0, %s115
    %s130 = sphi 0, %s116
    %s134 = sphi 0, %s134
    %s136 = sphi 0, %s134
    %s137 = sphi 0, %s136
    %s151 = sphi 0, %s137
    %s155 = sphi 0, %s155
    %s157 = sphi 0, %s155
    %s158 = sphi 0, %s157
    %s172 = sphi 0, %s158
    %s176 = sphi 0, %s176
    %s178 = sphi 0, %s176
    %s179 = sphi 0, %s178
    %s193 = sphi 0, %s179
    %s197 = sphi 0, %s197
    %s199 = sphi 0, %s197
    %s200 = sphi 0, %s199
    %s214 = sphi 0, %s200
    %s222 = sphi 0, %s224
    %s225 = sphi 0, %s222
    %s226 = sphi 0, %s225
    %s242 = sphi 0, %s226
    %s248 = sphi 0, %s250
    %s251 = sphi 0, %s248
    %s252 = sphi 0, %s251
    %s268 = sphi 0, %s252
  $region4: #{attention_block_forward.4} parent=0 // loop_header_branch
    %19 = sbr.rel (%p17) target = $region8
  $region5: #{attention_block_forward.4} parent=0 // loop_body
    %s21 = ssub.s32 %s16, 1
    %s22 = ssub.s32 %s16, 2
    %s29 = sadd.s32 1, %s24
    %p30 = scmp.ge.s32.totalorder %s29, 4
    %s31 = scalar_select %p30, 0, %s29
    %s32 = sadd.s32 1, %s23
    %s33 = scalar_select %p30, %s32, %s23
    %p34 = scmp.ge.s32.totalorder %s33, 2
    %s35 = scalar_select %p34, 0, %s33
    %s36 = ssub.s32 %s23, %s35
    %s37 = ssub.s32 %s24, %s31
    %s38 = sor.u32 %s36, %s37
    %p39 = scmp.eq.s32.totalorder %s38, 0
    %s41 = sadd.s32 %s40, 1
    %s42 = scalar_select %p39, %s40, %s41
    %p45 = pneg %p39
    %p46 = scmp.eq.s32.totalorder %s16, 7
    %p47 = por %p45, %p46
    %p48 = scmp.ne.s32.totalorder %s40, %s43
    %p49 = scmp.eq.s32.totalorder %s16, 0
    %p50 = por %p48, %p49
    %p51 = scmp.ne.s32.totalorder %s40, %s43
    %p52 = scmp.eq.s32.totalorder %s21, 7
    %p53 = por %p51, %p52
    %p54 = scmp.ne.s32.totalorder %s43, %s44
    %p55 = scmp.eq.s32.totalorder %s21, 0
    %p56 = por %p54, %p55
    %p57 = scmp.ne.s32.totalorder %s43, %s44
    %p58 = scmp.eq.s32.totalorder %s22, 7
    %p59 = por %p57, %p58
    %p61 = scmp.ne.s32.totalorder %s44, %s60
    %p62 = scmp.eq.s32.totalorder %s22, 0
    %p63 = por %p61, %p62
    %s64 = ssub.s32 %s23, %s35
    %s65 = ssub.s32 %s24, %s31
    %s66 = sor.u32 %s64, %s65
    %p67 = scmp.eq.s32.totalorder %s66, 0
    %s69 = sadd.s32 %s68, 1
    %s70 = scalar_select %p67, %s68, %s69
    %p73 = pneg %p67
    %p74 = scmp.eq.s32.totalorder %s16, 7
    %p75 = por %p73, %p74
    %p76 = scmp.ne.s32.totalorder %s68, %s71
    %p77 = scmp.eq.s32.totalorder %s16, 0
    %p78 = por %p76, %p77
    %p79 = scmp.ne.s32.totalorder %s68, %s71
    %p80 = scmp.eq.s32.totalorder %s21, 7
    %p81 = por %p79, %p80
    %p82 = scmp.ne.s32.totalorder %s71, %s72
    %p83 = scmp.eq.s32.totalorder %s21, 0
    %p84 = por %p82, %p83
    %p85 = scmp.ne.s32.totalorder %s71, %s72
    %p86 = scmp.eq.s32.totalorder %s22, 7
    %p87 = por %p85, %p86
    %p89 = scmp.ne.s32.totalorder %s72, %s88
    %p90 = scmp.eq.s32.totalorder %s22, 0
    %p91 = por %p89, %p90
    %s93 = sadd.s32 %s92, 1
    %p96 = scmp.eq.s32.totalorder %s16, 7
    %p97 = scmp.ne.s32.totalorder %s92, %s94
    %p98 = scmp.eq.s32.totalorder %s16, 0
    %p99 = por %p97, %p98
    %p100 = scmp.ne.s32.totalorder %s92, %s94
    %p101 = scmp.eq.s32.totalorder %s21, 7
    %p102 = por %p100, %p101
    %p103 = scmp.ne.s32.totalorder %s94, %s95
    %p104 = scmp.eq.s32.totalorder %s21, 0
    %p105 = por %p103, %p104
    %p106 = scmp.ne.s32.totalorder %s94, %s95
    %p107 = scmp.eq.s32.totalorder %s22, 7
    %p108 = por %p106, %p107
    %p110 = scmp.ne.s32.totalorder %s95, %s109
    %p111 = scmp.eq.s32.totalorder %s22, 0
    %p112 = por %p110, %p111
    %s114 = sadd.s32 %s113, 1
    %p117 = scmp.eq.s32.totalorder %s16, 7
    %p118 = scmp.ne.s32.totalorder %s113, %s115
    %p119 = scmp.eq.s32.totalorder %s16, 0
    %p120 = por %p118, %p119
    %p121 = scmp.ne.s32.totalorder %s113, %s115
    %p122 = scmp.eq.s32.totalorder %s21, 7
    %p123 = por %p121, %p122
    %p124 = scmp.ne.s32.totalorder %s115, %s116
    %p125 = scmp.eq.s32.totalorder %s21, 0
    %p126 = por %p124, %p125
    %p127 = scmp.ne.s32.totalorder %s115, %s116
    %p128 = scmp.eq.s32.totalorder %s22, 7
    %p129 = por %p127, %p128
    %p131 = scmp.ne.s32.totalorder %s116, %s130
    %p132 = scmp.eq.s32.totalorder %s22, 0
    %p133 = por %p131, %p132
    %s135 = sadd.s32 %s134, 1
    %p138 = scmp.eq.s32.totalorder %s16, 7
    %p139 = scmp.ne.s32.totalorder %s134, %s136
    %p140 = scmp.eq.s32.totalorder %s16, 0
    %p141 = por %p139, %p140
    %p142 = scmp.ne.s32.totalorder %s134, %s136
    %p143 = scmp.eq.s32.totalorder %s21, 7
    %p144 = por %p142, %p143
    %p145 = scmp.ne.s32.totalorder %s136, %s137
    %p146 = scmp.eq.s32.totalorder %s21, 0
    %p147 = por %p145, %p146
    %p148 = scmp.ne.s32.totalorder %s136, %s137
    %p149 = scmp.eq.s32.totalorder %s22, 7
    %p150 = por %p148, %p149
    %p152 = scmp.ne.s32.totalorder %s137, %s151
    %p153 = scmp.eq.s32.totalorder %s22, 0
    %p154 = por %p152, %p153
    %s156 = sadd.s32 %s155, 1
    %p159 = scmp.eq.s32.totalorder %s16, 7
    %p160 = scmp.ne.s32.totalorder %s155, %s157
    %p161 = scmp.eq.s32.totalorder %s16, 0
    %p162 = por %p160, %p161
    %p163 = scmp.ne.s32.totalorder %s155, %s157
    %p164 = scmp.eq.s32.totalorder %s21, 7
    %p165 = por %p163, %p164
    %p166 = scmp.ne.s32.totalorder %s157, %s158
    %p167 = scmp.eq.s32.totalorder %s21, 0
    %p168 = por %p166, %p167
    %p169 = scmp.ne.s32.totalorder %s157, %s158
    %p170 = scmp.eq.s32.totalorder %s22, 7
    %p171 = por %p169, %p170
    %p173 = scmp.ne.s32.totalorder %s158, %s172
    %p174 = scmp.eq.s32.totalorder %s22, 0
    %p175 = por %p173, %p174
    %s177 = sadd.s32 %s176, 1
    %p180 = scmp.eq.s32.totalorder %s16, 7
    %p181 = scmp.ne.s32.totalorder %s176, %s178
    %p182 = scmp.eq.s32.totalorder %s16, 0
    %p183 = por %p181, %p182
    %p184 = scmp.ne.s32.totalorder %s176, %s178
    %p185 = scmp.eq.s32.totalorder %s21, 7
    %p186 = por %p184, %p185
    %p187 = scmp.ne.s32.totalorder %s178, %s179
    %p188 = scmp.eq.s32.totalorder %s21, 0
    %p189 = por %p187, %p188
    %p190 = scmp.ne.s32.totalorder %s178, %s179
    %p191 = scmp.eq.s32.totalorder %s22, 7
    %p192 = por %p190, %p191
    %p194 = scmp.ne.s32.totalorder %s179, %s193
    %p195 = scmp.eq.s32.totalorder %s22, 0
    %p196 = por %p194, %p195
    %s198 = sadd.s32 %s197, 1
    %p201 = scmp.eq.s32.totalorder %s16, 7
    %p202 = scmp.ne.s32.totalorder %s197, %s199
    %p203 = scmp.eq.s32.totalorder %s16, 0
    %p204 = por %p202, %p203
    %p205 = scmp.ne.s32.totalorder %s197, %s199
    %p206 = scmp.eq.s32.totalorder %s21, 7
    %p207 = por %p205, %p206
    %p208 = scmp.ne.s32.totalorder %s199, %s200
    %p209 = scmp.eq.s32.totalorder %s21, 0
    %p210 = por %p208, %p209
    %p211 = scmp.ne.s32.totalorder %s199, %s200
    %p212 = scmp.eq.s32.totalorder %s22, 7
    %p213 = por %p211, %p212
    %p215 = scmp.ne.s32.totalorder %s200, %s214
    %p216 = scmp.eq.s32.totalorder %s22, 0
    %p217 = por %p215, %p216
    %s218 = ssub.s32 %s23, %s35
    %s219 = ssub.s32 %s24, %s31
    %s220 = sor.u32 %s218, %s219
    %p221 = scmp.eq.s32.totalorder %s220, 0
    %s223 = sadd.s32 %s222, 1
    %s224 = scalar_select %p221, %s222, %s223
    %p227 = pneg %p221
    %p228 = scmp.eq.s32.totalorder %s16, 7
    %p229 = por %p227, %p228
    %p230 = scmp.ne.s32.totalorder %s222, %s225
    %p231 = scmp.eq.s32.totalorder %s16, 0
    %p232 = por %p230, %p231
    %p233 = scmp.ne.s32.totalorder %s222, %s225
    %p234 = scmp.eq.s32.totalorder %s21, 7
    %p235 = por %p233, %p234
    %p236 = scmp.ne.s32.totalorder %s225, %s226
    %p237 = scmp.eq.s32.totalorder %s21, 0
    %p238 = por %p236, %p237
    %p239 = scmp.ne.s32.totalorder %s225, %s226
    %p240 = scmp.eq.s32.totalorder %s22, 7
    %p241 = por %p239, %p240
    %p243 = scmp.ne.s32.totalorder %s226, %s242
    %p244 = scmp.eq.s32.totalorder %s22, 0
    %p245 = por %p243, %p244
    %s246 = ssub.s32 %s23, %s35
    %p247 = scmp.eq.s32.totalorder %s246, 0
    %s249 = sadd.s32 %s248, 1
    %s250 = scalar_select %p247, %s248, %s249
    %p253 = pneg %p247
    %p254 = scmp.eq.s32.totalorder %s16, 7
    %p255 = por %p253, %p254
    %p256 = scmp.ne.s32.totalorder %s248, %s251
    %p257 = scmp.eq.s32.totalorder %s16, 0
    %p258 = por %p256, %p257
    %p259 = scmp.ne.s32.totalorder %s248, %s251
    %p260 = scmp.eq.s32.totalorder %s21, 7
    %p261 = por %p259, %p260
    %p262 = scmp.ne.s32.totalorder %s251, %s252
    %p263 = scmp.eq.s32.totalorder %s21, 0
    %p264 = por %p262, %p263
    %p265 = scmp.ne.s32.totalorder %s251, %s252
    %p266 = scmp.eq.s32.totalorder %s22, 7
    %p267 = por %p265, %p266
    %p269 = scmp.ne.s32.totalorder %s252, %s268
    %p270 = scmp.eq.s32.totalorder %s22, 0
    %p271 = por %p269, %p270
    %p272 = scmp.le.s32.totalorder 1, %s16
    %p273 = scmp.lt.s32.totalorder %s16, 9
    %p274 = pnand %p272, %p273
    %p275 = pneg %p274
    // Predicated region
    $region9: #{attention_block_forward.4} parent=5 // pred_check
      _
    $region10: #{attention_block_forward.4} parent=5 // pred_check_branch
      %277 = sbr.rel (%p274) target = $region12
    $region11: #{attention_block_forward.4} parent=5 // pred_region
      %s278 = ssub.s32 %s16, 1
      // Predicated region
      $region13: #{attention_block_forward.4} parent=11 // pred_check
        %p279 = pneg %p105
      $region14: #{attention_block_forward.4} parent=11 // pred_check_branch
        %281 = sbr.rel (%p279) target = $region16
      $region15: #{attention_block_forward.4} parent=11 // pred_region
        _
      $region16: #{attention_block_forward.4} parent=11 // pred_fallthru
        _
      // Predicated region
      $region17: #{attention_block_forward.4} parent=11 // pred_check
        %p282 = pneg %p126
      $region18: #{attention_block_forward.4} parent=11 // pred_check_branch
        %284 = sbr.rel (%p282) target = $region20
      $region19: #{attention_block_forward.4} parent=11 // pred_region
        _
      $region20: #{attention_block_forward.4} parent=11 // pred_fallthru
        _
      // Predicated region
      $region21: #{attention_block_forward.4} parent=11 // pred_check
        %p285 = pneg %p147
      $region22: #{attention_block_forward.4} parent=11 // pred_check_branch
        %287 = sbr.rel (%p285) target = $region24
      $region23: #{attention_block_forward.4} parent=11 // pred_region
        _
      $region24: #{attention_block_forward.4} parent=11 // pred_fallthru
        _
      // Predicated region
      $region25: #{attention_block_forward.4} parent=11 // pred_check
        %p288 = pneg %p168
      $region26: #{attention_block_forward.4} parent=11 // pred_check_branch
        %290 = sbr.rel (%p288) target = $region28
      $region27: #{attention_block_forward.4} parent=11 // pred_region
        _
      $region28: #{attention_block_forward.4} parent=11 // pred_fallthru
        _
      // Predicated region
      $region29: #{attention_block_forward.4} parent=11 // pred_check
        %p291 = pneg %p189
      $region30: #{attention_block_forward.4} parent=11 // pred_check_branch
        %293 = sbr.rel (%p291) target = $region32
      $region31: #{attention_block_forward.4} parent=11 // pred_region
        _
      $region32: #{attention_block_forward.4} parent=11 // pred_fallthru
        _
      // Predicated region
      $region33: #{attention_block_forward.4} parent=11 // pred_check
        %p294 = pneg %p210
      $region34: #{attention_block_forward.4} parent=11 // pred_check_branch
        %296 = sbr.rel (%p294) target = $region36
      $region35: #{attention_block_forward.4} parent=11 // pred_region
        _
      $region36: #{attention_block_forward.4} parent=11 // pred_fallthru
        _
    $region12: #{attention_block_forward.4} parent=5 // pred_fallthru
      _
    %p297 = scmp.lt.s32.totalorder %s16, 8
    // Predicated region
    $region37: #{attention_block_forward.4} parent=5 // pred_check
      %p298 = pneg %p297
    $region38: #{attention_block_forward.4} parent=5 // pred_check_branch
      %300 = sbr.rel (%p298) target = $region40
    $region39: #{attention_block_forward.4} parent=5 // pred_region
      // Predicated region
      $region41: #{attention_block_forward.4} parent=39 // pred_check
        %p301 = pneg %p50
      $region42: #{attention_block_forward.4} parent=39 // pred_check_branch
        %303 = sbr.rel (%p301) target = $region44
      $region43: #{attention_block_forward.4} parent=39 // pred_region
        %s304 = smul.u32 2, %s24
        %p305 = scmp.lt.s32.totalorder %s23, 1
        %s306 = scalar_select %p305, %s23, 1
        %p307 = scmp.lt.s32.totalorder %s304, 7
        %s308 = scalar_select %p307, %s304, 7
        %s309 = smul.addr %s306, 8
        %s310 = sadd.s32 %s308, %s309
        %s311 = smul.addr %s310, 8
        %s312 = scalar_lea.vmem %s0, %s311
        %s313 = smul.u32 2, %s24
      $region44: #{attention_block_forward.4} parent=39 // pred_fallthru
        _
      // Predicated region
      $region45: #{attention_block_forward.4} parent=39 // pred_check
        %p314 = pneg %p78
      $region46: #{attention_block_forward.4} parent=39 // pred_check_branch
        %316 = sbr.rel (%p314) target = $region48
      $region47: #{attention_block_forward.4} parent=39 // pred_region
        %s317 = smul.u32 4, %s24
        %p318 = scmp.lt.s32.totalorder %s23, 1
        %s319 = scalar_select %p318, %s23, 1
        %p320 = scmp.lt.s32.totalorder %s317, 15
        %s321 = scalar_select %p320, %s317, 15
        %s322 = smul.addr %s321, 2
        %s323 = smul.addr %s319, 32
        %s324 = sadd.s32 %s322, %s323
        %s325 = smul.addr %s324, 8
        %s326 = scalar_lea.vmem %s1, %s325
        %s327 = smul.u32 4, %s24
      $region48: #{attention_block_forward.4} parent=39 // pred_fallthru
        _
    $region40: #{attention_block_forward.4} parent=5 // pred_fallthru
      _
    %p328 = scmp.le.s32.totalorder 1, %s16
    %p329 = scmp.lt.s32.totalorder %s16, 9
    %p330 = pnand %p328, %p329
    %p331 = pneg %p330
    // Predicated region
    $region49: #{attention_block_forward.4} parent=5 // pred_check
      _
    $region50: #{attention_block_forward.4} parent=5 // pred_check_branch
      %333 = sbr.rel (%p330) target = $region52
    $region51: #{attention_block_forward.4} parent=5 // pred_region
      %s334 = ssub.s32 %s16, 1
      %s335 = smul.u32 2, %s26
      %p336 = scmp.lt.s32.totalorder %s25, 1
      %s337 = scalar_select %p336, %s25, 1
      %p338 = scmp.lt.s32.totalorder %s335, 7
      %s339 = scalar_select %p338, %s335, 7
      %s340 = smul.addr %s337, 8
      %s341 = sadd.s32 %s339, %s340
      %s342 = smul.addr %s341, 8
      %s343 = scalar_lea.vmem %s0, %s342
      %p344 = pneg %p56
      %p345 = pneg %p53
      %s346 = smul.u32 4, %s26
      %p347 = scmp.lt.s32.totalorder %s25, 1
      %s348 = scalar_select %p347, %s25, 1
      %p349 = scmp.lt.s32.totalorder %s346, 15
      %s350 = scalar_select %p349, %s346, 15
      %s351 = smul.addr %s350, 2
      %s352 = smul.addr %s348, 32
      %s353 = sadd.s32 %s351, %s352
      %s354 = smul.addr %s353, 8
      %s355 = scalar_lea.vmem %s1, %s354
      %p356 = pneg %p84
      %p357 = pneg %p81
      %p358 = pneg %p105
      %p359 = pneg %p102
      %p360 = pneg %p126
      %p361 = pneg %p123
      %p362 = pneg %p147
      %p363 = pneg %p144
      %p364 = pneg %p168
      %p365 = pneg %p165
      %p366 = pneg %p189
      %p367 = pneg %p186
      %p368 = pneg %p210
      %p369 = pneg %p207
      %p370 = pneg %p238
      %p371 = pneg %p235
      %s372 = smul.u32 4, %s26
      %p373 = scmp.lt.s32.totalorder %s25, 1
      %s374 = scalar_select %p373, %s25, 1
      %p375 = scmp.lt.s32.totalorder %s372, 15
      %s376 = scalar_select %p375, %s372, 15
      %s377 = smul.addr %s376, 2
      %s378 = smul.addr %s374, 32
      %s379 = sadd.s32 %s377, %s378
      %s380 = smul.addr %s379, 8
      %s381 = scalar_lea.vmem %s8, %s380
      %p382 = pneg %p264
      %p383 = pneg %p261
      %p384 = scmp.lt.s32.totalorder %s25, 1
      %s385 = scalar_select %p384, %s25, 1
      %s386 = smul.addr %s385, 4
      %s387 = scalar_lea.vmem %s9, %s386
      %s388 = smul.u32 2, %s26
      %p389 = scmp.lt.s32.totalorder %s25, 1
      %s390 = scalar_select %p389, %s25, 1
      %p391 = scmp.lt.s32.totalorder %s388, 7
      %s392 = scalar_select %p391, %s388, 7
      %s393 = smul.addr %s390, 8
      %s394 = sadd.s32 %s392, %s393
      %s395 = smul.addr %s394, 8
      %s396 = scalar_lea.vmem %s0, %s395
      %s397 = smul.u32 2, %s26
      %s398 = smul.u32 4, %s26
      %p399 = scmp.lt.s32.totalorder %s25, 1
      %s400 = scalar_select %p399, %s25, 1
      %p401 = scmp.lt.s32.totalorder %s398, 15
      %s402 = scalar_select %p401, %s398, 15
      %s403 = smul.addr %s402, 2
      %s404 = smul.addr %s400, 32
      %s405 = sadd.s32 %s403, %s404
      %s406 = smul.addr %s405, 8
      %s407 = scalar_lea.vmem %s1, %s406
      %s408 = smul.u32 4, %s26
      %s409 = smul.u32 4, %s26
      %p410 = scmp.lt.s32.totalorder %s25, 1
      %s411 = scalar_select %p410, %s25, 1
      %p412 = scmp.lt.s32.totalorder %s409, 15
      %s413 = scalar_select %p412, %s409, 15
      %s414 = smul.addr %s413, 2
      %s415 = smul.addr %s411, 32
      %s416 = sadd.s32 %s414, %s415
      %s417 = smul.addr %s416, 8
      %s418 = scalar_lea.vmem %s8, %s417
      %s419 = smul.u32 4, %s26
      %p420 = scmp.lt.s32.totalorder %s25, 1
      %s421 = scalar_select %p420, %s25, 1
      %s422 = smul.addr %s421, 4
      %s423 = scalar_lea.vmem %s9, %s422
      %v425 = vld [vmem:[%s396] sm:$0xff]
      %v426 = vld [vmem:[%s396 + $0x8] sm:$0xff]
      %v427 = vpack.c.bf16 %v426, %v425
      %v428 = vld [vmem:[%s2] sm:$0xf]
      %v429 = vld [vmem:[%s2 + $0x4] sm:$0xf]
      %v430 = vld [vmem:[%s2 + $0x8] sm:$0xf]
      %v431 = vld [vmem:[%s2 + $0xc] sm:$0xf]
      %v432 = vld [vmem:[%s2 + $0x10] sm:$0xf]
      %v433 = vld [vmem:[%s2 + $0x14] sm:$0xf]
      %v434 = vld [vmem:[%s2 + $0x18] sm:$0xf]
      %v435 = vld [vmem:[%s2 + $0x1c] sm:$0xf]
      %v436 = vld [vmem:[%s2 + $0x20] sm:$0xf]
      %v437 = vld [vmem:[%s2 + $0x24] sm:$0xf]
      %v438 = vld [vmem:[%s2 + $0x28] sm:$0xf]
      %v439 = vld [vmem:[%s2 + $0x2c] sm:$0xf]
      %v440 = vld [vmem:[%s2 + $0x30] sm:$0xf]
      %v441 = vld [vmem:[%s2 + $0x34] sm:$0xf]
      %v442 = vld [vmem:[%s2 + $0x38] sm:$0xf]
      %v443 = vld [vmem:[%s2 + $0x3c] sm:$0xf]
      %v460 = vunpack.c.l.b16 %v428
      %v461 = vunpack.c.l.b16 %v429
      %v462 = vunpack.c.l.b16 %v430
      %v463 = vunpack.c.l.b16 %v431
      %v464 = vunpack.c.l.b16 %v432
      %v465 = vunpack.c.l.b16 %v433
      %v466 = vunpack.c.l.b16 %v434
      %v467 = vunpack.c.l.b16 %v435
      %v468 = vunpack.c.l.b16 %v436
      %v469 = vunpack.c.l.b16 %v437
      %v470 = vunpack.c.l.b16 %v438
      %v471 = vunpack.c.l.b16 %v439
      %v472 = vunpack.c.l.b16 %v440
      %v473 = vunpack.c.l.b16 %v441
      %v474 = vunpack.c.l.b16 %v442
      %v475 = vunpack.c.l.b16 %v443
      %v476 = vpack.c.b16 %v461, %v460
      %v477 = vpack.c.b16 %v463, %v462
      %v478 = vpack.c.b16 %v465, %v464
      %v479 = vpack.c.b16 %v467, %v466
      %v480 = vpack.c.b16 %v469, %v468
      %v481 = vpack.c.b16 %v471, %v470
      %v482 = vpack.c.b16 %v473, %v472
      %v483 = vpack.c.b16 %v475, %v474
      %492 = vmatprep.subr.bf16.mxu0 0
      %493 = vmatpush1.bf16.msra.mxu0 %v476
      %494 = vmatprep.subr.bf16.mxu0 0
      %495 = vmatpush1.bf16.msra.mxu0 %v477
      %496 = vmatprep.subr.bf16.mxu0 0
      %497 = vmatpush1.bf16.msra.mxu0 %v478
      %498 = vmatprep.subr.bf16.mxu0 0
      %499 = vmatpush1.bf16.msra.mxu0 %v479
      %500 = vmatprep.subr.bf16.mxu0 0
      %501 = vmatpush1.bf16.msra.mxu0 %v480
      %502 = vmatprep.subr.bf16.mxu0 0
      %503 = vmatpush1.bf16.msra.mxu0 %v481
      %504 = vmatprep.subr.bf16.mxu0 0
      %505 = vmatpush1.bf16.msra.mxu0 %v482
      %506 = vmatprep.subr.bf16.mxu0 0
      %507 = vmatpush1.bf16.msra.mxu0 %v483
      %508 = vmatprep.subr.bf16.mxu0 0
      %509 = vmatpush1.bf16.msra.mxu0 0
      %510 = vmatprep.subr.bf16.mxu0 0
      %511 = vmatpush1.bf16.msra.mxu0 0
      %512 = vmatprep.subr.bf16.mxu0 0
      %513 = vmatpush1.bf16.msra.mxu0 0
      %514 = vmatprep.subr.bf16.mxu0 0
      %515 = vmatpush1.bf16.msra.mxu0 0
      %516 = vmatprep.subr.bf16.mxu0 0
      %517 = vmatpush1.bf16.msra.mxu0 0
      %518 = vmatprep.subr.bf16.mxu0 0
      %519 = vmatpush1.bf16.msra.mxu0 0
      %520 = vmatprep.subr.bf16.mxu0 0
      %521 = vmatpush1.bf16.msra.mxu0 0
      %522 = vmatprep.subr.bf16.mxu0 0
      %523 = vmatpush1.bf16.msra.mxu0 0
      %524 = vmatprep.mubr.bf16.mxu0 0
      %525 = vmatmul.mubr.bf16.gmra.mrb[0].mxu0 %v427
      %v526 = vpop.f32.mrb[0].mxu0
      %v527 = vadd.f32 0.0, %v526
      %v528 = vpop.f32.mrb[0].mxu0
      %v529 = vpop.f32.mrb[0].mxu0
      %v530 = vadd.f32 0.0, %v529
      %v531 = vpop.f32.mrb[0].mxu0
      %532 = vdwg.mxu0
      %s533 = scalar_lea.vmem %s2, 64
      %v534 = vld [vmem:[%s533] sm:$0xf]
      %v535 = vld [vmem:[%s533 + $0x4] sm:$0xf]
      %v536 = vld [vmem:[%s533 + $0x8] sm:$0xf]
      %v537 = vld [vmem:[%s533 + $0xc] sm:$0xf]
      %v538 = vld [vmem:[%s533 + $0x10] sm:$0xf]
      %v539 = vld [vmem:[%s533 + $0x14] sm:$0xf]
      %v540 = vld [vmem:[%s533 + $0x18] sm:$0xf]
      %v541 = vld [vmem:[%s533 + $0x1c] sm:$0xf]
      %v542 = vld [vmem:[%s533 + $0x20] sm:$0xf]
      %v543 = vld [vmem:[%s533 + $0x24] sm:$0xf]
      %v544 = vld [vmem:[%s533 + $0x28] sm:$0xf]
      %v545 = vld [vmem:[%s533 + $0x2c] sm:$0xf]
      %v546 = vld [vmem:[%s533 + $0x30] sm:$0xf]
      %v547 = vld [vmem:[%s533 + $0x34] sm:$0xf]
      %v548 = vld [vmem:[%s533 + $0x38] sm:$0xf]
      %v549 = vld [vmem:[%s533 + $0x3c] sm:$0xf]
      %v566 = vunpack.c.l.b16 %v534
      %v567 = vunpack.c.l.b16 %v535
      %v568 = vunpack.c.l.b16 %v536
      %v569 = vunpack.c.l.b16 %v537
      %v570 = vunpack.c.l.b16 %v538
      %v571 = vunpack.c.l.b16 %v539
      %v572 = vunpack.c.l.b16 %v540
      %v573 = vunpack.c.l.b16 %v541
      %v574 = vunpack.c.l.b16 %v542
      %v575 = vunpack.c.l.b16 %v543
      %v576 = vunpack.c.l.b16 %v544
      %v577 = vunpack.c.l.b16 %v545
      %v578 = vunpack.c.l.b16 %v546
      %v579 = vunpack.c.l.b16 %v547
      %v580 = vunpack.c.l.b16 %v548
      %v581 = vunpack.c.l.b16 %v549
      %v582 = vpack.c.b16 %v567, %v566
      %v583 = vpack.c.b16 %v569, %v568
      %v584 = vpack.c.b16 %v571, %v570
      %v585 = vpack.c.b16 %v573, %v572
      %v586 = vpack.c.b16 %v575, %v574
      %v587 = vpack.c.b16 %v577, %v576
      %v588 = vpack.c.b16 %v579, %v578
      %v589 = vpack.c.b16 %v581, %v580
      %598 = vmatprep.subr.bf16.mxu0 0
      %599 = vmatpush1.bf16.msra.mxu0 %v582
      %600 = vmatprep.subr.bf16.mxu0 0
      %601 = vmatpush1.bf16.msra.mxu0 %v583
      %602 = vmatprep.subr.bf16.mxu0 0
      %603 = vmatpush1.bf16.msra.mxu0 %v584
      %604 = vmatprep.subr.bf16.mxu0 0
      %605 = vmatpush1.bf16.msra.mxu0 %v585
      %606 = vmatprep.subr.bf16.mxu0 0
      %607 = vmatpush1.bf16.msra.mxu0 %v586
      %608 = vmatprep.subr.bf16.mxu0 0
      %609 = vmatpush1.bf16.msra.mxu0 %v587
      %610 = vmatprep.subr.bf16.mxu0 0
      %611 = vmatpush1.bf16.msra.mxu0 %v588
      %612 = vmatprep.subr.bf16.mxu0 0
      %613 = vmatpush1.bf16.msra.mxu0 %v589
      %614 = vmatprep.subr.bf16.mxu0 0
      %615 = vmatpush1.bf16.msra.mxu0 0
      %616 = vmatprep.subr.bf16.mxu0 0
      %617 = vmatpush1.bf16.msra.mxu0 0
      %618 = vmatprep.subr.bf16.mxu0 0
      %619 = vmatpush1.bf16.msra.mxu0 0
      %620 = vmatprep.subr.bf16.mxu0 0
      %621 = vmatpush1.bf16.msra.mxu0 0
      %622 = vmatprep.subr.bf16.mxu0 0
      %623 = vmatpush1.bf16.msra.mxu0 0
      %624 = vmatprep.subr.bf16.mxu0 0
      %625 = vmatpush1.bf16.msra.mxu0 0
      %626 = vmatprep.subr.bf16.mxu0 0
      %627 = vmatpush1.bf16.msra.mxu0 0
      %628 = vmatprep.subr.bf16.mxu0 0
      %629 = vmatpush1.bf16.msra.mxu0 0
      %630 = vmatprep.mubr.bf16.mxu0 0
      %631 = vmatmul.mubr.bf16.gmra.mrb[0].mxu0 %v427
      %v632 = vpop.f32.mrb[0].mxu0
      %v633 = vadd.f32 0.0, %v632
      %v634 = vpop.f32.mrb[0].mxu0
      %v635 = vpop.f32.mrb[0].mxu0
      %v636 = vadd.f32 0.0, %v635
      %v637 = vpop.f32.mrb[0].mxu0
      %638 = vdwg.mxu0
      %s639 = scalar_lea.vmem %s2, 128
      %v640 = vld [vmem:[%s639] sm:$0xf]
      %v641 = vld [vmem:[%s639 + $0x4] sm:$0xf]
      %v642 = vld [vmem:[%s639 + $0x8] sm:$0xf]
      %v643 = vld [vmem:[%s639 + $0xc] sm:$0xf]
      %v644 = vld [vmem:[%s639 + $0x10] sm:$0xf]
      %v645 = vld [vmem:[%s639 + $0x14] sm:$0xf]
      %v646 = vld [vmem:[%s639 + $0x18] sm:$0xf]
      %v647 = vld [vmem:[%s639 + $0x1c] sm:$0xf]
      %v648 = vld [vmem:[%s639 + $0x20] sm:$0xf]
      %v649 = vld [vmem:[%s639 + $0x24] sm:$0xf]
      %v650 = vld [vmem:[%s639 + $0x28] sm:$0xf]
      %v651 = vld [vmem:[%s639 + $0x2c] sm:$0xf]
      %v652 = vld [vmem:[%s639 + $0x30] sm:$0xf]
      %v653 = vld [vmem:[%s639 + $0x34] sm:$0xf]
      %v654 = vld [vmem:[%s639 + $0x38] sm:$0xf]
      %v655 = vld [vmem:[%s639 + $0x3c] sm:$0xf]
      %v672 = vunpack.c.l.b16 %v640
      %v673 = vunpack.c.l.b16 %v641
      %v674 = vunpack.c.l.b16 %v642
      %v675 = vunpack.c.l.b16 %v643
      %v676 = vunpack.c.l.b16 %v644
      %v677 = vunpack.c.l.b16 %v645
      %v678 = vunpack.c.l.b16 %v646
      %v679 = vunpack.c.l.b16 %v647
      %v680 = vunpack.c.l.b16 %v648
      %v681 = vunpack.c.l.b16 %v649
      %v682 = vunpack.c.l.b16 %v650
      %v683 = vunpack.c.l.b16 %v651
      %v684 = vunpack.c.l.b16 %v652
      %v685 = vunpack.c.l.b16 %v653
      %v686 = vunpack.c.l.b16 %v654
      %v687 = vunpack.c.l.b16 %v655
      %v688 = vpack.c.b16 %v673, %v672
      %v689 = vpack.c.b16 %v675, %v674
      %v690 = vpack.c.b16 %v677, %v676
      %v691 = vpack.c.b16 %v679, %v678
      %v692 = vpack.c.b16 %v681, %v680
      %v693 = vpack.c.b16 %v683, %v682
      %v694 = vpack.c.b16 %v685, %v684
      %v695 = vpack.c.b16 %v687, %v686
      %704 = vmatprep.subr.bf16.mxu0 0
      %705 = vmatpush1.bf16.msra.mxu0 %v688
      %706 = vmatprep.subr.bf16.mxu0 0
      %707 = vmatpush1.bf16.msra.mxu0 %v689
      %708 = vmatprep.subr.bf16.mxu0 0
      %709 = vmatpush1.bf16.msra.mxu0 %v690
      %710 = vmatprep.subr.bf16.mxu0 0
      %711 = vmatpush1.bf16.msra.mxu0 %v691
      %712 = vmatprep.subr.bf16.mxu0 0
      %713 = vmatpush1.bf16.msra.mxu0 %v692
      %714 = vmatprep.subr.bf16.mxu0 0
      %715 = vmatpush1.bf16.msra.mxu0 %v693
      %716 = vmatprep.subr.bf16.mxu0 0
      %717 = vmatpush1.bf16.msra.mxu0 %v694
      %718 = vmatprep.subr.bf16.mxu0 0
      %719 = vmatpush1.bf16.msra.mxu0 %v695
      %720 = vmatprep.subr.bf16.mxu0 0
      %721 = vmatpush1.bf16.msra.mxu0 0
      %722 = vmatprep.subr.bf16.mxu0 0
      %723 = vmatpush1.bf16.msra.mxu0 0
      %724 = vmatprep.subr.bf16.mxu0 0
      %725 = vmatpush1.bf16.msra.mxu0 0
      %726 = vmatprep.subr.bf16.mxu0 0
      %727 = vmatpush1.bf16.msra.mxu0 0
      %728 = vmatprep.subr.bf16.mxu0 0
      %729 = vmatpush1.bf16.msra.mxu0 0
      %730 = vmatprep.subr.bf16.mxu0 0
      %731 = vmatpush1.bf16.msra.mxu0 0
      %732 = vmatprep.subr.bf16.mxu0 0
      %733 = vmatpush1.bf16.msra.mxu0 0
      %734 = vmatprep.subr.bf16.mxu0 0
      %735 = vmatpush1.bf16.msra.mxu0 0
      %736 = vmatprep.mubr.bf16.mxu0 0
      %737 = vmatmul.mubr.bf16.gmra.mrb[0].mxu0 %v427
      %v738 = vpop.f32.mrb[0].mxu0
      %v739 = vadd.f32 0.0, %v738
      %v740 = vpop.f32.mrb[0].mxu0
      %v741 = vpop.f32.mrb[0].mxu0
      %v742 = vadd.f32 0.0, %v741
      %v743 = vpop.f32.mrb[0].mxu0
      %744 = vdwg.mxu0
      %s745 = scalar_lea.vmem %s2, 192
      %v746 = vld [vmem:[%s745] sm:$0xf]
      %v747 = vld [vmem:[%s745 + $0x4] sm:$0xf]
      %v748 = vld [vmem:[%s745 + $0x8] sm:$0xf]
      %v749 = vld [vmem:[%s745 + $0xc] sm:$0xf]
      %v750 = vld [vmem:[%s745 + $0x10] sm:$0xf]
      %v751 = vld [vmem:[%s745 + $0x14] sm:$0xf]
      %v752 = vld [vmem:[%s745 + $0x18] sm:$0xf]
      %v753 = vld [vmem:[%s745 + $0x1c] sm:$0xf]
      %v754 = vld [vmem:[%s745 + $0x20] sm:$0xf]
      %v755 = vld [vmem:[%s745 + $0x24] sm:$0xf]
      %v756 = vld [vmem:[%s745 + $0x28] sm:$0xf]
      %v757 = vld [vmem:[%s745 + $0x2c] sm:$0xf]
      %v758 = vld [vmem:[%s745 + $0x30] sm:$0xf]
      %v759 = vld [vmem:[%s745 + $0x34] sm:$0xf]
      %v760 = vld [vmem:[%s745 + $0x38] sm:$0xf]
      %v761 = vld [vmem:[%s745 + $0x3c] sm:$0xf]
      %v778 = vunpack.c.l.b16 %v746
      %v779 = vunpack.c.l.b16 %v747
      %v780 = vunpack.c.l.b16 %v748
      %v781 = vunpack.c.l.b16 %v749
      %v782 = vunpack.c.l.b16 %v750
      %v783 = vunpack.c.l.b16 %v751
      %v784 = vunpack.c.l.b16 %v752
      %v785 = vunpack.c.l.b16 %v753
      %v786 = vunpack.c.l.b16 %v754
      %v787 = vunpack.c.l.b16 %v755
      %v788 = vunpack.c.l.b16 %v756
      %v789 = vunpack.c.l.b16 %v757
      %v790 = vunpack.c.l.b16 %v758
      %v791 = vunpack.c.l.b16 %v759
      %v792 = vunpack.c.l.b16 %v760
      %v793 = vunpack.c.l.b16 %v761
      %v794 = vpack.c.b16 %v779, %v778
      %v795 = vpack.c.b16 %v781, %v780
      %v796 = vpack.c.b16 %v783, %v782
      %v797 = vpack.c.b16 %v785, %v784
      %v798 = vpack.c.b16 %v787, %v786
      %v799 = vpack.c.b16 %v789, %v788
      %v800 = vpack.c.b16 %v791, %v790
      %v801 = vpack.c.b16 %v793, %v792
      %810 = vmatprep.subr.bf16.mxu0 0
      %811 = vmatpush1.bf16.msra.mxu0 %v794
      %812 = vmatprep.subr.bf16.mxu0 0
      %813 = vmatpush1.bf16.msra.mxu0 %v795
      %814 = vmatprep.subr.bf16.mxu0 0
      %815 = vmatpush1.bf16.msra.mxu0 %v796
      %816 = vmatprep.subr.bf16.mxu0 0
      %817 = vmatpush1.bf16.msra.mxu0 %v797
      %818 = vmatprep.subr.bf16.mxu0 0
      %819 = vmatpush1.bf16.msra.mxu0 %v798
      %820 = vmatprep.subr.bf16.mxu0 0
      %821 = vmatpush1.bf16.msra.mxu0 %v799
      %822 = vmatprep.subr.bf16.mxu0 0
      %823 = vmatpush1.bf16.msra.mxu0 %v800
      %824 = vmatprep.subr.bf16.mxu0 0
      %825 = vmatpush1.bf16.msra.mxu0 %v801
      %826 = vmatprep.subr.bf16.mxu0 0
      %827 = vmatpush1.bf16.msra.mxu0 0
      %828 = vmatprep.subr.bf16.mxu0 0
      %829 = vmatpush1.bf16.msra.mxu0 0
      %830 = vmatprep.subr.bf16.mxu0 0
      %831 = vmatpush1.bf16.msra.mxu0 0
      %832 = vmatprep.subr.bf16.mxu0 0
      %833 = vmatpush1.bf16.msra.mxu0 0
      %834 = vmatprep.subr.bf16.mxu0 0
      %835 = vmatpush1.bf16.msra.mxu0 0
      %836 = vmatprep.subr.bf16.mxu0 0
      %837 = vmatpush1.bf16.msra.mxu0 0
      %838 = vmatprep.subr.bf16.mxu0 0
      %839 = vmatpush1.bf16.msra.mxu0 0
      %840 = vmatprep.subr.bf16.mxu0 0
      %841 = vmatpush1.bf16.msra.mxu0 0
      %842 = vmatprep.mubr.bf16.mxu0 0
      %843 = vmatmul.mubr.bf16.gmra.mrb[0].mxu0 %v427
      %v844 = vpop.f32.mrb[0].mxu0
      %v845 = vadd.f32 0.0, %v844
      %v846 = vpop.f32.mrb[0].mxu0
      %v847 = vpop.f32.mrb[0].mxu0
      %v848 = vadd.f32 0.0, %v847
      %v849 = vpop.f32.mrb[0].mxu0
      %850 = vdwg.mxu0
      %v853 = vcombine.high %v527, %v527
      %v855 = vunpack.c.l.s4 1966171168
      %v856 = vunpack.c.0.s8 %v855
      %v857 = vlaneseq
      %v858 = vshrl.u32 %v857, 7
      %v859 = vsub.s32 %v856, %v858
      %v860 = vrot.slane %v527, %v859
      %v862 = vunpack.c.l.s4 1966171168
      %v863 = vunpack.c.0.s8 %v862
      %v864 = vlaneseq
      %v865 = vshrl.u32 %v864, 7
      %v866 = vsub.s32 %v863, %v865
      %v867 = vrot.slane %v853, %v866
      %v868 = vcombine.high %v860, %v860
      %v869 = vcombine.high %v867, %v867
      %v871 = vunpack.c.l.s4 1966171168
      %v872 = vunpack.c.0.s8 %v871
      %v873 = vlaneseq
      %v874 = vshrl.u32 %v873, 7
      %v875 = vsub.s32 %v872, %v874
      %v876 = vrot.slane %v860, %v875
      %v878 = vunpack.c.l.s4 1966171168
      %v879 = vunpack.c.0.s8 %v878
      %v880 = vlaneseq
      %v881 = vshrl.u32 %v880, 7
      %v882 = vsub.s32 %v879, %v881
      %v883 = vrot.slane %v867, %v882
      %v885 = vunpack.c.l.s4 1966171168
      %v886 = vunpack.c.0.s8 %v885
      %v887 = vlaneseq
      %v888 = vshrl.u32 %v887, 7
      %v889 = vsub.s32 %v886, %v888
      %v890 = vrot.slane %v868, %v889
      %v892 = vunpack.c.l.s4 1966171168
      %v893 = vunpack.c.0.s8 %v892
      %v894 = vlaneseq
      %v895 = vshrl.u32 %v894, 7
      %v896 = vsub.s32 %v893, %v895
      %v897 = vrot.slane %v869, %v896
      %v898 = vcombine.high %v876, %v876
      %v899 = vcombine.high %v883, %v883
      %v900 = vcombine.high %v890, %v890
      %v901 = vcombine.high %v897, %v897
      %v902 = vcombine.high %v530, %v530
      %v904 = vunpack.c.l.s4 1966171168
      %v905 = vunpack.c.0.s8 %v904
      %v906 = vlaneseq
      %v907 = vshrl.u32 %v906, 7
      %v908 = vsub.s32 %v905, %v907
      %v909 = vrot.slane %v530, %v908
      %v911 = vunpack.c.l.s4 1966171168
      %v912 = vunpack.c.0.s8 %v911
      %v913 = vlaneseq
      %v914 = vshrl.u32 %v913, 7
      %v915 = vsub.s32 %v912, %v914
      %v916 = vrot.slane %v902, %v915
      %v917 = vcombine.high %v909, %v909
      %v918 = vcombine.high %v916, %v916
      %v920 = vunpack.c.l.s4 1966171168
      %v921 = vunpack.c.0.s8 %v920
      %v922 = vlaneseq
      %v923 = vshrl.u32 %v922, 7
      %v924 = vsub.s32 %v921, %v923
      %v925 = vrot.slane %v909, %v924
      %v927 = vunpack.c.l.s4 1966171168
      %v928 = vunpack.c.0.s8 %v927
      %v929 = vlaneseq
      %v930 = vshrl.u32 %v929, 7
      %v931 = vsub.s32 %v928, %v930
      %v932 = vrot.slane %v916, %v931
      %v934 = vunpack.c.l.s4 1966171168
      %v935 = vunpack.c.0.s8 %v934
      %v936 = vlaneseq
      %v937 = vshrl.u32 %v936, 7
      %v938 = vsub.s32 %v935, %v937
      %v939 = vrot.slane %v917, %v938
      %v941 = vunpack.c.l.s4 1966171168
      %v942 = vunpack.c.0.s8 %v941
      %v943 = vlaneseq
      %v944 = vshrl.u32 %v943, 7
      %v945 = vsub.s32 %v942, %v944
      %v946 = vrot.slane %v918, %v945
      %v947 = vcombine.high %v925, %v925
      %v948 = vcombine.high %v932, %v932
      %v949 = vcombine.high %v939, %v939
      %v950 = vcombine.high %v946, %v946
      %v969 = vcombine.high %v633, %v633
      %v971 = vunpack.c.l.s4 1966171168
      %v972 = vunpack.c.0.s8 %v971
      %v973 = vlaneseq
      %v974 = vshrl.u32 %v973, 7
      %v975 = vsub.s32 %v972, %v974
      %v976 = vrot.slane %v633, %v975
      %v978 = vunpack.c.l.s4 1966171168
      %v979 = vunpack.c.0.s8 %v978
      %v980 = vlaneseq
      %v981 = vshrl.u32 %v980, 7
      %v982 = vsub.s32 %v979, %v981
      %v983 = vrot.slane %v969, %v982
      %v984 = vcombine.high %v976, %v976
      %v985 = vcombine.high %v983, %v983
      %v987 = vunpack.c.l.s4 1966171168
      %v988 = vunpack.c.0.s8 %v987
      %v989 = vlaneseq
      %v990 = vshrl.u32 %v989, 7
      %v991 = vsub.s32 %v988, %v990
      %v992 = vrot.slane %v976, %v991
      %v994 = vunpack.c.l.s4 1966171168
      %v995 = vunpack.c.0.s8 %v994
      %v996 = vlaneseq
      %v997 = vshrl.u32 %v996, 7
      %v998 = vsub.s32 %v995, %v997
      %v999 = vrot.slane %v983, %v998
      %v1001 = vunpack.c.l.s4 1966171168
      %v1002 = vunpack.c.0.s8 %v1001
      %v1003 = vlaneseq
      %v1004 = vshrl.u32 %v1003, 7
      %v1005 = vsub.s32 %v1002, %v1004
      %v1006 = vrot.slane %v984, %v1005
      %v1008 = vunpack.c.l.s4 1966171168
      %v1009 = vunpack.c.0.s8 %v1008
      %v1010 = vlaneseq
      %v1011 = vshrl.u32 %v1010, 7
      %v1012 = vsub.s32 %v1009, %v1011
      %v1013 = vrot.slane %v985, %v1012
      %v1014 = vcombine.high %v992, %v992
      %v1015 = vcombine.high %v999, %v999
      %v1016 = vcombine.high %v1006, %v1006
      %v1017 = vcombine.high %v1013, %v1013
      %v1018 = vcombine.high %v636, %v636
      %v1020 = vunpack.c.l.s4 1966171168
      %v1021 = vunpack.c.0.s8 %v1020
      %v1022 = vlaneseq
      %v1023 = vshrl.u32 %v1022, 7
      %v1024 = vsub.s32 %v1021, %v1023
      %v1025 = vrot.slane %v636, %v1024
      %v1027 = vunpack.c.l.s4 1966171168
      %v1028 = vunpack.c.0.s8 %v1027
      %v1029 = vlaneseq
      %v1030 = vshrl.u32 %v1029, 7
      %v1031 = vsub.s32 %v1028, %v1030
      %v1032 = vrot.slane %v1018, %v1031
      %v1033 = vcombine.high %v1025, %v1025
      %v1034 = vcombine.high %v1032, %v1032
      %v1036 = vunpack.c.l.s4 1966171168
      %v1037 = vunpack.c.0.s8 %v1036
      %v1038 = vlaneseq
      %v1039 = vshrl.u32 %v1038, 7
      %v1040 = vsub.s32 %v1037, %v1039
      %v1041 = vrot.slane %v1025, %v1040
      %v1043 = vunpack.c.l.s4 1966171168
      %v1044 = vunpack.c.0.s8 %v1043
      %v1045 = vlaneseq
      %v1046 = vshrl.u32 %v1045, 7
      %v1047 = vsub.s32 %v1044, %v1046
      %v1048 = vrot.slane %v1032, %v1047
      %v1050 = vunpack.c.l.s4 1966171168
      %v1051 = vunpack.c.0.s8 %v1050
      %v1052 = vlaneseq
      %v1053 = vshrl.u32 %v1052, 7
      %v1054 = vsub.s32 %v1051, %v1053
      %v1055 = vrot.slane %v1033, %v1054
      %v1057 = vunpack.c.l.s4 1966171168
      %v1058 = vunpack.c.0.s8 %v1057
      %v1059 = vlaneseq
      %v1060 = vshrl.u32 %v1059, 7
      %v1061 = vsub.s32 %v1058, %v1060
      %v1062 = vrot.slane %v1034, %v1061
      %v1063 = vcombine.high %v1041, %v1041
      %v1064 = vcombine.high %v1048, %v1048
      %v1065 = vcombine.high %v1055, %v1055
      %v1066 = vcombine.high %v1062, %v1062
      %v1067 = vlaneseq
      %v1068 = vshrl.u32 %v1067, 7
      %v1069 = vsub.s32 0, %v1068
      %v1070 = vrot.slane %v992, %v1069
      %v1071 = vlaneseq
      %v1072 = vshrl.u32 %v1071, 7
      %v1073 = vsub.s32 0, %v1072
      %v1074 = vrot.slane %v1006, %v1073
      %v1075 = vlaneseq
      %v1076 = vshrl.u32 %v1075, 7
      %v1077 = vsub.s32 0, %v1076
      %v1078 = vrot.slane %v1014, %v1077
      %v1079 = vlaneseq
      %v1080 = vshrl.u32 %v1079, 7
      %v1081 = vsub.s32 0, %v1080
      %v1082 = vrot.slane %v1016, %v1081
      %v1083 = vlaneseq
      %v1084 = vshrl.u32 %v1083, 7
      %v1085 = vsub.s32 0, %v1084
      %v1086 = vrot.slane %v999, %v1085
      %v1087 = vlaneseq
      %v1088 = vshrl.u32 %v1087, 7
      %v1089 = vsub.s32 0, %v1088
      %v1090 = vrot.slane %v1013, %v1089
      %v1091 = vlaneseq
      %v1092 = vshrl.u32 %v1091, 7
      %v1093 = vsub.s32 0, %v1092
      %v1094 = vrot.slane %v1015, %v1093
      %v1095 = vlaneseq
      %v1096 = vshrl.u32 %v1095, 7
      %v1097 = vsub.s32 0, %v1096
      %v1098 = vrot.slane %v1017, %v1097
      %v1099 = vlaneseq
      %v1100 = vshrl.u32 %v1099, 7
      %v1101 = vsub.s32 0, %v1100
      %v1102 = vrot.slane %v1041, %v1101
      %v1103 = vlaneseq
      %v1104 = vshrl.u32 %v1103, 7
      %v1105 = vsub.s32 0, %v1104
      %v1106 = vrot.slane %v1055, %v1105
      %v1107 = vlaneseq
      %v1108 = vshrl.u32 %v1107, 7
      %v1109 = vsub.s32 0, %v1108
      %v1110 = vrot.slane %v1063, %v1109
      %v1111 = vlaneseq
      %v1112 = vshrl.u32 %v1111, 7
      %v1113 = vsub.s32 0, %v1112
      %v1114 = vrot.slane %v1065, %v1113
      %v1115 = vlaneseq
      %v1116 = vshrl.u32 %v1115, 7
      %v1117 = vsub.s32 0, %v1116
      %v1118 = vrot.slane %v1048, %v1117
      %v1119 = vlaneseq
      %v1120 = vshrl.u32 %v1119, 7
      %v1121 = vsub.s32 0, %v1120
      %v1122 = vrot.slane %v1062, %v1121
      %v1123 = vlaneseq
      %v1124 = vshrl.u32 %v1123, 7
      %v1125 = vsub.s32 0, %v1124
      %v1126 = vrot.slane %v1064, %v1125
      %v1127 = vlaneseq
      %v1128 = vshrl.u32 %v1127, 7
      %v1129 = vsub.s32 0, %v1128
      %v1130 = vrot.slane %v1066, %v1129
      %vm1147 = vcmask 1040384
      %v1148 = vsel %vm1147, %v876, %v1070
      %v1149 = vsel %vm1147, %v890, %v1074
      %v1150 = vsel %vm1147, %v898, %v1078
      %v1151 = vsel %vm1147, %v900, %v1082
      %v1152 = vsel %vm1147, %v883, %v1086
      %v1153 = vsel %vm1147, %v897, %v1090
      %v1154 = vsel %vm1147, %v899, %v1094
      %v1155 = vsel %vm1147, %v901, %v1098
      %v1156 = vsel %vm1147, %v925, %v1102
      %v1157 = vsel %vm1147, %v939, %v1106
      %v1158 = vsel %vm1147, %v947, %v1110
      %v1159 = vsel %vm1147, %v949, %v1114
      %v1160 = vsel %vm1147, %v932, %v1118
      %v1161 = vsel %vm1147, %v946, %v1122
      %v1162 = vsel %vm1147, %v948, %v1126
      %v1163 = vsel %vm1147, %v950, %v1130
      %v1166 = vcombine.high %v739, %v739
      %v1168 = vunpack.c.l.s4 1966171168
      %v1169 = vunpack.c.0.s8 %v1168
      %v1170 = vlaneseq
      %v1171 = vshrl.u32 %v1170, 7
      %v1172 = vsub.s32 %v1169, %v1171
      %v1173 = vrot.slane %v739, %v1172
      %v1175 = vunpack.c.l.s4 1966171168
      %v1176 = vunpack.c.0.s8 %v1175
      %v1177 = vlaneseq
      %v1178 = vshrl.u32 %v1177, 7
      %v1179 = vsub.s32 %v1176, %v1178
      %v1180 = vrot.slane %v1166, %v1179
      %v1181 = vcombine.high %v1173, %v1173
      %v1182 = vcombine.high %v1180, %v1180
      %v1184 = vunpack.c.l.s4 1966171168
      %v1185 = vunpack.c.0.s8 %v1184
      %v1186 = vlaneseq
      %v1187 = vshrl.u32 %v1186, 7
      %v1188 = vsub.s32 %v1185, %v1187
      %v1189 = vrot.slane %v1173, %v1188
      %v1191 = vunpack.c.l.s4 1966171168
      %v1192 = vunpack.c.0.s8 %v1191
      %v1193 = vlaneseq
      %v1194 = vshrl.u32 %v1193, 7
      %v1195 = vsub.s32 %v1192, %v1194
      %v1196 = vrot.slane %v1180, %v1195
      %v1198 = vunpack.c.l.s4 1966171168
      %v1199 = vunpack.c.0.s8 %v1198
      %v1200 = vlaneseq
      %v1201 = vshrl.u32 %v1200, 7
      %v1202 = vsub.s32 %v1199, %v1201
      %v1203 = vrot.slane %v1181, %v1202
      %v1205 = vunpack.c.l.s4 1966171168
      %v1206 = vunpack.c.0.s8 %v1205
      %v1207 = vlaneseq
      %v1208 = vshrl.u32 %v1207, 7
      %v1209 = vsub.s32 %v1206, %v1208
      %v1210 = vrot.slane %v1182, %v1209
      %v1211 = vcombine.high %v1189, %v1189
      %v1212 = vcombine.high %v1196, %v1196
      %v1213 = vcombine.high %v1203, %v1203
      %v1214 = vcombine.high %v1210, %v1210
      %v1215 = vcombine.high %v742, %v742
      %v1217 = vunpack.c.l.s4 1966171168
      %v1218 = vunpack.c.0.s8 %v1217
      %v1219 = vlaneseq
      %v1220 = vshrl.u32 %v1219, 7
      %v1221 = vsub.s32 %v1218, %v1220
      %v1222 = vrot.slane %v742, %v1221
      %v1224 = vunpack.c.l.s4 1966171168
      %v1225 = vunpack.c.0.s8 %v1224
      %v1226 = vlaneseq
      %v1227 = vshrl.u32 %v1226, 7
      %v1228 = vsub.s32 %v1225, %v1227
      %v1229 = vrot.slane %v1215, %v1228
      %v1230 = vcombine.high %v1222, %v1222
      %v1231 = vcombine.high %v1229, %v1229
      %v1233 = vunpack.c.l.s4 1966171168
      %v1234 = vunpack.c.0.s8 %v1233
      %v1235 = vlaneseq
      %v1236 = vshrl.u32 %v1235, 7
      %v1237 = vsub.s32 %v1234, %v1236
      %v1238 = vrot.slane %v1222, %v1237
      %v1240 = vunpack.c.l.s4 1966171168
      %v1241 = vunpack.c.0.s8 %v1240
      %v1242 = vlaneseq
      %v1243 = vshrl.u32 %v1242, 7
      %v1244 = vsub.s32 %v1241, %v1243
      %v1245 = vrot.slane %v1229, %v1244
      %v1247 = vunpack.c.l.s4 1966171168
      %v1248 = vunpack.c.0.s8 %v1247
      %v1249 = vlaneseq
      %v1250 = vshrl.u32 %v1249, 7
      %v1251 = vsub.s32 %v1248, %v1250
      %v1252 = vrot.slane %v1230, %v1251
      %v1254 = vunpack.c.l.s4 1966171168
      %v1255 = vunpack.c.0.s8 %v1254
      %v1256 = vlaneseq
      %v1257 = vshrl.u32 %v1256, 7
      %v1258 = vsub.s32 %v1255, %v1257
      %v1259 = vrot.slane %v1231, %v1258
      %v1260 = vcombine.high %v1238, %v1238
      %v1261 = vcombine.high %v1245, %v1245
      %v1262 = vcombine.high %v1252, %v1252
      %v1263 = vcombine.high %v1259, %v1259
      %v1282 = vcombine.high %v845, %v845
      %v1284 = vunpack.c.l.s4 1966171168
      %v1285 = vunpack.c.0.s8 %v1284
      %v1286 = vlaneseq
      %v1287 = vshrl.u32 %v1286, 7
      %v1288 = vsub.s32 %v1285, %v1287
      %v1289 = vrot.slane %v845, %v1288
      %v1291 = vunpack.c.l.s4 1966171168
      %v1292 = vunpack.c.0.s8 %v1291
      %v1293 = vlaneseq
      %v1294 = vshrl.u32 %v1293, 7
      %v1295 = vsub.s32 %v1292, %v1294
      %v1296 = vrot.slane %v1282, %v1295
      %v1297 = vcombine.high %v1289, %v1289
      %v1298 = vcombine.high %v1296, %v1296
      %v1300 = vunpack.c.l.s4 1966171168
      %v1301 = vunpack.c.0.s8 %v1300
      %v1302 = vlaneseq
      %v1303 = vshrl.u32 %v1302, 7
      %v1304 = vsub.s32 %v1301, %v1303
      %v1305 = vrot.slane %v1289, %v1304
      %v1307 = vunpack.c.l.s4 1966171168
      %v1308 = vunpack.c.0.s8 %v1307
      %v1309 = vlaneseq
      %v1310 = vshrl.u32 %v1309, 7
      %v1311 = vsub.s32 %v1308, %v1310
      %v1312 = vrot.slane %v1296, %v1311
      %v1314 = vunpack.c.l.s4 1966171168
      %v1315 = vunpack.c.0.s8 %v1314
      %v1316 = vlaneseq
      %v1317 = vshrl.u32 %v1316, 7
      %v1318 = vsub.s32 %v1315, %v1317
      %v1319 = vrot.slane %v1297, %v1318
      %v1321 = vunpack.c.l.s4 1966171168
      %v1322 = vunpack.c.0.s8 %v1321
      %v1323 = vlaneseq
      %v1324 = vshrl.u32 %v1323, 7
      %v1325 = vsub.s32 %v1322, %v1324
      %v1326 = vrot.slane %v1298, %v1325
      %v1327 = vcombine.high %v1305, %v1305
      %v1328 = vcombine.high %v1312, %v1312
      %v1329 = vcombine.high %v1319, %v1319
      %v1330 = vcombine.high %v1326, %v1326
      %v1331 = vcombine.high %v848, %v848
      %v1333 = vunpack.c.l.s4 1966171168
      %v1334 = vunpack.c.0.s8 %v1333
      %v1335 = vlaneseq
      %v1336 = vshrl.u32 %v1335, 7
      %v1337 = vsub.s32 %v1334, %v1336
      %v1338 = vrot.slane %v848, %v1337
      %v1340 = vunpack.c.l.s4 1966171168
      %v1341 = vunpack.c.0.s8 %v1340
      %v1342 = vlaneseq
      %v1343 = vshrl.u32 %v1342, 7
      %v1344 = vsub.s32 %v1341, %v1343
      %v1345 = vrot.slane %v1331, %v1344
      %v1346 = vcombine.high %v1338, %v1338
      %v1347 = vcombine.high %v1345, %v1345
      %v1349 = vunpack.c.l.s4 1966171168
      %v1350 = vunpack.c.0.s8 %v1349
      %v1351 = vlaneseq
      %v1352 = vshrl.u32 %v1351, 7
      %v1353 = vsub.s32 %v1350, %v1352
      %v1354 = vrot.slane %v1338, %v1353
      %v1356 = vunpack.c.l.s4 1966171168
      %v1357 = vunpack.c.0.s8 %v1356
      %v1358 = vlaneseq
      %v1359 = vshrl.u32 %v1358, 7
      %v1360 = vsub.s32 %v1357, %v1359
      %v1361 = vrot.slane %v1345, %v1360
      %v1363 = vunpack.c.l.s4 1966171168
      %v1364 = vunpack.c.0.s8 %v1363
      %v1365 = vlaneseq
      %v1366 = vshrl.u32 %v1365, 7
      %v1367 = vsub.s32 %v1364, %v1366
      %v1368 = vrot.slane %v1346, %v1367
      %v1370 = vunpack.c.l.s4 1966171168
      %v1371 = vunpack.c.0.s8 %v1370
      %v1372 = vlaneseq
      %v1373 = vshrl.u32 %v1372, 7
      %v1374 = vsub.s32 %v1371, %v1373
      %v1375 = vrot.slane %v1347, %v1374
      %v1376 = vcombine.high %v1354, %v1354
      %v1377 = vcombine.high %v1361, %v1361
      %v1378 = vcombine.high %v1368, %v1368
      %v1379 = vcombine.high %v1375, %v1375
      %v1380 = vlaneseq
      %v1381 = vshrl.u32 %v1380, 7
      %v1382 = vsub.s32 0, %v1381
      %v1383 = vrot.slane %v1305, %v1382
      %v1384 = vlaneseq
      %v1385 = vshrl.u32 %v1384, 7
      %v1386 = vsub.s32 0, %v1385
      %v1387 = vrot.slane %v1319, %v1386
      %v1388 = vlaneseq
      %v1389 = vshrl.u32 %v1388, 7
      %v1390 = vsub.s32 0, %v1389
      %v1391 = vrot.slane %v1327, %v1390
      %v1392 = vlaneseq
      %v1393 = vshrl.u32 %v1392, 7
      %v1394 = vsub.s32 0, %v1393
      %v1395 = vrot.slane %v1329, %v1394
      %v1396 = vlaneseq
      %v1397 = vshrl.u32 %v1396, 7
      %v1398 = vsub.s32 0, %v1397
      %v1399 = vrot.slane %v1312, %v1398
      %v1400 = vlaneseq
      %v1401 = vshrl.u32 %v1400, 7
      %v1402 = vsub.s32 0, %v1401
      %v1403 = vrot.slane %v1326, %v1402
      %v1404 = vlaneseq
      %v1405 = vshrl.u32 %v1404, 7
      %v1406 = vsub.s32 0, %v1405
      %v1407 = vrot.slane %v1328, %v1406
      %v1408 = vlaneseq
      %v1409 = vshrl.u32 %v1408, 7
      %v1410 = vsub.s32 0, %v1409
      %v1411 = vrot.slane %v1330, %v1410
      %v1412 = vlaneseq
      %v1413 = vshrl.u32 %v1412, 7
      %v1414 = vsub.s32 0, %v1413
      %v1415 = vrot.slane %v1354, %v1414
      %v1416 = vlaneseq
      %v1417 = vshrl.u32 %v1416, 7
      %v1418 = vsub.s32 0, %v1417
      %v1419 = vrot.slane %v1368, %v1418
      %v1420 = vlaneseq
      %v1421 = vshrl.u32 %v1420, 7
      %v1422 = vsub.s32 0, %v1421
      %v1423 = vrot.slane %v1376, %v1422
      %v1424 = vlaneseq
      %v1425 = vshrl.u32 %v1424, 7
      %v1426 = vsub.s32 0, %v1425
      %v1427 = vrot.slane %v1378, %v1426
      %v1428 = vlaneseq
      %v1429 = vshrl.u32 %v1428, 7
      %v1430 = vsub.s32 0, %v1429
      %v1431 = vrot.slane %v1361, %v1430
      %v1432 = vlaneseq
      %v1433 = vshrl.u32 %v1432, 7
      %v1434 = vsub.s32 0, %v1433
      %v1435 = vrot.slane %v1375, %v1434
      %v1436 = vlaneseq
      %v1437 = vshrl.u32 %v1436, 7
      %v1438 = vsub.s32 0, %v1437
      %v1439 = vrot.slane %v1377, %v1438
      %v1440 = vlaneseq
      %v1441 = vshrl.u32 %v1440, 7
      %v1442 = vsub.s32 0, %v1441
      %v1443 = vrot.slane %v1379, %v1442
      %v1460 = vsel %vm1147, %v1189, %v1383
      %v1461 = vsel %vm1147, %v1203, %v1387
      %v1462 = vsel %vm1147, %v1211, %v1391
      %v1463 = vsel %vm1147, %v1213, %v1395
      %v1464 = vsel %vm1147, %v1196, %v1399
      %v1465 = vsel %vm1147, %v1210, %v1403
      %v1466 = vsel %vm1147, %v1212, %v1407
      %v1467 = vsel %vm1147, %v1214, %v1411
      %v1468 = vsel %vm1147, %v1238, %v1415
      %v1469 = vsel %vm1147, %v1252, %v1419
      %v1470 = vsel %vm1147, %v1260, %v1423
      %v1471 = vsel %vm1147, %v1262, %v1427
      %v1472 = vsel %vm1147, %v1245, %v1431
      %v1473 = vsel %vm1147, %v1259, %v1435
      %v1474 = vsel %vm1147, %v1261, %v1439
      %v1475 = vsel %vm1147, %v1263, %v1443
      %v1476 = vld [vmem:[%s3] sm:$0x1]
      %v1478 = vlaneseq
      %v1479 = vshrl.u32 %v1478, 7
      %v1480 = vsub.s32 0, %v1479
      %v1481 = vrot.slane %v1476, %v1480
      %v1482 = vcombine.high %v1481, %v1481
      %v1484 = vunpack.c.l.s4 1983009808
      %v1485 = vunpack.c.0.s8 %v1484
      %v1486 = vlaneseq
      %v1487 = vshrl.u32 %v1486, 7
      %v1488 = vsub.s32 %v1485, %v1487
      %v1489 = vrot.slane %v1481, %v1488
      %v1491 = vunpack.c.l.s4 1983009808
      %v1492 = vunpack.c.0.s8 %v1491
      %v1493 = vlaneseq
      %v1494 = vshrl.u32 %v1493, 7
      %v1495 = vsub.s32 %v1492, %v1494
      %v1496 = vrot.slane %v1482, %v1495
      %v1497 = vcombine.high %v1489, %v1489
      %v1498 = vcombine.high %v1496, %v1496
      %v1503 = vadd.f32 %v1148, %v1489
      %v1504 = vadd.f32 %v1149, %v1497
      %v1505 = vadd.f32 %v1150, %v1496
      %v1506 = vadd.f32 %v1151, %v1498
      %v1507 = vadd.f32 %v1152, %v1489
      %v1508 = vadd.f32 %v1153, %v1497
      %v1509 = vadd.f32 %v1154, %v1496
      %v1510 = vadd.f32 %v1155, %v1498
      %v1511 = vadd.f32 %v1460, %v1489
      %v1512 = vadd.f32 %v1461, %v1497
      %v1513 = vadd.f32 %v1462, %v1496
      %v1514 = vadd.f32 %v1463, %v1498
      %v1515 = vadd.f32 %v1464, %v1489
      %v1516 = vadd.f32 %v1465, %v1497
      %v1517 = vadd.f32 %v1466, %v1496
      %v1518 = vadd.f32 %v1467, %v1498
      %v1519 = vadd.f32 %v1156, %v1489
      %v1520 = vadd.f32 %v1157, %v1497
      %v1521 = vadd.f32 %v1158, %v1496
      %v1522 = vadd.f32 %v1159, %v1498
      %v1523 = vadd.f32 %v1160, %v1489
      %v1524 = vadd.f32 %v1161, %v1497
      %v1525 = vadd.f32 %v1162, %v1496
      %v1526 = vadd.f32 %v1163, %v1498
      %v1527 = vadd.f32 %v1468, %v1489
      %v1528 = vadd.f32 %v1469, %v1497
      %v1529 = vadd.f32 %v1470, %v1496
      %v1530 = vadd.f32 %v1471, %v1498
      %v1531 = vadd.f32 %v1472, %v1489
      %v1532 = vadd.f32 %v1473, %v1497
      %v1533 = vadd.f32 %v1474, %v1496
      %v1534 = vadd.f32 %v1475, %v1498
      %v1567 = vcombine.low %v1503, %v1504
      %v1568 = vcombine.low %v1505, %v1506
      %v1570 = vunpack.c.l.s4 1983009808
      %v1571 = vunpack.c.0.s8 %v1570
      %v1572 = vlaneseq
      %v1573 = vshrl.u32 %v1572, 7
      %v1574 = vsub.s32 %v1571, %v1573
      %v1575 = vrot.slane %v1567, %v1574
      %v1577 = vunpack.c.l.s4 1983009808
      %v1578 = vunpack.c.0.s8 %v1577
      %v1579 = vlaneseq
      %v1580 = vshrl.u32 %v1579, 7
      %v1581 = vsub.s32 %v1578, %v1580
      %v1582 = vrot.slane %v1568, %v1581
      %v1583 = vcombine.low %v1575, %v1582
      %v1584 = vcombine.low %v1507, %v1508
      %v1585 = vcombine.low %v1509, %v1510
      %v1587 = vunpack.c.l.s4 1983009808
      %v1588 = vunpack.c.0.s8 %v1587
      %v1589 = vlaneseq
      %v1590 = vshrl.u32 %v1589, 7
      %v1591 = vsub.s32 %v1588, %v1590
      %v1592 = vrot.slane %v1584, %v1591
      %v1594 = vunpack.c.l.s4 1983009808
      %v1595 = vunpack.c.0.s8 %v1594
      %v1596 = vlaneseq
      %v1597 = vshrl.u32 %v1596, 7
      %v1598 = vsub.s32 %v1595, %v1597
      %v1599 = vrot.slane %v1585, %v1598
      %v1600 = vcombine.low %v1592, %v1599
      %v1601 = vcombine.low %v1511, %v1512
      %v1602 = vcombine.low %v1513, %v1514
      %v1604 = vunpack.c.l.s4 1983009808
      %v1605 = vunpack.c.0.s8 %v1604
      %v1606 = vlaneseq
      %v1607 = vshrl.u32 %v1606, 7
      %v1608 = vsub.s32 %v1605, %v1607
      %v1609 = vrot.slane %v1601, %v1608
      %v1611 = vunpack.c.l.s4 1983009808
      %v1612 = vunpack.c.0.s8 %v1611
      %v1613 = vlaneseq
      %v1614 = vshrl.u32 %v1613, 7
      %v1615 = vsub.s32 %v1612, %v1614
      %v1616 = vrot.slane %v1602, %v1615
      %v1617 = vcombine.low %v1609, %v1616
      %v1618 = vcombine.low %v1515, %v1516
      %v1619 = vcombine.low %v1517, %v1518
      %v1621 = vunpack.c.l.s4 1983009808
      %v1622 = vunpack.c.0.s8 %v1621
      %v1623 = vlaneseq
      %v1624 = vshrl.u32 %v1623, 7
      %v1625 = vsub.s32 %v1622, %v1624
      %v1626 = vrot.slane %v1618, %v1625
      %v1628 = vunpack.c.l.s4 1983009808
      %v1629 = vunpack.c.0.s8 %v1628
      %v1630 = vlaneseq
      %v1631 = vshrl.u32 %v1630, 7
      %v1632 = vsub.s32 %v1629, %v1631
      %v1633 = vrot.slane %v1619, %v1632
      %v1634 = vcombine.low %v1626, %v1633
      %v1635 = vcombine.low %v1519, %v1520
      %v1636 = vcombine.low %v1521, %v1522
      %v1638 = vunpack.c.l.s4 1983009808
      %v1639 = vunpack.c.0.s8 %v1638
      %v1640 = vlaneseq
      %v1641 = vshrl.u32 %v1640, 7
      %v1642 = vsub.s32 %v1639, %v1641
      %v1643 = vrot.slane %v1635, %v1642
      %v1645 = vunpack.c.l.s4 1983009808
      %v1646 = vunpack.c.0.s8 %v1645
      %v1647 = vlaneseq
      %v1648 = vshrl.u32 %v1647, 7
      %v1649 = vsub.s32 %v1646, %v1648
      %v1650 = vrot.slane %v1636, %v1649
      %v1651 = vcombine.low %v1643, %v1650
      %v1652 = vcombine.low %v1523, %v1524
      %v1653 = vcombine.low %v1525, %v1526
      %v1655 = vunpack.c.l.s4 1983009808
      %v1656 = vunpack.c.0.s8 %v1655
      %v1657 = vlaneseq
      %v1658 = vshrl.u32 %v1657, 7
      %v1659 = vsub.s32 %v1656, %v1658
      %v1660 = vrot.slane %v1652, %v1659
      %v1662 = vunpack.c.l.s4 1983009808
      %v1663 = vunpack.c.0.s8 %v1662
      %v1664 = vlaneseq
      %v1665 = vshrl.u32 %v1664, 7
      %v1666 = vsub.s32 %v1663, %v1665
      %v1667 = vrot.slane %v1653, %v1666
      %v1668 = vcombine.low %v1660, %v1667
      %v1669 = vcombine.low %v1527, %v1528
      %v1670 = vcombine.low %v1529, %v1530
      %v1672 = vunpack.c.l.s4 1983009808
      %v1673 = vunpack.c.0.s8 %v1672
      %v1674 = vlaneseq
      %v1675 = vshrl.u32 %v1674, 7
      %v1676 = vsub.s32 %v1673, %v1675
      %v1677 = vrot.slane %v1669, %v1676
      %v1679 = vunpack.c.l.s4 1983009808
      %v1680 = vunpack.c.0.s8 %v1679
      %v1681 = vlaneseq
      %v1682 = vshrl.u32 %v1681, 7
      %v1683 = vsub.s32 %v1680, %v1682
      %v1684 = vrot.slane %v1670, %v1683
      %v1685 = vcombine.low %v1677, %v1684
      %v1686 = vcombine.low %v1531, %v1532
      %v1687 = vcombine.low %v1533, %v1534
      %v1689 = vunpack.c.l.s4 1983009808
      %v1690 = vunpack.c.0.s8 %v1689
      %v1691 = vlaneseq
      %v1692 = vshrl.u32 %v1691, 7
      %v1693 = vsub.s32 %v1690, %v1692
      %v1694 = vrot.slane %v1686, %v1693
      %v1696 = vunpack.c.l.s4 1983009808
      %v1697 = vunpack.c.0.s8 %v1696
      %v1698 = vlaneseq
      %v1699 = vshrl.u32 %v1698, 7
      %v1700 = vsub.s32 %v1697, %v1699
      %v1701 = vrot.slane %v1687, %v1700
      %v1702 = vcombine.low %v1694, %v1701
      %1711 = vst [vmem:[%s418] sm:$0xff] %v1583
      %1712 = vst [vmem:[%s418 + $0x8] sm:$0xff] %v1600
      %1713 = vst [vmem:[%s418 + $0x10] sm:$0xff] %v1617
      %1714 = vst [vmem:[%s418 + $0x18] sm:$0xff] %v1634
      %1715 = vst [vmem:[%s418 + $0x20] sm:$0xff] %v1651
      %1716 = vst [vmem:[%s418 + $0x28] sm:$0xff] %v1668
      %1717 = vst [vmem:[%s418 + $0x30] sm:$0xff] %v1685
      %1718 = vst [vmem:[%s418 + $0x38] sm:$0xff] %v1702
      %v1719 = vpack.c.bf16 %v1600, %v1583
      %v1720 = vpack.c.bf16 %v1634, %v1617
      %v1721 = vpack.c.bf16 %v1668, %v1651
      %v1722 = vpack.c.bf16 %v1702, %v1685
      %v1723 = vld [vmem:[%s407] sm:$0xff]
      %v1724 = vld [vmem:[%s407 + $0x8] sm:$0xff]
      %v1725 = vld [vmem:[%s407 + $0x10] sm:$0xff]
      %v1726 = vld [vmem:[%s407 + $0x18] sm:$0xff]
      %v1727 = vld [vmem:[%s407 + $0x20] sm:$0xff]
      %v1728 = vld [vmem:[%s407 + $0x28] sm:$0xff]
      %v1729 = vld [vmem:[%s407 + $0x30] sm:$0xff]
      %v1730 = vld [vmem:[%s407 + $0x38] sm:$0xff]
      %v1731 = vpack.c.bf16 %v1724, %v1723
      %v1732 = vpack.c.bf16 %v1726, %v1725
      %v1733 = vpack.c.bf16 %v1728, %v1727
      %v1734 = vpack.c.bf16 %v1730, %v1729
      %v1735 = vld [vmem:[%s4] sm:$0xf]
      %v1736 = vld [vmem:[%s4 + $0x4] sm:$0xf]
      %v1737 = vld [vmem:[%s4 + $0x8] sm:$0xf]
      %v1738 = vld [vmem:[%s4 + $0xc] sm:$0xf]
      %v1739 = vld [vmem:[%s4 + $0x10] sm:$0xf]
      %v1740 = vld [vmem:[%s4 + $0x14] sm:$0xf]
      %v1741 = vld [vmem:[%s4 + $0x18] sm:$0xf]
      %v1742 = vld [vmem:[%s4 + $0x1c] sm:$0xf]
      %v1743 = vld [vmem:[%s4 + $0x20] sm:$0xf]
      %v1744 = vld [vmem:[%s4 + $0x24] sm:$0xf]
      %v1745 = vld [vmem:[%s4 + $0x28] sm:$0xf]
      %v1746 = vld [vmem:[%s4 + $0x2c] sm:$0xf]
      %v1747 = vld [vmem:[%s4 + $0x30] sm:$0xf]
      %v1748 = vld [vmem:[%s4 + $0x34] sm:$0xf]
      %v1749 = vld [vmem:[%s4 + $0x38] sm:$0xf]
      %v1750 = vld [vmem:[%s4 + $0x3c] sm:$0xf]
      %v1751 = vld [vmem:[%s5] sm:$0x1]
      %v1753 = vlaneseq
      %v1754 = vshrl.u32 %v1753, 7
      %v1755 = vsub.s32 0, %v1754
      %v1756 = vrot.slane %v1751, %v1755
      %v1774 = vunpack.c.l.b16 %v1735
      %v1775 = vunpack.c.l.b16 %v1736
      %v1776 = vunpack.c.l.b16 %v1737
      %v1777 = vunpack.c.l.b16 %v1738
      %v1778 = vunpack.c.l.b16 %v1739
      %v1779 = vunpack.c.l.b16 %v1740
      %v1780 = vunpack.c.l.b16 %v1741
      %v1781 = vunpack.c.l.b16 %v1742
      %v1782 = vunpack.c.l.b16 %v1743
      %v1783 = vunpack.c.l.b16 %v1744
      %v1784 = vunpack.c.l.b16 %v1745
      %v1785 = vunpack.c.l.b16 %v1746
      %v1786 = vunpack.c.l.b16 %v1747
      %v1787 = vunpack.c.l.b16 %v1748
      %v1788 = vunpack.c.l.b16 %v1749
      %v1789 = vunpack.c.l.b16 %v1750
      %v1790 = vpack.c.b16 %v1775, %v1774
      %v1791 = vpack.c.b16 %v1777, %v1776
      %v1792 = vpack.c.b16 %v1779, %v1778
      %v1793 = vpack.c.b16 %v1781, %v1780
      %v1794 = vpack.c.b16 %v1783, %v1782
      %v1795 = vpack.c.b16 %v1785, %v1784
      %v1796 = vpack.c.b16 %v1787, %v1786
      %v1797 = vpack.c.b16 %v1789, %v1788
      %1806 = vmatprep.subr.bf16.mxu0 0
      %1807 = vmatpush1.bf16.msra.mxu0 %v1790
      %1808 = vmatprep.subr.bf16.mxu0 0
      %1809 = vmatpush1.bf16.msra.mxu0 %v1791
      %1810 = vmatprep.subr.bf16.mxu0 0
      %1811 = vmatpush1.bf16.msra.mxu0 %v1792
      %1812 = vmatprep.subr.bf16.mxu0 0
      %1813 = vmatpush1.bf16.msra.mxu0 %v1793
      %1814 = vmatprep.subr.bf16.mxu0 0
      %1815 = vmatpush1.bf16.msra.mxu0 %v1794
      %1816 = vmatprep.subr.bf16.mxu0 0
      %1817 = vmatpush1.bf16.msra.mxu0 %v1795
      %1818 = vmatprep.subr.bf16.mxu0 0
      %1819 = vmatpush1.bf16.msra.mxu0 %v1796
      %1820 = vmatprep.subr.bf16.mxu0 0
      %1821 = vmatpush1.bf16.msra.mxu0 %v1797
      %1822 = vmatprep.subr.bf16.mxu0 0
      %1823 = vmatpush1.bf16.msra.mxu0 0
      %1824 = vmatprep.subr.bf16.mxu0 0
      %1825 = vmatpush1.bf16.msra.mxu0 0
      %1826 = vmatprep.subr.bf16.mxu0 0
      %1827 = vmatpush1.bf16.msra.mxu0 0
      %1828 = vmatprep.subr.bf16.mxu0 0
      %1829 = vmatpush1.bf16.msra.mxu0 0
      %1830 = vmatprep.subr.bf16.mxu0 0
      %1831 = vmatpush1.bf16.msra.mxu0 0
      %1832 = vmatprep.subr.bf16.mxu0 0
      %1833 = vmatpush1.bf16.msra.mxu0 0
      %1834 = vmatprep.subr.bf16.mxu0 0
      %1835 = vmatpush1.bf16.msra.mxu0 0
      %1836 = vmatprep.subr.bf16.mxu0 0
      %1837 = vmatpush1.bf16.msra.mxu0 0
      %1838 = vmatprep.mubr.bf16.mxu0 0
      %1839 = vmatmul.mubr.bf16.gmra.mrb[0].mxu0 %v1719
      %v1840 = vpop.f32.mrb[0].mxu0
      %v1841 = vadd.f32 %v1756, %v1840
      %v1842 = vpop.f32.mrb[0].mxu0
      %v1843 = vpop.f32.mrb[0].mxu0
      %v1844 = vadd.f32 %v1756, %v1843
      %v1845 = vpop.f32.mrb[0].mxu0
      %1846 = vmatprep.mubr.bf16.mxu0 0
      %1847 = vmatmul.mubr.bf16.gmra.mrb[0].mxu0 %v1720
      %v1848 = vpop.f32.mrb[0].mxu0
      %v1849 = vadd.f32 %v1756, %v1848
      %v1850 = vpop.f32.mrb[0].mxu0
      %v1851 = vpop.f32.mrb[0].mxu0
      %v1852 = vadd.f32 %v1756, %v1851
      %v1853 = vpop.f32.mrb[0].mxu0
      %1854 = vmatprep.mubr.bf16.mxu0 0
      %1855 = vmatmul.mubr.bf16.gmra.mrb[0].mxu0 %v1721
      %v1856 = vpop.f32.mrb[0].mxu0
      %v1857 = vadd.f32 %v1756, %v1856
      %v1858 = vpop.f32.mrb[0].mxu0
      %v1859 = vpop.f32.mrb[0].mxu0
      %v1860 = vadd.f32 %v1756, %v1859
      %v1861 = vpop.f32.mrb[0].mxu0
      %1862 = vmatprep.mubr.bf16.mxu0 0
      %1863 = vmatmul.mubr.bf16.gmra.mrb[0].mxu0 %v1722
      %v1864 = vpop.f32.mrb[0].mxu0
      %v1865 = vadd.f32 %v1756, %v1864
      %v1866 = vpop.f32.mrb[0].mxu0
      %v1867 = vpop.f32.mrb[0].mxu0
      %v1868 = vadd.f32 %v1756, %v1867
      %v1869 = vpop.f32.mrb[0].mxu0
      %1870 = vdwg.mxu0
      %v1871 = vld [vmem:[%s6] sm:$0xf]
      %v1872 = vld [vmem:[%s6 + $0x4] sm:$0xf]
      %v1873 = vld [vmem:[%s6 + $0x8] sm:$0xf]
      %v1874 = vld [vmem:[%s6 + $0xc] sm:$0xf]
      %v1875 = vld [vmem:[%s6 + $0x10] sm:$0xf]
      %v1876 = vld [vmem:[%s6 + $0x14] sm:$0xf]
      %v1877 = vld [vmem:[%s6 + $0x18] sm:$0xf]
      %v1878 = vld [vmem:[%s6 + $0x1c] sm:$0xf]
      %v1879 = vld [vmem:[%s6 + $0x20] sm:$0xf]
      %v1880 = vld [vmem:[%s6 + $0x24] sm:$0xf]
      %v1881 = vld [vmem:[%s6 + $0x28] sm:$0xf]
      %v1882 = vld [vmem:[%s6 + $0x2c] sm:$0xf]
      %v1883 = vld [vmem:[%s6 + $0x30] sm:$0xf]
      %v1884 = vld [vmem:[%s6 + $0x34] sm:$0xf]
      %v1885 = vld [vmem:[%s6 + $0x38] sm:$0xf]
      %v1886 = vld [vmem:[%s6 + $0x3c] sm:$0xf]
      %v1887 = vld [vmem:[%s7] sm:$0x1]
      %v1889 = vlaneseq
      %v1890 = vshrl.u32 %v1889, 7
      %v1891 = vsub.s32 0, %v1890
      %v1892 = vrot.slane %v1887, %v1891
      %v1910 = vunpack.c.l.b16 %v1871
      %v1911 = vunpack.c.l.b16 %v1872
      %v1912 = vunpack.c.l.b16 %v1873
      %v1913 = vunpack.c.l.b16 %v1874
      %v1914 = vunpack.c.l.b16 %v1875
      %v1915 = vunpack.c.l.b16 %v1876
      %v1916 = vunpack.c.l.b16 %v1877
      %v1917 = vunpack.c.l.b16 %v1878
      %v1918 = vunpack.c.l.b16 %v1879
      %v1919 = vunpack.c.l.b16 %v1880
      %v1920 = vunpack.c.l.b16 %v1881
      %v1921 = vunpack.c.l.b16 %v1882
      %v1922 = vunpack.c.l.b16 %v1883
      %v1923 = vunpack.c.l.b16 %v1884
      %v1924 = vunpack.c.l.b16 %v1885
      %v1925 = vunpack.c.l.b16 %v1886
      %v1926 = vpack.c.b16 %v1911, %v1910
      %v1927 = vpack.c.b16 %v1913, %v1912
      %v1928 = vpack.c.b16 %v1915, %v1914
      %v1929 = vpack.c.b16 %v1917, %v1916
      %v1930 = vpack.c.b16 %v1919, %v1918
      %v1931 = vpack.c.b16 %v1921, %v1920
      %v1932 = vpack.c.b16 %v1923, %v1922
      %v1933 = vpack.c.b16 %v1925, %v1924
      %1942 = vmatprep.subr.bf16.mxu0 0
      %1943 = vmatpush1.bf16.msra.mxu0 %v1926
      %1944 = vmatprep.subr.bf16.mxu0 0
      %1945 = vmatpush1.bf16.msra.mxu0 %v1927
      %1946 = vmatprep.subr.bf16.mxu0 0
      %1947 = vmatpush1.bf16.msra.mxu0 %v1928
      %1948 = vmatprep.subr.bf16.mxu0 0
      %1949 = vmatpush1.bf16.msra.mxu0 %v1929
      %1950 = vmatprep.subr.bf16.mxu0 0
      %1951 = vmatpush1.bf16.msra.mxu0 %v1930
      %1952 = vmatprep.subr.bf16.mxu0 0
      %1953 = vmatpush1.bf16.msra.mxu0 %v1931
      %1954 = vmatprep.subr.bf16.mxu0 0
      %1955 = vmatpush1.bf16.msra.mxu0 %v1932
      %1956 = vmatprep.subr.bf16.mxu0 0
      %1957 = vmatpush1.bf16.msra.mxu0 %v1933
      %1958 = vmatprep.subr.bf16.mxu0 0
      %1959 = vmatpush1.bf16.msra.mxu0 0
      %1960 = vmatprep.subr.bf16.mxu0 0
      %1961 = vmatpush1.bf16.msra.mxu0 0
      %1962 = vmatprep.subr.bf16.mxu0 0
      %1963 = vmatpush1.bf16.msra.mxu0 0
      %1964 = vmatprep.subr.bf16.mxu0 0
      %1965 = vmatpush1.bf16.msra.mxu0 0
      %1966 = vmatprep.subr.bf16.mxu0 0
      %1967 = vmatpush1.bf16.msra.mxu0 0
      %1968 = vmatprep.subr.bf16.mxu0 0
      %1969 = vmatpush1.bf16.msra.mxu0 0
      %1970 = vmatprep.subr.bf16.mxu0 0
      %1971 = vmatpush1.bf16.msra.mxu0 0
      %1972 = vmatprep.subr.bf16.mxu0 0
      %1973 = vmatpush1.bf16.msra.mxu0 0
      %1974 = vmatprep.mubr.bf16.mxu0 0
      %1975 = vmatmul.mubr.bf16.gmra.mrb[0].mxu0 %v1731
      %v1976 = vpop.f32.mrb[0].mxu0
      %v1977 = vadd.f32 %v1892, %v1976
      %v1978 = vpop.f32.mrb[0].mxu0
      %v1979 = vpop.f32.mrb[0].mxu0
      %v1980 = vadd.f32 %v1892, %v1979
      %v1981 = vpop.f32.mrb[0].mxu0
      %1982 = vmatprep.mubr.bf16.mxu0 0
      %1983 = vmatmul.mubr.bf16.gmra.mrb[0].mxu0 %v1732
      %v1984 = vpop.f32.mrb[0].mxu0
      %v1985 = vadd.f32 %v1892, %v1984
      %v1986 = vpop.f32.mrb[0].mxu0
      %v1987 = vpop.f32.mrb[0].mxu0
      %v1988 = vadd.f32 %v1892, %v1987
      %v1989 = vpop.f32.mrb[0].mxu0
      %1990 = vmatprep.mubr.bf16.mxu0 0
      %1991 = vmatmul.mubr.bf16.gmra.mrb[0].mxu0 %v1733
      %v1992 = vpop.f32.mrb[0].mxu0
      %v1993 = vadd.f32 %v1892, %v1992
      %v1994 = vpop.f32.mrb[0].mxu0
      %v1995 = vpop.f32.mrb[0].mxu0
      %v1996 = vadd.f32 %v1892, %v1995
      %v1997 = vpop.f32.mrb[0].mxu0
      %1998 = vmatprep.mubr.bf16.mxu0 0
      %1999 = vmatmul.mubr.bf16.gmra.mrb[0].mxu0 %v1734
      %v2000 = vpop.f32.mrb[0].mxu0
      %v2001 = vadd.f32 %v1892, %v2000
      %v2002 = vpop.f32.mrb[0].mxu0
      %v2003 = vpop.f32.mrb[0].mxu0
      %v2004 = vadd.f32 %v1892, %v2003
      %v2005 = vpop.f32.mrb[0].mxu0
      %2006 = vdwg.mxu0
      %v2007 = vadd.f32 %v1841, %v1844
      %v2008 = vadd.f32 %v2007, %v1849
      %v2009 = vadd.f32 %v2008, %v1852
      %v2010 = vadd.f32 %v2009, %v1857
      %v2011 = vadd.f32 %v2010, %v1860
      %v2012 = vadd.f32 %v2011, %v1865
      %v2013 = vadd.f32 %v2012, %v1868
      %v2014 = vrot.slane %v2013, 4
      %v2015 = vadd.f32 %v2013, %v2014
      %v2016 = vrot.slane %v2015, 2
      %v2017 = vadd.f32 %v2015, %v2016
      %v2018 = vrot.slane %v2017, 1
      %v2019 = vadd.f32 %v2017, %v2018
      %v2020 = vmul.f32 %v1841, %v1841
      %v2021 = vmul.f32 %v1844, %v1844
      %v2022 = vmul.f32 %v1849, %v1849
      %v2023 = vmul.f32 %v1852, %v1852
      %v2024 = vmul.f32 %v1857, %v1857
      %v2025 = vmul.f32 %v1860, %v1860
      %v2026 = vmul.f32 %v1865, %v1865
      %v2027 = vmul.f32 %v1868, %v1868
      %v2028 = vadd.f32 %v2020, %v2021
      %v2029 = vadd.f32 %v2028, %v2022
      %v2030 = vadd.f32 %v2029, %v2023
      %v2031 = vadd.f32 %v2030, %v2024
      %v2032 = vadd.f32 %v2031, %v2025
      %v2033 = vadd.f32 %v2032, %v2026
      %v2034 = vadd.f32 %v2033, %v2027
      %v2035 = vrot.slane %v2034, 4
      %v2036 = vadd.f32 %v2034, %v2035
      %v2037 = vrot.slane %v2036, 2
      %v2038 = vadd.f32 %v2036, %v2037
      %v2039 = vrot.slane %v2038, 1
      %v2040 = vadd.f32 %v2038, %v2039
      %v2041 = vadd.f32 %v1977, %v1980
      %v2042 = vadd.f32 %v2041, %v1985
      %v2043 = vadd.f32 %v2042, %v1988
      %v2044 = vadd.f32 %v2043, %v1993
      %v2045 = vadd.f32 %v2044, %v1996
      %v2046 = vadd.f32 %v2045, %v2001
      %v2047 = vadd.f32 %v2046, %v2004
      %v2048 = vrot.slane %v2047, 4
      %v2049 = vadd.f32 %v2047, %v2048
      %v2050 = vrot.slane %v2049, 2
      %v2051 = vadd.f32 %v2049, %v2050
      %v2052 = vrot.slane %v2051, 1
      %v2053 = vadd.f32 %v2051, %v2052
      %v2054 = vmul.f32 %v1977, %v1977
      %v2055 = vmul.f32 %v1980, %v1980
      %v2056 = vmul.f32 %v1985, %v1985
      %v2057 = vmul.f32 %v1988, %v1988
      %v2058 = vmul.f32 %v1993, %v1993
      %v2059 = vmul.f32 %v1996, %v1996
      %v2060 = vmul.f32 %v2001, %v2001
      %v2061 = vmul.f32 %v2004, %v2004
      %v2062 = vadd.f32 %v2054, %v2055
      %v2063 = vadd.f32 %v2062, %v2056
      %v2064 = vadd.f32 %v2063, %v2057
      %v2065 = vadd.f32 %v2064, %v2058
      %v2066 = vadd.f32 %v2065, %v2059
      %v2067 = vadd.f32 %v2066, %v2060
      %v2068 = vadd.f32 %v2067, %v2061
      %v2069 = vrot.slane %v2068, 4
      %v2070 = vadd.f32 %v2068, %v2069
      %v2071 = vrot.slane %v2070, 2
      %v2072 = vadd.f32 %v2070, %v2071
      %v2073 = vrot.slane %v2072, 1
      %v2074 = vadd.f32 %v2072, %v2073
      %v2075 = vsel %vm1147, %v2019, %v2040
      %vm2076 = vcmask 1041408
      %v2077 = vsel %vm2076, %v2075, %v2053
      %vm2078 = vcmask 1042432
      %v2079 = vsel %vm2078, %v2077, %v2074
      %p2080 = scmp.eq.s32.totalorder %s26, 0
      // Predicated region
      $region53: #{attention_block_forward.4} parent=51 // pred_check
        %p2081 = pneg %p2080
      $region54: #{attention_block_forward.4} parent=51 // pred_check_branch
        %2083 = sbr.rel (%p2081) target = $region56
      $region55: #{attention_block_forward.4} parent=51 // pred_region
        %2084 = vst [vmem:[%s423] sm:$0xf] 0.0
      $region56: #{attention_block_forward.4} parent=51 // pred_fallthru
        _
      %v2085 = vld [vmem:[%s423] sm:$0xf]
      %v2086 = vadd.f32 %v2085, %v2079
      %2087 = vst [vmem:[%s423] sm:$0xf] %v2086
      %s2088 = smul.u32 4, %s26
      %p2089 = scmp.lt.s32.totalorder %s25, 1
      %s2090 = scalar_select %p2089, %s25, 1
      %p2091 = scmp.lt.s32.totalorder %s2088, 15
      %s2092 = scalar_select %p2091, %s2088, 15
      %s2093 = smul.addr %s2092, 2
      %s2094 = smul.addr %s2090, 32
      %s2095 = sadd.s32 %s2093, %s2094
      %s2096 = smul.addr %s2095, 8
      %s2097 = scalar_lea.vmem %s8, %s2096
      %p2098 = scmp.lt.s32.totalorder %s25, 1
      %s2099 = scalar_select %p2098, %s25, 1
      %s2100 = smul.addr %s2099, 4
      %s2101 = scalar_lea.vmem %s9, %s2100
      // Predicated region
      $region57: #{attention_block_forward.4} parent=51 // pred_check
        %p2102 = pneg %p235
      $region58: #{attention_block_forward.4} parent=51 // pred_check_branch
        %2104 = sbr.rel (%p2102) target = $region60
      $region59: #{attention_block_forward.4} parent=51 // pred_region
        %s2105 = smul.u32 4, %s26
      $region60: #{attention_block_forward.4} parent=51 // pred_fallthru
        _
      // Predicated region
      $region61: #{attention_block_forward.4} parent=51 // pred_check
        %p2106 = pneg %p261
      $region62: #{attention_block_forward.4} parent=51 // pred_check_branch
        %2108 = sbr.rel (%p2106) target = $region64
      $region63: #{attention_block_forward.4} parent=51 // pred_region
        _
      $region64: #{attention_block_forward.4} parent=51 // pred_fallthru
        _
    $region52: #{attention_block_forward.4} parent=5 // pred_fallthru
      _
    %p2109 = scmp.le.s32.totalorder 2, %s16
    // Predicated region
    $region65: #{attention_block_forward.4} parent=5 // pred_check
      %p2110 = pneg %p2109
    $region66: #{attention_block_forward.4} parent=5 // pred_check_branch
      %2112 = sbr.rel (%p2110) target = $region68
    $region67: #{attention_block_forward.4} parent=5 // pred_region
      %s2113 = ssub.s32 %s16, 2
      // Predicated region
      $region69: #{attention_block_forward.4} parent=67 // pred_check
        %p2114 = pneg %p241
      $region70: #{attention_block_forward.4} parent=67 // pred_check_branch
        %2116 = sbr.rel (%p2114) target = $region72
      $region71: #{attention_block_forward.4} parent=67 // pred_region
        %s2117 = smul.u32 4, %s28
        %p2118 = scmp.lt.s32.totalorder %s27, 1
        %s2119 = scalar_select %p2118, %s27, 1
        %p2120 = scmp.lt.s32.totalorder %s2117, 15
        %s2121 = scalar_select %p2120, %s2117, 15
        %s2122 = smul.addr %s2121, 2
        %s2123 = smul.addr %s2119, 32
        %s2124 = sadd.s32 %s2122, %s2123
        %s2125 = smul.addr %s2124, 8
        %s2126 = scalar_lea.vmem %s8, %s2125
      $region72: #{attention_block_forward.4} parent=67 // pred_fallthru
        _
      // Predicated region
      $region73: #{attention_block_forward.4} parent=67 // pred_check
        %p2127 = pneg %p267
      $region74: #{attention_block_forward.4} parent=67 // pred_check_branch
        %2129 = sbr.rel (%p2127) target = $region76
      $region75: #{attention_block_forward.4} parent=67 // pred_region
        %p2130 = scmp.lt.s32.totalorder %s27, 1
        %s2131 = scalar_select %p2130, %s27, 1
        %s2132 = smul.addr %s2131, 4
        %s2133 = scalar_lea.vmem %s9, %s2132
      $region76: #{attention_block_forward.4} parent=67 // pred_fallthru
        _
    $region68: #{attention_block_forward.4} parent=5 // pred_fallthru
      _
  $region6: #{attention_block_forward.4} parent=0 // loop_footer
    %s20 = sadd.s32 1, %s16
  $region7: #{attention_block_forward.4} parent=0 // loop_footer_branch
    %15 = sbr.rel target = $region3
  $region8: #{attention_block_forward.4} parent=0 // loop_exit
    _

// kernel: attention_block_forward.6
$region0: #{attention_block_forward.6}
  #allocation0 [shape = 'u32[]', space=smem, size = 0x4, offset = 0x4, fixed_abs, tag = 'smem constant byte address 0x4 - core index']
  #allocation1 [shape = 'u32[144,128]{1,0:T(1,128)}', space=vmem, size = 0x12000, scoped, tag = 'internal scratch']
  %s0 = inlined_call_operand.vmem [shape: f32[2,16,16,128], index: 0, kind: input, shape index: {}, may-alias: {0,1,2}]
  %s1 = inlined_call_operand.vmem [shape: f32[2,16,16,128], index: 1, kind: input, shape index: {}, may-alias: {0,1,2}]
  %s2 = inlined_call_operand.vmem [shape: f32[2,16,16,128], index: 2, kind: input, shape index: {}, may-alias: {0,1,2}]
  %s3 = inlined_call_operand.vmem [shape: f32[2,128], index: 3, kind: input, shape index: {}]
  %s4 = inlined_call_operand.vmem [shape: bf16[1152,128], index: 4, kind: input, shape index: {}]
  %s5 = inlined_call_operand.vmem [shape: f32[1,128], index: 5, kind: input, shape index: {}]
  %s6 = inlined_call_operand.vmem [shape: f32[2,16,16,128], index: 6, kind: output, shape index: {0}]
  %s7 = inlined_call_operand.vmem [shape: f32[2,2,128], index: 7, kind: output, shape index: {1}]
  %8 = xla_tuple %s6, %s7
  %s9 = sld [smem:[#allocation0]]
  $region69: #{attention_block_forward.6} parent=0
    _
  %s11 = ssub.s32 1, %s9
  %s12 = scalar_select 0, %s11, %s9
  loop: start=0, step=1, limit=10
  $region2: #{attention_block_forward.6} parent=0 // loop_pre_header
    _
  $region3: #{attention_block_forward.6} parent=0 // loop_header
    %s14 = sphi 0, %s18
    %p15 = scmp.ge.s32.totalorder %s14, 10
    %s21 = sphi 0, %s33
    %s22 = sphi 0, %s29
    %s23 = sphi 0, %s21
    %s24 = sphi 0, %s22
    %s25 = sphi 0, %s23
    %s26 = sphi 0, %s24
    %s38 = sphi 0, %s40
    %s41 = sphi 0, %s38
    %s42 = sphi 0, %s41
    %s58 = sphi 0, %s42
    %s74 = sphi 0, %s76
    %s77 = sphi 0, %s74
    %s78 = sphi 0, %s77
    %s94 = sphi 0, %s78
    %s110 = sphi 0, %s112
    %s113 = sphi 0, %s110
    %s114 = sphi 0, %s113
    %s130 = sphi 0, %s114
    %s134 = sphi 0, %s134
    %s136 = sphi 0, %s134
    %s137 = sphi 0, %s136
    %s151 = sphi 0, %s137
    %s155 = sphi 0, %s155
    %s157 = sphi 0, %s155
    %s158 = sphi 0, %s157
    %s172 = sphi 0, %s158
    %s176 = sphi 0, %s176
    %s178 = sphi 0, %s176
    %s179 = sphi 0, %s178
    %s193 = sphi 0, %s179
    %s201 = sphi 0, %s203
    %s204 = sphi 0, %s201
    %s205 = sphi 0, %s204
    %s221 = sphi 0, %s205
    %s227 = sphi 0, %s229
    %s230 = sphi 0, %s227
    %s231 = sphi 0, %s230
    %s247 = sphi 0, %s231
  $region4: #{attention_block_forward.6} parent=0 // loop_header_branch
    %17 = sbr.rel (%p15) target = $region8
  $region5: #{attention_block_forward.6} parent=0 // loop_body
    %s19 = ssub.s32 %s14, 1
    %s20 = ssub.s32 %s14, 2
    %s27 = sadd.s32 1, %s22
    %p28 = scmp.ge.s32.totalorder %s27, 4
    %s29 = scalar_select %p28, 0, %s27
    %s30 = sadd.s32 1, %s21
    %s31 = scalar_select %p28, %s30, %s21
    %p32 = scmp.ge.s32.totalorder %s31, 2
    %s33 = scalar_select %p32, 0, %s31
    %s34 = ssub.s32 %s21, %s33
    %s35 = ssub.s32 %s22, %s29
    %s36 = sor.u32 %s34, %s35
    %p37 = scmp.eq.s32.totalorder %s36, 0
    %s39 = sadd.s32 %s38, 1
    %s40 = scalar_select %p37, %s38, %s39
    %p43 = pneg %p37
    %p44 = scmp.eq.s32.totalorder %s14, 7
    %p45 = por %p43, %p44
    %p46 = scmp.ne.s32.totalorder %s38, %s41
    %p47 = scmp.eq.s32.totalorder %s14, 0
    %p48 = por %p46, %p47
    %p49 = scmp.ne.s32.totalorder %s38, %s41
    %p50 = scmp.eq.s32.totalorder %s19, 7
    %p51 = por %p49, %p50
    %p52 = scmp.ne.s32.totalorder %s41, %s42
    %p53 = scmp.eq.s32.totalorder %s19, 0
    %p54 = por %p52, %p53
    %p55 = scmp.ne.s32.totalorder %s41, %s42
    %p56 = scmp.eq.s32.totalorder %s20, 7
    %p57 = por %p55, %p56
    %p59 = scmp.ne.s32.totalorder %s42, %s58
    %p60 = scmp.eq.s32.totalorder %s20, 0
    %p61 = por %p59, %p60
    %s62 = smul.u32 %s22, 4
    %s63 = ssub.s32 %s62, 1
    %p64 = scmp.gt.s32.totalorder %s63, 0
    %s65 = scalar_select %p64, %s63, 0
    %s66 = smul.u32 %s29, 4
    %s67 = ssub.s32 %s66, 1
    %p68 = scmp.gt.s32.totalorder %s67, 0
    %s69 = scalar_select %p68, %s67, 0
    %s70 = ssub.s32 %s21, %s33
    %s71 = ssub.s32 %s65, %s69
    %s72 = sor.u32 %s70, %s71
    %p73 = scmp.eq.s32.totalorder %s72, 0
    %s75 = sadd.s32 %s74, 1
    %s76 = scalar_select %p73, %s74, %s75
    %p79 = pneg %p73
    %p80 = scmp.eq.s32.totalorder %s14, 7
    %p81 = por %p79, %p80
    %p82 = scmp.ne.s32.totalorder %s74, %s77
    %p83 = scmp.eq.s32.totalorder %s14, 0
    %p84 = por %p82, %p83
    %p85 = scmp.ne.s32.totalorder %s74, %s77
    %p86 = scmp.eq.s32.totalorder %s19, 7
    %p87 = por %p85, %p86
    %p88 = scmp.ne.s32.totalorder %s77, %s78
    %p89 = scmp.eq.s32.totalorder %s19, 0
    %p90 = por %p88, %p89
    %p91 = scmp.ne.s32.totalorder %s77, %s78
    %p92 = scmp.eq.s32.totalorder %s20, 7
    %p93 = por %p91, %p92
    %p95 = scmp.ne.s32.totalorder %s78, %s94
    %p96 = scmp.eq.s32.totalorder %s20, 0
    %p97 = por %p95, %p96
    %s98 = smul.u32 %s22, 4
    %s99 = sadd.s32 %s98, 4
    %p100 = scmp.lt.s32.totalorder %s99, 15
    %s101 = scalar_select %p100, %s99, 15
    %s102 = smul.u32 %s29, 4
    %s103 = sadd.s32 %s102, 4
    %p104 = scmp.lt.s32.totalorder %s103, 15
    %s105 = scalar_select %p104, %s103, 15
    %s106 = ssub.s32 %s21, %s33
    %s107 = ssub.s32 %s101, %s105
    %s108 = sor.u32 %s106, %s107
    %p109 = scmp.eq.s32.totalorder %s108, 0
    %s111 = sadd.s32 %s110, 1
    %s112 = scalar_select %p109, %s110, %s111
    %p115 = pneg %p109
    %p116 = scmp.eq.s32.totalorder %s14, 7
    %p117 = por %p115, %p116
    %p118 = scmp.ne.s32.totalorder %s110, %s113
    %p119 = scmp.eq.s32.totalorder %s14, 0
    %p120 = por %p118, %p119
    %p121 = scmp.ne.s32.totalorder %s110, %s113
    %p122 = scmp.eq.s32.totalorder %s19, 7
    %p123 = por %p121, %p122
    %p124 = scmp.ne.s32.totalorder %s113, %s114
    %p125 = scmp.eq.s32.totalorder %s19, 0
    %p126 = por %p124, %p125
    %p127 = scmp.ne.s32.totalorder %s113, %s114
    %p128 = scmp.eq.s32.totalorder %s20, 7
    %p129 = por %p127, %p128
    %p131 = scmp.ne.s32.totalorder %s114, %s130
    %p132 = scmp.eq.s32.totalorder %s20, 0
    %p133 = por %p131, %p132
    %s135 = sadd.s32 %s134, 1
    %p138 = scmp.eq.s32.totalorder %s14, 7
    %p139 = scmp.ne.s32.totalorder %s134, %s136
    %p140 = scmp.eq.s32.totalorder %s14, 0
    %p141 = por %p139, %p140
    %p142 = scmp.ne.s32.totalorder %s134, %s136
    %p143 = scmp.eq.s32.totalorder %s19, 7
    %p144 = por %p142, %p143
    %p145 = scmp.ne.s32.totalorder %s136, %s137
    %p146 = scmp.eq.s32.totalorder %s19, 0
    %p147 = por %p145, %p146
    %p148 = scmp.ne.s32.totalorder %s136, %s137
    %p149 = scmp.eq.s32.totalorder %s20, 7
    %p150 = por %p148, %p149
    %p152 = scmp.ne.s32.totalorder %s137, %s151
    %p153 = scmp.eq.s32.totalorder %s20, 0
    %p154 = por %p152, %p153
    %s156 = sadd.s32 %s155, 1
    %p159 = scmp.eq.s32.totalorder %s14, 7
    %p160 = scmp.ne.s32.totalorder %s155, %s157
    %p161 = scmp.eq.s32.totalorder %s14, 0
    %p162 = por %p160, %p161
    %p163 = scmp.ne.s32.totalorder %s155, %s157
    %p164 = scmp.eq.s32.totalorder %s19, 7
    %p165 = por %p163, %p164
    %p166 = scmp.ne.s32.totalorder %s157, %s158
    %p167 = scmp.eq.s32.totalorder %s19, 0
    %p168 = por %p166, %p167
    %p169 = scmp.ne.s32.totalorder %s157, %s158
    %p170 = scmp.eq.s32.totalorder %s20, 7
    %p171 = por %p169, %p170
    %p173 = scmp.ne.s32.totalorder %s158, %s172
    %p174 = scmp.eq.s32.totalorder %s20, 0
    %p175 = por %p173, %p174
    %s177 = sadd.s32 %s176, 1
    %p180 = scmp.eq.s32.totalorder %s14, 7
    %p181 = scmp.ne.s32.totalorder %s176, %s178
    %p182 = scmp.eq.s32.totalorder %s14, 0
    %p183 = por %p181, %p182
    %p184 = scmp.ne.s32.totalorder %s176, %s178
    %p185 = scmp.eq.s32.totalorder %s19, 7
    %p186 = por %p184, %p185
    %p187 = scmp.ne.s32.totalorder %s178, %s179
    %p188 = scmp.eq.s32.totalorder %s19, 0
    %p189 = por %p187, %p188
    %p190 = scmp.ne.s32.totalorder %s178, %s179
    %p191 = scmp.eq.s32.totalorder %s20, 7
    %p192 = por %p190, %p191
    %p194 = scmp.ne.s32.totalorder %s179, %s193
    %p195 = scmp.eq.s32.totalorder %s20, 0
    %p196 = por %p194, %p195
    %s197 = ssub.s32 %s21, %s33
    %s198 = ssub.s32 %s22, %s29
    %s199 = sor.u32 %s197, %s198
    %p200 = scmp.eq.s32.totalorder %s199, 0
    %s202 = sadd.s32 %s201, 1
    %s203 = scalar_select %p200, %s201, %s202
    %p206 = pneg %p200
    %p207 = scmp.eq.s32.totalorder %s14, 7
    %p208 = por %p206, %p207
    %p209 = scmp.ne.s32.totalorder %s201, %s204
    %p210 = scmp.eq.s32.totalorder %s14, 0
    %p211 = por %p209, %p210
    %p212 = scmp.ne.s32.totalorder %s201, %s204
    %p213 = scmp.eq.s32.totalorder %s19, 7
    %p214 = por %p212, %p213
    %p215 = scmp.ne.s32.totalorder %s204, %s205
    %p216 = scmp.eq.s32.totalorder %s19, 0
    %p217 = por %p215, %p216
    %p218 = scmp.ne.s32.totalorder %s204, %s205
    %p219 = scmp.eq.s32.totalorder %s20, 7
    %p220 = por %p218, %p219
    %p222 = scmp.ne.s32.totalorder %s205, %s221
    %p223 = scmp.eq.s32.totalorder %s20, 0
    %p224 = por %p222, %p223
    %s225 = ssub.s32 %s21, %s33
    %p226 = scmp.eq.s32.totalorder %s225, 0
    %s228 = sadd.s32 %s227, 1
    %s229 = scalar_select %p226, %s227, %s228
    %p232 = pneg %p226
    %p233 = scmp.eq.s32.totalorder %s14, 7
    %p234 = por %p232, %p233
    %p235 = scmp.ne.s32.totalorder %s227, %s230
    %p236 = scmp.eq.s32.totalorder %s14, 0
    %p237 = por %p235, %p236
    %p238 = scmp.ne.s32.totalorder %s227, %s230
    %p239 = scmp.eq.s32.totalorder %s19, 7
    %p240 = por %p238, %p239
    %p241 = scmp.ne.s32.totalorder %s230, %s231
    %p242 = scmp.eq.s32.totalorder %s19, 0
    %p243 = por %p241, %p242
    %p244 = scmp.ne.s32.totalorder %s230, %s231
    %p245 = scmp.eq.s32.totalorder %s20, 7
    %p246 = por %p244, %p245
    %p248 = scmp.ne.s32.totalorder %s231, %s247
    %p249 = scmp.eq.s32.totalorder %s20, 0
    %p250 = por %p248, %p249
    %p251 = scmp.le.s32.totalorder 1, %s14
    %p252 = scmp.lt.s32.totalorder %s14, 9
    %p253 = pnand %p251, %p252
    %p254 = pneg %p253
    // Predicated region
    $region9: #{attention_block_forward.6} parent=5 // pred_check
      _
    $region10: #{attention_block_forward.6} parent=5 // pred_check_branch
      %256 = sbr.rel (%p253) target = $region12
    $region11: #{attention_block_forward.6} parent=5 // pred_region
      %s257 = ssub.s32 %s14, 1
      // Predicated region
      $region13: #{attention_block_forward.6} parent=11 // pred_check
        %p258 = pneg %p147
      $region14: #{attention_block_forward.6} parent=11 // pred_check_branch
        %260 = sbr.rel (%p258) target = $region16
      $region15: #{attention_block_forward.6} parent=11 // pred_region
        _
      $region16: #{attention_block_forward.6} parent=11 // pred_fallthru
        _
      // Predicated region
      $region17: #{attention_block_forward.6} parent=11 // pred_check
        %p261 = pneg %p168
      $region18: #{attention_block_forward.6} parent=11 // pred_check_branch
        %263 = sbr.rel (%p261) target = $region20
      $region19: #{attention_block_forward.6} parent=11 // pred_region
        _
      $region20: #{attention_block_forward.6} parent=11 // pred_fallthru
        _
      // Predicated region
      $region21: #{attention_block_forward.6} parent=11 // pred_check
        %p264 = pneg %p189
      $region22: #{attention_block_forward.6} parent=11 // pred_check_branch
        %266 = sbr.rel (%p264) target = $region24
      $region23: #{attention_block_forward.6} parent=11 // pred_region
        _
      $region24: #{attention_block_forward.6} parent=11 // pred_fallthru
        _
    $region12: #{attention_block_forward.6} parent=5 // pred_fallthru
      _
    %p267 = scmp.lt.s32.totalorder %s14, 8
    // Predicated region
    $region25: #{attention_block_forward.6} parent=5 // pred_check
      %p268 = pneg %p267
    $region26: #{attention_block_forward.6} parent=5 // pred_check_branch
      %270 = sbr.rel (%p268) target = $region28
    $region27: #{attention_block_forward.6} parent=5 // pred_region
      // Predicated region
      $region29: #{attention_block_forward.6} parent=27 // pred_check
        %p271 = pneg %p48
      $region30: #{attention_block_forward.6} parent=27 // pred_check_branch
        %273 = sbr.rel (%p271) target = $region32
      $region31: #{attention_block_forward.6} parent=27 // pred_region
        %s274 = smul.u32 4, %s22
        %p275 = scmp.lt.s32.totalorder %s21, 1
        %s276 = scalar_select %p275, %s21, 1
        %p277 = scmp.lt.s32.totalorder %s274, 15
        %s278 = scalar_select %p277, %s274, 15
        %s279 = smul.addr %s278, 2
        %s280 = smul.addr %s276, 32
        %s281 = sadd.s32 %s279, %s280
        %s282 = smul.addr %s281, 8
        %s283 = scalar_lea.vmem %s0, %s282
        %s284 = smul.u32 4, %s22
      $region32: #{attention_block_forward.6} parent=27 // pred_fallthru
        _
      // Predicated region
      $region33: #{attention_block_forward.6} parent=27 // pred_check
        %p285 = pneg %p84
      $region34: #{attention_block_forward.6} parent=27 // pred_check_branch
        %287 = sbr.rel (%p285) target = $region36
      $region35: #{attention_block_forward.6} parent=27 // pred_region
        %s288 = smul.u32 %s22, 4
        %s289 = ssub.s32 %s288, 1
        %p290 = scmp.gt.s32.totalorder %s289, 0
        %s291 = scalar_select %p290, %s289, 0
        %p292 = scmp.lt.s32.totalorder %s21, 1
        %s293 = scalar_select %p292, %s21, 1
        %p294 = scmp.lt.s32.totalorder %s291, 15
        %s295 = scalar_select %p294, %s291, 15
        %s296 = smul.addr %s295, 2
        %s297 = smul.addr %s293, 32
        %s298 = sadd.s32 %s296, %s297
        %s299 = smul.addr %s298, 8
        %s300 = scalar_lea.vmem %s1, %s299
        %s301 = smul.u32 %s22, 4
        %s302 = ssub.s32 %s301, 1
        %p303 = scmp.gt.s32.totalorder %s302, 0
        %s304 = scalar_select %p303, %s302, 0
      $region36: #{attention_block_forward.6} parent=27 // pred_fallthru
        _
      // Predicated region
      $region37: #{attention_block_forward.6} parent=27 // pred_check
        %p305 = pneg %p120
      $region38: #{attention_block_forward.6} parent=27 // pred_check_branch
        %307 = sbr.rel (%p305) target = $region40
      $region39: #{attention_block_forward.6} parent=27 // pred_region
        %s308 = smul.u32 %s22, 4
        %s309 = sadd.s32 %s308, 4
        %p310 = scmp.lt.s32.totalorder %s309, 15
        %s311 = scalar_select %p310, %s309, 15
        %p312 = scmp.lt.s32.totalorder %s21, 1
        %s313 = scalar_select %p312, %s21, 1
        %p314 = scmp.lt.s32.totalorder %s311, 15
        %s315 = scalar_select %p314, %s311, 15
        %s316 = smul.addr %s315, 2
        %s317 = smul.addr %s313, 32
        %s318 = sadd.s32 %s316, %s317
        %s319 = smul.addr %s318, 8
        %s320 = scalar_lea.vmem %s2, %s319
        %s321 = smul.u32 %s22, 4
        %s322 = sadd.s32 %s321, 4
        %p323 = scmp.lt.s32.totalorder %s322, 15
        %s324 = scalar_select %p323, %s322, 15
      $region40: #{attention_block_forward.6} parent=27 // pred_fallthru
        _
    $region28: #{attention_block_forward.6} parent=5 // pred_fallthru
      _
    %p325 = scmp.le.s32.totalorder 1, %s14
    %p326 = scmp.lt.s32.totalorder %s14, 9
    %p327 = pnand %p325, %p326
    %p328 = pneg %p327
    // Predicated region
    $region41: #{attention_block_forward.6} parent=5 // pred_check
      _
    $region42: #{attention_block_forward.6} parent=5 // pred_check_branch
      %330 = sbr.rel (%p327) target = $region44
    $region43: #{attention_block_forward.6} parent=5 // pred_region
      %s331 = ssub.s32 %s14, 1
      %s332 = smul.u32 4, %s24
      %p333 = scmp.lt.s32.totalorder %s23, 1
      %s334 = scalar_select %p333, %s23, 1
      %p335 = scmp.lt.s32.totalorder %s332, 15
      %s336 = scalar_select %p335, %s332, 15
      %s337 = smul.addr %s336, 2
      %s338 = smul.addr %s334, 32
      %s339 = sadd.s32 %s337, %s338
      %s340 = smul.addr %s339, 8
      %s341 = scalar_lea.vmem %s0, %s340
      %p342 = pneg %p54
      %p343 = pneg %p51
      %s344 = smul.u32 %s24, 4
      %s345 = ssub.s32 %s344, 1
      %p346 = scmp.gt.s32.totalorder %s345, 0
      %s347 = scalar_select %p346, %s345, 0
      %p348 = scmp.lt.s32.totalorder %s23, 1
      %s349 = scalar_select %p348, %s23, 1
      %p350 = scmp.lt.s32.totalorder %s347, 15
      %s351 = scalar_select %p350, %s347, 15
      %s352 = smul.addr %s351, 2
      %s353 = smul.addr %s349, 32
      %s354 = sadd.s32 %s352, %s353
      %s355 = smul.addr %s354, 8
      %s356 = scalar_lea.vmem %s1, %s355
      %p357 = pneg %p90
      %p358 = pneg %p87
      %s359 = smul.u32 %s24, 4
      %s360 = sadd.s32 %s359, 4
      %p361 = scmp.lt.s32.totalorder %s360, 15
      %s362 = scalar_select %p361, %s360, 15
      %p363 = scmp.lt.s32.totalorder %s23, 1
      %s364 = scalar_select %p363, %s23, 1
      %p365 = scmp.lt.s32.totalorder %s362, 15
      %s366 = scalar_select %p365, %s362, 15
      %s367 = smul.addr %s366, 2
      %s368 = smul.addr %s364, 32
      %s369 = sadd.s32 %s367, %s368
      %s370 = smul.addr %s369, 8
      %s371 = scalar_lea.vmem %s2, %s370
      %p372 = pneg %p126
      %p373 = pneg %p123
      %p374 = pneg %p147
      %p375 = pneg %p144
      %p376 = pneg %p168
      %p377 = pneg %p165
      %p378 = pneg %p189
      %p379 = pneg %p186
      %p380 = pneg %p217
      %p381 = pneg %p214
      %s382 = smul.u32 4, %s24
      %p383 = scmp.lt.s32.totalorder %s23, 1
      %s384 = scalar_select %p383, %s23, 1
      %p385 = scmp.lt.s32.totalorder %s382, 15
      %s386 = scalar_select %p385, %s382, 15
      %s387 = smul.addr %s386, 2
      %s388 = smul.addr %s384, 32
      %s389 = sadd.s32 %s387, %s388
      %s390 = smul.addr %s389, 8
      %s391 = scalar_lea.vmem %s6, %s390
      %p392 = pneg %p243
      %p393 = pneg %p240
      %p394 = scmp.lt.s32.totalorder %s23, 1
      %s395 = scalar_select %p394, %s23, 1
      %s396 = smul.addr %s395, 2
      %s397 = scalar_lea.vmem %s7, %s396
      %s398 = smul.u32 4, %s24
      %p399 = scmp.lt.s32.totalorder %s23, 1
      %s400 = scalar_select %p399, %s23, 1
      %p401 = scmp.lt.s32.totalorder %s398, 15
      %s402 = scalar_select %p401, %s398, 15
      %s403 = smul.addr %s402, 2
      %s404 = smul.addr %s400, 32
      %s405 = sadd.s32 %s403, %s404
      %s406 = smul.addr %s405, 8
      %s407 = scalar_lea.vmem %s0, %s406
      %s408 = smul.u32 4, %s24
      %s409 = smul.u32 %s24, 4
      %s410 = ssub.s32 %s409, 1
      %p411 = scmp.gt.s32.totalorder %s410, 0
      %s412 = scalar_select %p411, %s410, 0
      %p413 = scmp.lt.s32.totalorder %s23, 1
      %s414 = scalar_select %p413, %s23, 1
      %p415 = scmp.lt.s32.totalorder %s412, 15
      %s416 = scalar_select %p415, %s412, 15
      %s417 = smul.addr %s416, 2
      %s418 = smul.addr %s414, 32
      %s419 = sadd.s32 %s417, %s418
      %s420 = smul.addr %s419, 8
      %s421 = scalar_lea.vmem %s1, %s420
      %s422 = smul.u32 %s24, 4
      %s423 = ssub.s32 %s422, 1
      %p424 = scmp.gt.s32.totalorder %s423, 0
      %s425 = scalar_select %p424, %s423, 0
      %s426 = smul.u32 %s24, 4
      %s427 = sadd.s32 %s426, 4
      %p428 = scmp.lt.s32.totalorder %s427, 15
      %s429 = scalar_select %p428, %s427, 15
      %p430 = scmp.lt.s32.totalorder %s23, 1
      %s431 = scalar_select %p430, %s23, 1
      %p432 = scmp.lt.s32.totalorder %s429, 15
      %s433 = scalar_select %p432, %s429, 15
      %s434 = smul.addr %s433, 2
      %s435 = smul.addr %s431, 32
      %s436 = sadd.s32 %s434, %s435
      %s437 = smul.addr %s436, 8
      %s438 = scalar_lea.vmem %s2, %s437
      %s439 = smul.u32 %s24, 4
      %s440 = sadd.s32 %s439, 4
      %p441 = scmp.lt.s32.totalorder %s440, 15
      %s442 = scalar_select %p441, %s440, 15
      %s443 = smul.u32 4, %s24
      %p444 = scmp.lt.s32.totalorder %s23, 1
      %s445 = scalar_select %p444, %s23, 1
      %p446 = scmp.lt.s32.totalorder %s443, 15
      %s447 = scalar_select %p446, %s443, 15
      %s448 = smul.addr %s447, 2
      %s449 = smul.addr %s445, 32
      %s450 = sadd.s32 %s448, %s449
      %s451 = smul.addr %s450, 8
      %s452 = scalar_lea.vmem %s6, %s451
      %s453 = smul.u32 4, %s24
      %p454 = scmp.lt.s32.totalorder %s23, 1
      %s455 = scalar_select %p454, %s23, 1
      %s456 = smul.addr %s455, 2
      %s457 = scalar_lea.vmem %s7, %s456
      %v459 = vld [vmem:[%s3] sm:$0x3]
      %v460 = vld [vmem:[%s421] sm:$0xff]
      %v461 = vld [vmem:[%s421 + $0x8] sm:$0xff]
      %v462 = vld [vmem:[%s407] sm:$0xff]
      %v463 = vld [vmem:[%s407 + $0x8] sm:$0xff]
      %v464 = vld [vmem:[%s407 + $0x10] sm:$0xff]
      %v465 = vld [vmem:[%s407 + $0x18] sm:$0xff]
      %v466 = vld [vmem:[%s407 + $0x20] sm:$0xff]
      %v467 = vld [vmem:[%s407 + $0x28] sm:$0xff]
      %v468 = vld [vmem:[%s407 + $0x30] sm:$0xff]
      %v469 = vld [vmem:[%s407 + $0x38] sm:$0xff]
      %v470 = vld [vmem:[%s438] sm:$0xff]
      %v471 = vld [vmem:[%s438 + $0x8] sm:$0xff]
      %v472 = vlaneseq
      %v473 = vshrl.u32 %v472, 7
      %v474 = vsub.s32 0, %v473
      %v475 = vrot.slane %v459, %v474
      %v476 = vmul.f32 %v460, %v475
      %v477 = vmul.f32 %v461, %v475
      %v478 = vmul.f32 %v462, %v475
      %v479 = vmul.f32 %v463, %v475
      %v480 = vmul.f32 %v464, %v475
      %v481 = vmul.f32 %v465, %v475
      %v482 = vmul.f32 %v466, %v475
      %v483 = vmul.f32 %v467, %v475
      %v484 = vmul.f32 %v468, %v475
      %v485 = vmul.f32 %v469, %v475
      %v486 = vmul.f32 %v470, %v475
      %v487 = vmul.f32 %v471, %v475
      %v488 = vlaneseq
      %v489 = vshrl.u32 %v488, 7
      %v490 = vsub.s32 1, %v489
      %v491 = vrot.slane %v459, %v490
      %v492 = vadd.f32 %v476, %v491
      %v493 = vadd.f32 %v477, %v491
      %v494 = vadd.f32 %v478, %v491
      %v495 = vadd.f32 %v479, %v491
      %v496 = vadd.f32 %v480, %v491
      %v497 = vadd.f32 %v481, %v491
      %v498 = vadd.f32 %v482, %v491
      %v499 = vadd.f32 %v483, %v491
      %v500 = vadd.f32 %v484, %v491
      %v501 = vadd.f32 %v485, %v491
      %v502 = vadd.f32 %v486, %v491
      %v503 = vadd.f32 %v487, %v491
      %p504 = scmp.eq.s32.totalorder %s24, 0
      %s505 = scalar_select %p504, 1, 0
      %v506 = vstv %s505
      %vm507 = vcmp.eq.s32.totalorder %v506, 1
      %p508 = scmp.eq.s32.totalorder %s24, 3
      %s509 = scalar_select %p508, 1, 0
      %v510 = vstv %s509
      %vm511 = vcmp.eq.s32.totalorder %v510, 1
      %v512 = vsel %vm507, 1, 0
      %v513 = vsel %vm511, 1, 0
      %vm514 = vcmp.eq.s32.totalorder %v512, 1
      %vm515 = vcmp.eq.s32.totalorder %v513, 1
      %v516 = vsel %vm514, 0.0, %v492
      %v517 = vsel %vm514, 0.0, %v493
      %v518 = vsel 0, 0.0, %v494
      %v519 = vsel 0, 0.0, %v495
      %v520 = vsel 0, 0.0, %v496
      %v521 = vsel 0, 0.0, %v497
      %v522 = vsel 0, 0.0, %v498
      %v523 = vsel 0, 0.0, %v499
      %v524 = vsel 0, 0.0, %v500
      %v525 = vsel 0, 0.0, %v501
      %v526 = vsel %vm515, 0.0, %v502
      %v527 = vsel %vm515, 0.0, %v503
      %vm540 = vcmask 1040384
      %v541 = vrot.slane %v516, 7
      %v542 = vrot.slane %v517, 7
      %v543 = vsel %vm540, %v541, %v542
      %v544 = vrot.slane %v518, 7
      %v545 = vrot.slane %v519, 7
      %v546 = vsel %vm540, %v544, %v545
      %v547 = vrot.slane %v520, 7
      %v548 = vrot.slane %v521, 7
      %v549 = vsel %vm540, %v547, %v548
      %v550 = vrot.slane %v522, 7
      %v551 = vrot.slane %v523, 7
      %v552 = vsel %vm540, %v550, %v551
      %v553 = vrot.slane %v524, 7
      %v554 = vrot.slane %v525, 7
      %v555 = vsel %vm540, %v553, %v554
      %v556 = vrot.slane %v526, 7
      %v557 = vrot.slane %v527, 7
      %v558 = vsel %vm540, %v556, %v557
      %v577 = vsel %vm540, 0.0, %v541
      %v578 = vsel %vm540, 0.0, %v544
      %v579 = vsel %vm540, 0.0, %v547
      %v580 = vsel %vm540, 0.0, %v550
      %v581 = vsel %vm540, 0.0, %v553
      %v582 = vsel %vm540, 0.0, %v556
      %v583 = vsel %vm540, %v542, 0.0
      %v584 = vsel %vm540, %v545, 0.0
      %v585 = vsel %vm540, %v548, 0.0
      %v586 = vsel %vm540, %v551, 0.0
      %v587 = vsel %vm540, %v554, 0.0
      %v588 = vsel %vm540, %v557, 0.0
      %vm597 = vcmask 1046528
      %v598 = vrot.slane %v577, 1
      %v599 = vrot.slane %v543, 1
      %v600 = vsel %vm597, %v598, %v599
      %v601 = vrot.slane %v583, 1
      %v602 = vsel %vm597, %v599, %v601
      %v603 = vrot.slane %v578, 1
      %v604 = vrot.slane %v546, 1
      %v605 = vsel %vm597, %v603, %v604
      %v606 = vrot.slane %v584, 1
      %v607 = vsel %vm597, %v604, %v606
      %v608 = vrot.slane %v579, 1
      %v609 = vrot.slane %v549, 1
      %v610 = vsel %vm597, %v608, %v609
      %v611 = vrot.slane %v585, 1
      %v612 = vsel %vm597, %v609, %v611
      %v613 = vrot.slane %v580, 1
      %v614 = vrot.slane %v552, 1
      %v615 = vsel %vm597, %v613, %v614
      %v616 = vrot.slane %v586, 1
      %v617 = vsel %vm597, %v614, %v616
      %vm626 = vcmask 1045504
      %v627 = vrot.slane %v577, 2
      %v628 = vrot.slane %v543, 2
      %v629 = vsel %vm626, %v627, %v628
      %v630 = vrot.slane %v583, 2
      %v631 = vsel %vm626, %v628, %v630
      %v632 = vrot.slane %v578, 2
      %v633 = vrot.slane %v546, 2
      %v634 = vsel %vm626, %v632, %v633
      %v635 = vrot.slane %v584, 2
      %v636 = vsel %vm626, %v633, %v635
      %v637 = vrot.slane %v579, 2
      %v638 = vrot.slane %v549, 2
      %v639 = vsel %vm626, %v637, %v638
      %v640 = vrot.slane %v585, 2
      %v641 = vsel %vm626, %v638, %v640
      %v642 = vrot.slane %v580, 2
      %v643 = vrot.slane %v552, 2
      %v644 = vsel %vm626, %v642, %v643
      %v645 = vrot.slane %v586, 2
      %v646 = vsel %vm626, %v643, %v645
      %v657 = vrot.slane %v581, 1
      %v658 = vrot.slane %v555, 1
      %v659 = vsel %vm597, %v657, %v658
      %v660 = vrot.slane %v587, 1
      %v661 = vsel %vm597, %v658, %v660
      %v664 = vrot.slane %v581, 2
      %v665 = vrot.slane %v555, 2
      %v666 = vsel %vm626, %v664, %v665
      %v667 = vrot.slane %v587, 2
      %v668 = vsel %vm626, %v665, %v667
      %v673 = vrot.slane %v582, 1
      %v674 = vrot.slane %v558, 1
      %v675 = vsel %vm597, %v673, %v674
      %v676 = vrot.slane %v588, 1
      %v677 = vsel %vm597, %v674, %v676
      %v680 = vrot.slane %v582, 2
      %v681 = vrot.slane %v558, 2
      %v682 = vsel %vm626, %v680, %v681
      %v683 = vrot.slane %v588, 2
      %v684 = vsel %vm626, %v681, %v683
      %v687 = vpack.c.bf16 %v543, %v577
      %v688 = vpack.c.bf16 %v602, %v600
      %v689 = vpack.c.bf16 %v631, %v629
      %v690 = vpack.c.bf16 %v546, %v578
      %v691 = vpack.c.bf16 %v607, %v605
      %v692 = vpack.c.bf16 %v636, %v634
      %v693 = vpack.c.bf16 %v549, %v579
      %v694 = vpack.c.bf16 %v612, %v610
      %v695 = vpack.c.bf16 %v641, %v639
      %v696 = vpack.c.bf16 %v552, %v580
      %v697 = vpack.c.bf16 %v617, %v615
      %v698 = vpack.c.bf16 %v646, %v644
      %v699 = vpack.c.bf16 %v555, %v581
      %v700 = vpack.c.bf16 %v661, %v659
      %v701 = vpack.c.bf16 %v668, %v666
      %v702 = vpack.c.bf16 %v558, %v582
      %v703 = vpack.c.bf16 %v677, %v675
      %v704 = vpack.c.bf16 %v684, %v682
      %v705 = vld [vmem:[%s4] sm:$0xf]
      %v706 = vld [vmem:[%s4 + $0x4] sm:$0xf]
      %v707 = vld [vmem:[%s4 + $0x8] sm:$0xf]
      %v708 = vld [vmem:[%s4 + $0xc] sm:$0xf]
      %v709 = vld [vmem:[%s4 + $0x10] sm:$0xf]
      %v710 = vld [vmem:[%s4 + $0x14] sm:$0xf]
      %v711 = vld [vmem:[%s4 + $0x18] sm:$0xf]
      %v712 = vld [vmem:[%s4 + $0x1c] sm:$0xf]
      %v713 = vld [vmem:[%s4 + $0x20] sm:$0xf]
      %v714 = vld [vmem:[%s4 + $0x24] sm:$0xf]
      %v715 = vld [vmem:[%s4 + $0x28] sm:$0xf]
      %v716 = vld [vmem:[%s4 + $0x2c] sm:$0xf]
      %v717 = vld [vmem:[%s4 + $0x30] sm:$0xf]
      %v718 = vld [vmem:[%s4 + $0x34] sm:$0xf]
      %v719 = vld [vmem:[%s4 + $0x38] sm:$0xf]
      %v720 = vld [vmem:[%s4 + $0x3c] sm:$0xf]
      %v721 = vld [vmem:[%s4 + $0x40] sm:$0xf]
      %v722 = vld [vmem:[%s4 + $0x44] sm:$0xf]
      %v723 = vld [vmem:[%s4 + $0x48] sm:$0xf]
      %v724 = vld [vmem:[%s4 + $0x4c] sm:$0xf]
      %v725 = vld [vmem:[%s4 + $0x50] sm:$0xf]
      %v726 = vld [vmem:[%s4 + $0x54] sm:$0xf]
      %v727 = vld [vmem:[%s4 + $0x58] sm:$0xf]
      %v728 = vld [vmem:[%s4 + $0x5c] sm:$0xf]
      %v729 = vld [vmem:[%s4 + $0x60] sm:$0xf]
      %v730 = vld [vmem:[%s4 + $0x64] sm:$0xf]
      %v731 = vld [vmem:[%s4 + $0x68] sm:$0xf]
      %v732 = vld [vmem:[%s4 + $0x6c] sm:$0xf]
      %v733 = vld [vmem:[%s4 + $0x70] sm:$0xf]
      %v734 = vld [vmem:[%s4 + $0x74] sm:$0xf]
      %v735 = vld [vmem:[%s4 + $0x78] sm:$0xf]
      %v736 = vld [vmem:[%s4 + $0x7c] sm:$0xf]
      %v737 = vld [vmem:[%s4 + $0x80] sm:$0xf]
      %v738 = vld [vmem:[%s4 + $0x84] sm:$0xf]
      %v739 = vld [vmem:[%s4 + $0x88] sm:$0xf]
      %v740 = vld [vmem:[%s4 + $0x8c] sm:$0xf]
      %v741 = vld [vmem:[%s4 + $0x90] sm:$0xf]
      %v742 = vld [vmem:[%s4 + $0x94] sm:$0xf]
      %v743 = vld [vmem:[%s4 + $0x98] sm:$0xf]
      %v744 = vld [vmem:[%s4 + $0x9c] sm:$0xf]
      %v745 = vld [vmem:[%s4 + $0xa0] sm:$0xf]
      %v746 = vld [vmem:[%s4 + $0xa4] sm:$0xf]
      %v747 = vld [vmem:[%s4 + $0xa8] sm:$0xf]
      %v748 = vld [vmem:[%s4 + $0xac] sm:$0xf]
      %v749 = vld [vmem:[%s4 + $0xb0] sm:$0xf]
      %v750 = vld [vmem:[%s4 + $0xb4] sm:$0xf]
      %v751 = vld [vmem:[%s4 + $0xb8] sm:$0xf]
      %v752 = vld [vmem:[%s4 + $0xbc] sm:$0xf]
      %v753 = vld [vmem:[%s4 + $0xc0] sm:$0xf]
      %v754 = vld [vmem:[%s4 + $0xc4] sm:$0xf]
      %v755 = vld [vmem:[%s4 + $0xc8] sm:$0xf]
      %v756 = vld [vmem:[%s4 + $0xcc] sm:$0xf]
      %v757 = vld [vmem:[%s4 + $0xd0] sm:$0xf]
      %v758 = vld [vmem:[%s4 + $0xd4] sm:$0xf]
      %v759 = vld [vmem:[%s4 + $0xd8] sm:$0xf]
      %v760 = vld [vmem:[%s4 + $0xdc] sm:$0xf]
      %v761 = vld [vmem:[%s4 + $0xe0] sm:$0xf]
      %v762 = vld [vmem:[%s4 + $0xe4] sm:$0xf]
      %v763 = vld [vmem:[%s4 + $0xe8] sm:$0xf]
      %v764 = vld [vmem:[%s4 + $0xec] sm:$0xf]
      %v765 = vld [vmem:[%s4 + $0xf0] sm:$0xf]
      %v766 = vld [vmem:[%s4 + $0xf4] sm:$0xf]
      %v767 = vld [vmem:[%s4 + $0xf8] sm:$0xf]
      %v768 = vld [vmem:[%s4 + $0xfc] sm:$0xf]
      %v769 = vld [vmem:[%s4 + $0x100] sm:$0xf]
      %v770 = vld [vmem:[%s4 + $0x104] sm:$0xf]
      %v771 = vld [vmem:[%s4 + $0x108] sm:$0xf]
      %v772 = vld [vmem:[%s4 + $0x10c] sm:$0xf]
      %v773 = vld [vmem:[%s4 + $0x110] sm:$0xf]
      %v774 = vld [vmem:[%s4 + $0x114] sm:$0xf]
      %v775 = vld [vmem:[%s4 + $0x118] sm:$0xf]
      %v776 = vld [vmem:[%s4 + $0x11c] sm:$0xf]
      %v777 = vld [vmem:[%s4 + $0x120] sm:$0xf]
      %v778 = vld [vmem:[%s4 + $0x124] sm:$0xf]
      %v779 = vld [vmem:[%s4 + $0x128] sm:$0xf]
      %v780 = vld [vmem:[%s4 + $0x12c] sm:$0xf]
      %v781 = vld [vmem:[%s4 + $0x130] sm:$0xf]
      %v782 = vld [vmem:[%s4 + $0x134] sm:$0xf]
      %v783 = vld [vmem:[%s4 + $0x138] sm:$0xf]
      %v784 = vld [vmem:[%s4 + $0x13c] sm:$0xf]
      %v785 = vld [vmem:[%s4 + $0x140] sm:$0xf]
      %v786 = vld [vmem:[%s4 + $0x144] sm:$0xf]
      %v787 = vld [vmem:[%s4 + $0x148] sm:$0xf]
      %v788 = vld [vmem:[%s4 + $0x14c] sm:$0xf]
      %v789 = vld [vmem:[%s4 + $0x150] sm:$0xf]
      %v790 = vld [vmem:[%s4 + $0x154] sm:$0xf]
      %v791 = vld [vmem:[%s4 + $0x158] sm:$0xf]
      %v792 = vld [vmem:[%s4 + $0x15c] sm:$0xf]
      %v793 = vld [vmem:[%s4 + $0x160] sm:$0xf]
      %v794 = vld [vmem:[%s4 + $0x164] sm:$0xf]
      %v795 = vld [vmem:[%s4 + $0x168] sm:$0xf]
      %v796 = vld [vmem:[%s4 + $0x16c] sm:$0xf]
      %v797 = vld [vmem:[%s4 + $0x170] sm:$0xf]
      %v798 = vld [vmem:[%s4 + $0x174] sm:$0xf]
      %v799 = vld [vmem:[%s4 + $0x178] sm:$0xf]
      %v800 = vld [vmem:[%s4 + $0x17c] sm:$0xf]
      %v801 = vld [vmem:[%s4 + $0x180] sm:$0xf]
      %v802 = vld [vmem:[%s4 + $0x184] sm:$0xf]
      %v803 = vld [vmem:[%s4 + $0x188] sm:$0xf]
      %v804 = vld [vmem:[%s4 + $0x18c] sm:$0xf]
      %v805 = vld [vmem:[%s4 + $0x190] sm:$0xf]
      %v806 = vld [vmem:[%s4 + $0x194] sm:$0xf]
      %v807 = vld [vmem:[%s4 + $0x198] sm:$0xf]
      %v808 = vld [vmem:[%s4 + $0x19c] sm:$0xf]
      %v809 = vld [vmem:[%s4 + $0x1a0] sm:$0xf]
      %v810 = vld [vmem:[%s4 + $0x1a4] sm:$0xf]
      %v811 = vld [vmem:[%s4 + $0x1a8] sm:$0xf]
      %v812 = vld [vmem:[%s4 + $0x1ac] sm:$0xf]
      %v813 = vld [vmem:[%s4 + $0x1b0] sm:$0xf]
      %v814 = vld [vmem:[%s4 + $0x1b4] sm:$0xf]
      %v815 = vld [vmem:[%s4 + $0x1b8] sm:$0xf]
      %v816 = vld [vmem:[%s4 + $0x1bc] sm:$0xf]
      %v817 = vld [vmem:[%s4 + $0x1c0] sm:$0xf]
      %v818 = vld [vmem:[%s4 + $0x1c4] sm:$0xf]
      %v819 = vld [vmem:[%s4 + $0x1c8] sm:$0xf]
      %v820 = vld [vmem:[%s4 + $0x1cc] sm:$0xf]
      %v821 = vld [vmem:[%s4 + $0x1d0] sm:$0xf]
      %v822 = vld [vmem:[%s4 + $0x1d4] sm:$0xf]
      %v823 = vld [vmem:[%s4 + $0x1d8] sm:$0xf]
      %v824 = vld [vmem:[%s4 + $0x1dc] sm:$0xf]
      %v825 = vld [vmem:[%s4 + $0x1e0] sm:$0xf]
      %v826 = vld [vmem:[%s4 + $0x1e4] sm:$0xf]
      %v827 = vld [vmem:[%s4 + $0x1e8] sm:$0xf]
      %v828 = vld [vmem:[%s4 + $0x1ec] sm:$0xf]
      %v829 = vld [vmem:[%s4 + $0x1f0] sm:$0xf]
      %v830 = vld [vmem:[%s4 + $0x1f4] sm:$0xf]
      %v831 = vld [vmem:[%s4 + $0x1f8] sm:$0xf]
      %v832 = vld [vmem:[%s4 + $0x1fc] sm:$0xf]
      %v833 = vld [vmem:[%s4 + $0x200] sm:$0xf]
      %v834 = vld [vmem:[%s4 + $0x204] sm:$0xf]
      %v835 = vld [vmem:[%s4 + $0x208] sm:$0xf]
      %v836 = vld [vmem:[%s4 + $0x20c] sm:$0xf]
      %v837 = vld [vmem:[%s4 + $0x210] sm:$0xf]
      %v838 = vld [vmem:[%s4 + $0x214] sm:$0xf]
      %v839 = vld [vmem:[%s4 + $0x218] sm:$0xf]
      %v840 = vld [vmem:[%s4 + $0x21c] sm:$0xf]
      %v841 = vld [vmem:[%s4 + $0x220] sm:$0xf]
      %v842 = vld [vmem:[%s4 + $0x224] sm:$0xf]
      %v843 = vld [vmem:[%s4 + $0x228] sm:$0xf]
      %v844 = vld [vmem:[%s4 + $0x22c] sm:$0xf]
      %v845 = vld [vmem:[%s4 + $0x230] sm:$0xf]
      %v846 = vld [vmem:[%s4 + $0x234] sm:$0xf]
      %v847 = vld [vmem:[%s4 + $0x238] sm:$0xf]
      %v848 = vld [vmem:[%s4 + $0x23c] sm:$0xf]
      %v849 = vld [vmem:[%s5] sm:$0x1]
      %v851 = vlaneseq
      %v852 = vshrl.u32 %v851, 7
      %v853 = vsub.s32 0, %v852
      %v854 = vrot.slane %v849, %v853
      %v1000 = vunpack.c.l.b16 %v705
      %v1001 = vunpack.c.l.b16 %v706
      %v1002 = vunpack.c.l.b16 %v707
      %v1003 = vunpack.c.l.b16 %v708
      %v1004 = vunpack.c.l.b16 %v709
      %v1005 = vunpack.c.l.b16 %v710
      %v1006 = vunpack.c.l.b16 %v711
      %v1007 = vunpack.c.l.b16 %v712
      %v1008 = vunpack.c.l.b16 %v713
      %v1009 = vunpack.c.l.b16 %v714
      %v1010 = vunpack.c.l.b16 %v715
      %v1011 = vunpack.c.l.b16 %v716
      %v1012 = vunpack.c.l.b16 %v717
      %v1013 = vunpack.c.l.b16 %v718
      %v1014 = vunpack.c.l.b16 %v719
      %v1015 = vunpack.c.l.b16 %v720
      %v1016 = vunpack.c.l.b16 %v721
      %v1017 = vunpack.c.l.b16 %v722
      %v1018 = vunpack.c.l.b16 %v723
      %v1019 = vunpack.c.l.b16 %v724
      %v1020 = vunpack.c.l.b16 %v725
      %v1021 = vunpack.c.l.b16 %v726
      %v1022 = vunpack.c.l.b16 %v727
      %v1023 = vunpack.c.l.b16 %v728
      %v1024 = vunpack.c.l.b16 %v729
      %v1025 = vunpack.c.l.b16 %v730
      %v1026 = vunpack.c.l.b16 %v731
      %v1027 = vunpack.c.l.b16 %v732
      %v1028 = vunpack.c.l.b16 %v733
      %v1029 = vunpack.c.l.b16 %v734
      %v1030 = vunpack.c.l.b16 %v735
      %v1031 = vunpack.c.l.b16 %v736
      %v1032 = vunpack.c.l.b16 %v737
      %v1033 = vunpack.c.l.b16 %v738
      %v1034 = vunpack.c.l.b16 %v739
      %v1035 = vunpack.c.l.b16 %v740
      %v1036 = vunpack.c.l.b16 %v741
      %v1037 = vunpack.c.l.b16 %v742
      %v1038 = vunpack.c.l.b16 %v743
      %v1039 = vunpack.c.l.b16 %v744
      %v1040 = vunpack.c.l.b16 %v745
      %v1041 = vunpack.c.l.b16 %v746
      %v1042 = vunpack.c.l.b16 %v747
      %v1043 = vunpack.c.l.b16 %v748
      %v1044 = vunpack.c.l.b16 %v749
      %v1045 = vunpack.c.l.b16 %v750
      %v1046 = vunpack.c.l.b16 %v751
      %v1047 = vunpack.c.l.b16 %v752
      %v1048 = vunpack.c.l.b16 %v753
      %v1049 = vunpack.c.l.b16 %v754
      %v1050 = vunpack.c.l.b16 %v755
      %v1051 = vunpack.c.l.b16 %v756
      %v1052 = vunpack.c.l.b16 %v757
      %v1053 = vunpack.c.l.b16 %v758
      %v1054 = vunpack.c.l.b16 %v759
      %v1055 = vunpack.c.l.b16 %v760
      %v1056 = vunpack.c.l.b16 %v761
      %v1057 = vunpack.c.l.b16 %v762
      %v1058 = vunpack.c.l.b16 %v763
      %v1059 = vunpack.c.l.b16 %v764
      %v1060 = vunpack.c.l.b16 %v765
      %v1061 = vunpack.c.l.b16 %v766
      %v1062 = vunpack.c.l.b16 %v767
      %v1063 = vunpack.c.l.b16 %v768
      %v1064 = vunpack.c.l.b16 %v769
      %v1065 = vunpack.c.l.b16 %v770
      %v1066 = vunpack.c.l.b16 %v771
      %v1067 = vunpack.c.l.b16 %v772
      %v1068 = vunpack.c.l.b16 %v773
      %v1069 = vunpack.c.l.b16 %v774
      %v1070 = vunpack.c.l.b16 %v775
      %v1071 = vunpack.c.l.b16 %v776
      %v1072 = vunpack.c.l.b16 %v777
      %v1073 = vunpack.c.l.b16 %v778
      %v1074 = vunpack.c.l.b16 %v779
      %v1075 = vunpack.c.l.b16 %v780
      %v1076 = vunpack.c.l.b16 %v781
      %v1077 = vunpack.c.l.b16 %v782
      %v1078 = vunpack.c.l.b16 %v783
      %v1079 = vunpack.c.l.b16 %v784
      %v1080 = vunpack.c.l.b16 %v785
      %v1081 = vunpack.c.l.b16 %v786
      %v1082 = vunpack.c.l.b16 %v787
      %v1083 = vunpack.c.l.b16 %v788
      %v1084 = vunpack.c.l.b16 %v789
      %v1085 = vunpack.c.l.b16 %v790
      %v1086 = vunpack.c.l.b16 %v791
      %v1087 = vunpack.c.l.b16 %v792
      %v1088 = vunpack.c.l.b16 %v793
      %v1089 = vunpack.c.l.b16 %v794
      %v1090 = vunpack.c.l.b16 %v795
      %v1091 = vunpack.c.l.b16 %v796
      %v1092 = vunpack.c.l.b16 %v797
      %v1093 = vunpack.c.l.b16 %v798
      %v1094 = vunpack.c.l.b16 %v799
      %v1095 = vunpack.c.l.b16 %v800
      %v1096 = vunpack.c.l.b16 %v801
      %v1097 = vunpack.c.l.b16 %v802
      %v1098 = vunpack.c.l.b16 %v803
      %v1099 = vunpack.c.l.b16 %v804
      %v1100 = vunpack.c.l.b16 %v805
      %v1101 = vunpack.c.l.b16 %v806
      %v1102 = vunpack.c.l.b16 %v807
      %v1103 = vunpack.c.l.b16 %v808
      %v1104 = vunpack.c.l.b16 %v809
      %v1105 = vunpack.c.l.b16 %v810
      %v1106 = vunpack.c.l.b16 %v811
      %v1107 = vunpack.c.l.b16 %v812
      %v1108 = vunpack.c.l.b16 %v813
      %v1109 = vunpack.c.l.b16 %v814
      %v1110 = vunpack.c.l.b16 %v815
      %v1111 = vunpack.c.l.b16 %v816
      %v1112 = vunpack.c.l.b16 %v817
      %v1113 = vunpack.c.l.b16 %v818
      %v1114 = vunpack.c.l.b16 %v819
      %v1115 = vunpack.c.l.b16 %v820
      %v1116 = vunpack.c.l.b16 %v821
      %v1117 = vunpack.c.l.b16 %v822
      %v1118 = vunpack.c.l.b16 %v823
      %v1119 = vunpack.c.l.b16 %v824
      %v1120 = vunpack.c.l.b16 %v825
      %v1121 = vunpack.c.l.b16 %v826
      %v1122 = vunpack.c.l.b16 %v827
      %v1123 = vunpack.c.l.b16 %v828
      %v1124 = vunpack.c.l.b16 %v829
      %v1125 = vunpack.c.l.b16 %v830
      %v1126 = vunpack.c.l.b16 %v831
      %v1127 = vunpack.c.l.b16 %v832
      %v1128 = vunpack.c.l.b16 %v833
      %v1129 = vunpack.c.l.b16 %v834
      %v1130 = vunpack.c.l.b16 %v835
      %v1131 = vunpack.c.l.b16 %v836
      %v1132 = vunpack.c.l.b16 %v837
      %v1133 = vunpack.c.l.b16 %v838
      %v1134 = vunpack.c.l.b16 %v839
      %v1135 = vunpack.c.l.b16 %v840
      %v1136 = vunpack.c.l.b16 %v841
      %v1137 = vunpack.c.l.b16 %v842
      %v1138 = vunpack.c.l.b16 %v843
      %v1139 = vunpack.c.l.b16 %v844
      %v1140 = vunpack.c.l.b16 %v845
      %v1141 = vunpack.c.l.b16 %v846
      %v1142 = vunpack.c.l.b16 %v847
      %v1143 = vunpack.c.l.b16 %v848
      %v1144 = vpack.c.b16 %v1001, %v1000
      %v1145 = vpack.c.b16 %v1003, %v1002
      %v1146 = vpack.c.b16 %v1005, %v1004
      %v1147 = vpack.c.b16 %v1007, %v1006
      %v1148 = vpack.c.b16 %v1009, %v1008
      %v1149 = vpack.c.b16 %v1011, %v1010
      %v1150 = vpack.c.b16 %v1013, %v1012
      %v1151 = vpack.c.b16 %v1015, %v1014
      %v1152 = vpack.c.b16 %v1017, %v1016
      %v1153 = vpack.c.b16 %v1019, %v1018
      %v1154 = vpack.c.b16 %v1021, %v1020
      %v1155 = vpack.c.b16 %v1023, %v1022
      %v1156 = vpack.c.b16 %v1025, %v1024
      %v1157 = vpack.c.b16 %v1027, %v1026
      %v1158 = vpack.c.b16 %v1029, %v1028
      %v1159 = vpack.c.b16 %v1031, %v1030
      %v1160 = vpack.c.b16 %v1033, %v1032
      %v1161 = vpack.c.b16 %v1035, %v1034
      %v1162 = vpack.c.b16 %v1037, %v1036
      %v1163 = vpack.c.b16 %v1039, %v1038
      %v1164 = vpack.c.b16 %v1041, %v1040
      %v1165 = vpack.c.b16 %v1043, %v1042
      %v1166 = vpack.c.b16 %v1045, %v1044
      %v1167 = vpack.c.b16 %v1047, %v1046
      %v1168 = vpack.c.b16 %v1049, %v1048
      %v1169 = vpack.c.b16 %v1051, %v1050
      %v1170 = vpack.c.b16 %v1053, %v1052
      %v1171 = vpack.c.b16 %v1055, %v1054
      %v1172 = vpack.c.b16 %v1057, %v1056
      %v1173 = vpack.c.b16 %v1059, %v1058
      %v1174 = vpack.c.b16 %v1061, %v1060
      %v1175 = vpack.c.b16 %v1063, %v1062
      %v1176 = vpack.c.b16 %v1065, %v1064
      %v1177 = vpack.c.b16 %v1067, %v1066
      %v1178 = vpack.c.b16 %v1069, %v1068
      %v1179 = vpack.c.b16 %v1071, %v1070
      %v1180 = vpack.c.b16 %v1073, %v1072
      %v1181 = vpack.c.b16 %v1075, %v1074
      %v1182 = vpack.c.b16 %v1077, %v1076
      %v1183 = vpack.c.b16 %v1079, %v1078
      %v1184 = vpack.c.b16 %v1081, %v1080
      %v1185 = vpack.c.b16 %v1083, %v1082
      %v1186 = vpack.c.b16 %v1085, %v1084
      %v1187 = vpack.c.b16 %v1087, %v1086
      %v1188 = vpack.c.b16 %v1089, %v1088
      %v1189 = vpack.c.b16 %v1091, %v1090
      %v1190 = vpack.c.b16 %v1093, %v1092
      %v1191 = vpack.c.b16 %v1095, %v1094
      %v1192 = vpack.c.b16 %v1097, %v1096
      %v1193 = vpack.c.b16 %v1099, %v1098
      %v1194 = vpack.c.b16 %v1101, %v1100
      %v1195 = vpack.c.b16 %v1103, %v1102
      %v1196 = vpack.c.b16 %v1105, %v1104
      %v1197 = vpack.c.b16 %v1107, %v1106
      %v1198 = vpack.c.b16 %v1109, %v1108
      %v1199 = vpack.c.b16 %v1111, %v1110
      %v1200 = vpack.c.b16 %v1113, %v1112
      %v1201 = vpack.c.b16 %v1115, %v1114
      %v1202 = vpack.c.b16 %v1117, %v1116
      %v1203 = vpack.c.b16 %v1119, %v1118
      %v1204 = vpack.c.b16 %v1121, %v1120
      %v1205 = vpack.c.b16 %v1123, %v1122
      %v1206 = vpack.c.b16 %v1125, %v1124
      %v1207 = vpack.c.b16 %v1127, %v1126
      %v1208 = vpack.c.b16 %v1129, %v1128
      %v1209 = vpack.c.b16 %v1131, %v1130
      %v1210 = vpack.c.b16 %v1133, %v1132
      %v1211 = vpack.c.b16 %v1135, %v1134
      %v1212 = vpack.c.b16 %v1137, %v1136
      %v1213 = vpack.c.b16 %v1139, %v1138
      %v1214 = vpack.c.b16 %v1141, %v1140
      %v1215 = vpack.c.b16 %v1143, %v1142
      %1288 = vmatprep.subr.bf16.mxu0 0
      %1289 = vmatpush1.bf16.msra.mxu0 %v1144
      %1290 = vmatprep.subr.bf16.mxu0 0
      %1291 = vmatpush1.bf16.msra.mxu0 %v1145
      %1292 = vmatprep.subr.bf16.mxu0 0
      %1293 = vmatpush1.bf16.msra.mxu0 %v1146
      %1294 = vmatprep.subr.bf16.mxu0 0
      %1295 = vmatpush1.bf16.msra.mxu0 %v1147
      %1296 = vmatprep.subr.bf16.mxu0 0
      %1297 = vmatpush1.bf16.msra.mxu0 %v1148
      %1298 = vmatprep.subr.bf16.mxu0 0
      %1299 = vmatpush1.bf16.msra.mxu0 %v1149
      %1300 = vmatprep.subr.bf16.mxu0 0
      %1301 = vmatpush1.bf16.msra.mxu0 %v1150
      %1302 = vmatprep.subr.bf16.mxu0 0
      %1303 = vmatpush1.bf16.msra.mxu0 %v1151
      %1304 = vmatprep.subr.bf16.mxu0 0
      %1305 = vmatpush1.bf16.msra.mxu0 %v1152
      %1306 = vmatprep.subr.bf16.mxu0 0
      %1307 = vmatpush1.bf16.msra.mxu0 %v1153
      %1308 = vmatprep.subr.bf16.mxu0 0
      %1309 = vmatpush1.bf16.msra.mxu0 %v1154
      %1310 = vmatprep.subr.bf16.mxu0 0
      %1311 = vmatpush1.bf16.msra.mxu0 %v1155
      %1312 = vmatprep.subr.bf16.mxu0 0
      %1313 = vmatpush1.bf16.msra.mxu0 %v1156
      %1314 = vmatprep.subr.bf16.mxu0 0
      %1315 = vmatpush1.bf16.msra.mxu0 %v1157
      %1316 = vmatprep.subr.bf16.mxu0 0
      %1317 = vmatpush1.bf16.msra.mxu0 %v1158
      %1318 = vmatprep.subr.bf16.mxu0 0
      %1319 = vmatpush1.bf16.msra.mxu0 %v1159
      %1320 = vmatprep.mubr.bf16.mxu0 %v688
      %1321 = vmatmul.mubr.bf16.gmra.mrb[0].mxu0 %v687
      %v1322 = vpop.f32.mrb[0].mxu0
      %v1323 = vadd.f32 %v854, %v1322
      %v1324 = vpop.f32.mrb[0].mxu0
      %v1325 = vpop.f32.mrb[0].mxu0
      %v1326 = vadd.f32 %v854, %v1325
      %v1327 = vpop.f32.mrb[0].mxu0
      %1328 = vmatprep.mubr.bf16.mxu0 %v691
      %1329 = vmatmul.mubr.bf16.gmra.mrb[0].mxu0 %v690
      %v1330 = vpop.f32.mrb[0].mxu0
      %v1331 = vadd.f32 %v854, %v1330
      %v1332 = vpop.f32.mrb[0].mxu0
      %v1333 = vpop.f32.mrb[0].mxu0
      %v1334 = vadd.f32 %v854, %v1333
      %v1335 = vpop.f32.mrb[0].mxu0
      %1336 = vmatprep.mubr.bf16.mxu0 %v694
      %1337 = vmatmul.mubr.bf16.gmra.mrb[0].mxu0 %v693
      %v1338 = vpop.f32.mrb[0].mxu0
      %v1339 = vadd.f32 %v854, %v1338
      %v1340 = vpop.f32.mrb[0].mxu0
      %v1341 = vpop.f32.mrb[0].mxu0
      %v1342 = vadd.f32 %v854, %v1341
      %v1343 = vpop.f32.mrb[0].mxu0
      %1344 = vmatprep.mubr.bf16.mxu0 %v697
      %1345 = vmatmul.mubr.bf16.gmra.mrb[0].mxu0 %v696
      %v1346 = vpop.f32.mrb[0].mxu0
      %v1347 = vadd.f32 %v854, %v1346
      %v1348 = vpop.f32.mrb[0].mxu0
      %v1349 = vpop.f32.mrb[0].mxu0
      %v1350 = vadd.f32 %v854, %v1349
      %v1351 = vpop.f32.mrb[0].mxu0
      %1352 = vdwg.mxu0
      %1353 = vmatprep.subr.bf16.mxu0 0
      %1354 = vmatpush1.bf16.msra.mxu0 %v1160
      %1355 = vmatprep.subr.bf16.mxu0 0
      %1356 = vmatpush1.bf16.msra.mxu0 %v1161
      %1357 = vmatprep.subr.bf16.mxu0 0
      %1358 = vmatpush1.bf16.msra.mxu0 %v1162
      %1359 = vmatprep.subr.bf16.mxu0 0
      %1360 = vmatpush1.bf16.msra.mxu0 %v1163
      %1361 = vmatprep.subr.bf16.mxu0 0
      %1362 = vmatpush1.bf16.msra.mxu0 %v1164
      %1363 = vmatprep.subr.bf16.mxu0 0
      %1364 = vmatpush1.bf16.msra.mxu0 %v1165
      %1365 = vmatprep.subr.bf16.mxu0 0
      %1366 = vmatpush1.bf16.msra.mxu0 %v1166
      %1367 = vmatprep.subr.bf16.mxu0 0
      %1368 = vmatpush1.bf16.msra.mxu0 %v1167
      %1369 = vmatprep.subr.bf16.mxu0 0
      %1370 = vmatpush1.bf16.msra.mxu0 %v1168
      %1371 = vmatprep.subr.bf16.mxu0 0
      %1372 = vmatpush1.bf16.msra.mxu0 %v1169
      %1373 = vmatprep.subr.bf16.mxu0 0
      %1374 = vmatpush1.bf16.msra.mxu0 %v1170
      %1375 = vmatprep.subr.bf16.mxu0 0
      %1376 = vmatpush1.bf16.msra.mxu0 %v1171
      %1377 = vmatprep.subr.bf16.mxu0 0
      %1378 = vmatpush1.bf16.msra.mxu0 %v1172
      %1379 = vmatprep.subr.bf16.mxu0 0
      %1380 = vmatpush1.bf16.msra.mxu0 %v1173
      %1381 = vmatprep.subr.bf16.mxu0 0
      %1382 = vmatpush1.bf16.msra.mxu0 %v1174
      %1383 = vmatprep.subr.bf16.mxu0 0
      %1384 = vmatpush1.bf16.msra.mxu0 %v1175
      %1385 = vmatprep.mubr.bf16.mxu0 %v690
      %1386 = vmatmul.mubr.bf16.gmra.mrb[0].mxu0 %v689
      %v1387 = vpop.f32.mrb[0].mxu0
      %v1388 = vadd.f32 %v1323, %v1387
      %v1389 = vpop.f32.mrb[0].mxu0
      %v1390 = vpop.f32.mrb[0].mxu0
      %v1391 = vadd.f32 %v1326, %v1390
      %v1392 = vpop.f32.mrb[0].mxu0
      %1393 = vmatprep.mubr.bf16.mxu0 %v693
      %1394 = vmatmul.mubr.bf16.gmra.mrb[0].mxu0 %v692
      %v1395 = vpop.f32.mrb[0].mxu0
      %v1396 = vadd.f32 %v1331, %v1395
      %v1397 = vpop.f32.mrb[0].mxu0
      %v1398 = vpop.f32.mrb[0].mxu0
      %v1399 = vadd.f32 %v1334, %v1398
      %v1400 = vpop.f32.mrb[0].mxu0
      %1401 = vmatprep.mubr.bf16.mxu0 %v696
      %1402 = vmatmul.mubr.bf16.gmra.mrb[0].mxu0 %v695
      %v1403 = vpop.f32.mrb[0].mxu0
      %v1404 = vadd.f32 %v1339, %v1403
      %v1405 = vpop.f32.mrb[0].mxu0
      %v1406 = vpop.f32.mrb[0].mxu0
      %v1407 = vadd.f32 %v1342, %v1406
      %v1408 = vpop.f32.mrb[0].mxu0
      %1409 = vmatprep.mubr.bf16.mxu0 %v699
      %1410 = vmatmul.mubr.bf16.gmra.mrb[0].mxu0 %v698
      %v1411 = vpop.f32.mrb[0].mxu0
      %v1412 = vadd.f32 %v1347, %v1411
      %v1413 = vpop.f32.mrb[0].mxu0
      %v1414 = vpop.f32.mrb[0].mxu0
      %v1415 = vadd.f32 %v1350, %v1414
      %v1416 = vpop.f32.mrb[0].mxu0
      %1417 = vdwg.mxu0
      %1418 = vmatprep.subr.bf16.mxu0 0
      %1419 = vmatpush1.bf16.msra.mxu0 %v1176
      %1420 = vmatprep.subr.bf16.mxu0 0
      %1421 = vmatpush1.bf16.msra.mxu0 %v1177
      %1422 = vmatprep.subr.bf16.mxu0 0
      %1423 = vmatpush1.bf16.msra.mxu0 %v1178
      %1424 = vmatprep.subr.bf16.mxu0 0
      %1425 = vmatpush1.bf16.msra.mxu0 %v1179
      %1426 = vmatprep.subr.bf16.mxu0 0
      %1427 = vmatpush1.bf16.msra.mxu0 %v1180
      %1428 = vmatprep.subr.bf16.mxu0 0
      %1429 = vmatpush1.bf16.msra.mxu0 %v1181
      %1430 = vmatprep.subr.bf16.mxu0 0
      %1431 = vmatpush1.bf16.msra.mxu0 %v1182
      %1432 = vmatprep.subr.bf16.mxu0 0
      %1433 = vmatpush1.bf16.msra.mxu0 %v1183
      %1434 = vmatprep.subr.bf16.mxu0 0
      %1435 = vmatpush1.bf16.msra.mxu0 %v1184
      %1436 = vmatprep.subr.bf16.mxu0 0
      %1437 = vmatpush1.bf16.msra.mxu0 %v1185
      %1438 = vmatprep.subr.bf16.mxu0 0
      %1439 = vmatpush1.bf16.msra.mxu0 %v1186
      %1440 = vmatprep.subr.bf16.mxu0 0
      %1441 = vmatpush1.bf16.msra.mxu0 %v1187
      %1442 = vmatprep.subr.bf16.mxu0 0
      %1443 = vmatpush1.bf16.msra.mxu0 %v1188
      %1444 = vmatprep.subr.bf16.mxu0 0
      %1445 = vmatpush1.bf16.msra.mxu0 %v1189
      %1446 = vmatprep.subr.bf16.mxu0 0
      %1447 = vmatpush1.bf16.msra.mxu0 %v1190
      %1448 = vmatprep.subr.bf16.mxu0 0
      %1449 = vmatpush1.bf16.msra.mxu0 %v1191
      %1450 = vmatprep.mubr.bf16.mxu0 %v692
      %1451 = vmatmul.mubr.bf16.gmra.mrb[0].mxu0 %v691
      %v1452 = vpop.f32.mrb[0].mxu0
      %v1453 = vadd.f32 %v1388, %v1452
      %v1454 = vpop.f32.mrb[0].mxu0
      %v1455 = vpop.f32.mrb[0].mxu0
      %v1456 = vadd.f32 %v1391, %v1455
      %v1457 = vpop.f32.mrb[0].mxu0
      %1458 = vmatprep.mubr.bf16.mxu0 %v695
      %1459 = vmatmul.mubr.bf16.gmra.mrb[0].mxu0 %v694
      %v1460 = vpop.f32.mrb[0].mxu0
      %v1461 = vadd.f32 %v1396, %v1460
      %v1462 = vpop.f32.mrb[0].mxu0
      %v1463 = vpop.f32.mrb[0].mxu0
      %v1464 = vadd.f32 %v1399, %v1463
      %v1465 = vpop.f32.mrb[0].mxu0
      %1466 = vmatprep.mubr.bf16.mxu0 %v698
      %1467 = vmatmul.mubr.bf16.gmra.mrb[0].mxu0 %v697
      %v1468 = vpop.f32.mrb[0].mxu0
      %v1469 = vadd.f32 %v1404, %v1468
      %v1470 = vpop.f32.mrb[0].mxu0
      %v1471 = vpop.f32.mrb[0].mxu0
      %v1472 = vadd.f32 %v1407, %v1471
      %v1473 = vpop.f32.mrb[0].mxu0
      %1474 = vmatprep.mubr.bf16.mxu0 %v701
      %1475 = vmatmul.mubr.bf16.gmra.mrb[0].mxu0 %v700
      %v1476 = vpop.f32.mrb[0].mxu0
      %v1477 = vadd.f32 %v1412, %v1476
      %v1478 = vpop.f32.mrb[0].mxu0
      %v1479 = vpop.f32.mrb[0].mxu0
      %v1480 = vadd.f32 %v1415, %v1479
      %v1481 = vpop.f32.mrb[0].mxu0
      %1482 = vdwg.mxu0
      %1483 = vmatprep.subr.bf16.mxu0 0
      %1484 = vmatpush1.bf16.msra.mxu0 %v1192
      %1485 = vmatprep.subr.bf16.mxu0 0
      %1486 = vmatpush1.bf16.msra.mxu0 %v1193
      %1487 = vmatprep.subr.bf16.mxu0 0
      %1488 = vmatpush1.bf16.msra.mxu0 %v1194
      %1489 = vmatprep.subr.bf16.mxu0 0
      %1490 = vmatpush1.bf16.msra.mxu0 %v1195
      %1491 = vmatprep.subr.bf16.mxu0 0
      %1492 = vmatpush1.bf16.msra.mxu0 %v1196
      %1493 = vmatprep.subr.bf16.mxu0 0
      %1494 = vmatpush1.bf16.msra.mxu0 %v1197
      %1495 = vmatprep.subr.bf16.mxu0 0
      %1496 = vmatpush1.bf16.msra.mxu0 %v1198
      %1497 = vmatprep.subr.bf16.mxu0 0
      %1498 = vmatpush1.bf16.msra.mxu0 %v1199
      %1499 = vmatprep.subr.bf16.mxu0 0
      %1500 = vmatpush1.bf16.msra.mxu0 %v1200
      %1501 = vmatprep.subr.bf16.mxu0 0
      %1502 = vmatpush1.bf16.msra.mxu0 %v1201
      %1503 = vmatprep.subr.bf16.mxu0 0
      %1504 = vmatpush1.bf16.msra.mxu0 %v1202
      %1505 = vmatprep.subr.bf16.mxu0 0
      %1506 = vmatpush1.bf16.msra.mxu0 %v1203
      %1507 = vmatprep.subr.bf16.mxu0 0
      %1508 = vmatpush1.bf16.msra.mxu0 %v1204
      %1509 = vmatprep.subr.bf16.mxu0 0
      %1510 = vmatpush1.bf16.msra.mxu0 %v1205
      %1511 = vmatprep.subr.bf16.mxu0 0
      %1512 = vmatpush1.bf16.msra.mxu0 %v1206
      %1513 = vmatprep.subr.bf16.mxu0 0
      %1514 = vmatpush1.bf16.msra.mxu0 %v1207
      %1515 = vmatprep.mubr.bf16.mxu0 %v694
      %1516 = vmatmul.mubr.bf16.gmra.mrb[0].mxu0 %v693
      %v1517 = vpop.f32.mrb[0].mxu0
      %v1518 = vadd.f32 %v1453, %v1517
      %v1519 = vpop.f32.mrb[0].mxu0
      %v1520 = vpop.f32.mrb[0].mxu0
      %v1521 = vadd.f32 %v1456, %v1520
      %v1522 = vpop.f32.mrb[0].mxu0
      %1523 = vmatprep.mubr.bf16.mxu0 %v697
      %1524 = vmatmul.mubr.bf16.gmra.mrb[0].mxu0 %v696
      %v1525 = vpop.f32.mrb[0].mxu0
      %v1526 = vadd.f32 %v1461, %v1525
      %v1527 = vpop.f32.mrb[0].mxu0
      %v1528 = vpop.f32.mrb[0].mxu0
      %v1529 = vadd.f32 %v1464, %v1528
      %v1530 = vpop.f32.mrb[0].mxu0
      %1531 = vmatprep.mubr.bf16.mxu0 %v700
      %1532 = vmatmul.mubr.bf16.gmra.mrb[0].mxu0 %v699
      %v1533 = vpop.f32.mrb[0].mxu0
      %v1534 = vadd.f32 %v1469, %v1533
      %v1535 = vpop.f32.mrb[0].mxu0
      %v1536 = vpop.f32.mrb[0].mxu0
      %v1537 = vadd.f32 %v1472, %v1536
      %v1538 = vpop.f32.mrb[0].mxu0
      %1539 = vmatprep.mubr.bf16.mxu0 %v703
      %1540 = vmatmul.mubr.bf16.gmra.mrb[0].mxu0 %v702
      %v1541 = vpop.f32.mrb[0].mxu0
      %v1542 = vadd.f32 %v1477, %v1541
      %v1543 = vpop.f32.mrb[0].mxu0
      %v1544 = vpop.f32.mrb[0].mxu0
      %v1545 = vadd.f32 %v1480, %v1544
      %v1546 = vpop.f32.mrb[0].mxu0
      %1547 = vdwg.mxu0
      %1548 = vmatprep.subr.bf16.mxu0 0
      %1549 = vmatpush1.bf16.msra.mxu0 %v1208
      %1550 = vmatprep.subr.bf16.mxu0 0
      %1551 = vmatpush1.bf16.msra.mxu0 %v1209
      %1552 = vmatprep.subr.bf16.mxu0 0
      %1553 = vmatpush1.bf16.msra.mxu0 %v1210
      %1554 = vmatprep.subr.bf16.mxu0 0
      %1555 = vmatpush1.bf16.msra.mxu0 %v1211
      %1556 = vmatprep.subr.bf16.mxu0 0
      %1557 = vmatpush1.bf16.msra.mxu0 %v1212
      %1558 = vmatprep.subr.bf16.mxu0 0
      %1559 = vmatpush1.bf16.msra.mxu0 %v1213
      %1560 = vmatprep.subr.bf16.mxu0 0
      %1561 = vmatpush1.bf16.msra.mxu0 %v1214
      %1562 = vmatprep.subr.bf16.mxu0 0
      %1563 = vmatpush1.bf16.msra.mxu0 %v1215
      %1564 = vmatprep.subr.bf16.mxu0 0
      %1565 = vmatpush1.bf16.msra.mxu0 0
      %1566 = vmatprep.subr.bf16.mxu0 0
      %1567 = vmatpush1.bf16.msra.mxu0 0
      %1568 = vmatprep.subr.bf16.mxu0 0
      %1569 = vmatpush1.bf16.msra.mxu0 0
      %1570 = vmatprep.subr.bf16.mxu0 0
      %1571 = vmatpush1.bf16.msra.mxu0 0
      %1572 = vmatprep.subr.bf16.mxu0 0
      %1573 = vmatpush1.bf16.msra.mxu0 0
      %1574 = vmatprep.subr.bf16.mxu0 0
      %1575 = vmatpush1.bf16.msra.mxu0 0
      %1576 = vmatprep.subr.bf16.mxu0 0
      %1577 = vmatpush1.bf16.msra.mxu0 0
      %1578 = vmatprep.subr.bf16.mxu0 0
      %1579 = vmatpush1.bf16.msra.mxu0 0
      %1580 = vmatprep.mubr.bf16.mxu0 0
      %1581 = vmatmul.mubr.bf16.gmra.mrb[0].mxu0 %v695
      %v1582 = vpop.f32.mrb[0].mxu0
      %v1583 = vadd.f32 %v1518, %v1582
      %v1584 = vpop.f32.mrb[0].mxu0
      %v1585 = vpop.f32.mrb[0].mxu0
      %v1586 = vadd.f32 %v1521, %v1585
      %v1587 = vpop.f32.mrb[0].mxu0
      %1588 = vmatprep.mubr.bf16.mxu0 0
      %1589 = vmatmul.mubr.bf16.gmra.mrb[0].mxu0 %v698
      %v1590 = vpop.f32.mrb[0].mxu0
      %v1591 = vadd.f32 %v1526, %v1590
      %v1592 = vpop.f32.mrb[0].mxu0
      %v1593 = vpop.f32.mrb[0].mxu0
      %v1594 = vadd.f32 %v1529, %v1593
      %v1595 = vpop.f32.mrb[0].mxu0
      %1596 = vmatprep.mubr.bf16.mxu0 0
      %1597 = vmatmul.mubr.bf16.gmra.mrb[0].mxu0 %v701
      %v1598 = vpop.f32.mrb[0].mxu0
      %v1599 = vadd.f32 %v1534, %v1598
      %v1600 = vpop.f32.mrb[0].mxu0
      %v1601 = vpop.f32.mrb[0].mxu0
      %v1602 = vadd.f32 %v1537, %v1601
      %v1603 = vpop.f32.mrb[0].mxu0
      %1604 = vmatprep.mubr.bf16.mxu0 0
      %1605 = vmatmul.mubr.bf16.gmra.mrb[0].mxu0 %v704
      %v1606 = vpop.f32.mrb[0].mxu0
      %v1607 = vadd.f32 %v1542, %v1606
      %v1608 = vpop.f32.mrb[0].mxu0
      %v1609 = vpop.f32.mrb[0].mxu0
      %v1610 = vadd.f32 %v1545, %v1609
      %v1611 = vpop.f32.mrb[0].mxu0
      %1612 = vdwg.mxu0
      %vm1613 = vcmp.gt.f32.partialorder %v1583, 0.0
      %vm1614 = vcmp.gt.f32.partialorder %v1586, 0.0
      %vm1615 = vcmp.gt.f32.partialorder %v1591, 0.0
      %vm1616 = vcmp.gt.f32.partialorder %v1594, 0.0
      %vm1617 = vcmp.gt.f32.partialorder %v1599, 0.0
      %vm1618 = vcmp.gt.f32.partialorder %v1602, 0.0
      %vm1619 = vcmp.gt.f32.partialorder %v1607, 0.0
      %vm1620 = vcmp.gt.f32.partialorder %v1610, 0.0
      %v1621 = vmul.f32 %v1583, 0.01
      %v1622 = vmul.f32 %v1586, 0.01
      %v1623 = vmul.f32 %v1591, 0.01
      %v1624 = vmul.f32 %v1594, 0.01
      %v1625 = vmul.f32 %v1599, 0.01
      %v1626 = vmul.f32 %v1602, 0.01
      %v1627 = vmul.f32 %v1607, 0.01
      %v1628 = vmul.f32 %v1610, 0.01
      %v1629 = vsel %vm1613, %v1583, %v1621
      %v1630 = vsel %vm1614, %v1586, %v1622
      %v1631 = vsel %vm1615, %v1591, %v1623
      %v1632 = vsel %vm1616, %v1594, %v1624
      %v1633 = vsel %vm1617, %v1599, %v1625
      %v1634 = vsel %vm1618, %v1602, %v1626
      %v1635 = vsel %vm1619, %v1607, %v1627
      %v1636 = vsel %vm1620, %v1610, %v1628
      %1637 = vst [vmem:[%s452] sm:$0xff] %v1629
      %1638 = vst [vmem:[%s452 + $0x8] sm:$0xff] %v1630
      %1639 = vst [vmem:[%s452 + $0x10] sm:$0xff] %v1631
      %1640 = vst [vmem:[%s452 + $0x18] sm:$0xff] %v1632
      %1641 = vst [vmem:[%s452 + $0x20] sm:$0xff] %v1633
      %1642 = vst [vmem:[%s452 + $0x28] sm:$0xff] %v1634
      %1643 = vst [vmem:[%s452 + $0x30] sm:$0xff] %v1635
      %1644 = vst [vmem:[%s452 + $0x38] sm:$0xff] %v1636
      %v1645 = vadd.f32 %v1629, %v1630
      %v1646 = vadd.f32 %v1645, %v1631
      %v1647 = vadd.f32 %v1646, %v1632
      %v1648 = vadd.f32 %v1647, %v1633
      %v1649 = vadd.f32 %v1648, %v1634
      %v1650 = vadd.f32 %v1649, %v1635
      %v1651 = vadd.f32 %v1650, %v1636
      %v1652 = vrot.slane %v1651, 4
      %v1653 = vadd.f32 %v1651, %v1652
      %v1654 = vrot.slane %v1653, 2
      %v1655 = vadd.f32 %v1653, %v1654
      %v1656 = vrot.slane %v1655, 1
      %v1657 = vadd.f32 %v1655, %v1656
      %v1658 = vmul.f32 %v1629, %v1629
      %v1659 = vmul.f32 %v1630, %v1630
      %v1660 = vmul.f32 %v1631, %v1631
      %v1661 = vmul.f32 %v1632, %v1632
      %v1662 = vmul.f32 %v1633, %v1633
      %v1663 = vmul.f32 %v1634, %v1634
      %v1664 = vmul.f32 %v1635, %v1635
      %v1665 = vmul.f32 %v1636, %v1636
      %v1666 = vadd.f32 %v1658, %v1659
      %v1667 = vadd.f32 %v1666, %v1660
      %v1668 = vadd.f32 %v1667, %v1661
      %v1669 = vadd.f32 %v1668, %v1662
      %v1670 = vadd.f32 %v1669, %v1663
      %v1671 = vadd.f32 %v1670, %v1664
      %v1672 = vadd.f32 %v1671, %v1665
      %v1673 = vrot.slane %v1672, 4
      %v1674 = vadd.f32 %v1672, %v1673
      %v1675 = vrot.slane %v1674, 2
      %v1676 = vadd.f32 %v1674, %v1675
      %v1677 = vrot.slane %v1676, 1
      %v1678 = vadd.f32 %v1676, %v1677
      %v1679 = vsel %vm540, %v1657, %v1678
      // Predicated region
      $region45: #{attention_block_forward.6} parent=43 // pred_check
        %p1680 = pneg %p504
      $region46: #{attention_block_forward.6} parent=43 // pred_check_branch
        %1682 = sbr.rel (%p1680) target = $region48
      $region47: #{attention_block_forward.6} parent=43 // pred_region
        %1683 = vst [vmem:[%s457] sm:$0x3] 0.0
      $region48: #{attention_block_forward.6} parent=43 // pred_fallthru
        _
      %v1684 = vld [vmem:[%s457] sm:$0x3]
      %v1685 = vadd.f32 %v1684, %v1679
      %1686 = vst [vmem:[%s457] sm:$0x3] %v1685
      %s1687 = smul.u32 4, %s24
      %p1688 = scmp.lt.s32.totalorder %s23, 1
      %s1689 = scalar_select %p1688, %s23, 1
      %p1690 = scmp.lt.s32.totalorder %s1687, 15
      %s1691 = scalar_select %p1690, %s1687, 15
      %s1692 = smul.addr %s1691, 2
      %s1693 = smul.addr %s1689, 32
      %s1694 = sadd.s32 %s1692, %s1693
      %s1695 = smul.addr %s1694, 8
      %s1696 = scalar_lea.vmem %s6, %s1695
      %p1697 = scmp.lt.s32.totalorder %s23, 1
      %s1698 = scalar_select %p1697, %s23, 1
      %s1699 = smul.addr %s1698, 2
      %s1700 = scalar_lea.vmem %s7, %s1699
      // Predicated region
      $region49: #{attention_block_forward.6} parent=43 // pred_check
        %p1701 = pneg %p214
      $region50: #{attention_block_forward.6} parent=43 // pred_check_branch
        %1703 = sbr.rel (%p1701) target = $region52
      $region51: #{attention_block_forward.6} parent=43 // pred_region
        %s1704 = smul.u32 4, %s24
      $region52: #{attention_block_forward.6} parent=43 // pred_fallthru
        _
      // Predicated region
      $region53: #{attention_block_forward.6} parent=43 // pred_check
        %p1705 = pneg %p240
      $region54: #{attention_block_forward.6} parent=43 // pred_check_branch
        %1707 = sbr.rel (%p1705) target = $region56
      $region55: #{attention_block_forward.6} parent=43 // pred_region
        _
      $region56: #{attention_block_forward.6} parent=43 // pred_fallthru
        _
    $region44: #{attention_block_forward.6} parent=5 // pred_fallthru
      _
    %p1708 = scmp.le.s32.totalorder 2, %s14
    // Predicated region
    $region57: #{attention_block_forward.6} parent=5 // pred_check
      %p1709 = pneg %p1708
    $region58: #{attention_block_forward.6} parent=5 // pred_check_branch
      %1711 = sbr.rel (%p1709) target = $region60
    $region59: #{attention_block_forward.6} parent=5 // pred_region
      %s1712 = ssub.s32 %s14, 2
      // Predicated region
      $region61: #{attention_block_forward.6} parent=59 // pred_check
        %p1713 = pneg %p220
      $region62: #{attention_block_forward.6} parent=59 // pred_check_branch
        %1715 = sbr.rel (%p1713) target = $region64
      $region63: #{attention_block_forward.6} parent=59 // pred_region
        %s1716 = smul.u32 4, %s26
        %p1717 = scmp.lt.s32.totalorder %s25, 1
        %s1718 = scalar_select %p1717, %s25, 1
        %p1719 = scmp.lt.s32.totalorder %s1716, 15
        %s1720 = scalar_select %p1719, %s1716, 15
        %s1721 = smul.addr %s1720, 2
        %s1722 = smul.addr %s1718, 32
        %s1723 = sadd.s32 %s1721, %s1722
        %s1724 = smul.addr %s1723, 8
        %s1725 = scalar_lea.vmem %s6, %s1724
      $region64: #{attention_block_forward.6} parent=59 // pred_fallthru
        _
      // Predicated region
      $region65: #{attention_block_forward.6} parent=59 // pred_check
        %p1726 = pneg %p246
      $region66: #{attention_block_forward.6} parent=59 // pred_check_branch
        %1728 = sbr.rel (%p1726) target = $region68
      $region67: #{attention_block_forward.6} parent=59 // pred_region
        %p1729 = scmp.lt.s32.totalorder %s25, 1
        %s1730 = scalar_select %p1729, %s25, 1
        %s1731 = smul.addr %s1730, 2
        %s1732 = scalar_lea.vmem %s7, %s1731
      $region68: #{attention_block_forward.6} parent=59 // pred_fallthru
        _
    $region60: #{attention_block_forward.6} parent=5 // pred_fallthru
      _
  $region6: #{attention_block_forward.6} parent=0 // loop_footer
    %s18 = sadd.s32 1, %s14
  $region7: #{attention_block_forward.6} parent=0 // loop_footer_branch
    %13 = sbr.rel target = $region3
  $region8: #{attention_block_forward.6} parent=0 // loop_exit
    _

// kernel: attention_block_forward.5
$region0: #{attention_block_forward.5}
  #allocation0 [shape = 'u32[]', space=smem, size = 0x4, offset = 0x4, fixed_abs, tag = 'smem constant byte address 0x4 - core index']
  #allocation1 [shape = 'u32[144,128]{1,0:T(1,128)}', space=vmem, size = 0x12000, scoped, tag = 'internal scratch']
  #allocation2 [shape = 'f32[1,1]{1,0:T(1,128)S(1)}', space=vmem, size = 0x200, scoped, tag = 'scoped memory for attention_block_forward.5']
  %s0 = inlined_call_operand.vmem [shape: f32[2,16,16,128], index: 0, kind: input, shape index: {}, may-alias: {0,1,2}]
  %s1 = inlined_call_operand.vmem [shape: f32[2,16,16,128], index: 1, kind: input, shape index: {}, may-alias: {0,1,2}]
  %s2 = inlined_call_operand.vmem [shape: f32[2,16,16,128], index: 2, kind: input, shape index: {}, may-alias: {0,1,2}]
  %s3 = inlined_call_operand.vmem [shape: f32[2,16,16,128], index: 3, kind: input, shape index: {}, may-alias: {3,4,5}]
  %s4 = inlined_call_operand.vmem [shape: f32[2,16,16,128], index: 4, kind: input, shape index: {}, may-alias: {3,4,5}]
  %s5 = inlined_call_operand.vmem [shape: f32[2,16,16,128], index: 5, kind: input, shape index: {}, may-alias: {3,4,5}]
  %s6 = inlined_call_operand.vmem [shape: bf16[128,128], index: 6, kind: input, shape index: {}]
  %s7 = inlined_call_operand.vmem [shape: bf16[128,128], index: 7, kind: input, shape index: {}]
  %s8 = inlined_call_operand.vmem [shape: f32[8,128], index: 8, kind: input, shape index: {}]
  %s9 = inlined_call_operand.<no memory space> [shape: f32[1,1], index: 9, kind: input, shape index: {}]
  %s10 = inlined_call_operand.vmem [shape: bf16[2304,128], index: 10, kind: input, shape index: {}]
  %s11 = inlined_call_operand.vmem [shape: f32[1,128], index: 11, kind: input, shape index: {}]
  %s12 = inlined_call_operand.vmem [shape: f32[2,16,16,128], index: 12, kind: output, shape index: {0}]
  %s13 = inlined_call_operand.vmem [shape: f32[2,2,128], index: 13, kind: output, shape index: {1}]
  %14 = xla_tuple %s12, %s13
  %s15 = sld [smem:[#allocation0]]
  $region93: #{attention_block_forward.5} parent=0
    _
  %s17 = ssub.s32 1, %s15
  %s18 = scalar_select 0, %s17, %s15
  %v19 = vstv %s9
  %20 = vst [vmem:[#allocation2] sm:$0x1] %v19
  loop: start=0, step=1, limit=10
  $region2: #{attention_block_forward.5} parent=0 // loop_pre_header
    _
  $region3: #{attention_block_forward.5} parent=0 // loop_header
    %s22 = sphi 0, %s26
    %p23 = scmp.ge.s32.totalorder %s22, 10
    %s29 = sphi 0, %s41
    %s30 = sphi 0, %s37
    %s31 = sphi 0, %s29
    %s32 = sphi 0, %s30
    %s33 = sphi 0, %s31
    %s34 = sphi 0, %s32
    %s46 = sphi 0, %s48
    %s49 = sphi 0, %s46
    %s50 = sphi 0, %s49
    %s66 = sphi 0, %s50
    %s82 = sphi 0, %s84
    %s85 = sphi 0, %s82
    %s86 = sphi 0, %s85
    %s102 = sphi 0, %s86
    %s118 = sphi 0, %s120
    %s121 = sphi 0, %s118
    %s122 = sphi 0, %s121
    %s138 = sphi 0, %s122
    %s146 = sphi 0, %s148
    %s149 = sphi 0, %s146
    %s150 = sphi 0, %s149
    %s166 = sphi 0, %s150
    %s182 = sphi 0, %s184
    %s185 = sphi 0, %s182
    %s186 = sphi 0, %s185
    %s202 = sphi 0, %s186
    %s218 = sphi 0, %s220
    %s221 = sphi 0, %s218
    %s222 = sphi 0, %s221
    %s238 = sphi 0, %s222
    %s242 = sphi 0, %s242
    %s244 = sphi 0, %s242
    %s245 = sphi 0, %s244
    %s259 = sphi 0, %s245
    %s263 = sphi 0, %s263
    %s265 = sphi 0, %s263
    %s266 = sphi 0, %s265
    %s280 = sphi 0, %s266
    %s284 = sphi 0, %s284
    %s286 = sphi 0, %s284
    %s287 = sphi 0, %s286
    %s301 = sphi 0, %s287
    %s305 = sphi 0, %s305
    %s307 = sphi 0, %s305
    %s308 = sphi 0, %s307
    %s322 = sphi 0, %s308
    %s326 = sphi 0, %s326
    %s328 = sphi 0, %s326
    %s329 = sphi 0, %s328
    %s343 = sphi 0, %s329
    %s347 = sphi 0, %s347
    %s349 = sphi 0, %s347
    %s350 = sphi 0, %s349
    %s364 = sphi 0, %s350
    %s372 = sphi 0, %s374
    %s375 = sphi 0, %s372
    %s376 = sphi 0, %s375
    %s392 = sphi 0, %s376
    %s398 = sphi 0, %s400
    %s401 = sphi 0, %s398
    %s402 = sphi 0, %s401
    %s418 = sphi 0, %s402
  $region4: #{attention_block_forward.5} parent=0 // loop_header_branch
    %25 = sbr.rel (%p23) target = $region8
  $region5: #{attention_block_forward.5} parent=0 // loop_body
    %s27 = ssub.s32 %s22, 1
    %s28 = ssub.s32 %s22, 2
    %s35 = sadd.s32 1, %s30
    %p36 = scmp.ge.s32.totalorder %s35, 4
    %s37 = scalar_select %p36, 0, %s35
    %s38 = sadd.s32 1, %s29
    %s39 = scalar_select %p36, %s38, %s29
    %p40 = scmp.ge.s32.totalorder %s39, 2
    %s41 = scalar_select %p40, 0, %s39
    %s42 = ssub.s32 %s29, %s41
    %s43 = ssub.s32 %s30, %s37
    %s44 = sor.u32 %s42, %s43
    %p45 = scmp.eq.s32.totalorder %s44, 0
    %s47 = sadd.s32 %s46, 1
    %s48 = scalar_select %p45, %s46, %s47
    %p51 = pneg %p45
    %p52 = scmp.eq.s32.totalorder %s22, 7
    %p53 = por %p51, %p52
    %p54 = scmp.ne.s32.totalorder %s46, %s49
    %p55 = scmp.eq.s32.totalorder %s22, 0
    %p56 = por %p54, %p55
    %p57 = scmp.ne.s32.totalorder %s46, %s49
    %p58 = scmp.eq.s32.totalorder %s27, 7
    %p59 = por %p57, %p58
    %p60 = scmp.ne.s32.totalorder %s49, %s50
    %p61 = scmp.eq.s32.totalorder %s27, 0
    %p62 = por %p60, %p61
    %p63 = scmp.ne.s32.totalorder %s49, %s50
    %p64 = scmp.eq.s32.totalorder %s28, 7
    %p65 = por %p63, %p64
    %p67 = scmp.ne.s32.totalorder %s50, %s66
    %p68 = scmp.eq.s32.totalorder %s28, 0
    %p69 = por %p67, %p68
    %s70 = smul.u32 %s30, 4
    %s71 = ssub.s32 %s70, 1
    %p72 = scmp.gt.s32.totalorder %s71, 0
    %s73 = scalar_select %p72, %s71, 0
    %s74 = smul.u32 %s37, 4
    %s75 = ssub.s32 %s74, 1
    %p76 = scmp.gt.s32.totalorder %s75, 0
    %s77 = scalar_select %p76, %s75, 0
    %s78 = ssub.s32 %s29, %s41
    %s79 = ssub.s32 %s73, %s77
    %s80 = sor.u32 %s78, %s79
    %p81 = scmp.eq.s32.totalorder %s80, 0
    %s83 = sadd.s32 %s82, 1
    %s84 = scalar_select %p81, %s82, %s83
    %p87 = pneg %p81
    %p88 = scmp.eq.s32.totalorder %s22, 7
    %p89 = por %p87, %p88
    %p90 = scmp.ne.s32.totalorder %s82, %s85
    %p91 = scmp.eq.s32.totalorder %s22, 0
    %p92 = por %p90, %p91
    %p93 = scmp.ne.s32.totalorder %s82, %s85
    %p94 = scmp.eq.s32.totalorder %s27, 7
    %p95 = por %p93, %p94
    %p96 = scmp.ne.s32.totalorder %s85, %s86
    %p97 = scmp.eq.s32.totalorder %s27, 0
    %p98 = por %p96, %p97
    %p99 = scmp.ne.s32.totalorder %s85, %s86
    %p100 = scmp.eq.s32.totalorder %s28, 7
    %p101 = por %p99, %p100
    %p103 = scmp.ne.s32.totalorder %s86, %s102
    %p104 = scmp.eq.s32.totalorder %s28, 0
    %p105 = por %p103, %p104
    %s106 = smul.u32 %s30, 4
    %s107 = sadd.s32 %s106, 4
    %p108 = scmp.lt.s32.totalorder %s107, 15
    %s109 = scalar_select %p108, %s107, 15
    %s110 = smul.u32 %s37, 4
    %s111 = sadd.s32 %s110, 4
    %p112 = scmp.lt.s32.totalorder %s111, 15
    %s113 = scalar_select %p112, %s111, 15
    %s114 = ssub.s32 %s29, %s41
    %s115 = ssub.s32 %s109, %s113
    %s116 = sor.u32 %s114, %s115
    %p117 = scmp.eq.s32.totalorder %s116, 0
    %s119 = sadd.s32 %s118, 1
    %s120 = scalar_select %p117, %s118, %s119
    %p123 = pneg %p117
    %p124 = scmp.eq.s32.totalorder %s22, 7
    %p125 = por %p123, %p124
    %p126 = scmp.ne.s32.totalorder %s118, %s121
    %p127 = scmp.eq.s32.totalorder %s22, 0
    %p128 = por %p126, %p127
    %p129 = scmp.ne.s32.totalorder %s118, %s121
    %p130 = scmp.eq.s32.totalorder %s27, 7
    %p131 = por %p129, %p130
    %p132 = scmp.ne.s32.totalorder %s121, %s122
    %p133 = scmp.eq.s32.totalorder %s27, 0
    %p134 = por %p132, %p133
    %p135 = scmp.ne.s32.totalorder %s121, %s122
    %p136 = scmp.eq.s32.totalorder %s28, 7
    %p137 = por %p135, %p136
    %p139 = scmp.ne.s32.totalorder %s122, %s138
    %p140 = scmp.eq.s32.totalorder %s28, 0
    %p141 = por %p139, %p140
    %s142 = ssub.s32 %s29, %s41
    %s143 = ssub.s32 %s30, %s37
    %s144 = sor.u32 %s142, %s143
    %p145 = scmp.eq.s32.totalorder %s144, 0
    %s147 = sadd.s32 %s146, 1
    %s148 = scalar_select %p145, %s146, %s147
    %p151 = pneg %p145
    %p152 = scmp.eq.s32.totalorder %s22, 7
    %p153 = por %p151, %p152
    %p154 = scmp.ne.s32.totalorder %s146, %s149
    %p155 = scmp.eq.s32.totalorder %s22, 0
    %p156 = por %p154, %p155
    %p157 = scmp.ne.s32.totalorder %s146, %s149
    %p158 = scmp.eq.s32.totalorder %s27, 7
    %p159 = por %p157, %p158
    %p160 = scmp.ne.s32.totalorder %s149, %s150
    %p161 = scmp.eq.s32.totalorder %s27, 0
    %p162 = por %p160, %p161
    %p163 = scmp.ne.s32.totalorder %s149, %s150
    %p164 = scmp.eq.s32.totalorder %s28, 7
    %p165 = por %p163, %p164
    %p167 = scmp.ne.s32.totalorder %s150, %s166
    %p168 = scmp.eq.s32.totalorder %s28, 0
    %p169 = por %p167, %p168
    %s170 = smul.u32 %s30, 4
    %s171 = ssub.s32 %s170, 1
    %p172 = scmp.gt.s32.totalorder %s171, 0
    %s173 = scalar_select %p172, %s171, 0
    %s174 = smul.u32 %s37, 4
    %s175 = ssub.s32 %s174, 1
    %p176 = scmp.gt.s32.totalorder %s175, 0
    %s177 = scalar_select %p176, %s175, 0
    %s178 = ssub.s32 %s29, %s41
    %s179 = ssub.s32 %s173, %s177
    %s180 = sor.u32 %s178, %s179
    %p181 = scmp.eq.s32.totalorder %s180, 0
    %s183 = sadd.s32 %s182, 1
    %s184 = scalar_select %p181, %s182, %s183
    %p187 = pneg %p181
    %p188 = scmp.eq.s32.totalorder %s22, 7
    %p189 = por %p187, %p188
    %p190 = scmp.ne.s32.totalorder %s182, %s185
    %p191 = scmp.eq.s32.totalorder %s22, 0
    %p192 = por %p190, %p191
    %p193 = scmp.ne.s32.totalorder %s182, %s185
    %p194 = scmp.eq.s32.totalorder %s27, 7
    %p195 = por %p193, %p194
    %p196 = scmp.ne.s32.totalorder %s185, %s186
    %p197 = scmp.eq.s32.totalorder %s27, 0
    %p198 = por %p196, %p197
    %p199 = scmp.ne.s32.totalorder %s185, %s186
    %p200 = scmp.eq.s32.totalorder %s28, 7
    %p201 = por %p199, %p200
    %p203 = scmp.ne.s32.totalorder %s186, %s202
    %p204 = scmp.eq.s32.totalorder %s28, 0
    %p205 = por %p203, %p204
    %s206 = smul.u32 %s30, 4
    %s207 = sadd.s32 %s206, 4
    %p208 = scmp.lt.s32.totalorder %s207, 15
    %s209 = scalar_select %p208, %s207, 15
    %s210 = smul.u32 %s37, 4
    %s211 = sadd.s32 %s210, 4
    %p212 = scmp.lt.s32.totalorder %s211, 15
    %s213 = scalar_select %p212, %s211, 15
    %s214 = ssub.s32 %s29, %s41
    %s215 = ssub.s32 %s209, %s213
    %s216 = sor.u32 %s214, %s215
    %p217 = scmp.eq.s32.totalorder %s216, 0
    %s219 = sadd.s32 %s218, 1
    %s220 = scalar_select %p217, %s218, %s219
    %p223 = pneg %p217
    %p224 = scmp.eq.s32.totalorder %s22, 7
    %p225 = por %p223, %p224
    %p226 = scmp.ne.s32.totalorder %s218, %s221
    %p227 = scmp.eq.s32.totalorder %s22, 0
    %p228 = por %p226, %p227
    %p229 = scmp.ne.s32.totalorder %s218, %s221
    %p230 = scmp.eq.s32.totalorder %s27, 7
    %p231 = por %p229, %p230
    %p232 = scmp.ne.s32.totalorder %s221, %s222
    %p233 = scmp.eq.s32.totalorder %s27, 0
    %p234 = por %p232, %p233
    %p235 = scmp.ne.s32.totalorder %s221, %s222
    %p236 = scmp.eq.s32.totalorder %s28, 7
    %p237 = por %p235, %p236
    %p239 = scmp.ne.s32.totalorder %s222, %s238
    %p240 = scmp.eq.s32.totalorder %s28, 0
    %p241 = por %p239, %p240
    %s243 = sadd.s32 %s242, 1
    %p246 = scmp.eq.s32.totalorder %s22, 7
    %p247 = scmp.ne.s32.totalorder %s242, %s244
    %p248 = scmp.eq.s32.totalorder %s22, 0
    %p249 = por %p247, %p248
    %p250 = scmp.ne.s32.totalorder %s242, %s244
    %p251 = scmp.eq.s32.totalorder %s27, 7
    %p252 = por %p250, %p251
    %p253 = scmp.ne.s32.totalorder %s244, %s245
    %p254 = scmp.eq.s32.totalorder %s27, 0
    %p255 = por %p253, %p254
    %p256 = scmp.ne.s32.totalorder %s244, %s245
    %p257 = scmp.eq.s32.totalorder %s28, 7
    %p258 = por %p256, %p257
    %p260 = scmp.ne.s32.totalorder %s245, %s259
    %p261 = scmp.eq.s32.totalorder %s28, 0
    %p262 = por %p260, %p261
    %s264 = sadd.s32 %s263, 1
    %p267 = scmp.eq.s32.totalorder %s22, 7
    %p268 = scmp.ne.s32.totalorder %s263, %s265
    %p269 = scmp.eq.s32.totalorder %s22, 0
    %p270 = por %p268, %p269
    %p271 = scmp.ne.s32.totalorder %s263, %s265
    %p272 = scmp.eq.s32.totalorder %s27, 7
    %p273 = por %p271, %p272
    %p274 = scmp.ne.s32.totalorder %s265, %s266
    %p275 = scmp.eq.s32.totalorder %s27, 0
    %p276 = por %p274, %p275
    %p277 = scmp.ne.s32.totalorder %s265, %s266
    %p278 = scmp.eq.s32.totalorder %s28, 7
    %p279 = por %p277, %p278
    %p281 = scmp.ne.s32.totalorder %s266, %s280
    %p282 = scmp.eq.s32.totalorder %s28, 0
    %p283 = por %p281, %p282
    %s285 = sadd.s32 %s284, 1
    %p288 = scmp.eq.s32.totalorder %s22, 7
    %p289 = scmp.ne.s32.totalorder %s284, %s286
    %p290 = scmp.eq.s32.totalorder %s22, 0
    %p291 = por %p289, %p290
    %p292 = scmp.ne.s32.totalorder %s284, %s286
    %p293 = scmp.eq.s32.totalorder %s27, 7
    %p294 = por %p292, %p293
    %p295 = scmp.ne.s32.totalorder %s286, %s287
    %p296 = scmp.eq.s32.totalorder %s27, 0
    %p297 = por %p295, %p296
    %p298 = scmp.ne.s32.totalorder %s286, %s287
    %p299 = scmp.eq.s32.totalorder %s28, 7
    %p300 = por %p298, %p299
    %p302 = scmp.ne.s32.totalorder %s287, %s301
    %p303 = scmp.eq.s32.totalorder %s28, 0
    %p304 = por %p302, %p303
    %s306 = sadd.s32 %s305, 1
    %p309 = scmp.eq.s32.totalorder %s22, 7
    %p310 = scmp.ne.s32.totalorder %s305, %s307
    %p311 = scmp.eq.s32.totalorder %s22, 0
    %p312 = por %p310, %p311
    %p313 = scmp.ne.s32.totalorder %s305, %s307
    %p314 = scmp.eq.s32.totalorder %s27, 7
    %p315 = por %p313, %p314
    %p316 = scmp.ne.s32.totalorder %s307, %s308
    %p317 = scmp.eq.s32.totalorder %s27, 0
    %p318 = por %p316, %p317
    %p319 = scmp.ne.s32.totalorder %s307, %s308
    %p320 = scmp.eq.s32.totalorder %s28, 7
    %p321 = por %p319, %p320
    %p323 = scmp.ne.s32.totalorder %s308, %s322
    %p324 = scmp.eq.s32.totalorder %s28, 0
    %p325 = por %p323, %p324
    %s327 = sadd.s32 %s326, 1
    %p330 = scmp.eq.s32.totalorder %s22, 7
    %p331 = scmp.ne.s32.totalorder %s326, %s328
    %p332 = scmp.eq.s32.totalorder %s22, 0
    %p333 = por %p331, %p332
    %p334 = scmp.ne.s32.totalorder %s326, %s328
    %p335 = scmp.eq.s32.totalorder %s27, 7
    %p336 = por %p334, %p335
    %p337 = scmp.ne.s32.totalorder %s328, %s329
    %p338 = scmp.eq.s32.totalorder %s27, 0
    %p339 = por %p337, %p338
    %p340 = scmp.ne.s32.totalorder %s328, %s329
    %p341 = scmp.eq.s32.totalorder %s28, 7
    %p342 = por %p340, %p341
    %p344 = scmp.ne.s32.totalorder %s329, %s343
    %p345 = scmp.eq.s32.totalorder %s28, 0
    %p346 = por %p344, %p345
    %s348 = sadd.s32 %s347, 1
    %p351 = scmp.eq.s32.totalorder %s22, 7
    %p352 = scmp.ne.s32.totalorder %s347, %s349
    %p353 = scmp.eq.s32.totalorder %s22, 0
    %p354 = por %p352, %p353
    %p355 = scmp.ne.s32.totalorder %s347, %s349
    %p356 = scmp.eq.s32.totalorder %s27, 7
    %p357 = por %p355, %p356
    %p358 = scmp.ne.s32.totalorder %s349, %s350
    %p359 = scmp.eq.s32.totalorder %s27, 0
    %p360 = por %p358, %p359
    %p361 = scmp.ne.s32.totalorder %s349, %s350
    %p362 = scmp.eq.s32.totalorder %s28, 7
    %p363 = por %p361, %p362
    %p365 = scmp.ne.s32.totalorder %s350, %s364
    %p366 = scmp.eq.s32.totalorder %s28, 0
    %p367 = por %p365, %p366
    %s368 = ssub.s32 %s29, %s41
    %s369 = ssub.s32 %s30, %s37
    %s370 = sor.u32 %s368, %s369
    %p371 = scmp.eq.s32.totalorder %s370, 0
    %s373 = sadd.s32 %s372, 1
    %s374 = scalar_select %p371, %s372, %s373
    %p377 = pneg %p371
    %p378 = scmp.eq.s32.totalorder %s22, 7
    %p379 = por %p377, %p378
    %p380 = scmp.ne.s32.totalorder %s372, %s375
    %p381 = scmp.eq.s32.totalorder %s22, 0
    %p382 = por %p380, %p381
    %p383 = scmp.ne.s32.totalorder %s372, %s375
    %p384 = scmp.eq.s32.totalorder %s27, 7
    %p385 = por %p383, %p384
    %p386 = scmp.ne.s32.totalorder %s375, %s376
    %p387 = scmp.eq.s32.totalorder %s27, 0
    %p388 = por %p386, %p387
    %p389 = scmp.ne.s32.totalorder %s375, %s376
    %p390 = scmp.eq.s32.totalorder %s28, 7
    %p391 = por %p389, %p390
    %p393 = scmp.ne.s32.totalorder %s376, %s392
    %p394 = scmp.eq.s32.totalorder %s28, 0
    %p395 = por %p393, %p394
    %s396 = ssub.s32 %s29, %s41
    %p397 = scmp.eq.s32.totalorder %s396, 0
    %s399 = sadd.s32 %s398, 1
    %s400 = scalar_select %p397, %s398, %s399
    %p403 = pneg %p397
    %p404 = scmp.eq.s32.totalorder %s22, 7
    %p405 = por %p403, %p404
    %p406 = scmp.ne.s32.totalorder %s398, %s401
    %p407 = scmp.eq.s32.totalorder %s22, 0
    %p408 = por %p406, %p407
    %p409 = scmp.ne.s32.totalorder %s398, %s401
    %p410 = scmp.eq.s32.totalorder %s27, 7
    %p411 = por %p409, %p410
    %p412 = scmp.ne.s32.totalorder %s401, %s402
    %p413 = scmp.eq.s32.totalorder %s27, 0
    %p414 = por %p412, %p413
    %p415 = scmp.ne.s32.totalorder %s401, %s402
    %p416 = scmp.eq.s32.totalorder %s28, 7
    %p417 = por %p415, %p416
    %p419 = scmp.ne.s32.totalorder %s402, %s418
    %p420 = scmp.eq.s32.totalorder %s28, 0
    %p421 = por %p419, %p420
    %p422 = scmp.le.s32.totalorder 1, %s22
    %p423 = scmp.lt.s32.totalorder %s22, 9
    %p424 = pnand %p422, %p423
    %p425 = pneg %p424
    // Predicated region
    $region9: #{attention_block_forward.5} parent=5 // pred_check
      _
    $region10: #{attention_block_forward.5} parent=5 // pred_check_branch
      %427 = sbr.rel (%p424) target = $region12
    $region11: #{attention_block_forward.5} parent=5 // pred_region
      %s428 = ssub.s32 %s22, 1
      // Predicated region
      $region13: #{attention_block_forward.5} parent=11 // pred_check
        %p429 = pneg %p255
      $region14: #{attention_block_forward.5} parent=11 // pred_check_branch
        %431 = sbr.rel (%p429) target = $region16
      $region15: #{attention_block_forward.5} parent=11 // pred_region
        _
      $region16: #{attention_block_forward.5} parent=11 // pred_fallthru
        _
      // Predicated region
      $region17: #{attention_block_forward.5} parent=11 // pred_check
        %p432 = pneg %p276
      $region18: #{attention_block_forward.5} parent=11 // pred_check_branch
        %434 = sbr.rel (%p432) target = $region20
      $region19: #{attention_block_forward.5} parent=11 // pred_region
        _
      $region20: #{attention_block_forward.5} parent=11 // pred_fallthru
        _
      // Predicated region
      $region21: #{attention_block_forward.5} parent=11 // pred_check
        %p435 = pneg %p297
      $region22: #{attention_block_forward.5} parent=11 // pred_check_branch
        %437 = sbr.rel (%p435) target = $region24
      $region23: #{attention_block_forward.5} parent=11 // pred_region
        _
      $region24: #{attention_block_forward.5} parent=11 // pred_fallthru
        _
      // Predicated region
      $region25: #{attention_block_forward.5} parent=11 // pred_check
        %p438 = pneg %p318
      $region26: #{attention_block_forward.5} parent=11 // pred_check_branch
        %440 = sbr.rel (%p438) target = $region28
      $region27: #{attention_block_forward.5} parent=11 // pred_region
        _
      $region28: #{attention_block_forward.5} parent=11 // pred_fallthru
        _
      // Predicated region
      $region29: #{attention_block_forward.5} parent=11 // pred_check
        %p441 = pneg %p339
      $region30: #{attention_block_forward.5} parent=11 // pred_check_branch
        %443 = sbr.rel (%p441) target = $region32
      $region31: #{attention_block_forward.5} parent=11 // pred_region
        _
      $region32: #{attention_block_forward.5} parent=11 // pred_fallthru
        _
      // Predicated region
      $region33: #{attention_block_forward.5} parent=11 // pred_check
        %p444 = pneg %p360
      $region34: #{attention_block_forward.5} parent=11 // pred_check_branch
        %446 = sbr.rel (%p444) target = $region36
      $region35: #{attention_block_forward.5} parent=11 // pred_region
        _
      $region36: #{attention_block_forward.5} parent=11 // pred_fallthru
        _
    $region12: #{attention_block_forward.5} parent=5 // pred_fallthru
      _
    %p447 = scmp.lt.s32.totalorder %s22, 8
    // Predicated region
    $region37: #{attention_block_forward.5} parent=5 // pred_check
      %p448 = pneg %p447
    $region38: #{attention_block_forward.5} parent=5 // pred_check_branch
      %450 = sbr.rel (%p448) target = $region40
    $region39: #{attention_block_forward.5} parent=5 // pred_region
      // Predicated region
      $region41: #{attention_block_forward.5} parent=39 // pred_check
        %p451 = pneg %p56
      $region42: #{attention_block_forward.5} parent=39 // pred_check_branch
        %453 = sbr.rel (%p451) target = $region44
      $region43: #{attention_block_forward.5} parent=39 // pred_region
        %s454 = smul.u32 4, %s30
        %p455 = scmp.lt.s32.totalorder %s29, 1
        %s456 = scalar_select %p455, %s29, 1
        %p457 = scmp.lt.s32.totalorder %s454, 15
        %s458 = scalar_select %p457, %s454, 15
        %s459 = smul.addr %s458, 2
        %s460 = smul.addr %s456, 32
        %s461 = sadd.s32 %s459, %s460
        %s462 = smul.addr %s461, 8
        %s463 = scalar_lea.vmem %s0, %s462
        %s464 = smul.u32 4, %s30
      $region44: #{attention_block_forward.5} parent=39 // pred_fallthru
        _
      // Predicated region
      $region45: #{attention_block_forward.5} parent=39 // pred_check
        %p465 = pneg %p92
      $region46: #{attention_block_forward.5} parent=39 // pred_check_branch
        %467 = sbr.rel (%p465) target = $region48
      $region47: #{attention_block_forward.5} parent=39 // pred_region
        %s468 = smul.u32 %s30, 4
        %s469 = ssub.s32 %s468, 1
        %p470 = scmp.gt.s32.totalorder %s469, 0
        %s471 = scalar_select %p470, %s469, 0
        %p472 = scmp.lt.s32.totalorder %s29, 1
        %s473 = scalar_select %p472, %s29, 1
        %p474 = scmp.lt.s32.totalorder %s471, 15
        %s475 = scalar_select %p474, %s471, 15
        %s476 = smul.addr %s475, 2
        %s477 = smul.addr %s473, 32
        %s478 = sadd.s32 %s476, %s477
        %s479 = smul.addr %s478, 8
        %s480 = scalar_lea.vmem %s1, %s479
        %s481 = smul.u32 %s30, 4
        %s482 = ssub.s32 %s481, 1
        %p483 = scmp.gt.s32.totalorder %s482, 0
        %s484 = scalar_select %p483, %s482, 0
      $region48: #{attention_block_forward.5} parent=39 // pred_fallthru
        _
      // Predicated region
      $region49: #{attention_block_forward.5} parent=39 // pred_check
        %p485 = pneg %p128
      $region50: #{attention_block_forward.5} parent=39 // pred_check_branch
        %487 = sbr.rel (%p485) target = $region52
      $region51: #{attention_block_forward.5} parent=39 // pred_region
        %s488 = smul.u32 %s30, 4
        %s489 = sadd.s32 %s488, 4
        %p490 = scmp.lt.s32.totalorder %s489, 15
        %s491 = scalar_select %p490, %s489, 15
        %p492 = scmp.lt.s32.totalorder %s29, 1
        %s493 = scalar_select %p492, %s29, 1
        %p494 = scmp.lt.s32.totalorder %s491, 15
        %s495 = scalar_select %p494, %s491, 15
        %s496 = smul.addr %s495, 2
        %s497 = smul.addr %s493, 32
        %s498 = sadd.s32 %s496, %s497
        %s499 = smul.addr %s498, 8
        %s500 = scalar_lea.vmem %s2, %s499
        %s501 = smul.u32 %s30, 4
        %s502 = sadd.s32 %s501, 4
        %p503 = scmp.lt.s32.totalorder %s502, 15
        %s504 = scalar_select %p503, %s502, 15
      $region52: #{attention_block_forward.5} parent=39 // pred_fallthru
        _
      // Predicated region
      $region53: #{attention_block_forward.5} parent=39 // pred_check
        %p505 = pneg %p156
      $region54: #{attention_block_forward.5} parent=39 // pred_check_branch
        %507 = sbr.rel (%p505) target = $region56
      $region55: #{attention_block_forward.5} parent=39 // pred_region
        %s508 = smul.u32 4, %s30
        %p509 = scmp.lt.s32.totalorder %s29, 1
        %s510 = scalar_select %p509, %s29, 1
        %p511 = scmp.lt.s32.totalorder %s508, 15
        %s512 = scalar_select %p511, %s508, 15
        %s513 = smul.addr %s512, 2
        %s514 = smul.addr %s510, 32
        %s515 = sadd.s32 %s513, %s514
        %s516 = smul.addr %s515, 8
        %s517 = scalar_lea.vmem %s3, %s516
        %s518 = smul.u32 4, %s30
      $region56: #{attention_block_forward.5} parent=39 // pred_fallthru
        _
      // Predicated region
      $region57: #{attention_block_forward.5} parent=39 // pred_check
        %p519 = pneg %p192
      $region58: #{attention_block_forward.5} parent=39 // pred_check_branch
        %521 = sbr.rel (%p519) target = $region60
      $region59: #{attention_block_forward.5} parent=39 // pred_region
        %s522 = smul.u32 %s30, 4
        %s523 = ssub.s32 %s522, 1
        %p524 = scmp.gt.s32.totalorder %s523, 0
        %s525 = scalar_select %p524, %s523, 0
        %p526 = scmp.lt.s32.totalorder %s29, 1
        %s527 = scalar_select %p526, %s29, 1
        %p528 = scmp.lt.s32.totalorder %s525, 15
        %s529 = scalar_select %p528, %s525, 15
        %s530 = smul.addr %s529, 2
        %s531 = smul.addr %s527, 32
        %s532 = sadd.s32 %s530, %s531
        %s533 = smul.addr %s532, 8
        %s534 = scalar_lea.vmem %s4, %s533
        %s535 = smul.u32 %s30, 4
        %s536 = ssub.s32 %s535, 1
        %p537 = scmp.gt.s32.totalorder %s536, 0
        %s538 = scalar_select %p537, %s536, 0
      $region60: #{attention_block_forward.5} parent=39 // pred_fallthru
        _
      // Predicated region
      $region61: #{attention_block_forward.5} parent=39 // pred_check
        %p539 = pneg %p228
      $region62: #{attention_block_forward.5} parent=39 // pred_check_branch
        %541 = sbr.rel (%p539) target = $region64
      $region63: #{attention_block_forward.5} parent=39 // pred_region
        %s542 = smul.u32 %s30, 4
        %s543 = sadd.s32 %s542, 4
        %p544 = scmp.lt.s32.totalorder %s543, 15
        %s545 = scalar_select %p544, %s543, 15
        %p546 = scmp.lt.s32.totalorder %s29, 1
        %s547 = scalar_select %p546, %s29, 1
        %p548 = scmp.lt.s32.totalorder %s545, 15
        %s549 = scalar_select %p548, %s545, 15
        %s550 = smul.addr %s549, 2
        %s551 = smul.addr %s547, 32
        %s552 = sadd.s32 %s550, %s551
        %s553 = smul.addr %s552, 8
        %s554 = scalar_lea.vmem %s5, %s553
        %s555 = smul.u32 %s30, 4
        %s556 = sadd.s32 %s555, 4
        %p557 = scmp.lt.s32.totalorder %s556, 15
        %s558 = scalar_select %p557, %s556, 15
      $region64: #{attention_block_forward.5} parent=39 // pred_fallthru
        _
    $region40: #{attention_block_forward.5} parent=5 // pred_fallthru
      _
    %p559 = scmp.le.s32.totalorder 1, %s22
    %p560 = scmp.lt.s32.totalorder %s22, 9
    %p561 = pnand %p559, %p560
    %p562 = pneg %p561
    // Predicated region
    $region65: #{attention_block_forward.5} parent=5 // pred_check
      _
    $region66: #{attention_block_forward.5} parent=5 // pred_check_branch
      %564 = sbr.rel (%p561) target = $region68
    $region67: #{attention_block_forward.5} parent=5 // pred_region
      %s565 = ssub.s32 %s22, 1
      %s566 = smul.u32 4, %s32
      %p567 = scmp.lt.s32.totalorder %s31, 1
      %s568 = scalar_select %p567, %s31, 1
      %p569 = scmp.lt.s32.totalorder %s566, 15
      %s570 = scalar_select %p569, %s566, 15
      %s571 = smul.addr %s570, 2
      %s572 = smul.addr %s568, 32
      %s573 = sadd.s32 %s571, %s572
      %s574 = smul.addr %s573, 8
      %s575 = scalar_lea.vmem %s0, %s574
      %p576 = pneg %p62
      %p577 = pneg %p59
      %s578 = smul.u32 %s32, 4
      %s579 = ssub.s32 %s578, 1
      %p580 = scmp.gt.s32.totalorder %s579, 0
      %s581 = scalar_select %p580, %s579, 0
      %p582 = scmp.lt.s32.totalorder %s31, 1
      %s583 = scalar_select %p582, %s31, 1
      %p584 = scmp.lt.s32.totalorder %s581, 15
      %s585 = scalar_select %p584, %s581, 15
      %s586 = smul.addr %s585, 2
      %s587 = smul.addr %s583, 32
      %s588 = sadd.s32 %s586, %s587
      %s589 = smul.addr %s588, 8
      %s590 = scalar_lea.vmem %s1, %s589
      %p591 = pneg %p98
      %p592 = pneg %p95
      %s593 = smul.u32 %s32, 4
      %s594 = sadd.s32 %s593, 4
      %p595 = scmp.lt.s32.totalorder %s594, 15
      %s596 = scalar_select %p595, %s594, 15
      %p597 = scmp.lt.s32.totalorder %s31, 1
      %s598 = scalar_select %p597, %s31, 1
      %p599 = scmp.lt.s32.totalorder %s596, 15
      %s600 = scalar_select %p599, %s596, 15
      %s601 = smul.addr %s600, 2
      %s602 = smul.addr %s598, 32
      %s603 = sadd.s32 %s601, %s602
      %s604 = smul.addr %s603, 8
      %s605 = scalar_lea.vmem %s2, %s604
      %p606 = pneg %p134
      %p607 = pneg %p131
      %s608 = smul.u32 4, %s32
      %p609 = scmp.lt.s32.totalorder %s31, 1
      %s610 = scalar_select %p609, %s31, 1
      %p611 = scmp.lt.s32.totalorder %s608, 15
      %s612 = scalar_select %p611, %s608, 15
      %s613 = smul.addr %s612, 2
      %s614 = smul.addr %s610, 32
      %s615 = sadd.s32 %s613, %s614
      %s616 = smul.addr %s615, 8
      %s617 = scalar_lea.vmem %s3, %s616
      %p618 = pneg %p162
      %p619 = pneg %p159
      %s620 = smul.u32 %s32, 4
      %s621 = ssub.s32 %s620, 1
      %p622 = scmp.gt.s32.totalorder %s621, 0
      %s623 = scalar_select %p622, %s621, 0
      %p624 = scmp.lt.s32.totalorder %s31, 1
      %s625 = scalar_select %p624, %s31, 1
      %p626 = scmp.lt.s32.totalorder %s623, 15
      %s627 = scalar_select %p626, %s623, 15
      %s628 = smul.addr %s627, 2
      %s629 = smul.addr %s625, 32
      %s630 = sadd.s32 %s628, %s629
      %s631 = smul.addr %s630, 8
      %s632 = scalar_lea.vmem %s4, %s631
      %p633 = pneg %p198
      %p634 = pneg %p195
      %s635 = smul.u32 %s32, 4
      %s636 = sadd.s32 %s635, 4
      %p637 = scmp.lt.s32.totalorder %s636, 15
      %s638 = scalar_select %p637, %s636, 15
      %p639 = scmp.lt.s32.totalorder %s31, 1
      %s640 = scalar_select %p639, %s31, 1
      %p641 = scmp.lt.s32.totalorder %s638, 15
      %s642 = scalar_select %p641, %s638, 15
      %s643 = smul.addr %s642, 2
      %s644 = smul.addr %s640, 32
      %s645 = sadd.s32 %s643, %s644
      %s646 = smul.addr %s645, 8
      %s647 = scalar_lea.vmem %s5, %s646
      %p648 = pneg %p234
      %p649 = pneg %p231
      %p650 = pneg %p255
      %p651 = pneg %p252
      %p652 = pneg %p276
      %p653 = pneg %p273
      %p654 = pneg %p297
      %p655 = pneg %p294
      %p656 = pneg %p318
      %p657 = pneg %p315
      %p658 = pneg %p339
      %p659 = pneg %p336
      %p660 = pneg %p360
      %p661 = pneg %p357
      %p662 = pneg %p388
      %p663 = pneg %p385
      %s664 = smul.u32 4, %s32
      %p665 = scmp.lt.s32.totalorder %s31, 1
      %s666 = scalar_select %p665, %s31, 1
      %p667 = scmp.lt.s32.totalorder %s664, 15
      %s668 = scalar_select %p667, %s664, 15
      %s669 = smul.addr %s668, 2
      %s670 = smul.addr %s666, 32
      %s671 = sadd.s32 %s669, %s670
      %s672 = smul.addr %s671, 8
      %s673 = scalar_lea.vmem %s12, %s672
      %p674 = pneg %p414
      %p675 = pneg %p411
      %p676 = scmp.lt.s32.totalorder %s31, 1
      %s677 = scalar_select %p676, %s31, 1
      %s678 = smul.addr %s677, 2
      %s679 = scalar_lea.vmem %s13, %s678
      %s680 = smul.u32 4, %s32
      %p681 = scmp.lt.s32.totalorder %s31, 1
      %s682 = scalar_select %p681, %s31, 1
      %p683 = scmp.lt.s32.totalorder %s680, 15
      %s684 = scalar_select %p683, %s680, 15
      %s685 = smul.addr %s684, 2
      %s686 = smul.addr %s682, 32
      %s687 = sadd.s32 %s685, %s686
      %s688 = smul.addr %s687, 8
      %s689 = scalar_lea.vmem %s0, %s688
      %s690 = smul.u32 4, %s32
      %s691 = smul.u32 %s32, 4
      %s692 = ssub.s32 %s691, 1
      %p693 = scmp.gt.s32.totalorder %s692, 0
      %s694 = scalar_select %p693, %s692, 0
      %p695 = scmp.lt.s32.totalorder %s31, 1
      %s696 = scalar_select %p695, %s31, 1
      %p697 = scmp.lt.s32.totalorder %s694, 15
      %s698 = scalar_select %p697, %s694, 15
      %s699 = smul.addr %s698, 2
      %s700 = smul.addr %s696, 32
      %s701 = sadd.s32 %s699, %s700
      %s702 = smul.addr %s701, 8
      %s703 = scalar_lea.vmem %s1, %s702
      %s704 = smul.u32 %s32, 4
      %s705 = ssub.s32 %s704, 1
      %p706 = scmp.gt.s32.totalorder %s705, 0
      %s707 = scalar_select %p706, %s705, 0
      %s708 = smul.u32 %s32, 4
      %s709 = sadd.s32 %s708, 4
      %p710 = scmp.lt.s32.totalorder %s709, 15
      %s711 = scalar_select %p710, %s709, 15
      %p712 = scmp.lt.s32.totalorder %s31, 1
      %s713 = scalar_select %p712, %s31, 1
      %p714 = scmp.lt.s32.totalorder %s711, 15
      %s715 = scalar_select %p714, %s711, 15
      %s716 = smul.addr %s715, 2
      %s717 = smul.addr %s713, 32
      %s718 = sadd.s32 %s716, %s717
      %s719 = smul.addr %s718, 8
      %s720 = scalar_lea.vmem %s2, %s719
      %s721 = smul.u32 %s32, 4
      %s722 = sadd.s32 %s721, 4
      %p723 = scmp.lt.s32.totalorder %s722, 15
      %s724 = scalar_select %p723, %s722, 15
      %s725 = smul.u32 4, %s32
      %p726 = scmp.lt.s32.totalorder %s31, 1
      %s727 = scalar_select %p726, %s31, 1
      %p728 = scmp.lt.s32.totalorder %s725, 15
      %s729 = scalar_select %p728, %s725, 15
      %s730 = smul.addr %s729, 2
      %s731 = smul.addr %s727, 32
      %s732 = sadd.s32 %s730, %s731
      %s733 = smul.addr %s732, 8
      %s734 = scalar_lea.vmem %s3, %s733
      %s735 = smul.u32 4, %s32
      %s736 = smul.u32 %s32, 4
      %s737 = ssub.s32 %s736, 1
      %p738 = scmp.gt.s32.totalorder %s737, 0
      %s739 = scalar_select %p738, %s737, 0
      %p740 = scmp.lt.s32.totalorder %s31, 1
      %s741 = scalar_select %p740, %s31, 1
      %p742 = scmp.lt.s32.totalorder %s739, 15
      %s743 = scalar_select %p742, %s739, 15
      %s744 = smul.addr %s743, 2
      %s745 = smul.addr %s741, 32
      %s746 = sadd.s32 %s744, %s745
      %s747 = smul.addr %s746, 8
      %s748 = scalar_lea.vmem %s4, %s747
      %s749 = smul.u32 %s32, 4
      %s750 = ssub.s32 %s749, 1
      %p751 = scmp.gt.s32.totalorder %s750, 0
      %s752 = scalar_select %p751, %s750, 0
      %s753 = smul.u32 %s32, 4
      %s754 = sadd.s32 %s753, 4
      %p755 = scmp.lt.s32.totalorder %s754, 15
      %s756 = scalar_select %p755, %s754, 15
      %p757 = scmp.lt.s32.totalorder %s31, 1
      %s758 = scalar_select %p757, %s31, 1
      %p759 = scmp.lt.s32.totalorder %s756, 15
      %s760 = scalar_select %p759, %s756, 15
      %s761 = smul.addr %s760, 2
      %s762 = smul.addr %s758, 32
      %s763 = sadd.s32 %s761, %s762
      %s764 = smul.addr %s763, 8
      %s765 = scalar_lea.vmem %s5, %s764
      %s766 = smul.u32 %s32, 4
      %s767 = sadd.s32 %s766, 4
      %p768 = scmp.lt.s32.totalorder %s767, 15
      %s769 = scalar_select %p768, %s767, 15
      %s770 = smul.u32 4, %s32
      %p771 = scmp.lt.s32.totalorder %s31, 1
      %s772 = scalar_select %p771, %s31, 1
      %p773 = scmp.lt.s32.totalorder %s770, 15
      %s774 = scalar_select %p773, %s770, 15
      %s775 = smul.addr %s774, 2
      %s776 = smul.addr %s772, 32
      %s777 = sadd.s32 %s775, %s776
      %s778 = smul.addr %s777, 8
      %s779 = scalar_lea.vmem %s12, %s778
      %s780 = smul.u32 4, %s32
      %p781 = scmp.lt.s32.totalorder %s31, 1
      %s782 = scalar_select %p781, %s31, 1
      %s783 = smul.addr %s782, 2
      %s784 = scalar_lea.vmem %s13, %s783
      %v786 = vld [vmem:[%s8] sm:$0xff]
      %v787 = vld [vmem:[%s703] sm:$0xff]
      %v788 = vld [vmem:[%s703 + $0x8] sm:$0xff]
      %v789 = vld [vmem:[%s689] sm:$0xff]
      %v790 = vld [vmem:[%s689 + $0x8] sm:$0xff]
      %v791 = vld [vmem:[%s689 + $0x10] sm:$0xff]
      %v792 = vld [vmem:[%s689 + $0x18] sm:$0xff]
      %v793 = vld [vmem:[%s689 + $0x20] sm:$0xff]
      %v794 = vld [vmem:[%s689 + $0x28] sm:$0xff]
      %v795 = vld [vmem:[%s689 + $0x30] sm:$0xff]
      %v796 = vld [vmem:[%s689 + $0x38] sm:$0xff]
      %v797 = vld [vmem:[%s720] sm:$0xff]
      %v798 = vld [vmem:[%s720 + $0x8] sm:$0xff]
      %v799 = vld [vmem:[%s748] sm:$0xff]
      %v800 = vld [vmem:[%s748 + $0x8] sm:$0xff]
      %v801 = vld [vmem:[%s734] sm:$0xff]
      %v802 = vld [vmem:[%s734 + $0x8] sm:$0xff]
      %v803 = vld [vmem:[%s734 + $0x10] sm:$0xff]
      %v804 = vld [vmem:[%s734 + $0x18] sm:$0xff]
      %v805 = vld [vmem:[%s734 + $0x20] sm:$0xff]
      %v806 = vld [vmem:[%s734 + $0x28] sm:$0xff]
      %v807 = vld [vmem:[%s734 + $0x30] sm:$0xff]
      %v808 = vld [vmem:[%s734 + $0x38] sm:$0xff]
      %v809 = vld [vmem:[%s765] sm:$0xff]
      %v810 = vld [vmem:[%s765 + $0x8] sm:$0xff]
      %v811 = vpack.c.bf16 %v788, %v787
      %v812 = vpack.c.bf16 %v790, %v789
      %v813 = vpack.c.bf16 %v792, %v791
      %v814 = vpack.c.bf16 %v794, %v793
      %v815 = vpack.c.bf16 %v796, %v795
      %v816 = vpack.c.bf16 %v798, %v797
      %v817 = vld [vmem:[%s6] sm:$0xf]
      %v818 = vld [vmem:[%s6 + $0x4] sm:$0xf]
      %v819 = vld [vmem:[%s6 + $0x8] sm:$0xf]
      %v820 = vld [vmem:[%s6 + $0xc] sm:$0xf]
      %v821 = vld [vmem:[%s6 + $0x10] sm:$0xf]
      %v822 = vld [vmem:[%s6 + $0x14] sm:$0xf]
      %v823 = vld [vmem:[%s6 + $0x18] sm:$0xf]
      %v824 = vld [vmem:[%s6 + $0x1c] sm:$0xf]
      %v825 = vld [vmem:[%s6 + $0x20] sm:$0xf]
      %v826 = vld [vmem:[%s6 + $0x24] sm:$0xf]
      %v827 = vld [vmem:[%s6 + $0x28] sm:$0xf]
      %v828 = vld [vmem:[%s6 + $0x2c] sm:$0xf]
      %v829 = vld [vmem:[%s6 + $0x30] sm:$0xf]
      %v830 = vld [vmem:[%s6 + $0x34] sm:$0xf]
      %v831 = vld [vmem:[%s6 + $0x38] sm:$0xf]
      %v832 = vld [vmem:[%s6 + $0x3c] sm:$0xf]
      %v833 = vlaneseq
      %v834 = vshrl.u32 %v833, 7
      %v835 = vsub.s32 0, %v834
      %v836 = vrot.slane %v786, %v835
      %v853 = vunpack.c.l.b16 %v817
      %v854 = vunpack.c.l.b16 %v818
      %v855 = vunpack.c.l.b16 %v819
      %v856 = vunpack.c.l.b16 %v820
      %v857 = vunpack.c.l.b16 %v821
      %v858 = vunpack.c.l.b16 %v822
      %v859 = vunpack.c.l.b16 %v823
      %v860 = vunpack.c.l.b16 %v824
      %v861 = vunpack.c.l.b16 %v825
      %v862 = vunpack.c.l.b16 %v826
      %v863 = vunpack.c.l.b16 %v827
      %v864 = vunpack.c.l.b16 %v828
      %v865 = vunpack.c.l.b16 %v829
      %v866 = vunpack.c.l.b16 %v830
      %v867 = vunpack.c.l.b16 %v831
      %v868 = vunpack.c.l.b16 %v832
      %v869 = vpack.c.b16 %v854, %v853
      %v870 = vpack.c.b16 %v856, %v855
      %v871 = vpack.c.b16 %v858, %v857
      %v872 = vpack.c.b16 %v860, %v859
      %v873 = vpack.c.b16 %v862, %v861
      %v874 = vpack.c.b16 %v864, %v863
      %v875 = vpack.c.b16 %v866, %v865
      %v876 = vpack.c.b16 %v868, %v867
      %885 = vmatprep.subr.bf16.mxu0 0
      %886 = vmatpush1.bf16.msra.mxu0 %v869
      %887 = vmatprep.subr.bf16.mxu0 0
      %888 = vmatpush1.bf16.msra.mxu0 %v870
      %889 = vmatprep.subr.bf16.mxu0 0
      %890 = vmatpush1.bf16.msra.mxu0 %v871
      %891 = vmatprep.subr.bf16.mxu0 0
      %892 = vmatpush1.bf16.msra.mxu0 %v872
      %893 = vmatprep.subr.bf16.mxu0 0
      %894 = vmatpush1.bf16.msra.mxu0 %v873
      %895 = vmatprep.subr.bf16.mxu0 0
      %896 = vmatpush1.bf16.msra.mxu0 %v874
      %897 = vmatprep.subr.bf16.mxu0 0
      %898 = vmatpush1.bf16.msra.mxu0 %v875
      %899 = vmatprep.subr.bf16.mxu0 0
      %900 = vmatpush1.bf16.msra.mxu0 %v876
      %901 = vmatprep.subr.bf16.mxu0 0
      %902 = vmatpush1.bf16.msra.mxu0 0
      %903 = vmatprep.subr.bf16.mxu0 0
      %904 = vmatpush1.bf16.msra.mxu0 0
      %905 = vmatprep.subr.bf16.mxu0 0
      %906 = vmatpush1.bf16.msra.mxu0 0
      %907 = vmatprep.subr.bf16.mxu0 0
      %908 = vmatpush1.bf16.msra.mxu0 0
      %909 = vmatprep.subr.bf16.mxu0 0
      %910 = vmatpush1.bf16.msra.mxu0 0
      %911 = vmatprep.subr.bf16.mxu0 0
      %912 = vmatpush1.bf16.msra.mxu0 0
      %913 = vmatprep.subr.bf16.mxu0 0
      %914 = vmatpush1.bf16.msra.mxu0 0
      %915 = vmatprep.subr.bf16.mxu0 0
      %916 = vmatpush1.bf16.msra.mxu0 0
      %917 = vmatprep.mubr.bf16.mxu0 0
      %918 = vmatmul.mubr.bf16.gmra.mrb[0].mxu0 %v811
      %v919 = vpop.f32.mrb[0].mxu0
      %v920 = vadd.f32 %v836, %v919
      %v921 = vpop.f32.mrb[0].mxu0
      %v922 = vpop.f32.mrb[0].mxu0
      %v923 = vadd.f32 %v836, %v922
      %v924 = vpop.f32.mrb[0].mxu0
      %925 = vmatprep.mubr.bf16.mxu0 0
      %926 = vmatmul.mubr.bf16.gmra.mrb[0].mxu0 %v812
      %v927 = vpop.f32.mrb[0].mxu0
      %v928 = vadd.f32 %v836, %v927
      %v929 = vpop.f32.mrb[0].mxu0
      %v930 = vpop.f32.mrb[0].mxu0
      %v931 = vadd.f32 %v836, %v930
      %v932 = vpop.f32.mrb[0].mxu0
      %933 = vmatprep.mubr.bf16.mxu0 0
      %934 = vmatmul.mubr.bf16.gmra.mrb[0].mxu0 %v813
      %v935 = vpop.f32.mrb[0].mxu0
      %v936 = vadd.f32 %v836, %v935
      %v937 = vpop.f32.mrb[0].mxu0
      %v938 = vpop.f32.mrb[0].mxu0
      %v939 = vadd.f32 %v836, %v938
      %v940 = vpop.f32.mrb[0].mxu0
      %941 = vmatprep.mubr.bf16.mxu0 0
      %942 = vmatmul.mubr.bf16.gmra.mrb[0].mxu0 %v814
      %v943 = vpop.f32.mrb[0].mxu0
      %v944 = vadd.f32 %v836, %v943
      %v945 = vpop.f32.mrb[0].mxu0
      %v946 = vpop.f32.mrb[0].mxu0
      %v947 = vadd.f32 %v836, %v946
      %v948 = vpop.f32.mrb[0].mxu0
      %949 = vmatprep.mubr.bf16.mxu0 0
      %950 = vmatmul.mubr.bf16.gmra.mrb[0].mxu0 %v815
      %v951 = vpop.f32.mrb[0].mxu0
      %v952 = vadd.f32 %v836, %v951
      %v953 = vpop.f32.mrb[0].mxu0
      %v954 = vpop.f32.mrb[0].mxu0
      %v955 = vadd.f32 %v836, %v954
      %v956 = vpop.f32.mrb[0].mxu0
      %957 = vmatprep.mubr.bf16.mxu0 0
      %958 = vmatmul.mubr.bf16.gmra.mrb[0].mxu0 %v816
      %v959 = vpop.f32.mrb[0].mxu0
      %v960 = vadd.f32 %v836, %v959
      %v961 = vpop.f32.mrb[0].mxu0
      %v962 = vpop.f32.mrb[0].mxu0
      %v963 = vadd.f32 %v836, %v962
      %v964 = vpop.f32.mrb[0].mxu0
      %965 = vdwg.mxu0
      %v966 = vlaneseq
      %v967 = vshrl.u32 %v966, 7
      %v968 = vsub.s32 1, %v967
      %v969 = vrot.slane %v786, %v968
      %v970 = vmul.f32 %v920, %v969
      %v971 = vmul.f32 %v923, %v969
      %v972 = vmul.f32 %v928, %v969
      %v973 = vmul.f32 %v931, %v969
      %v974 = vmul.f32 %v936, %v969
      %v975 = vmul.f32 %v939, %v969
      %v976 = vmul.f32 %v944, %v969
      %v977 = vmul.f32 %v947, %v969
      %v978 = vmul.f32 %v952, %v969
      %v979 = vmul.f32 %v955, %v969
      %v980 = vmul.f32 %v960, %v969
      %v981 = vmul.f32 %v963, %v969
      %v982 = vlaneseq
      %v983 = vshrl.u32 %v982, 7
      %v984 = vsub.s32 2, %v983
      %v985 = vrot.slane %v786, %v984
      %v986 = vadd.f32 %v970, %v985
      %v987 = vadd.f32 %v971, %v985
      %v988 = vadd.f32 %v972, %v985
      %v989 = vadd.f32 %v973, %v985
      %v990 = vadd.f32 %v974, %v985
      %v991 = vadd.f32 %v975, %v985
      %v992 = vadd.f32 %v976, %v985
      %v993 = vadd.f32 %v977, %v985
      %v994 = vadd.f32 %v978, %v985
      %v995 = vadd.f32 %v979, %v985
      %v996 = vadd.f32 %v980, %v985
      %v997 = vadd.f32 %v981, %v985
      %v998 = vpack.c.bf16 %v800, %v799
      %v999 = vpack.c.bf16 %v802, %v801
      %v1000 = vpack.c.bf16 %v804, %v803
      %v1001 = vpack.c.bf16 %v806, %v805
      %v1002 = vpack.c.bf16 %v808, %v807
      %v1003 = vpack.c.bf16 %v810, %v809
      %v1004 = vld [vmem:[%s7] sm:$0xf]
      %v1005 = vld [vmem:[%s7 + $0x4] sm:$0xf]
      %v1006 = vld [vmem:[%s7 + $0x8] sm:$0xf]
      %v1007 = vld [vmem:[%s7 + $0xc] sm:$0xf]
      %v1008 = vld [vmem:[%s7 + $0x10] sm:$0xf]
      %v1009 = vld [vmem:[%s7 + $0x14] sm:$0xf]
      %v1010 = vld [vmem:[%s7 + $0x18] sm:$0xf]
      %v1011 = vld [vmem:[%s7 + $0x1c] sm:$0xf]
      %v1012 = vld [vmem:[%s7 + $0x20] sm:$0xf]
      %v1013 = vld [vmem:[%s7 + $0x24] sm:$0xf]
      %v1014 = vld [vmem:[%s7 + $0x28] sm:$0xf]
      %v1015 = vld [vmem:[%s7 + $0x2c] sm:$0xf]
      %v1016 = vld [vmem:[%s7 + $0x30] sm:$0xf]
      %v1017 = vld [vmem:[%s7 + $0x34] sm:$0xf]
      %v1018 = vld [vmem:[%s7 + $0x38] sm:$0xf]
      %v1019 = vld [vmem:[%s7 + $0x3c] sm:$0xf]
      %v1020 = vlaneseq
      %v1021 = vshrl.u32 %v1020, 7
      %v1022 = vsub.s32 3, %v1021
      %v1023 = vrot.slane %v786, %v1022
      %v1040 = vunpack.c.l.b16 %v1004
      %v1041 = vunpack.c.l.b16 %v1005
      %v1042 = vunpack.c.l.b16 %v1006
      %v1043 = vunpack.c.l.b16 %v1007
      %v1044 = vunpack.c.l.b16 %v1008
      %v1045 = vunpack.c.l.b16 %v1009
      %v1046 = vunpack.c.l.b16 %v1010
      %v1047 = vunpack.c.l.b16 %v1011
      %v1048 = vunpack.c.l.b16 %v1012
      %v1049 = vunpack.c.l.b16 %v1013
      %v1050 = vunpack.c.l.b16 %v1014
      %v1051 = vunpack.c.l.b16 %v1015
      %v1052 = vunpack.c.l.b16 %v1016
      %v1053 = vunpack.c.l.b16 %v1017
      %v1054 = vunpack.c.l.b16 %v1018
      %v1055 = vunpack.c.l.b16 %v1019
      %v1056 = vpack.c.b16 %v1041, %v1040
      %v1057 = vpack.c.b16 %v1043, %v1042
      %v1058 = vpack.c.b16 %v1045, %v1044
      %v1059 = vpack.c.b16 %v1047, %v1046
      %v1060 = vpack.c.b16 %v1049, %v1048
      %v1061 = vpack.c.b16 %v1051, %v1050
      %v1062 = vpack.c.b16 %v1053, %v1052
      %v1063 = vpack.c.b16 %v1055, %v1054
      %1072 = vmatprep.subr.bf16.mxu0 0
      %1073 = vmatpush1.bf16.msra.mxu0 %v1056
      %1074 = vmatprep.subr.bf16.mxu0 0
      %1075 = vmatpush1.bf16.msra.mxu0 %v1057
      %1076 = vmatprep.subr.bf16.mxu0 0
      %1077 = vmatpush1.bf16.msra.mxu0 %v1058
      %1078 = vmatprep.subr.bf16.mxu0 0
      %1079 = vmatpush1.bf16.msra.mxu0 %v1059
      %1080 = vmatprep.subr.bf16.mxu0 0
      %1081 = vmatpush1.bf16.msra.mxu0 %v1060
      %1082 = vmatprep.subr.bf16.mxu0 0
      %1083 = vmatpush1.bf16.msra.mxu0 %v1061
      %1084 = vmatprep.subr.bf16.mxu0 0
      %1085 = vmatpush1.bf16.msra.mxu0 %v1062
      %1086 = vmatprep.subr.bf16.mxu0 0
      %1087 = vmatpush1.bf16.msra.mxu0 %v1063
      %1088 = vmatprep.subr.bf16.mxu0 0
      %1089 = vmatpush1.bf16.msra.mxu0 0
      %1090 = vmatprep.subr.bf16.mxu0 0
      %1091 = vmatpush1.bf16.msra.mxu0 0
      %1092 = vmatprep.subr.bf16.mxu0 0
      %1093 = vmatpush1.bf16.msra.mxu0 0
      %1094 = vmatprep.subr.bf16.mxu0 0
      %1095 = vmatpush1.bf16.msra.mxu0 0
      %1096 = vmatprep.subr.bf16.mxu0 0
      %1097 = vmatpush1.bf16.msra.mxu0 0
      %1098 = vmatprep.subr.bf16.mxu0 0
      %1099 = vmatpush1.bf16.msra.mxu0 0
      %1100 = vmatprep.subr.bf16.mxu0 0
      %1101 = vmatpush1.bf16.msra.mxu0 0
      %1102 = vmatprep.subr.bf16.mxu0 0
      %1103 = vmatpush1.bf16.msra.mxu0 0
      %1104 = vmatprep.mubr.bf16.mxu0 0
      %1105 = vmatmul.mubr.bf16.gmra.mrb[0].mxu0 %v998
      %v1106 = vpop.f32.mrb[0].mxu0
      %v1107 = vadd.f32 %v1023, %v1106
      %v1108 = vpop.f32.mrb[0].mxu0
      %v1109 = vpop.f32.mrb[0].mxu0
      %v1110 = vadd.f32 %v1023, %v1109
      %v1111 = vpop.f32.mrb[0].mxu0
      %1112 = vmatprep.mubr.bf16.mxu0 0
      %1113 = vmatmul.mubr.bf16.gmra.mrb[0].mxu0 %v999
      %v1114 = vpop.f32.mrb[0].mxu0
      %v1115 = vadd.f32 %v1023, %v1114
      %v1116 = vpop.f32.mrb[0].mxu0
      %v1117 = vpop.f32.mrb[0].mxu0
      %v1118 = vadd.f32 %v1023, %v1117
      %v1119 = vpop.f32.mrb[0].mxu0
      %1120 = vmatprep.mubr.bf16.mxu0 0
      %1121 = vmatmul.mubr.bf16.gmra.mrb[0].mxu0 %v1000
      %v1122 = vpop.f32.mrb[0].mxu0
      %v1123 = vadd.f32 %v1023, %v1122
      %v1124 = vpop.f32.mrb[0].mxu0
      %v1125 = vpop.f32.mrb[0].mxu0
      %v1126 = vadd.f32 %v1023, %v1125
      %v1127 = vpop.f32.mrb[0].mxu0
      %1128 = vmatprep.mubr.bf16.mxu0 0
      %1129 = vmatmul.mubr.bf16.gmra.mrb[0].mxu0 %v1001
      %v1130 = vpop.f32.mrb[0].mxu0
      %v1131 = vadd.f32 %v1023, %v1130
      %v1132 = vpop.f32.mrb[0].mxu0
      %v1133 = vpop.f32.mrb[0].mxu0
      %v1134 = vadd.f32 %v1023, %v1133
      %v1135 = vpop.f32.mrb[0].mxu0
      %1136 = vmatprep.mubr.bf16.mxu0 0
      %1137 = vmatmul.mubr.bf16.gmra.mrb[0].mxu0 %v1002
      %v1138 = vpop.f32.mrb[0].mxu0
      %v1139 = vadd.f32 %v1023, %v1138
      %v1140 = vpop.f32.mrb[0].mxu0
      %v1141 = vpop.f32.mrb[0].mxu0
      %v1142 = vadd.f32 %v1023, %v1141
      %v1143 = vpop.f32.mrb[0].mxu0
      %1144 = vmatprep.mubr.bf16.mxu0 0
      %1145 = vmatmul.mubr.bf16.gmra.mrb[0].mxu0 %v1003
      %v1146 = vpop.f32.mrb[0].mxu0
      %v1147 = vadd.f32 %v1023, %v1146
      %v1148 = vpop.f32.mrb[0].mxu0
      %v1149 = vpop.f32.mrb[0].mxu0
      %v1150 = vadd.f32 %v1023, %v1149
      %v1151 = vpop.f32.mrb[0].mxu0
      %1152 = vdwg.mxu0
      %v1153 = vlaneseq
      %v1154 = vshrl.u32 %v1153, 7
      %v1155 = vsub.s32 4, %v1154
      %v1156 = vrot.slane %v786, %v1155
      %v1157 = vmul.f32 %v1107, %v1156
      %v1158 = vmul.f32 %v1110, %v1156
      %v1159 = vmul.f32 %v1115, %v1156
      %v1160 = vmul.f32 %v1118, %v1156
      %v1161 = vmul.f32 %v1123, %v1156
      %v1162 = vmul.f32 %v1126, %v1156
      %v1163 = vmul.f32 %v1131, %v1156
      %v1164 = vmul.f32 %v1134, %v1156
      %v1165 = vmul.f32 %v1139, %v1156
      %v1166 = vmul.f32 %v1142, %v1156
      %v1167 = vmul.f32 %v1147, %v1156
      %v1168 = vmul.f32 %v1150, %v1156
      %v1169 = vlaneseq
      %v1170 = vshrl.u32 %v1169, 7
      %v1171 = vsub.s32 5, %v1170
      %v1172 = vrot.slane %v786, %v1171
      %v1173 = vadd.f32 %v1157, %v1172
      %v1174 = vadd.f32 %v1158, %v1172
      %v1175 = vadd.f32 %v1159, %v1172
      %v1176 = vadd.f32 %v1160, %v1172
      %v1177 = vadd.f32 %v1161, %v1172
      %v1178 = vadd.f32 %v1162, %v1172
      %v1179 = vadd.f32 %v1163, %v1172
      %v1180 = vadd.f32 %v1164, %v1172
      %v1181 = vadd.f32 %v1165, %v1172
      %v1182 = vadd.f32 %v1166, %v1172
      %v1183 = vadd.f32 %v1167, %v1172
      %v1184 = vadd.f32 %v1168, %v1172
      %vm1185 = vcmp.gt.f32.partialorder %v986, 0.0
      %vm1186 = vcmp.gt.f32.partialorder %v987, 0.0
      %vm1187 = vcmp.gt.f32.partialorder %v988, 0.0
      %vm1188 = vcmp.gt.f32.partialorder %v989, 0.0
      %vm1189 = vcmp.gt.f32.partialorder %v990, 0.0
      %vm1190 = vcmp.gt.f32.partialorder %v991, 0.0
      %vm1191 = vcmp.gt.f32.partialorder %v992, 0.0
      %vm1192 = vcmp.gt.f32.partialorder %v993, 0.0
      %vm1193 = vcmp.gt.f32.partialorder %v994, 0.0
      %vm1194 = vcmp.gt.f32.partialorder %v995, 0.0
      %vm1195 = vcmp.gt.f32.partialorder %v996, 0.0
      %vm1196 = vcmp.gt.f32.partialorder %v997, 0.0
      %v1197 = vmul.f32 %v986, 0.01
      %v1198 = vmul.f32 %v987, 0.01
      %v1199 = vmul.f32 %v988, 0.01
      %v1200 = vmul.f32 %v989, 0.01
      %v1201 = vmul.f32 %v990, 0.01
      %v1202 = vmul.f32 %v991, 0.01
      %v1203 = vmul.f32 %v992, 0.01
      %v1204 = vmul.f32 %v993, 0.01
      %v1205 = vmul.f32 %v994, 0.01
      %v1206 = vmul.f32 %v995, 0.01
      %v1207 = vmul.f32 %v996, 0.01
      %v1208 = vmul.f32 %v997, 0.01
      %v1209 = vsel %vm1185, %v986, %v1197
      %v1210 = vsel %vm1186, %v987, %v1198
      %v1211 = vsel %vm1187, %v988, %v1199
      %v1212 = vsel %vm1188, %v989, %v1200
      %v1213 = vsel %vm1189, %v990, %v1201
      %v1214 = vsel %vm1190, %v991, %v1202
      %v1215 = vsel %vm1191, %v992, %v1203
      %v1216 = vsel %vm1192, %v993, %v1204
      %v1217 = vsel %vm1193, %v994, %v1205
      %v1218 = vsel %vm1194, %v995, %v1206
      %v1219 = vsel %vm1195, %v996, %v1207
      %v1220 = vsel %vm1196, %v997, %v1208
      %vm1221 = vcmp.gt.f32.partialorder %v1173, 0.0
      %vm1222 = vcmp.gt.f32.partialorder %v1174, 0.0
      %vm1223 = vcmp.gt.f32.partialorder %v1175, 0.0
      %vm1224 = vcmp.gt.f32.partialorder %v1176, 0.0
      %vm1225 = vcmp.gt.f32.partialorder %v1177, 0.0
      %vm1226 = vcmp.gt.f32.partialorder %v1178, 0.0
      %vm1227 = vcmp.gt.f32.partialorder %v1179, 0.0
      %vm1228 = vcmp.gt.f32.partialorder %v1180, 0.0
      %vm1229 = vcmp.gt.f32.partialorder %v1181, 0.0
      %vm1230 = vcmp.gt.f32.partialorder %v1182, 0.0
      %vm1231 = vcmp.gt.f32.partialorder %v1183, 0.0
      %vm1232 = vcmp.gt.f32.partialorder %v1184, 0.0
      %v1233 = vmul.f32 %v1173, 0.01
      %v1234 = vmul.f32 %v1174, 0.01
      %v1235 = vmul.f32 %v1175, 0.01
      %v1236 = vmul.f32 %v1176, 0.01
      %v1237 = vmul.f32 %v1177, 0.01
      %v1238 = vmul.f32 %v1178, 0.01
      %v1239 = vmul.f32 %v1179, 0.01
      %v1240 = vmul.f32 %v1180, 0.01
      %v1241 = vmul.f32 %v1181, 0.01
      %v1242 = vmul.f32 %v1182, 0.01
      %v1243 = vmul.f32 %v1183, 0.01
      %v1244 = vmul.f32 %v1184, 0.01
      %v1245 = vsel %vm1221, %v1173, %v1233
      %v1246 = vsel %vm1222, %v1174, %v1234
      %v1247 = vsel %vm1223, %v1175, %v1235
      %v1248 = vsel %vm1224, %v1176, %v1236
      %v1249 = vsel %vm1225, %v1177, %v1237
      %v1250 = vsel %vm1226, %v1178, %v1238
      %v1251 = vsel %vm1227, %v1179, %v1239
      %v1252 = vsel %vm1228, %v1180, %v1240
      %v1253 = vsel %vm1229, %v1181, %v1241
      %v1254 = vsel %vm1230, %v1182, %v1242
      %v1255 = vsel %vm1231, %v1183, %v1243
      %v1256 = vsel %vm1232, %v1184, %v1244
      %v1257 = vlaneseq
      %v1258 = vshrl.u32 %v1257, 7
      %v1259 = vsub.s32 6, %v1258
      %v1260 = vrot.slane %v786, %v1259
      %v1261 = vmul.f32 %v1209, %v1260
      %v1262 = vmul.f32 %v1210, %v1260
      %v1263 = vmul.f32 %v1211, %v1260
      %v1264 = vmul.f32 %v1212, %v1260
      %v1265 = vmul.f32 %v1213, %v1260
      %v1266 = vmul.f32 %v1214, %v1260
      %v1267 = vmul.f32 %v1215, %v1260
      %v1268 = vmul.f32 %v1216, %v1260
      %v1269 = vmul.f32 %v1217, %v1260
      %v1270 = vmul.f32 %v1218, %v1260
      %v1271 = vmul.f32 %v1219, %v1260
      %v1272 = vmul.f32 %v1220, %v1260
      %1273 = vadd.xlane.f32.xlu0 %v1261
      %v1274 = vpop.xlane.xlu0 %1273
      %1275 = vadd.xlane.f32.xlu0 %v1262
      %v1276 = vpop.xlane.xlu0 %1275
      %1277 = vadd.xlane.f32.xlu0 %v1263
      %v1278 = vpop.xlane.xlu0 %1277
      %1279 = vadd.xlane.f32.xlu0 %v1264
      %v1280 = vpop.xlane.xlu0 %1279
      %1281 = vadd.xlane.f32.xlu0 %v1265
      %v1282 = vpop.xlane.xlu0 %1281
      %1283 = vadd.xlane.f32.xlu0 %v1266
      %v1284 = vpop.xlane.xlu0 %1283
      %1285 = vadd.xlane.f32.xlu0 %v1267
      %v1286 = vpop.xlane.xlu0 %1285
      %1287 = vadd.xlane.f32.xlu0 %v1268
      %v1288 = vpop.xlane.xlu0 %1287
      %1289 = vadd.xlane.f32.xlu0 %v1269
      %v1290 = vpop.xlane.xlu0 %1289
      %1291 = vadd.xlane.f32.xlu0 %v1270
      %v1292 = vpop.xlane.xlu0 %1291
      %1293 = vadd.xlane.f32.xlu0 %v1271
      %v1294 = vpop.xlane.xlu0 %1293
      %1295 = vadd.xlane.f32.xlu0 %v1272
      %v1296 = vpop.xlane.xlu0 %1295
      %v1297 = vlaneseq
      %v1298 = vshrl.u32 %v1297, 7
      %v1299 = vsub.s32 7, %v1298
      %v1300 = vrot.slane %v786, %v1299
      %v1301 = vmul.f32 %v1245, %v1300
      %v1302 = vmul.f32 %v1246, %v1300
      %v1303 = vmul.f32 %v1247, %v1300
      %v1304 = vmul.f32 %v1248, %v1300
      %v1305 = vmul.f32 %v1249, %v1300
      %v1306 = vmul.f32 %v1250, %v1300
      %v1307 = vmul.f32 %v1251, %v1300
      %v1308 = vmul.f32 %v1252, %v1300
      %v1309 = vmul.f32 %v1253, %v1300
      %v1310 = vmul.f32 %v1254, %v1300
      %v1311 = vmul.f32 %v1255, %v1300
      %v1312 = vmul.f32 %v1256, %v1300
      %1313 = vadd.xlane.f32.xlu0 %v1301
      %v1314 = vpop.xlane.xlu0 %1313
      %1315 = vadd.xlane.f32.xlu0 %v1302
      %v1316 = vpop.xlane.xlu0 %1315
      %1317 = vadd.xlane.f32.xlu0 %v1303
      %v1318 = vpop.xlane.xlu0 %1317
      %1319 = vadd.xlane.f32.xlu0 %v1304
      %v1320 = vpop.xlane.xlu0 %1319
      %1321 = vadd.xlane.f32.xlu0 %v1305
      %v1322 = vpop.xlane.xlu0 %1321
      %1323 = vadd.xlane.f32.xlu0 %v1306
      %v1324 = vpop.xlane.xlu0 %1323
      %1325 = vadd.xlane.f32.xlu0 %v1307
      %v1326 = vpop.xlane.xlu0 %1325
      %1327 = vadd.xlane.f32.xlu0 %v1308
      %v1328 = vpop.xlane.xlu0 %1327
      %1329 = vadd.xlane.f32.xlu0 %v1309
      %v1330 = vpop.xlane.xlu0 %1329
      %1331 = vadd.xlane.f32.xlu0 %v1310
      %v1332 = vpop.xlane.xlu0 %1331
      %1333 = vadd.xlane.f32.xlu0 %v1311
      %v1334 = vpop.xlane.xlu0 %1333
      %1335 = vadd.xlane.f32.xlu0 %v1312
      %v1336 = vpop.xlane.xlu0 %1335
      %v1337 = vadd.f32 %v1274, %v1314
      %v1338 = vadd.f32 %v1276, %v1316
      %v1339 = vadd.f32 %v1278, %v1318
      %v1340 = vadd.f32 %v1280, %v1320
      %v1341 = vadd.f32 %v1282, %v1322
      %v1342 = vadd.f32 %v1284, %v1324
      %v1343 = vadd.f32 %v1286, %v1326
      %v1344 = vadd.f32 %v1288, %v1328
      %v1345 = vadd.f32 %v1290, %v1330
      %v1346 = vadd.f32 %v1292, %v1332
      %v1347 = vadd.f32 %v1294, %v1334
      %v1348 = vadd.f32 %v1296, %v1336
      %v1349 = vld [vmem:[#allocation2] sm:$0x1]
      %v1351 = vlaneseq
      %v1352 = vshrl.u32 %v1351, 7
      %v1353 = vsub.s32 0, %v1352
      %v1354 = vrot.slane %v1349, %v1353
      %v1356 = vadd.f32 %v1337, %v1354
      %v1357 = vadd.f32 %v1338, %v1354
      %v1358 = vadd.f32 %v1339, %v1354
      %v1359 = vadd.f32 %v1340, %v1354
      %v1360 = vadd.f32 %v1341, %v1354
      %v1361 = vadd.f32 %v1342, %v1354
      %v1362 = vadd.f32 %v1343, %v1354
      %v1363 = vadd.f32 %v1344, %v1354
      %v1364 = vadd.f32 %v1345, %v1354
      %v1365 = vadd.f32 %v1346, %v1354
      %v1366 = vadd.f32 %v1347, %v1354
      %v1367 = vadd.f32 %v1348, %v1354
      %v1368 = vmul.f32 %v1356, 0.5
      %v1369 = vmul.f32 %v1357, 0.5
      %v1370 = vmul.f32 %v1358, 0.5
      %v1371 = vmul.f32 %v1359, 0.5
      %v1372 = vmul.f32 %v1360, 0.5
      %v1373 = vmul.f32 %v1361, 0.5
      %v1374 = vmul.f32 %v1362, 0.5
      %v1375 = vmul.f32 %v1363, 0.5
      %v1376 = vmul.f32 %v1364, 0.5
      %v1377 = vmul.f32 %v1365, 0.5
      %v1378 = vmul.f32 %v1366, 0.5
      %v1379 = vmul.f32 %v1367, 0.5
      %v1380 = vtanh.pop %v1368
      %v1381 = vtanh.pop %v1369
      %v1382 = vtanh.pop %v1370
      %v1383 = vtanh.pop %v1371
      %v1384 = vtanh.pop %v1372
      %v1385 = vtanh.pop %v1373
      %v1386 = vtanh.pop %v1374
      %v1387 = vtanh.pop %v1375
      %v1388 = vtanh.pop %v1376
      %v1389 = vtanh.pop %v1377
      %v1390 = vtanh.pop %v1378
      %v1391 = vtanh.pop %v1379
      %v1392 = vadd.f32 %v1380, 1.0
      %v1393 = vadd.f32 %v1381, 1.0
      %v1394 = vadd.f32 %v1382, 1.0
      %v1395 = vadd.f32 %v1383, 1.0
      %v1396 = vadd.f32 %v1384, 1.0
      %v1397 = vadd.f32 %v1385, 1.0
      %v1398 = vadd.f32 %v1386, 1.0
      %v1399 = vadd.f32 %v1387, 1.0
      %v1400 = vadd.f32 %v1388, 1.0
      %v1401 = vadd.f32 %v1389, 1.0
      %v1402 = vadd.f32 %v1390, 1.0
      %v1403 = vadd.f32 %v1391, 1.0
      %v1404 = vmul.f32 %v1392, 0.5
      %v1405 = vmul.f32 %v1393, 0.5
      %v1406 = vmul.f32 %v1394, 0.5
      %v1407 = vmul.f32 %v1395, 0.5
      %v1408 = vmul.f32 %v1396, 0.5
      %v1409 = vmul.f32 %v1397, 0.5
      %v1410 = vmul.f32 %v1398, 0.5
      %v1411 = vmul.f32 %v1399, 0.5
      %v1412 = vmul.f32 %v1400, 0.5
      %v1413 = vmul.f32 %v1401, 0.5
      %v1414 = vmul.f32 %v1402, 0.5
      %v1415 = vmul.f32 %v1403, 0.5
      %1417 = vset.pattern.permute.xlu0 0
      %1418 = vperm.xlu0 %1417, %v1404
      %v1419 = vpop.permute.xlu0 %1418
      %1422 = vset.pattern.permute.xlu0 0
      %1423 = vperm.xlu0 %1422, %v1405
      %v1424 = vpop.permute.xlu0 %1423
      %1427 = vset.pattern.permute.xlu0 0
      %1428 = vperm.xlu0 %1427, %v1406
      %v1429 = vpop.permute.xlu0 %1428
      %1432 = vset.pattern.permute.xlu0 0
      %1433 = vperm.xlu0 %1432, %v1407
      %v1434 = vpop.permute.xlu0 %1433
      %1437 = vset.pattern.permute.xlu0 0
      %1438 = vperm.xlu0 %1437, %v1408
      %v1439 = vpop.permute.xlu0 %1438
      %1442 = vset.pattern.permute.xlu0 0
      %1443 = vperm.xlu0 %1442, %v1409
      %v1444 = vpop.permute.xlu0 %1443
      %1447 = vset.pattern.permute.xlu0 0
      %1448 = vperm.xlu0 %1447, %v1410
      %v1449 = vpop.permute.xlu0 %1448
      %1452 = vset.pattern.permute.xlu0 0
      %1453 = vperm.xlu0 %1452, %v1411
      %v1454 = vpop.permute.xlu0 %1453
      %1457 = vset.pattern.permute.xlu0 0
      %1458 = vperm.xlu0 %1457, %v1412
      %v1459 = vpop.permute.xlu0 %1458
      %1462 = vset.pattern.permute.xlu0 0
      %1463 = vperm.xlu0 %1462, %v1413
      %v1464 = vpop.permute.xlu0 %1463
      %1467 = vset.pattern.permute.xlu0 0
      %1468 = vperm.xlu0 %1467, %v1414
      %v1469 = vpop.permute.xlu0 %1468
      %1472 = vset.pattern.permute.xlu0 0
      %1473 = vperm.xlu0 %1472, %v1415
      %v1474 = vpop.permute.xlu0 %1473
      %v1476 = vmul.f32 %v787, %v1419
      %v1477 = vmul.f32 %v788, %v1424
      %v1478 = vmul.f32 %v789, %v1429
      %v1479 = vmul.f32 %v790, %v1434
      %v1480 = vmul.f32 %v791, %v1439
      %v1481 = vmul.f32 %v792, %v1444
      %v1482 = vmul.f32 %v793, %v1449
      %v1483 = vmul.f32 %v794, %v1454
      %v1484 = vmul.f32 %v795, %v1459
      %v1485 = vmul.f32 %v796, %v1464
      %v1486 = vmul.f32 %v797, %v1469
      %v1487 = vmul.f32 %v798, %v1474
      %p1488 = scmp.eq.s32.totalorder %s32, 0
      %s1489 = scalar_select %p1488, 1, 0
      %v1490 = vstv %s1489
      %vm1491 = vcmp.eq.s32.totalorder %v1490, 1
      %p1492 = scmp.eq.s32.totalorder %s32, 3
      %s1493 = scalar_select %p1492, 1, 0
      %v1494 = vstv %s1493
      %vm1495 = vcmp.eq.s32.totalorder %v1494, 1
      %v1496 = vsel %vm1491, 1, 0
      %v1497 = vsel %vm1495, 1, 0
      %vm1498 = vcmp.eq.s32.totalorder %v1496, 1
      %vm1499 = vcmp.eq.s32.totalorder %v1497, 1
      %v1500 = vsel %vm1498, 0.0, %v787
      %v1501 = vsel %vm1498, 0.0, %v1476
      %v1502 = vsel %vm1498, 0.0, %v788
      %v1503 = vsel %vm1498, 0.0, %v1477
      %v1504 = vsel 0, 0.0, %v789
      %v1505 = vsel 0, 0.0, %v1478
      %v1506 = vsel 0, 0.0, %v790
      %v1507 = vsel 0, 0.0, %v1479
      %v1508 = vsel 0, 0.0, %v791
      %v1509 = vsel 0, 0.0, %v1480
      %v1510 = vsel 0, 0.0, %v792
      %v1511 = vsel 0, 0.0, %v1481
      %v1512 = vsel 0, 0.0, %v793
      %v1513 = vsel 0, 0.0, %v1482
      %v1514 = vsel 0, 0.0, %v794
      %v1515 = vsel 0, 0.0, %v1483
      %v1516 = vsel 0, 0.0, %v795
      %v1517 = vsel 0, 0.0, %v1484
      %v1518 = vsel 0, 0.0, %v796
      %v1519 = vsel 0, 0.0, %v1485
      %v1520 = vsel %vm1499, 0.0, %v797
      %v1521 = vsel %vm1499, 0.0, %v1486
      %v1522 = vsel %vm1499, 0.0, %v798
      %v1523 = vsel %vm1499, 0.0, %v1487
      %vm1548 = vcmask 1040384
      %v1549 = vrot.slane %v1500, 7
      %v1550 = vrot.slane %v1501, 7
      %v1551 = vrot.slane %v1502, 7
      %v1552 = vsel %vm1548, %v1549, %v1551
      %v1553 = vrot.slane %v1503, 7
      %v1554 = vsel %vm1548, %v1550, %v1553
      %v1555 = vrot.slane %v1504, 7
      %v1556 = vrot.slane %v1505, 7
      %v1557 = vrot.slane %v1506, 7
      %v1558 = vsel %vm1548, %v1555, %v1557
      %v1559 = vrot.slane %v1507, 7
      %v1560 = vsel %vm1548, %v1556, %v1559
      %v1561 = vrot.slane %v1508, 7
      %v1562 = vrot.slane %v1509, 7
      %v1563 = vrot.slane %v1510, 7
      %v1564 = vsel %vm1548, %v1561, %v1563
      %v1565 = vrot.slane %v1511, 7
      %v1566 = vsel %vm1548, %v1562, %v1565
      %v1567 = vrot.slane %v1512, 7
      %v1568 = vrot.slane %v1513, 7
      %v1569 = vrot.slane %v1514, 7
      %v1570 = vsel %vm1548, %v1567, %v1569
      %v1571 = vrot.slane %v1515, 7
      %v1572 = vsel %vm1548, %v1568, %v1571
      %v1573 = vrot.slane %v1516, 7
      %v1574 = vrot.slane %v1517, 7
      %v1575 = vrot.slane %v1518, 7
      %v1576 = vsel %vm1548, %v1573, %v1575
      %v1577 = vrot.slane %v1519, 7
      %v1578 = vsel %vm1548, %v1574, %v1577
      %v1579 = vrot.slane %v1520, 7
      %v1580 = vrot.slane %v1521, 7
      %v1581 = vrot.slane %v1522, 7
      %v1582 = vsel %vm1548, %v1579, %v1581
      %v1583 = vrot.slane %v1523, 7
      %v1584 = vsel %vm1548, %v1580, %v1583
      %v1621 = vsel %vm1548, 0.0, %v1549
      %v1622 = vsel %vm1548, 0.0, %v1550
      %v1623 = vsel %vm1548, 0.0, %v1555
      %v1624 = vsel %vm1548, 0.0, %v1556
      %v1625 = vsel %vm1548, 0.0, %v1561
      %v1626 = vsel %vm1548, 0.0, %v1562
      %v1627 = vsel %vm1548, 0.0, %v1567
      %v1628 = vsel %vm1548, 0.0, %v1568
      %v1629 = vsel %vm1548, 0.0, %v1573
      %v1630 = vsel %vm1548, 0.0, %v1574
      %v1631 = vsel %vm1548, 0.0, %v1579
      %v1632 = vsel %vm1548, 0.0, %v1580
      %v1633 = vsel %vm1548, %v1551, 0.0
      %v1634 = vsel %vm1548, %v1553, 0.0
      %v1635 = vsel %vm1548, %v1557, 0.0
      %v1636 = vsel %vm1548, %v1559, 0.0
      %v1637 = vsel %vm1548, %v1563, 0.0
      %v1638 = vsel %vm1548, %v1565, 0.0
      %v1639 = vsel %vm1548, %v1569, 0.0
      %v1640 = vsel %vm1548, %v1571, 0.0
      %v1641 = vsel %vm1548, %v1575, 0.0
      %v1642 = vsel %vm1548, %v1577, 0.0
      %v1643 = vsel %vm1548, %v1581, 0.0
      %v1644 = vsel %vm1548, %v1583, 0.0
      %vm1661 = vcmask 1046528
      %v1662 = vrot.slane %v1621, 1
      %v1663 = vrot.slane %v1552, 1
      %v1664 = vsel %vm1661, %v1662, %v1663
      %v1665 = vrot.slane %v1622, 1
      %v1666 = vrot.slane %v1554, 1
      %v1667 = vsel %vm1661, %v1665, %v1666
      %v1668 = vrot.slane %v1633, 1
      %v1669 = vsel %vm1661, %v1663, %v1668
      %v1670 = vrot.slane %v1634, 1
      %v1671 = vsel %vm1661, %v1666, %v1670
      %v1672 = vrot.slane %v1623, 1
      %v1673 = vrot.slane %v1558, 1
      %v1674 = vsel %vm1661, %v1672, %v1673
      %v1675 = vrot.slane %v1624, 1
      %v1676 = vrot.slane %v1560, 1
      %v1677 = vsel %vm1661, %v1675, %v1676
      %v1678 = vrot.slane %v1635, 1
      %v1679 = vsel %vm1661, %v1673, %v1678
      %v1680 = vrot.slane %v1636, 1
      %v1681 = vsel %vm1661, %v1676, %v1680
      %v1682 = vrot.slane %v1625, 1
      %v1683 = vrot.slane %v1564, 1
      %v1684 = vsel %vm1661, %v1682, %v1683
      %v1685 = vrot.slane %v1626, 1
      %v1686 = vrot.slane %v1566, 1
      %v1687 = vsel %vm1661, %v1685, %v1686
      %v1688 = vrot.slane %v1637, 1
      %v1689 = vsel %vm1661, %v1683, %v1688
      %v1690 = vrot.slane %v1638, 1
      %v1691 = vsel %vm1661, %v1686, %v1690
      %v1692 = vrot.slane %v1627, 1
      %v1693 = vrot.slane %v1570, 1
      %v1694 = vsel %vm1661, %v1692, %v1693
      %v1695 = vrot.slane %v1628, 1
      %v1696 = vrot.slane %v1572, 1
      %v1697 = vsel %vm1661, %v1695, %v1696
      %v1698 = vrot.slane %v1639, 1
      %v1699 = vsel %vm1661, %v1693, %v1698
      %v1700 = vrot.slane %v1640, 1
      %v1701 = vsel %vm1661, %v1696, %v1700
      %vm1718 = vcmask 1045504
      %v1719 = vrot.slane %v1621, 2
      %v1720 = vrot.slane %v1552, 2
      %v1721 = vsel %vm1718, %v1719, %v1720
      %v1722 = vrot.slane %v1622, 2
      %v1723 = vrot.slane %v1554, 2
      %v1724 = vsel %vm1718, %v1722, %v1723
      %v1725 = vrot.slane %v1633, 2
      %v1726 = vsel %vm1718, %v1720, %v1725
      %v1727 = vrot.slane %v1634, 2
      %v1728 = vsel %vm1718, %v1723, %v1727
      %v1729 = vrot.slane %v1623, 2
      %v1730 = vrot.slane %v1558, 2
      %v1731 = vsel %vm1718, %v1729, %v1730
      %v1732 = vrot.slane %v1624, 2
      %v1733 = vrot.slane %v1560, 2
      %v1734 = vsel %vm1718, %v1732, %v1733
      %v1735 = vrot.slane %v1635, 2
      %v1736 = vsel %vm1718, %v1730, %v1735
      %v1737 = vrot.slane %v1636, 2
      %v1738 = vsel %vm1718, %v1733, %v1737
      %v1739 = vrot.slane %v1625, 2
      %v1740 = vrot.slane %v1564, 2
      %v1741 = vsel %vm1718, %v1739, %v1740
      %v1742 = vrot.slane %v1626, 2
      %v1743 = vrot.slane %v1566, 2
      %v1744 = vsel %vm1718, %v1742, %v1743
      %v1745 = vrot.slane %v1637, 2
      %v1746 = vsel %vm1718, %v1740, %v1745
      %v1747 = vrot.slane %v1638, 2
      %v1748 = vsel %vm1718, %v1743, %v1747
      %v1749 = vrot.slane %v1627, 2
      %v1750 = vrot.slane %v1570, 2
      %v1751 = vsel %vm1718, %v1749, %v1750
      %v1752 = vrot.slane %v1628, 2
      %v1753 = vrot.slane %v1572, 2
      %v1754 = vsel %vm1718, %v1752, %v1753
      %v1755 = vrot.slane %v1639, 2
      %v1756 = vsel %vm1718, %v1750, %v1755
      %v1757 = vrot.slane %v1640, 2
      %v1758 = vsel %vm1718, %v1753, %v1757
      %v1779 = vrot.slane %v1629, 1
      %v1780 = vrot.slane %v1576, 1
      %v1781 = vsel %vm1661, %v1779, %v1780
      %v1782 = vrot.slane %v1630, 1
      %v1783 = vrot.slane %v1578, 1
      %v1784 = vsel %vm1661, %v1782, %v1783
      %v1785 = vrot.slane %v1641, 1
      %v1786 = vsel %vm1661, %v1780, %v1785
      %v1787 = vrot.slane %v1642, 1
      %v1788 = vsel %vm1661, %v1783, %v1787
      %v1793 = vrot.slane %v1629, 2
      %v1794 = vrot.slane %v1576, 2
      %v1795 = vsel %vm1718, %v1793, %v1794
      %v1796 = vrot.slane %v1630, 2
      %v1797 = vrot.slane %v1578, 2
      %v1798 = vsel %vm1718, %v1796, %v1797
      %v1799 = vrot.slane %v1641, 2
      %v1800 = vsel %vm1718, %v1794, %v1799
      %v1801 = vrot.slane %v1642, 2
      %v1802 = vsel %vm1718, %v1797, %v1801
      %v1811 = vrot.slane %v1631, 1
      %v1812 = vrot.slane %v1582, 1
      %v1813 = vsel %vm1661, %v1811, %v1812
      %v1814 = vrot.slane %v1632, 1
      %v1815 = vrot.slane %v1584, 1
      %v1816 = vsel %vm1661, %v1814, %v1815
      %v1817 = vrot.slane %v1643, 1
      %v1818 = vsel %vm1661, %v1812, %v1817
      %v1819 = vrot.slane %v1644, 1
      %v1820 = vsel %vm1661, %v1815, %v1819
      %v1825 = vrot.slane %v1631, 2
      %v1826 = vrot.slane %v1582, 2
      %v1827 = vsel %vm1718, %v1825, %v1826
      %v1828 = vrot.slane %v1632, 2
      %v1829 = vrot.slane %v1584, 2
      %v1830 = vsel %vm1718, %v1828, %v1829
      %v1831 = vrot.slane %v1643, 2
      %v1832 = vsel %vm1718, %v1826, %v1831
      %v1833 = vrot.slane %v1644, 2
      %v1834 = vsel %vm1718, %v1829, %v1833
      %v1839 = vpack.c.bf16 %v1552, %v1621
      %v1840 = vpack.c.bf16 %v1554, %v1622
      %v1841 = vpack.c.bf16 %v1669, %v1664
      %v1842 = vpack.c.bf16 %v1671, %v1667
      %v1843 = vpack.c.bf16 %v1726, %v1721
      %v1844 = vpack.c.bf16 %v1728, %v1724
      %v1845 = vpack.c.bf16 %v1558, %v1623
      %v1846 = vpack.c.bf16 %v1560, %v1624
      %v1847 = vpack.c.bf16 %v1679, %v1674
      %v1848 = vpack.c.bf16 %v1681, %v1677
      %v1849 = vpack.c.bf16 %v1736, %v1731
      %v1850 = vpack.c.bf16 %v1738, %v1734
      %v1851 = vpack.c.bf16 %v1564, %v1625
      %v1852 = vpack.c.bf16 %v1566, %v1626
      %v1853 = vpack.c.bf16 %v1689, %v1684
      %v1854 = vpack.c.bf16 %v1691, %v1687
      %v1855 = vpack.c.bf16 %v1746, %v1741
      %v1856 = vpack.c.bf16 %v1748, %v1744
      %v1857 = vpack.c.bf16 %v1570, %v1627
      %v1858 = vpack.c.bf16 %v1572, %v1628
      %v1859 = vpack.c.bf16 %v1699, %v1694
      %v1860 = vpack.c.bf16 %v1701, %v1697
      %v1861 = vpack.c.bf16 %v1756, %v1751
      %v1862 = vpack.c.bf16 %v1758, %v1754
      %v1863 = vpack.c.bf16 %v1576, %v1629
      %v1864 = vpack.c.bf16 %v1578, %v1630
      %v1865 = vpack.c.bf16 %v1786, %v1781
      %v1866 = vpack.c.bf16 %v1788, %v1784
      %v1867 = vpack.c.bf16 %v1800, %v1795
      %v1868 = vpack.c.bf16 %v1802, %v1798
      %v1869 = vpack.c.bf16 %v1582, %v1631
      %v1870 = vpack.c.bf16 %v1584, %v1632
      %v1871 = vpack.c.bf16 %v1818, %v1813
      %v1872 = vpack.c.bf16 %v1820, %v1816
      %v1873 = vpack.c.bf16 %v1832, %v1827
      %v1874 = vpack.c.bf16 %v1834, %v1830
      %v1875 = vld [vmem:[%s10] sm:$0xf]
      %v1876 = vld [vmem:[%s10 + $0x4] sm:$0xf]
      %v1877 = vld [vmem:[%s10 + $0x8] sm:$0xf]
      %v1878 = vld [vmem:[%s10 + $0xc] sm:$0xf]
      %v1879 = vld [vmem:[%s10 + $0x10] sm:$0xf]
      %v1880 = vld [vmem:[%s10 + $0x14] sm:$0xf]
      %v1881 = vld [vmem:[%s10 + $0x18] sm:$0xf]
      %v1882 = vld [vmem:[%s10 + $0x1c] sm:$0xf]
      %v1883 = vld [vmem:[%s10 + $0x20] sm:$0xf]
      %v1884 = vld [vmem:[%s10 + $0x24] sm:$0xf]
      %v1885 = vld [vmem:[%s10 + $0x28] sm:$0xf]
      %v1886 = vld [vmem:[%s10 + $0x2c] sm:$0xf]
      %v1887 = vld [vmem:[%s10 + $0x30] sm:$0xf]
      %v1888 = vld [vmem:[%s10 + $0x34] sm:$0xf]
      %v1889 = vld [vmem:[%s10 + $0x38] sm:$0xf]
      %v1890 = vld [vmem:[%s10 + $0x3c] sm:$0xf]
      %v1891 = vld [vmem:[%s10 + $0x40] sm:$0xf]
      %v1892 = vld [vmem:[%s10 + $0x44] sm:$0xf]
      %v1893 = vld [vmem:[%s10 + $0x48] sm:$0xf]
      %v1894 = vld [vmem:[%s10 + $0x4c] sm:$0xf]
      %v1895 = vld [vmem:[%s10 + $0x50] sm:$0xf]
      %v1896 = vld [vmem:[%s10 + $0x54] sm:$0xf]
      %v1897 = vld [vmem:[%s10 + $0x58] sm:$0xf]
      %v1898 = vld [vmem:[%s10 + $0x5c] sm:$0xf]
      %v1899 = vld [vmem:[%s10 + $0x60] sm:$0xf]
      %v1900 = vld [vmem:[%s10 + $0x64] sm:$0xf]
      %v1901 = vld [vmem:[%s10 + $0x68] sm:$0xf]
      %v1902 = vld [vmem:[%s10 + $0x6c] sm:$0xf]
      %v1903 = vld [vmem:[%s10 + $0x70] sm:$0xf]
      %v1904 = vld [vmem:[%s10 + $0x74] sm:$0xf]
      %v1905 = vld [vmem:[%s10 + $0x78] sm:$0xf]
      %v1906 = vld [vmem:[%s10 + $0x7c] sm:$0xf]
      %v1907 = vld [vmem:[%s10 + $0x80] sm:$0xf]
      %v1908 = vld [vmem:[%s10 + $0x84] sm:$0xf]
      %v1909 = vld [vmem:[%s10 + $0x88] sm:$0xf]
      %v1910 = vld [vmem:[%s10 + $0x8c] sm:$0xf]
      %v1911 = vld [vmem:[%s10 + $0x90] sm:$0xf]
      %v1912 = vld [vmem:[%s10 + $0x94] sm:$0xf]
      %v1913 = vld [vmem:[%s10 + $0x98] sm:$0xf]
      %v1914 = vld [vmem:[%s10 + $0x9c] sm:$0xf]
      %v1915 = vld [vmem:[%s10 + $0xa0] sm:$0xf]
      %v1916 = vld [vmem:[%s10 + $0xa4] sm:$0xf]
      %v1917 = vld [vmem:[%s10 + $0xa8] sm:$0xf]
      %v1918 = vld [vmem:[%s10 + $0xac] sm:$0xf]
      %v1919 = vld [vmem:[%s10 + $0xb0] sm:$0xf]
      %v1920 = vld [vmem:[%s10 + $0xb4] sm:$0xf]
      %v1921 = vld [vmem:[%s10 + $0xb8] sm:$0xf]
      %v1922 = vld [vmem:[%s10 + $0xbc] sm:$0xf]
      %v1923 = vld [vmem:[%s10 + $0xc0] sm:$0xf]
      %v1924 = vld [vmem:[%s10 + $0xc4] sm:$0xf]
      %v1925 = vld [vmem:[%s10 + $0xc8] sm:$0xf]
      %v1926 = vld [vmem:[%s10 + $0xcc] sm:$0xf]
      %v1927 = vld [vmem:[%s10 + $0xd0] sm:$0xf]
      %v1928 = vld [vmem:[%s10 + $0xd4] sm:$0xf]
      %v1929 = vld [vmem:[%s10 + $0xd8] sm:$0xf]
      %v1930 = vld [vmem:[%s10 + $0xdc] sm:$0xf]
      %v1931 = vld [vmem:[%s10 + $0xe0] sm:$0xf]
      %v1932 = vld [vmem:[%s10 + $0xe4] sm:$0xf]
      %v1933 = vld [vmem:[%s10 + $0xe8] sm:$0xf]
      %v1934 = vld [vmem:[%s10 + $0xec] sm:$0xf]
      %v1935 = vld [vmem:[%s10 + $0xf0] sm:$0xf]
      %v1936 = vld [vmem:[%s10 + $0xf4] sm:$0xf]
      %v1937 = vld [vmem:[%s10 + $0xf8] sm:$0xf]
      %v1938 = vld [vmem:[%s10 + $0xfc] sm:$0xf]
      %v1939 = vld [vmem:[%s10 + $0x100] sm:$0xf]
      %v1940 = vld [vmem:[%s10 + $0x104] sm:$0xf]
      %v1941 = vld [vmem:[%s10 + $0x108] sm:$0xf]
      %v1942 = vld [vmem:[%s10 + $0x10c] sm:$0xf]
      %v1943 = vld [vmem:[%s10 + $0x110] sm:$0xf]
      %v1944 = vld [vmem:[%s10 + $0x114] sm:$0xf]
      %v1945 = vld [vmem:[%s10 + $0x118] sm:$0xf]
      %v1946 = vld [vmem:[%s10 + $0x11c] sm:$0xf]
      %v1947 = vld [vmem:[%s10 + $0x120] sm:$0xf]
      %v1948 = vld [vmem:[%s10 + $0x124] sm:$0xf]
      %v1949 = vld [vmem:[%s10 + $0x128] sm:$0xf]
      %v1950 = vld [vmem:[%s10 + $0x12c] sm:$0xf]
      %v1951 = vld [vmem:[%s10 + $0x130] sm:$0xf]
      %v1952 = vld [vmem:[%s10 + $0x134] sm:$0xf]
      %v1953 = vld [vmem:[%s10 + $0x138] sm:$0xf]
      %v1954 = vld [vmem:[%s10 + $0x13c] sm:$0xf]
      %v1955 = vld [vmem:[%s10 + $0x140] sm:$0xf]
      %v1956 = vld [vmem:[%s10 + $0x144] sm:$0xf]
      %v1957 = vld [vmem:[%s10 + $0x148] sm:$0xf]
      %v1958 = vld [vmem:[%s10 + $0x14c] sm:$0xf]
      %v1959 = vld [vmem:[%s10 + $0x150] sm:$0xf]
      %v1960 = vld [vmem:[%s10 + $0x154] sm:$0xf]
      %v1961 = vld [vmem:[%s10 + $0x158] sm:$0xf]
      %v1962 = vld [vmem:[%s10 + $0x15c] sm:$0xf]
      %v1963 = vld [vmem:[%s10 + $0x160] sm:$0xf]
      %v1964 = vld [vmem:[%s10 + $0x164] sm:$0xf]
      %v1965 = vld [vmem:[%s10 + $0x168] sm:$0xf]
      %v1966 = vld [vmem:[%s10 + $0x16c] sm:$0xf]
      %v1967 = vld [vmem:[%s10 + $0x170] sm:$0xf]
      %v1968 = vld [vmem:[%s10 + $0x174] sm:$0xf]
      %v1969 = vld [vmem:[%s10 + $0x178] sm:$0xf]
      %v1970 = vld [vmem:[%s10 + $0x17c] sm:$0xf]
      %v1971 = vld [vmem:[%s10 + $0x180] sm:$0xf]
      %v1972 = vld [vmem:[%s10 + $0x184] sm:$0xf]
      %v1973 = vld [vmem:[%s10 + $0x188] sm:$0xf]
      %v1974 = vld [vmem:[%s10 + $0x18c] sm:$0xf]
      %v1975 = vld [vmem:[%s10 + $0x190] sm:$0xf]
      %v1976 = vld [vmem:[%s10 + $0x194] sm:$0xf]
      %v1977 = vld [vmem:[%s10 + $0x198] sm:$0xf]
      %v1978 = vld [vmem:[%s10 + $0x19c] sm:$0xf]
      %v1979 = vld [vmem:[%s10 + $0x1a0] sm:$0xf]
      %v1980 = vld [vmem:[%s10 + $0x1a4] sm:$0xf]
      %v1981 = vld [vmem:[%s10 + $0x1a8] sm:$0xf]
      %v1982 = vld [vmem:[%s10 + $0x1ac] sm:$0xf]
      %v1983 = vld [vmem:[%s10 + $0x1b0] sm:$0xf]
      %v1984 = vld [vmem:[%s10 + $0x1b4] sm:$0xf]
      %v1985 = vld [vmem:[%s10 + $0x1b8] sm:$0xf]
      %v1986 = vld [vmem:[%s10 + $0x1bc] sm:$0xf]
      %v1987 = vld [vmem:[%s10 + $0x1c0] sm:$0xf]
      %v1988 = vld [vmem:[%s10 + $0x1c4] sm:$0xf]
      %v1989 = vld [vmem:[%s10 + $0x1c8] sm:$0xf]
      %v1990 = vld [vmem:[%s10 + $0x1cc] sm:$0xf]
      %v1991 = vld [vmem:[%s10 + $0x1d0] sm:$0xf]
      %v1992 = vld [vmem:[%s10 + $0x1d4] sm:$0xf]
      %v1993 = vld [vmem:[%s10 + $0x1d8] sm:$0xf]
      %v1994 = vld [vmem:[%s10 + $0x1dc] sm:$0xf]
      %v1995 = vld [vmem:[%s10 + $0x1e0] sm:$0xf]
      %v1996 = vld [vmem:[%s10 + $0x1e4] sm:$0xf]
      %v1997 = vld [vmem:[%s10 + $0x1e8] sm:$0xf]
      %v1998 = vld [vmem:[%s10 + $0x1ec] sm:$0xf]
      %v1999 = vld [vmem:[%s10 + $0x1f0] sm:$0xf]
      %v2000 = vld [vmem:[%s10 + $0x1f4] sm:$0xf]
      %v2001 = vld [vmem:[%s10 + $0x1f8] sm:$0xf]
      %v2002 = vld [vmem:[%s10 + $0x1fc] sm:$0xf]
      %v2003 = vld [vmem:[%s10 + $0x200] sm:$0xf]
      %v2004 = vld [vmem:[%s10 + $0x204] sm:$0xf]
      %v2005 = vld [vmem:[%s10 + $0x208] sm:$0xf]
      %v2006 = vld [vmem:[%s10 + $0x20c] sm:$0xf]
      %v2007 = vld [vmem:[%s10 + $0x210] sm:$0xf]
      %v2008 = vld [vmem:[%s10 + $0x214] sm:$0xf]
      %v2009 = vld [vmem:[%s10 + $0x218] sm:$0xf]
      %v2010 = vld [vmem:[%s10 + $0x21c] sm:$0xf]
      %v2011 = vld [vmem:[%s10 + $0x220] sm:$0xf]
      %v2012 = vld [vmem:[%s10 + $0x224] sm:$0xf]
      %v2013 = vld [vmem:[%s10 + $0x228] sm:$0xf]
      %v2014 = vld [vmem:[%s10 + $0x22c] sm:$0xf]
      %v2015 = vld [vmem:[%s10 + $0x230] sm:$0xf]
      %v2016 = vld [vmem:[%s10 + $0x234] sm:$0xf]
      %v2017 = vld [vmem:[%s10 + $0x238] sm:$0xf]
      %v2018 = vld [vmem:[%s10 + $0x23c] sm:$0xf]
      %v2019 = vld [vmem:[%s10 + $0x240] sm:$0xf]
      %v2020 = vld [vmem:[%s10 + $0x244] sm:$0xf]
      %v2021 = vld [vmem:[%s10 + $0x248] sm:$0xf]
      %v2022 = vld [vmem:[%s10 + $0x24c] sm:$0xf]
      %v2023 = vld [vmem:[%s10 + $0x250] sm:$0xf]
      %v2024 = vld [vmem:[%s10 + $0x254] sm:$0xf]
      %v2025 = vld [vmem:[%s10 + $0x258] sm:$0xf]
      %v2026 = vld [vmem:[%s10 + $0x25c] sm:$0xf]
      %v2027 = vld [vmem:[%s10 + $0x260] sm:$0xf]
      %v2028 = vld [vmem:[%s10 + $0x264] sm:$0xf]
      %v2029 = vld [vmem:[%s10 + $0x268] sm:$0xf]
      %v2030 = vld [vmem:[%s10 + $0x26c] sm:$0xf]
      %v2031 = vld [vmem:[%s10 + $0x270] sm:$0xf]
      %v2032 = vld [vmem:[%s10 + $0x274] sm:$0xf]
      %v2033 = vld [vmem:[%s10 + $0x278] sm:$0xf]
      %v2034 = vld [vmem:[%s10 + $0x27c] sm:$0xf]
      %v2035 = vld [vmem:[%s10 + $0x280] sm:$0xf]
      %v2036 = vld [vmem:[%s10 + $0x284] sm:$0xf]
      %v2037 = vld [vmem:[%s10 + $0x288] sm:$0xf]
      %v2038 = vld [vmem:[%s10 + $0x28c] sm:$0xf]
      %v2039 = vld [vmem:[%s10 + $0x290] sm:$0xf]
      %v2040 = vld [vmem:[%s10 + $0x294] sm:$0xf]
      %v2041 = vld [vmem:[%s10 + $0x298] sm:$0xf]
      %v2042 = vld [vmem:[%s10 + $0x29c] sm:$0xf]
      %v2043 = vld [vmem:[%s10 + $0x2a0] sm:$0xf]
      %v2044 = vld [vmem:[%s10 + $0x2a4] sm:$0xf]
      %v2045 = vld [vmem:[%s10 + $0x2a8] sm:$0xf]
      %v2046 = vld [vmem:[%s10 + $0x2ac] sm:$0xf]
      %v2047 = vld [vmem:[%s10 + $0x2b0] sm:$0xf]
      %v2048 = vld [vmem:[%s10 + $0x2b4] sm:$0xf]
      %v2049 = vld [vmem:[%s10 + $0x2b8] sm:$0xf]
      %v2050 = vld [vmem:[%s10 + $0x2bc] sm:$0xf]
      %v2051 = vld [vmem:[%s10 + $0x2c0] sm:$0xf]
      %v2052 = vld [vmem:[%s10 + $0x2c4] sm:$0xf]
      %v2053 = vld [vmem:[%s10 + $0x2c8] sm:$0xf]
      %v2054 = vld [vmem:[%s10 + $0x2cc] sm:$0xf]
      %v2055 = vld [vmem:[%s10 + $0x2d0] sm:$0xf]
      %v2056 = vld [vmem:[%s10 + $0x2d4] sm:$0xf]
      %v2057 = vld [vmem:[%s10 + $0x2d8] sm:$0xf]
      %v2058 = vld [vmem:[%s10 + $0x2dc] sm:$0xf]
      %v2059 = vld [vmem:[%s10 + $0x2e0] sm:$0xf]
      %v2060 = vld [vmem:[%s10 + $0x2e4] sm:$0xf]
      %v2061 = vld [vmem:[%s10 + $0x2e8] sm:$0xf]
      %v2062 = vld [vmem:[%s10 + $0x2ec] sm:$0xf]
      %v2063 = vld [vmem:[%s10 + $0x2f0] sm:$0xf]
      %v2064 = vld [vmem:[%s10 + $0x2f4] sm:$0xf]
      %v2065 = vld [vmem:[%s10 + $0x2f8] sm:$0xf]
      %v2066 = vld [vmem:[%s10 + $0x2fc] sm:$0xf]
      %v2067 = vld [vmem:[%s10 + $0x300] sm:$0xf]
      %v2068 = vld [vmem:[%s10 + $0x304] sm:$0xf]
      %v2069 = vld [vmem:[%s10 + $0x308] sm:$0xf]
      %v2070 = vld [vmem:[%s10 + $0x30c] sm:$0xf]
      %v2071 = vld [vmem:[%s10 + $0x310] sm:$0xf]
      %v2072 = vld [vmem:[%s10 + $0x314] sm:$0xf]
      %v2073 = vld [vmem:[%s10 + $0x318] sm:$0xf]
      %v2074 = vld [vmem:[%s10 + $0x31c] sm:$0xf]
      %v2075 = vld [vmem:[%s10 + $0x320] sm:$0xf]
      %v2076 = vld [vmem:[%s10 + $0x324] sm:$0xf]
      %v2077 = vld [vmem:[%s10 + $0x328] sm:$0xf]
      %v2078 = vld [vmem:[%s10 + $0x32c] sm:$0xf]
      %v2079 = vld [vmem:[%s10 + $0x330] sm:$0xf]
      %v2080 = vld [vmem:[%s10 + $0x334] sm:$0xf]
      %v2081 = vld [vmem:[%s10 + $0x338] sm:$0xf]
      %v2082 = vld [vmem:[%s10 + $0x33c] sm:$0xf]
      %v2083 = vld [vmem:[%s10 + $0x340] sm:$0xf]
      %v2084 = vld [vmem:[%s10 + $0x344] sm:$0xf]
      %v2085 = vld [vmem:[%s10 + $0x348] sm:$0xf]
      %v2086 = vld [vmem:[%s10 + $0x34c] sm:$0xf]
      %v2087 = vld [vmem:[%s10 + $0x350] sm:$0xf]
      %v2088 = vld [vmem:[%s10 + $0x354] sm:$0xf]
      %v2089 = vld [vmem:[%s10 + $0x358] sm:$0xf]
      %v2090 = vld [vmem:[%s10 + $0x35c] sm:$0xf]
      %v2091 = vld [vmem:[%s10 + $0x360] sm:$0xf]
      %v2092 = vld [vmem:[%s10 + $0x364] sm:$0xf]
      %v2093 = vld [vmem:[%s10 + $0x368] sm:$0xf]
      %v2094 = vld [vmem:[%s10 + $0x36c] sm:$0xf]
      %v2095 = vld [vmem:[%s10 + $0x370] sm:$0xf]
      %v2096 = vld [vmem:[%s10 + $0x374] sm:$0xf]
      %v2097 = vld [vmem:[%s10 + $0x378] sm:$0xf]
      %v2098 = vld [vmem:[%s10 + $0x37c] sm:$0xf]
      %v2099 = vld [vmem:[%s10 + $0x380] sm:$0xf]
      %v2100 = vld [vmem:[%s10 + $0x384] sm:$0xf]
      %v2101 = vld [vmem:[%s10 + $0x388] sm:$0xf]
      %v2102 = vld [vmem:[%s10 + $0x38c] sm:$0xf]
      %v2103 = vld [vmem:[%s10 + $0x390] sm:$0xf]
      %v2104 = vld [vmem:[%s10 + $0x394] sm:$0xf]
      %v2105 = vld [vmem:[%s10 + $0x398] sm:$0xf]
      %v2106 = vld [vmem:[%s10 + $0x39c] sm:$0xf]
      %v2107 = vld [vmem:[%s10 + $0x3a0] sm:$0xf]
      %v2108 = vld [vmem:[%s10 + $0x3a4] sm:$0xf]
      %v2109 = vld [vmem:[%s10 + $0x3a8] sm:$0xf]
      %v2110 = vld [vmem:[%s10 + $0x3ac] sm:$0xf]
      %v2111 = vld [vmem:[%s10 + $0x3b0] sm:$0xf]
      %v2112 = vld [vmem:[%s10 + $0x3b4] sm:$0xf]
      %v2113 = vld [vmem:[%s10 + $0x3b8] sm:$0xf]
      %v2114 = vld [vmem:[%s10 + $0x3bc] sm:$0xf]
      %v2115 = vld [vmem:[%s10 + $0x3c0] sm:$0xf]
      %v2116 = vld [vmem:[%s10 + $0x3c4] sm:$0xf]
      %v2117 = vld [vmem:[%s10 + $0x3c8] sm:$0xf]
      %v2118 = vld [vmem:[%s10 + $0x3cc] sm:$0xf]
      %v2119 = vld [vmem:[%s10 + $0x3d0] sm:$0xf]
      %v2120 = vld [vmem:[%s10 + $0x3d4] sm:$0xf]
      %v2121 = vld [vmem:[%s10 + $0x3d8] sm:$0xf]
      %v2122 = vld [vmem:[%s10 + $0x3dc] sm:$0xf]
      %v2123 = vld [vmem:[%s10 + $0x3e0] sm:$0xf]
      %v2124 = vld [vmem:[%s10 + $0x3e4] sm:$0xf]
      %v2125 = vld [vmem:[%s10 + $0x3e8] sm:$0xf]
      %v2126 = vld [vmem:[%s10 + $0x3ec] sm:$0xf]
      %v2127 = vld [vmem:[%s10 + $0x3f0] sm:$0xf]
      %v2128 = vld [vmem:[%s10 + $0x3f4] sm:$0xf]
      %v2129 = vld [vmem:[%s10 + $0x3f8] sm:$0xf]
      %v2130 = vld [vmem:[%s10 + $0x3fc] sm:$0xf]
      %v2131 = vld [vmem:[%s10 + $0x400] sm:$0xf]
      %v2132 = vld [vmem:[%s10 + $0x404] sm:$0xf]
      %v2133 = vld [vmem:[%s10 + $0x408] sm:$0xf]
      %v2134 = vld [vmem:[%s10 + $0x40c] sm:$0xf]
      %v2135 = vld [vmem:[%s10 + $0x410] sm:$0xf]
      %v2136 = vld [vmem:[%s10 + $0x414] sm:$0xf]
      %v2137 = vld [vmem:[%s10 + $0x418] sm:$0xf]
      %v2138 = vld [vmem:[%s10 + $0x41c] sm:$0xf]
      %v2139 = vld [vmem:[%s10 + $0x420] sm:$0xf]
      %v2140 = vld [vmem:[%s10 + $0x424] sm:$0xf]
      %v2141 = vld [vmem:[%s10 + $0x428] sm:$0xf]
      %v2142 = vld [vmem:[%s10 + $0x42c] sm:$0xf]
      %v2143 = vld [vmem:[%s10 + $0x430] sm:$0xf]
      %v2144 = vld [vmem:[%s10 + $0x434] sm:$0xf]
      %v2145 = vld [vmem:[%s10 + $0x438] sm:$0xf]
      %v2146 = vld [vmem:[%s10 + $0x43c] sm:$0xf]
      %v2147 = vld [vmem:[%s10 + $0x440] sm:$0xf]
      %v2148 = vld [vmem:[%s10 + $0x444] sm:$0xf]
      %v2149 = vld [vmem:[%s10 + $0x448] sm:$0xf]
      %v2150 = vld [vmem:[%s10 + $0x44c] sm:$0xf]
      %v2151 = vld [vmem:[%s10 + $0x450] sm:$0xf]
      %v2152 = vld [vmem:[%s10 + $0x454] sm:$0xf]
      %v2153 = vld [vmem:[%s10 + $0x458] sm:$0xf]
      %v2154 = vld [vmem:[%s10 + $0x45c] sm:$0xf]
      %v2155 = vld [vmem:[%s10 + $0x460] sm:$0xf]
      %v2156 = vld [vmem:[%s10 + $0x464] sm:$0xf]
      %v2157 = vld [vmem:[%s10 + $0x468] sm:$0xf]
      %v2158 = vld [vmem:[%s10 + $0x46c] sm:$0xf]
      %v2159 = vld [vmem:[%s10 + $0x470] sm:$0xf]
      %v2160 = vld [vmem:[%s10 + $0x474] sm:$0xf]
      %v2161 = vld [vmem:[%s10 + $0x478] sm:$0xf]
      %v2162 = vld [vmem:[%s10 + $0x47c] sm:$0xf]
      %v2163 = vld [vmem:[%s11] sm:$0x1]
      %v2165 = vlaneseq
      %v2166 = vshrl.u32 %v2165, 7
      %v2167 = vsub.s32 0, %v2166
      %v2168 = vrot.slane %v2163, %v2167
      %v2458 = vunpack.c.l.b16 %v1875
      %v2459 = vunpack.c.l.b16 %v1876
      %v2460 = vunpack.c.l.b16 %v1877
      %v2461 = vunpack.c.l.b16 %v1878
      %v2462 = vunpack.c.l.b16 %v1879
      %v2463 = vunpack.c.l.b16 %v1880
      %v2464 = vunpack.c.l.b16 %v1881
      %v2465 = vunpack.c.l.b16 %v1882
      %v2466 = vunpack.c.l.b16 %v1883
      %v2467 = vunpack.c.l.b16 %v1884
      %v2468 = vunpack.c.l.b16 %v1885
      %v2469 = vunpack.c.l.b16 %v1886
      %v2470 = vunpack.c.l.b16 %v1887
      %v2471 = vunpack.c.l.b16 %v1888
      %v2472 = vunpack.c.l.b16 %v1889
      %v2473 = vunpack.c.l.b16 %v1890
      %v2474 = vunpack.c.l.b16 %v1891
      %v2475 = vunpack.c.l.b16 %v1892
      %v2476 = vunpack.c.l.b16 %v1893
      %v2477 = vunpack.c.l.b16 %v1894
      %v2478 = vunpack.c.l.b16 %v1895
      %v2479 = vunpack.c.l.b16 %v1896
      %v2480 = vunpack.c.l.b16 %v1897
      %v2481 = vunpack.c.l.b16 %v1898
      %v2482 = vunpack.c.l.b16 %v1899
      %v2483 = vunpack.c.l.b16 %v1900
      %v2484 = vunpack.c.l.b16 %v1901
      %v2485 = vunpack.c.l.b16 %v1902
      %v2486 = vunpack.c.l.b16 %v1903
      %v2487 = vunpack.c.l.b16 %v1904
      %v2488 = vunpack.c.l.b16 %v1905
      %v2489 = vunpack.c.l.b16 %v1906
      %v2490 = vunpack.c.l.b16 %v1907
      %v2491 = vunpack.c.l.b16 %v1908
      %v2492 = vunpack.c.l.b16 %v1909
      %v2493 = vunpack.c.l.b16 %v1910
      %v2494 = vunpack.c.l.b16 %v1911
      %v2495 = vunpack.c.l.b16 %v1912
      %v2496 = vunpack.c.l.b16 %v1913
      %v2497 = vunpack.c.l.b16 %v1914
      %v2498 = vunpack.c.l.b16 %v1915
      %v2499 = vunpack.c.l.b16 %v1916
      %v2500 = vunpack.c.l.b16 %v1917
      %v2501 = vunpack.c.l.b16 %v1918
      %v2502 = vunpack.c.l.b16 %v1919
      %v2503 = vunpack.c.l.b16 %v1920
      %v2504 = vunpack.c.l.b16 %v1921
      %v2505 = vunpack.c.l.b16 %v1922
      %v2506 = vunpack.c.l.b16 %v1923
      %v2507 = vunpack.c.l.b16 %v1924
      %v2508 = vunpack.c.l.b16 %v1925
      %v2509 = vunpack.c.l.b16 %v1926
      %v2510 = vunpack.c.l.b16 %v1927
      %v2511 = vunpack.c.l.b16 %v1928
      %v2512 = vunpack.c.l.b16 %v1929
      %v2513 = vunpack.c.l.b16 %v1930
      %v2514 = vunpack.c.l.b16 %v1931
      %v2515 = vunpack.c.l.b16 %v1932
      %v2516 = vunpack.c.l.b16 %v1933
      %v2517 = vunpack.c.l.b16 %v1934
      %v2518 = vunpack.c.l.b16 %v1935
      %v2519 = vunpack.c.l.b16 %v1936
      %v2520 = vunpack.c.l.b16 %v1937
      %v2521 = vunpack.c.l.b16 %v1938
      %v2522 = vunpack.c.l.b16 %v1939
      %v2523 = vunpack.c.l.b16 %v1940
      %v2524 = vunpack.c.l.b16 %v1941
      %v2525 = vunpack.c.l.b16 %v1942
      %v2526 = vunpack.c.l.b16 %v1943
      %v2527 = vunpack.c.l.b16 %v1944
      %v2528 = vunpack.c.l.b16 %v1945
      %v2529 = vunpack.c.l.b16 %v1946
      %v2530 = vunpack.c.l.b16 %v1947
      %v2531 = vunpack.c.l.b16 %v1948
      %v2532 = vunpack.c.l.b16 %v1949
      %v2533 = vunpack.c.l.b16 %v1950
      %v2534 = vunpack.c.l.b16 %v1951
      %v2535 = vunpack.c.l.b16 %v1952
      %v2536 = vunpack.c.l.b16 %v1953
      %v2537 = vunpack.c.l.b16 %v1954
      %v2538 = vunpack.c.l.b16 %v1955
      %v2539 = vunpack.c.l.b16 %v1956
      %v2540 = vunpack.c.l.b16 %v1957
      %v2541 = vunpack.c.l.b16 %v1958
      %v2542 = vunpack.c.l.b16 %v1959
      %v2543 = vunpack.c.l.b16 %v1960
      %v2544 = vunpack.c.l.b16 %v1961
      %v2545 = vunpack.c.l.b16 %v1962
      %v2546 = vunpack.c.l.b16 %v1963
      %v2547 = vunpack.c.l.b16 %v1964
      %v2548 = vunpack.c.l.b16 %v1965
      %v2549 = vunpack.c.l.b16 %v1966
      %v2550 = vunpack.c.l.b16 %v1967
      %v2551 = vunpack.c.l.b16 %v1968
      %v2552 = vunpack.c.l.b16 %v1969
      %v2553 = vunpack.c.l.b16 %v1970
      %v2554 = vunpack.c.l.b16 %v1971
      %v2555 = vunpack.c.l.b16 %v1972
      %v2556 = vunpack.c.l.b16 %v1973
      %v2557 = vunpack.c.l.b16 %v1974
      %v2558 = vunpack.c.l.b16 %v1975
      %v2559 = vunpack.c.l.b16 %v1976
      %v2560 = vunpack.c.l.b16 %v1977
      %v2561 = vunpack.c.l.b16 %v1978
      %v2562 = vunpack.c.l.b16 %v1979
      %v2563 = vunpack.c.l.b16 %v1980
      %v2564 = vunpack.c.l.b16 %v1981
      %v2565 = vunpack.c.l.b16 %v1982
      %v2566 = vunpack.c.l.b16 %v1983
      %v2567 = vunpack.c.l.b16 %v1984
      %v2568 = vunpack.c.l.b16 %v1985
      %v2569 = vunpack.c.l.b16 %v1986
      %v2570 = vunpack.c.l.b16 %v1987
      %v2571 = vunpack.c.l.b16 %v1988
      %v2572 = vunpack.c.l.b16 %v1989
      %v2573 = vunpack.c.l.b16 %v1990
      %v2574 = vunpack.c.l.b16 %v1991
      %v2575 = vunpack.c.l.b16 %v1992
      %v2576 = vunpack.c.l.b16 %v1993
      %v2577 = vunpack.c.l.b16 %v1994
      %v2578 = vunpack.c.l.b16 %v1995
      %v2579 = vunpack.c.l.b16 %v1996
      %v2580 = vunpack.c.l.b16 %v1997
      %v2581 = vunpack.c.l.b16 %v1998
      %v2582 = vunpack.c.l.b16 %v1999
      %v2583 = vunpack.c.l.b16 %v2000
      %v2584 = vunpack.c.l.b16 %v2001
      %v2585 = vunpack.c.l.b16 %v2002
      %v2586 = vunpack.c.l.b16 %v2003
      %v2587 = vunpack.c.l.b16 %v2004
      %v2588 = vunpack.c.l.b16 %v2005
      %v2589 = vunpack.c.l.b16 %v2006
      %v2590 = vunpack.c.l.b16 %v2007
      %v2591 = vunpack.c.l.b16 %v2008
      %v2592 = vunpack.c.l.b16 %v2009
      %v2593 = vunpack.c.l.b16 %v2010
      %v2594 = vunpack.c.l.b16 %v2011
      %v2595 = vunpack.c.l.b16 %v2012
      %v2596 = vunpack.c.l.b16 %v2013
      %v2597 = vunpack.c.l.b16 %v2014
      %v2598 = vunpack.c.l.b16 %v2015
      %v2599 = vunpack.c.l.b16 %v2016
      %v2600 = vunpack.c.l.b16 %v2017
      %v2601 = vunpack.c.l.b16 %v2018
      %v2602 = vunpack.c.l.b16 %v2019
      %v2603 = vunpack.c.l.b16 %v2020
      %v2604 = vunpack.c.l.b16 %v2021
      %v2605 = vunpack.c.l.b16 %v2022
      %v2606 = vunpack.c.l.b16 %v2023
      %v2607 = vunpack.c.l.b16 %v2024
      %v2608 = vunpack.c.l.b16 %v2025
      %v2609 = vunpack.c.l.b16 %v2026
      %v2610 = vunpack.c.l.b16 %v2027
      %v2611 = vunpack.c.l.b16 %v2028
      %v2612 = vunpack.c.l.b16 %v2029
      %v2613 = vunpack.c.l.b16 %v2030
      %v2614 = vunpack.c.l.b16 %v2031
      %v2615 = vunpack.c.l.b16 %v2032
      %v2616 = vunpack.c.l.b16 %v2033
      %v2617 = vunpack.c.l.b16 %v2034
      %v2618 = vunpack.c.l.b16 %v2035
      %v2619 = vunpack.c.l.b16 %v2036
      %v2620 = vunpack.c.l.b16 %v2037
      %v2621 = vunpack.c.l.b16 %v2038
      %v2622 = vunpack.c.l.b16 %v2039
      %v2623 = vunpack.c.l.b16 %v2040
      %v2624 = vunpack.c.l.b16 %v2041
      %v2625 = vunpack.c.l.b16 %v2042
      %v2626 = vunpack.c.l.b16 %v2043
      %v2627 = vunpack.c.l.b16 %v2044
      %v2628 = vunpack.c.l.b16 %v2045
      %v2629 = vunpack.c.l.b16 %v2046
      %v2630 = vunpack.c.l.b16 %v2047
      %v2631 = vunpack.c.l.b16 %v2048
      %v2632 = vunpack.c.l.b16 %v2049
      %v2633 = vunpack.c.l.b16 %v2050
      %v2634 = vunpack.c.l.b16 %v2051
      %v2635 = vunpack.c.l.b16 %v2052
      %v2636 = vunpack.c.l.b16 %v2053
      %v2637 = vunpack.c.l.b16 %v2054
      %v2638 = vunpack.c.l.b16 %v2055
      %v2639 = vunpack.c.l.b16 %v2056
      %v2640 = vunpack.c.l.b16 %v2057
      %v2641 = vunpack.c.l.b16 %v2058
      %v2642 = vunpack.c.l.b16 %v2059
      %v2643 = vunpack.c.l.b16 %v2060
      %v2644 = vunpack.c.l.b16 %v2061
      %v2645 = vunpack.c.l.b16 %v2062
      %v2646 = vunpack.c.l.b16 %v2063
      %v2647 = vunpack.c.l.b16 %v2064
      %v2648 = vunpack.c.l.b16 %v2065
      %v2649 = vunpack.c.l.b16 %v2066
      %v2650 = vunpack.c.l.b16 %v2067
      %v2651 = vunpack.c.l.b16 %v2068
      %v2652 = vunpack.c.l.b16 %v2069
      %v2653 = vunpack.c.l.b16 %v2070
      %v2654 = vunpack.c.l.b16 %v2071
      %v2655 = vunpack.c.l.b16 %v2072
      %v2656 = vunpack.c.l.b16 %v2073
      %v2657 = vunpack.c.l.b16 %v2074
      %v2658 = vunpack.c.l.b16 %v2075
      %v2659 = vunpack.c.l.b16 %v2076
      %v2660 = vunpack.c.l.b16 %v2077
      %v2661 = vunpack.c.l.b16 %v2078
      %v2662 = vunpack.c.l.b16 %v2079
      %v2663 = vunpack.c.l.b16 %v2080
      %v2664 = vunpack.c.l.b16 %v2081
      %v2665 = vunpack.c.l.b16 %v2082
      %v2666 = vunpack.c.l.b16 %v2083
      %v2667 = vunpack.c.l.b16 %v2084
      %v2668 = vunpack.c.l.b16 %v2085
      %v2669 = vunpack.c.l.b16 %v2086
      %v2670 = vunpack.c.l.b16 %v2087
      %v2671 = vunpack.c.l.b16 %v2088
      %v2672 = vunpack.c.l.b16 %v2089
      %v2673 = vunpack.c.l.b16 %v2090
      %v2674 = vunpack.c.l.b16 %v2091
      %v2675 = vunpack.c.l.b16 %v2092
      %v2676 = vunpack.c.l.b16 %v2093
      %v2677 = vunpack.c.l.b16 %v2094
      %v2678 = vunpack.c.l.b16 %v2095
      %v2679 = vunpack.c.l.b16 %v2096
      %v2680 = vunpack.c.l.b16 %v2097
      %v2681 = vunpack.c.l.b16 %v2098
      %v2682 = vunpack.c.l.b16 %v2099
      %v2683 = vunpack.c.l.b16 %v2100
      %v2684 = vunpack.c.l.b16 %v2101
      %v2685 = vunpack.c.l.b16 %v2102
      %v2686 = vunpack.c.l.b16 %v2103
      %v2687 = vunpack.c.l.b16 %v2104
      %v2688 = vunpack.c.l.b16 %v2105
      %v2689 = vunpack.c.l.b16 %v2106
      %v2690 = vunpack.c.l.b16 %v2107
      %v2691 = vunpack.c.l.b16 %v2108
      %v2692 = vunpack.c.l.b16 %v2109
      %v2693 = vunpack.c.l.b16 %v2110
      %v2694 = vunpack.c.l.b16 %v2111
      %v2695 = vunpack.c.l.b16 %v2112
      %v2696 = vunpack.c.l.b16 %v2113
      %v2697 = vunpack.c.l.b16 %v2114
      %v2698 = vunpack.c.l.b16 %v2115
      %v2699 = vunpack.c.l.b16 %v2116
      %v2700 = vunpack.c.l.b16 %v2117
      %v2701 = vunpack.c.l.b16 %v2118
      %v2702 = vunpack.c.l.b16 %v2119
      %v2703 = vunpack.c.l.b16 %v2120
      %v2704 = vunpack.c.l.b16 %v2121
      %v2705 = vunpack.c.l.b16 %v2122
      %v2706 = vunpack.c.l.b16 %v2123
      %v2707 = vunpack.c.l.b16 %v2124
      %v2708 = vunpack.c.l.b16 %v2125
      %v2709 = vunpack.c.l.b16 %v2126
      %v2710 = vunpack.c.l.b16 %v2127
      %v2711 = vunpack.c.l.b16 %v2128
      %v2712 = vunpack.c.l.b16 %v2129
      %v2713 = vunpack.c.l.b16 %v2130
      %v2714 = vunpack.c.l.b16 %v2131
      %v2715 = vunpack.c.l.b16 %v2132
      %v2716 = vunpack.c.l.b16 %v2133
      %v2717 = vunpack.c.l.b16 %v2134
      %v2718 = vunpack.c.l.b16 %v2135
      %v2719 = vunpack.c.l.b16 %v2136
      %v2720 = vunpack.c.l.b16 %v2137
      %v2721 = vunpack.c.l.b16 %v2138
      %v2722 = vunpack.c.l.b16 %v2139
      %v2723 = vunpack.c.l.b16 %v2140
      %v2724 = vunpack.c.l.b16 %v2141
      %v2725 = vunpack.c.l.b16 %v2142
      %v2726 = vunpack.c.l.b16 %v2143
      %v2727 = vunpack.c.l.b16 %v2144
      %v2728 = vunpack.c.l.b16 %v2145
      %v2729 = vunpack.c.l.b16 %v2146
      %v2730 = vunpack.c.l.b16 %v2147
      %v2731 = vunpack.c.l.b16 %v2148
      %v2732 = vunpack.c.l.b16 %v2149
      %v2733 = vunpack.c.l.b16 %v2150
      %v2734 = vunpack.c.l.b16 %v2151
      %v2735 = vunpack.c.l.b16 %v2152
      %v2736 = vunpack.c.l.b16 %v2153
      %v2737 = vunpack.c.l.b16 %v2154
      %v2738 = vunpack.c.l.b16 %v2155
      %v2739 = vunpack.c.l.b16 %v2156
      %v2740 = vunpack.c.l.b16 %v2157
      %v2741 = vunpack.c.l.b16 %v2158
      %v2742 = vunpack.c.l.b16 %v2159
      %v2743 = vunpack.c.l.b16 %v2160
      %v2744 = vunpack.c.l.b16 %v2161
      %v2745 = vunpack.c.l.b16 %v2162
      %v2746 = vpack.c.b16 %v2459, %v2458
      %v2747 = vpack.c.b16 %v2461, %v2460
      %v2748 = vpack.c.b16 %v2463, %v2462
      %v2749 = vpack.c.b16 %v2465, %v2464
      %v2750 = vpack.c.b16 %v2467, %v2466
      %v2751 = vpack.c.b16 %v2469, %v2468
      %v2752 = vpack.c.b16 %v2471, %v2470
      %v2753 = vpack.c.b16 %v2473, %v2472
      %v2754 = vpack.c.b16 %v2475, %v2474
      %v2755 = vpack.c.b16 %v2477, %v2476
      %v2756 = vpack.c.b16 %v2479, %v2478
      %v2757 = vpack.c.b16 %v2481, %v2480
      %v2758 = vpack.c.b16 %v2483, %v2482
      %v2759 = vpack.c.b16 %v2485, %v2484
      %v2760 = vpack.c.b16 %v2487, %v2486
      %v2761 = vpack.c.b16 %v2489, %v2488
      %v2762 = vpack.c.b16 %v2491, %v2490
      %v2763 = vpack.c.b16 %v2493, %v2492
      %v2764 = vpack.c.b16 %v2495, %v2494
      %v2765 = vpack.c.b16 %v2497, %v2496
      %v2766 = vpack.c.b16 %v2499, %v2498
      %v2767 = vpack.c.b16 %v2501, %v2500
      %v2768 = vpack.c.b16 %v2503, %v2502
      %v2769 = vpack.c.b16 %v2505, %v2504
      %v2770 = vpack.c.b16 %v2507, %v2506
      %v2771 = vpack.c.b16 %v2509, %v2508
      %v2772 = vpack.c.b16 %v2511, %v2510
      %v2773 = vpack.c.b16 %v2513, %v2512
      %v2774 = vpack.c.b16 %v2515, %v2514
      %v2775 = vpack.c.b16 %v2517, %v2516
      %v2776 = vpack.c.b16 %v2519, %v2518
      %v2777 = vpack.c.b16 %v2521, %v2520
      %v2778 = vpack.c.b16 %v2523, %v2522
      %v2779 = vpack.c.b16 %v2525, %v2524
      %v2780 = vpack.c.b16 %v2527, %v2526
      %v2781 = vpack.c.b16 %v2529, %v2528
      %v2782 = vpack.c.b16 %v2531, %v2530
      %v2783 = vpack.c.b16 %v2533, %v2532
      %v2784 = vpack.c.b16 %v2535, %v2534
      %v2785 = vpack.c.b16 %v2537, %v2536
      %v2786 = vpack.c.b16 %v2539, %v2538
      %v2787 = vpack.c.b16 %v2541, %v2540
      %v2788 = vpack.c.b16 %v2543, %v2542
      %v2789 = vpack.c.b16 %v2545, %v2544
      %v2790 = vpack.c.b16 %v2547, %v2546
      %v2791 = vpack.c.b16 %v2549, %v2548
      %v2792 = vpack.c.b16 %v2551, %v2550
      %v2793 = vpack.c.b16 %v2553, %v2552
      %v2794 = vpack.c.b16 %v2555, %v2554
      %v2795 = vpack.c.b16 %v2557, %v2556
      %v2796 = vpack.c.b16 %v2559, %v2558
      %v2797 = vpack.c.b16 %v2561, %v2560
      %v2798 = vpack.c.b16 %v2563, %v2562
      %v2799 = vpack.c.b16 %v2565, %v2564
      %v2800 = vpack.c.b16 %v2567, %v2566
      %v2801 = vpack.c.b16 %v2569, %v2568
      %v2802 = vpack.c.b16 %v2571, %v2570
      %v2803 = vpack.c.b16 %v2573, %v2572
      %v2804 = vpack.c.b16 %v2575, %v2574
      %v2805 = vpack.c.b16 %v2577, %v2576
      %v2806 = vpack.c.b16 %v2579, %v2578
      %v2807 = vpack.c.b16 %v2581, %v2580
      %v2808 = vpack.c.b16 %v2583, %v2582
      %v2809 = vpack.c.b16 %v2585, %v2584
      %v2810 = vpack.c.b16 %v2587, %v2586
      %v2811 = vpack.c.b16 %v2589, %v2588
      %v2812 = vpack.c.b16 %v2591, %v2590
      %v2813 = vpack.c.b16 %v2593, %v2592
      %v2814 = vpack.c.b16 %v2595, %v2594
      %v2815 = vpack.c.b16 %v2597, %v2596
      %v2816 = vpack.c.b16 %v2599, %v2598
      %v2817 = vpack.c.b16 %v2601, %v2600
      %v2818 = vpack.c.b16 %v2603, %v2602
      %v2819 = vpack.c.b16 %v2605, %v2604
      %v2820 = vpack.c.b16 %v2607, %v2606
      %v2821 = vpack.c.b16 %v2609, %v2608
      %v2822 = vpack.c.b16 %v2611, %v2610
      %v2823 = vpack.c.b16 %v2613, %v2612
      %v2824 = vpack.c.b16 %v2615, %v2614
      %v2825 = vpack.c.b16 %v2617, %v2616
      %v2826 = vpack.c.b16 %v2619, %v2618
      %v2827 = vpack.c.b16 %v2621, %v2620
      %v2828 = vpack.c.b16 %v2623, %v2622
      %v2829 = vpack.c.b16 %v2625, %v2624
      %v2830 = vpack.c.b16 %v2627, %v2626
      %v2831 = vpack.c.b16 %v2629, %v2628
      %v2832 = vpack.c.b16 %v2631, %v2630
      %v2833 = vpack.c.b16 %v2633, %v2632
      %v2834 = vpack.c.b16 %v2635, %v2634
      %v2835 = vpack.c.b16 %v2637, %v2636
      %v2836 = vpack.c.b16 %v2639, %v2638
      %v2837 = vpack.c.b16 %v2641, %v2640
      %v2838 = vpack.c.b16 %v2643, %v2642
      %v2839 = vpack.c.b16 %v2645, %v2644
      %v2840 = vpack.c.b16 %v2647, %v2646
      %v2841 = vpack.c.b16 %v2649, %v2648
      %v2842 = vpack.c.b16 %v2651, %v2650
      %v2843 = vpack.c.b16 %v2653, %v2652
      %v2844 = vpack.c.b16 %v2655, %v2654
      %v2845 = vpack.c.b16 %v2657, %v2656
      %v2846 = vpack.c.b16 %v2659, %v2658
      %v2847 = vpack.c.b16 %v2661, %v2660
      %v2848 = vpack.c.b16 %v2663, %v2662
      %v2849 = vpack.c.b16 %v2665, %v2664
      %v2850 = vpack.c.b16 %v2667, %v2666
      %v2851 = vpack.c.b16 %v2669, %v2668
      %v2852 = vpack.c.b16 %v2671, %v2670
      %v2853 = vpack.c.b16 %v2673, %v2672
      %v2854 = vpack.c.b16 %v2675, %v2674
      %v2855 = vpack.c.b16 %v2677, %v2676
      %v2856 = vpack.c.b16 %v2679, %v2678
      %v2857 = vpack.c.b16 %v2681, %v2680
      %v2858 = vpack.c.b16 %v2683, %v2682
      %v2859 = vpack.c.b16 %v2685, %v2684
      %v2860 = vpack.c.b16 %v2687, %v2686
      %v2861 = vpack.c.b16 %v2689, %v2688
      %v2862 = vpack.c.b16 %v2691, %v2690
      %v2863 = vpack.c.b16 %v2693, %v2692
      %v2864 = vpack.c.b16 %v2695, %v2694
      %v2865 = vpack.c.b16 %v2697, %v2696
      %v2866 = vpack.c.b16 %v2699, %v2698
      %v2867 = vpack.c.b16 %v2701, %v2700
      %v2868 = vpack.c.b16 %v2703, %v2702
      %v2869 = vpack.c.b16 %v2705, %v2704
      %v2870 = vpack.c.b16 %v2707, %v2706
      %v2871 = vpack.c.b16 %v2709, %v2708
      %v2872 = vpack.c.b16 %v2711, %v2710
      %v2873 = vpack.c.b16 %v2713, %v2712
      %v2874 = vpack.c.b16 %v2715, %v2714
      %v2875 = vpack.c.b16 %v2717, %v2716
      %v2876 = vpack.c.b16 %v2719, %v2718
      %v2877 = vpack.c.b16 %v2721, %v2720
      %v2878 = vpack.c.b16 %v2723, %v2722
      %v2879 = vpack.c.b16 %v2725, %v2724
      %v2880 = vpack.c.b16 %v2727, %v2726
      %v2881 = vpack.c.b16 %v2729, %v2728
      %v2882 = vpack.c.b16 %v2731, %v2730
      %v2883 = vpack.c.b16 %v2733, %v2732
      %v2884 = vpack.c.b16 %v2735, %v2734
      %v2885 = vpack.c.b16 %v2737, %v2736
      %v2886 = vpack.c.b16 %v2739, %v2738
      %v2887 = vpack.c.b16 %v2741, %v2740
      %v2888 = vpack.c.b16 %v2743, %v2742
      %v2889 = vpack.c.b16 %v2745, %v2744
      %3034 = vmatprep.subr.bf16.mxu0 0
      %3035 = vmatpush1.bf16.msra.mxu0 %v2746
      %3036 = vmatprep.subr.bf16.mxu0 0
      %3037 = vmatpush1.bf16.msra.mxu0 %v2747
      %3038 = vmatprep.subr.bf16.mxu0 0
      %3039 = vmatpush1.bf16.msra.mxu0 %v2748
      %3040 = vmatprep.subr.bf16.mxu0 0
      %3041 = vmatpush1.bf16.msra.mxu0 %v2749
      %3042 = vmatprep.subr.bf16.mxu0 0
      %3043 = vmatpush1.bf16.msra.mxu0 %v2750
      %3044 = vmatprep.subr.bf16.mxu0 0
      %3045 = vmatpush1.bf16.msra.mxu0 %v2751
      %3046 = vmatprep.subr.bf16.mxu0 0
      %3047 = vmatpush1.bf16.msra.mxu0 %v2752
      %3048 = vmatprep.subr.bf16.mxu0 0
      %3049 = vmatpush1.bf16.msra.mxu0 %v2753
      %3050 = vmatprep.subr.bf16.mxu0 0
      %3051 = vmatpush1.bf16.msra.mxu0 %v2754
      %3052 = vmatprep.subr.bf16.mxu0 0
      %3053 = vmatpush1.bf16.msra.mxu0 %v2755
      %3054 = vmatprep.subr.bf16.mxu0 0
      %3055 = vmatpush1.bf16.msra.mxu0 %v2756
      %3056 = vmatprep.subr.bf16.mxu0 0
      %3057 = vmatpush1.bf16.msra.mxu0 %v2757
      %3058 = vmatprep.subr.bf16.mxu0 0
      %3059 = vmatpush1.bf16.msra.mxu0 %v2758
      %3060 = vmatprep.subr.bf16.mxu0 0
      %3061 = vmatpush1.bf16.msra.mxu0 %v2759
      %3062 = vmatprep.subr.bf16.mxu0 0
      %3063 = vmatpush1.bf16.msra.mxu0 %v2760
      %3064 = vmatprep.subr.bf16.mxu0 0
      %3065 = vmatpush1.bf16.msra.mxu0 %v2761
      %3066 = vmatprep.mubr.bf16.mxu0 %v1840
      %3067 = vmatmul.mubr.bf16.gmra.mrb[0].mxu0 %v1839
      %v3068 = vpop.f32.mrb[0].mxu0
      %v3069 = vadd.f32 %v2168, %v3068
      %v3070 = vpop.f32.mrb[0].mxu0
      %v3071 = vpop.f32.mrb[0].mxu0
      %v3072 = vadd.f32 %v2168, %v3071
      %v3073 = vpop.f32.mrb[0].mxu0
      %3074 = vmatprep.mubr.bf16.mxu0 %v1846
      %3075 = vmatmul.mubr.bf16.gmra.mrb[0].mxu0 %v1845
      %v3076 = vpop.f32.mrb[0].mxu0
      %v3077 = vadd.f32 %v2168, %v3076
      %v3078 = vpop.f32.mrb[0].mxu0
      %v3079 = vpop.f32.mrb[0].mxu0
      %v3080 = vadd.f32 %v2168, %v3079
      %v3081 = vpop.f32.mrb[0].mxu0
      %3082 = vmatprep.mubr.bf16.mxu0 %v1852
      %3083 = vmatmul.mubr.bf16.gmra.mrb[0].mxu0 %v1851
      %v3084 = vpop.f32.mrb[0].mxu0
      %v3085 = vadd.f32 %v2168, %v3084
      %v3086 = vpop.f32.mrb[0].mxu0
      %v3087 = vpop.f32.mrb[0].mxu0
      %v3088 = vadd.f32 %v2168, %v3087
      %v3089 = vpop.f32.mrb[0].mxu0
      %3090 = vmatprep.mubr.bf16.mxu0 %v1858
      %3091 = vmatmul.mubr.bf16.gmra.mrb[0].mxu0 %v1857
      %v3092 = vpop.f32.mrb[0].mxu0
      %v3093 = vadd.f32 %v2168, %v3092
      %v3094 = vpop.f32.mrb[0].mxu0
      %v3095 = vpop.f32.mrb[0].mxu0
      %v3096 = vadd.f32 %v2168, %v3095
      %v3097 = vpop.f32.mrb[0].mxu0
      %3098 = vdwg.mxu0
      %3099 = vmatprep.subr.bf16.mxu0 0
      %3100 = vmatpush1.bf16.msra.mxu0 %v2762
      %3101 = vmatprep.subr.bf16.mxu0 0
      %3102 = vmatpush1.bf16.msra.mxu0 %v2763
      %3103 = vmatprep.subr.bf16.mxu0 0
      %3104 = vmatpush1.bf16.msra.mxu0 %v2764
      %3105 = vmatprep.subr.bf16.mxu0 0
      %3106 = vmatpush1.bf16.msra.mxu0 %v2765
      %3107 = vmatprep.subr.bf16.mxu0 0
      %3108 = vmatpush1.bf16.msra.mxu0 %v2766
      %3109 = vmatprep.subr.bf16.mxu0 0
      %3110 = vmatpush1.bf16.msra.mxu0 %v2767
      %3111 = vmatprep.subr.bf16.mxu0 0
      %3112 = vmatpush1.bf16.msra.mxu0 %v2768
      %3113 = vmatprep.subr.bf16.mxu0 0
      %3114 = vmatpush1.bf16.msra.mxu0 %v2769
      %3115 = vmatprep.subr.bf16.mxu0 0
      %3116 = vmatpush1.bf16.msra.mxu0 %v2770
      %3117 = vmatprep.subr.bf16.mxu0 0
      %3118 = vmatpush1.bf16.msra.mxu0 %v2771
      %3119 = vmatprep.subr.bf16.mxu0 0
      %3120 = vmatpush1.bf16.msra.mxu0 %v2772
      %3121 = vmatprep.subr.bf16.mxu0 0
      %3122 = vmatpush1.bf16.msra.mxu0 %v2773
      %3123 = vmatprep.subr.bf16.mxu0 0
      %3124 = vmatpush1.bf16.msra.mxu0 %v2774
      %3125 = vmatprep.subr.bf16.mxu0 0
      %3126 = vmatpush1.bf16.msra.mxu0 %v2775
      %3127 = vmatprep.subr.bf16.mxu0 0
      %3128 = vmatpush1.bf16.msra.mxu0 %v2776
      %3129 = vmatprep.subr.bf16.mxu0 0
      %3130 = vmatpush1.bf16.msra.mxu0 %v2777
      %3131 = vmatprep.mubr.bf16.mxu0 %v1842
      %3132 = vmatmul.mubr.bf16.gmra.mrb[0].mxu0 %v1841
      %v3133 = vpop.f32.mrb[0].mxu0
      %v3134 = vadd.f32 %v3069, %v3133
      %v3135 = vpop.f32.mrb[0].mxu0
      %v3136 = vpop.f32.mrb[0].mxu0
      %v3137 = vadd.f32 %v3072, %v3136
      %v3138 = vpop.f32.mrb[0].mxu0
      %3139 = vmatprep.mubr.bf16.mxu0 %v1848
      %3140 = vmatmul.mubr.bf16.gmra.mrb[0].mxu0 %v1847
      %v3141 = vpop.f32.mrb[0].mxu0
      %v3142 = vadd.f32 %v3077, %v3141
      %v3143 = vpop.f32.mrb[0].mxu0
      %v3144 = vpop.f32.mrb[0].mxu0
      %v3145 = vadd.f32 %v3080, %v3144
      %v3146 = vpop.f32.mrb[0].mxu0
      %3147 = vmatprep.mubr.bf16.mxu0 %v1854
      %3148 = vmatmul.mubr.bf16.gmra.mrb[0].mxu0 %v1853
      %v3149 = vpop.f32.mrb[0].mxu0
      %v3150 = vadd.f32 %v3085, %v3149
      %v3151 = vpop.f32.mrb[0].mxu0
      %v3152 = vpop.f32.mrb[0].mxu0
      %v3153 = vadd.f32 %v3088, %v3152
      %v3154 = vpop.f32.mrb[0].mxu0
      %3155 = vmatprep.mubr.bf16.mxu0 %v1860
      %3156 = vmatmul.mubr.bf16.gmra.mrb[0].mxu0 %v1859
      %v3157 = vpop.f32.mrb[0].mxu0
      %v3158 = vadd.f32 %v3093, %v3157
      %v3159 = vpop.f32.mrb[0].mxu0
      %v3160 = vpop.f32.mrb[0].mxu0
      %v3161 = vadd.f32 %v3096, %v3160
      %v3162 = vpop.f32.mrb[0].mxu0
      %3163 = vdwg.mxu0
      %3164 = vmatprep.subr.bf16.mxu0 0
      %3165 = vmatpush1.bf16.msra.mxu0 %v2778
      %3166 = vmatprep.subr.bf16.mxu0 0
      %3167 = vmatpush1.bf16.msra.mxu0 %v2779
      %3168 = vmatprep.subr.bf16.mxu0 0
      %3169 = vmatpush1.bf16.msra.mxu0 %v2780
      %3170 = vmatprep.subr.bf16.mxu0 0
      %3171 = vmatpush1.bf16.msra.mxu0 %v2781
      %3172 = vmatprep.subr.bf16.mxu0 0
      %3173 = vmatpush1.bf16.msra.mxu0 %v2782
      %3174 = vmatprep.subr.bf16.mxu0 0
      %3175 = vmatpush1.bf16.msra.mxu0 %v2783
      %3176 = vmatprep.subr.bf16.mxu0 0
      %3177 = vmatpush1.bf16.msra.mxu0 %v2784
      %3178 = vmatprep.subr.bf16.mxu0 0
      %3179 = vmatpush1.bf16.msra.mxu0 %v2785
      %3180 = vmatprep.subr.bf16.mxu0 0
      %3181 = vmatpush1.bf16.msra.mxu0 %v2786
      %3182 = vmatprep.subr.bf16.mxu0 0
      %3183 = vmatpush1.bf16.msra.mxu0 %v2787
      %3184 = vmatprep.subr.bf16.mxu0 0
      %3185 = vmatpush1.bf16.msra.mxu0 %v2788
      %3186 = vmatprep.subr.bf16.mxu0 0
      %3187 = vmatpush1.bf16.msra.mxu0 %v2789
      %3188 = vmatprep.subr.bf16.mxu0 0
      %3189 = vmatpush1.bf16.msra.mxu0 %v2790
      %3190 = vmatprep.subr.bf16.mxu0 0
      %3191 = vmatpush1.bf16.msra.mxu0 %v2791
      %3192 = vmatprep.subr.bf16.mxu0 0
      %3193 = vmatpush1.bf16.msra.mxu0 %v2792
      %3194 = vmatprep.subr.bf16.mxu0 0
      %3195 = vmatpush1.bf16.msra.mxu0 %v2793
      %3196 = vmatprep.mubr.bf16.mxu0 %v1844
      %3197 = vmatmul.mubr.bf16.gmra.mrb[0].mxu0 %v1843
      %v3198 = vpop.f32.mrb[0].mxu0
      %v3199 = vadd.f32 %v3134, %v3198
      %v3200 = vpop.f32.mrb[0].mxu0
      %v3201 = vpop.f32.mrb[0].mxu0
      %v3202 = vadd.f32 %v3137, %v3201
      %v3203 = vpop.f32.mrb[0].mxu0
      %3204 = vmatprep.mubr.bf16.mxu0 %v1850
      %3205 = vmatmul.mubr.bf16.gmra.mrb[0].mxu0 %v1849
      %v3206 = vpop.f32.mrb[0].mxu0
      %v3207 = vadd.f32 %v3142, %v3206
      %v3208 = vpop.f32.mrb[0].mxu0
      %v3209 = vpop.f32.mrb[0].mxu0
      %v3210 = vadd.f32 %v3145, %v3209
      %v3211 = vpop.f32.mrb[0].mxu0
      %3212 = vmatprep.mubr.bf16.mxu0 %v1856
      %3213 = vmatmul.mubr.bf16.gmra.mrb[0].mxu0 %v1855
      %v3214 = vpop.f32.mrb[0].mxu0
      %v3215 = vadd.f32 %v3150, %v3214
      %v3216 = vpop.f32.mrb[0].mxu0
      %v3217 = vpop.f32.mrb[0].mxu0
      %v3218 = vadd.f32 %v3153, %v3217
      %v3219 = vpop.f32.mrb[0].mxu0
      %3220 = vmatprep.mubr.bf16.mxu0 %v1862
      %3221 = vmatmul.mubr.bf16.gmra.mrb[0].mxu0 %v1861
      %v3222 = vpop.f32.mrb[0].mxu0
      %v3223 = vadd.f32 %v3158, %v3222
      %v3224 = vpop.f32.mrb[0].mxu0
      %v3225 = vpop.f32.mrb[0].mxu0
      %v3226 = vadd.f32 %v3161, %v3225
      %v3227 = vpop.f32.mrb[0].mxu0
      %3228 = vdwg.mxu0
      %3229 = vmatprep.subr.bf16.mxu0 0
      %3230 = vmatpush1.bf16.msra.mxu0 %v2794
      %3231 = vmatprep.subr.bf16.mxu0 0
      %3232 = vmatpush1.bf16.msra.mxu0 %v2795
      %3233 = vmatprep.subr.bf16.mxu0 0
      %3234 = vmatpush1.bf16.msra.mxu0 %v2796
      %3235 = vmatprep.subr.bf16.mxu0 0
      %3236 = vmatpush1.bf16.msra.mxu0 %v2797
      %3237 = vmatprep.subr.bf16.mxu0 0
      %3238 = vmatpush1.bf16.msra.mxu0 %v2798
      %3239 = vmatprep.subr.bf16.mxu0 0
      %3240 = vmatpush1.bf16.msra.mxu0 %v2799
      %3241 = vmatprep.subr.bf16.mxu0 0
      %3242 = vmatpush1.bf16.msra.mxu0 %v2800
      %3243 = vmatprep.subr.bf16.mxu0 0
      %3244 = vmatpush1.bf16.msra.mxu0 %v2801
      %3245 = vmatprep.subr.bf16.mxu0 0
      %3246 = vmatpush1.bf16.msra.mxu0 %v2802
      %3247 = vmatprep.subr.bf16.mxu0 0
      %3248 = vmatpush1.bf16.msra.mxu0 %v2803
      %3249 = vmatprep.subr.bf16.mxu0 0
      %3250 = vmatpush1.bf16.msra.mxu0 %v2804
      %3251 = vmatprep.subr.bf16.mxu0 0
      %3252 = vmatpush1.bf16.msra.mxu0 %v2805
      %3253 = vmatprep.subr.bf16.mxu0 0
      %3254 = vmatpush1.bf16.msra.mxu0 %v2806
      %3255 = vmatprep.subr.bf16.mxu0 0
      %3256 = vmatpush1.bf16.msra.mxu0 %v2807
      %3257 = vmatprep.subr.bf16.mxu0 0
      %3258 = vmatpush1.bf16.msra.mxu0 %v2808
      %3259 = vmatprep.subr.bf16.mxu0 0
      %3260 = vmatpush1.bf16.msra.mxu0 %v2809
      %3261 = vmatprep.mubr.bf16.mxu0 %v1846
      %3262 = vmatmul.mubr.bf16.gmra.mrb[0].mxu0 %v1845
      %v3263 = vpop.f32.mrb[0].mxu0
      %v3264 = vadd.f32 %v3199, %v3263
      %v3265 = vpop.f32.mrb[0].mxu0
      %v3266 = vpop.f32.mrb[0].mxu0
      %v3267 = vadd.f32 %v3202, %v3266
      %v3268 = vpop.f32.mrb[0].mxu0
      %3269 = vmatprep.mubr.bf16.mxu0 %v1852
      %3270 = vmatmul.mubr.bf16.gmra.mrb[0].mxu0 %v1851
      %v3271 = vpop.f32.mrb[0].mxu0
      %v3272 = vadd.f32 %v3207, %v3271
      %v3273 = vpop.f32.mrb[0].mxu0
      %v3274 = vpop.f32.mrb[0].mxu0
      %v3275 = vadd.f32 %v3210, %v3274
      %v3276 = vpop.f32.mrb[0].mxu0
      %3277 = vmatprep.mubr.bf16.mxu0 %v1858
      %3278 = vmatmul.mubr.bf16.gmra.mrb[0].mxu0 %v1857
      %v3279 = vpop.f32.mrb[0].mxu0
      %v3280 = vadd.f32 %v3215, %v3279
      %v3281 = vpop.f32.mrb[0].mxu0
      %v3282 = vpop.f32.mrb[0].mxu0
      %v3283 = vadd.f32 %v3218, %v3282
      %v3284 = vpop.f32.mrb[0].mxu0
      %3285 = vmatprep.mubr.bf16.mxu0 %v1864
      %3286 = vmatmul.mubr.bf16.gmra.mrb[0].mxu0 %v1863
      %v3287 = vpop.f32.mrb[0].mxu0
      %v3288 = vadd.f32 %v3223, %v3287
      %v3289 = vpop.f32.mrb[0].mxu0
      %v3290 = vpop.f32.mrb[0].mxu0
      %v3291 = vadd.f32 %v3226, %v3290
      %v3292 = vpop.f32.mrb[0].mxu0
      %3293 = vdwg.mxu0
      %3294 = vmatprep.subr.bf16.mxu0 0
      %3295 = vmatpush1.bf16.msra.mxu0 %v2810
      %3296 = vmatprep.subr.bf16.mxu0 0
      %3297 = vmatpush1.bf16.msra.mxu0 %v2811
      %3298 = vmatprep.subr.bf16.mxu0 0
      %3299 = vmatpush1.bf16.msra.mxu0 %v2812
      %3300 = vmatprep.subr.bf16.mxu0 0
      %3301 = vmatpush1.bf16.msra.mxu0 %v2813
      %3302 = vmatprep.subr.bf16.mxu0 0
      %3303 = vmatpush1.bf16.msra.mxu0 %v2814
      %3304 = vmatprep.subr.bf16.mxu0 0
      %3305 = vmatpush1.bf16.msra.mxu0 %v2815
      %3306 = vmatprep.subr.bf16.mxu0 0
      %3307 = vmatpush1.bf16.msra.mxu0 %v2816
      %3308 = vmatprep.subr.bf16.mxu0 0
      %3309 = vmatpush1.bf16.msra.mxu0 %v2817
      %3310 = vmatprep.subr.bf16.mxu0 0
      %3311 = vmatpush1.bf16.msra.mxu0 %v2818
      %3312 = vmatprep.subr.bf16.mxu0 0
      %3313 = vmatpush1.bf16.msra.mxu0 %v2819
      %3314 = vmatprep.subr.bf16.mxu0 0
      %3315 = vmatpush1.bf16.msra.mxu0 %v2820
      %3316 = vmatprep.subr.bf16.mxu0 0
      %3317 = vmatpush1.bf16.msra.mxu0 %v2821
      %3318 = vmatprep.subr.bf16.mxu0 0
      %3319 = vmatpush1.bf16.msra.mxu0 %v2822
      %3320 = vmatprep.subr.bf16.mxu0 0
      %3321 = vmatpush1.bf16.msra.mxu0 %v2823
      %3322 = vmatprep.subr.bf16.mxu0 0
      %3323 = vmatpush1.bf16.msra.mxu0 %v2824
      %3324 = vmatprep.subr.bf16.mxu0 0
      %3325 = vmatpush1.bf16.msra.mxu0 %v2825
      %3326 = vmatprep.mubr.bf16.mxu0 %v1848
      %3327 = vmatmul.mubr.bf16.gmra.mrb[0].mxu0 %v1847
      %v3328 = vpop.f32.mrb[0].mxu0
      %v3329 = vadd.f32 %v3264, %v3328
      %v3330 = vpop.f32.mrb[0].mxu0
      %v3331 = vpop.f32.mrb[0].mxu0
      %v3332 = vadd.f32 %v3267, %v3331
      %v3333 = vpop.f32.mrb[0].mxu0
      %3334 = vmatprep.mubr.bf16.mxu0 %v1854
      %3335 = vmatmul.mubr.bf16.gmra.mrb[0].mxu0 %v1853
      %v3336 = vpop.f32.mrb[0].mxu0
      %v3337 = vadd.f32 %v3272, %v3336
      %v3338 = vpop.f32.mrb[0].mxu0
      %v3339 = vpop.f32.mrb[0].mxu0
      %v3340 = vadd.f32 %v3275, %v3339
      %v3341 = vpop.f32.mrb[0].mxu0
      %3342 = vmatprep.mubr.bf16.mxu0 %v1860
      %3343 = vmatmul.mubr.bf16.gmra.mrb[0].mxu0 %v1859
      %v3344 = vpop.f32.mrb[0].mxu0
      %v3345 = vadd.f32 %v3280, %v3344
      %v3346 = vpop.f32.mrb[0].mxu0
      %v3347 = vpop.f32.mrb[0].mxu0
      %v3348 = vadd.f32 %v3283, %v3347
      %v3349 = vpop.f32.mrb[0].mxu0
      %3350 = vmatprep.mubr.bf16.mxu0 %v1866
      %3351 = vmatmul.mubr.bf16.gmra.mrb[0].mxu0 %v1865
      %v3352 = vpop.f32.mrb[0].mxu0
      %v3353 = vadd.f32 %v3288, %v3352
      %v3354 = vpop.f32.mrb[0].mxu0
      %v3355 = vpop.f32.mrb[0].mxu0
      %v3356 = vadd.f32 %v3291, %v3355
      %v3357 = vpop.f32.mrb[0].mxu0
      %3358 = vdwg.mxu0
      %3359 = vmatprep.subr.bf16.mxu0 0
      %3360 = vmatpush1.bf16.msra.mxu0 %v2826
      %3361 = vmatprep.subr.bf16.mxu0 0
      %3362 = vmatpush1.bf16.msra.mxu0 %v2827
      %3363 = vmatprep.subr.bf16.mxu0 0
      %3364 = vmatpush1.bf16.msra.mxu0 %v2828
      %3365 = vmatprep.subr.bf16.mxu0 0
      %3366 = vmatpush1.bf16.msra.mxu0 %v2829
      %3367 = vmatprep.subr.bf16.mxu0 0
      %3368 = vmatpush1.bf16.msra.mxu0 %v2830
      %3369 = vmatprep.subr.bf16.mxu0 0
      %3370 = vmatpush1.bf16.msra.mxu0 %v2831
      %3371 = vmatprep.subr.bf16.mxu0 0
      %3372 = vmatpush1.bf16.msra.mxu0 %v2832
      %3373 = vmatprep.subr.bf16.mxu0 0
      %3374 = vmatpush1.bf16.msra.mxu0 %v2833
      %3375 = vmatprep.subr.bf16.mxu0 0
      %3376 = vmatpush1.bf16.msra.mxu0 %v2834
      %3377 = vmatprep.subr.bf16.mxu0 0
      %3378 = vmatpush1.bf16.msra.mxu0 %v2835
      %3379 = vmatprep.subr.bf16.mxu0 0
      %3380 = vmatpush1.bf16.msra.mxu0 %v2836
      %3381 = vmatprep.subr.bf16.mxu0 0
      %3382 = vmatpush1.bf16.msra.mxu0 %v2837
      %3383 = vmatprep.subr.bf16.mxu0 0
      %3384 = vmatpush1.bf16.msra.mxu0 %v2838
      %3385 = vmatprep.subr.bf16.mxu0 0
      %3386 = vmatpush1.bf16.msra.mxu0 %v2839
      %3387 = vmatprep.subr.bf16.mxu0 0
      %3388 = vmatpush1.bf16.msra.mxu0 %v2840
      %3389 = vmatprep.subr.bf16.mxu0 0
      %3390 = vmatpush1.bf16.msra.mxu0 %v2841
      %3391 = vmatprep.mubr.bf16.mxu0 %v1850
      %3392 = vmatmul.mubr.bf16.gmra.mrb[0].mxu0 %v1849
      %v3393 = vpop.f32.mrb[0].mxu0
      %v3394 = vadd.f32 %v3329, %v3393
      %v3395 = vpop.f32.mrb[0].mxu0
      %v3396 = vpop.f32.mrb[0].mxu0
      %v3397 = vadd.f32 %v3332, %v3396
      %v3398 = vpop.f32.mrb[0].mxu0
      %3399 = vmatprep.mubr.bf16.mxu0 %v1856
      %3400 = vmatmul.mubr.bf16.gmra.mrb[0].mxu0 %v1855
      %v3401 = vpop.f32.mrb[0].mxu0
      %v3402 = vadd.f32 %v3337, %v3401
      %v3403 = vpop.f32.mrb[0].mxu0
      %v3404 = vpop.f32.mrb[0].mxu0
      %v3405 = vadd.f32 %v3340, %v3404
      %v3406 = vpop.f32.mrb[0].mxu0
      %3407 = vmatprep.mubr.bf16.mxu0 %v1862
      %3408 = vmatmul.mubr.bf16.gmra.mrb[0].mxu0 %v1861
      %v3409 = vpop.f32.mrb[0].mxu0
      %v3410 = vadd.f32 %v3345, %v3409
      %v3411 = vpop.f32.mrb[0].mxu0
      %v3412 = vpop.f32.mrb[0].mxu0
      %v3413 = vadd.f32 %v3348, %v3412
      %v3414 = vpop.f32.mrb[0].mxu0
      %3415 = vmatprep.mubr.bf16.mxu0 %v1868
      %3416 = vmatmul.mubr.bf16.gmra.mrb[0].mxu0 %v1867
      %v3417 = vpop.f32.mrb[0].mxu0
      %v3418 = vadd.f32 %v3353, %v3417
      %v3419 = vpop.f32.mrb[0].mxu0
      %v3420 = vpop.f32.mrb[0].mxu0
      %v3421 = vadd.f32 %v3356, %v3420
      %v3422 = vpop.f32.mrb[0].mxu0
      %3423 = vdwg.mxu0
      %3424 = vmatprep.subr.bf16.mxu0 0
      %3425 = vmatpush1.bf16.msra.mxu0 %v2842
      %3426 = vmatprep.subr.bf16.mxu0 0
      %3427 = vmatpush1.bf16.msra.mxu0 %v2843
      %3428 = vmatprep.subr.bf16.mxu0 0
      %3429 = vmatpush1.bf16.msra.mxu0 %v2844
      %3430 = vmatprep.subr.bf16.mxu0 0
      %3431 = vmatpush1.bf16.msra.mxu0 %v2845
      %3432 = vmatprep.subr.bf16.mxu0 0
      %3433 = vmatpush1.bf16.msra.mxu0 %v2846
      %3434 = vmatprep.subr.bf16.mxu0 0
      %3435 = vmatpush1.bf16.msra.mxu0 %v2847
      %3436 = vmatprep.subr.bf16.mxu0 0
      %3437 = vmatpush1.bf16.msra.mxu0 %v2848
      %3438 = vmatprep.subr.bf16.mxu0 0
      %3439 = vmatpush1.bf16.msra.mxu0 %v2849
      %3440 = vmatprep.subr.bf16.mxu0 0
      %3441 = vmatpush1.bf16.msra.mxu0 %v2850
      %3442 = vmatprep.subr.bf16.mxu0 0
      %3443 = vmatpush1.bf16.msra.mxu0 %v2851
      %3444 = vmatprep.subr.bf16.mxu0 0
      %3445 = vmatpush1.bf16.msra.mxu0 %v2852
      %3446 = vmatprep.subr.bf16.mxu0 0
      %3447 = vmatpush1.bf16.msra.mxu0 %v2853
      %3448 = vmatprep.subr.bf16.mxu0 0
      %3449 = vmatpush1.bf16.msra.mxu0 %v2854
      %3450 = vmatprep.subr.bf16.mxu0 0
      %3451 = vmatpush1.bf16.msra.mxu0 %v2855
      %3452 = vmatprep.subr.bf16.mxu0 0
      %3453 = vmatpush1.bf16.msra.mxu0 %v2856
      %3454 = vmatprep.subr.bf16.mxu0 0
      %3455 = vmatpush1.bf16.msra.mxu0 %v2857
      %3456 = vmatprep.mubr.bf16.mxu0 %v1852
      %3457 = vmatmul.mubr.bf16.gmra.mrb[0].mxu0 %v1851
      %v3458 = vpop.f32.mrb[0].mxu0
      %v3459 = vadd.f32 %v3394, %v3458
      %v3460 = vpop.f32.mrb[0].mxu0
      %v3461 = vpop.f32.mrb[0].mxu0
      %v3462 = vadd.f32 %v3397, %v3461
      %v3463 = vpop.f32.mrb[0].mxu0
      %3464 = vmatprep.mubr.bf16.mxu0 %v1858
      %3465 = vmatmul.mubr.bf16.gmra.mrb[0].mxu0 %v1857
      %v3466 = vpop.f32.mrb[0].mxu0
      %v3467 = vadd.f32 %v3402, %v3466
      %v3468 = vpop.f32.mrb[0].mxu0
      %v3469 = vpop.f32.mrb[0].mxu0
      %v3470 = vadd.f32 %v3405, %v3469
      %v3471 = vpop.f32.mrb[0].mxu0
      %3472 = vmatprep.mubr.bf16.mxu0 %v1864
      %3473 = vmatmul.mubr.bf16.gmra.mrb[0].mxu0 %v1863
      %v3474 = vpop.f32.mrb[0].mxu0
      %v3475 = vadd.f32 %v3410, %v3474
      %v3476 = vpop.f32.mrb[0].mxu0
      %v3477 = vpop.f32.mrb[0].mxu0
      %v3478 = vadd.f32 %v3413, %v3477
      %v3479 = vpop.f32.mrb[0].mxu0
      %3480 = vmatprep.mubr.bf16.mxu0 %v1870
      %3481 = vmatmul.mubr.bf16.gmra.mrb[0].mxu0 %v1869
      %v3482 = vpop.f32.mrb[0].mxu0
      %v3483 = vadd.f32 %v3418, %v3482
      %v3484 = vpop.f32.mrb[0].mxu0
      %v3485 = vpop.f32.mrb[0].mxu0
      %v3486 = vadd.f32 %v3421, %v3485
      %v3487 = vpop.f32.mrb[0].mxu0
      %3488 = vdwg.mxu0
      %3489 = vmatprep.subr.bf16.mxu0 0
      %3490 = vmatpush1.bf16.msra.mxu0 %v2858
      %3491 = vmatprep.subr.bf16.mxu0 0
      %3492 = vmatpush1.bf16.msra.mxu0 %v2859
      %3493 = vmatprep.subr.bf16.mxu0 0
      %3494 = vmatpush1.bf16.msra.mxu0 %v2860
      %3495 = vmatprep.subr.bf16.mxu0 0
      %3496 = vmatpush1.bf16.msra.mxu0 %v2861
      %3497 = vmatprep.subr.bf16.mxu0 0
      %3498 = vmatpush1.bf16.msra.mxu0 %v2862
      %3499 = vmatprep.subr.bf16.mxu0 0
      %3500 = vmatpush1.bf16.msra.mxu0 %v2863
      %3501 = vmatprep.subr.bf16.mxu0 0
      %3502 = vmatpush1.bf16.msra.mxu0 %v2864
      %3503 = vmatprep.subr.bf16.mxu0 0
      %3504 = vmatpush1.bf16.msra.mxu0 %v2865
      %3505 = vmatprep.subr.bf16.mxu0 0
      %3506 = vmatpush1.bf16.msra.mxu0 %v2866
      %3507 = vmatprep.subr.bf16.mxu0 0
      %3508 = vmatpush1.bf16.msra.mxu0 %v2867
      %3509 = vmatprep.subr.bf16.mxu0 0
      %3510 = vmatpush1.bf16.msra.mxu0 %v2868
      %3511 = vmatprep.subr.bf16.mxu0 0
      %3512 = vmatpush1.bf16.msra.mxu0 %v2869
      %3513 = vmatprep.subr.bf16.mxu0 0
      %3514 = vmatpush1.bf16.msra.mxu0 %v2870
      %3515 = vmatprep.subr.bf16.mxu0 0
      %3516 = vmatpush1.bf16.msra.mxu0 %v2871
      %3517 = vmatprep.subr.bf16.mxu0 0
      %3518 = vmatpush1.bf16.msra.mxu0 %v2872
      %3519 = vmatprep.subr.bf16.mxu0 0
      %3520 = vmatpush1.bf16.msra.mxu0 %v2873
      %3521 = vmatprep.mubr.bf16.mxu0 %v1854
      %3522 = vmatmul.mubr.bf16.gmra.mrb[0].mxu0 %v1853
      %v3523 = vpop.f32.mrb[0].mxu0
      %v3524 = vadd.f32 %v3459, %v3523
      %v3525 = vpop.f32.mrb[0].mxu0
      %v3526 = vpop.f32.mrb[0].mxu0
      %v3527 = vadd.f32 %v3462, %v3526
      %v3528 = vpop.f32.mrb[0].mxu0
      %3529 = vmatprep.mubr.bf16.mxu0 %v1860
      %3530 = vmatmul.mubr.bf16.gmra.mrb[0].mxu0 %v1859
      %v3531 = vpop.f32.mrb[0].mxu0
      %v3532 = vadd.f32 %v3467, %v3531
      %v3533 = vpop.f32.mrb[0].mxu0
      %v3534 = vpop.f32.mrb[0].mxu0
      %v3535 = vadd.f32 %v3470, %v3534
      %v3536 = vpop.f32.mrb[0].mxu0
      %3537 = vmatprep.mubr.bf16.mxu0 %v1866
      %3538 = vmatmul.mubr.bf16.gmra.mrb[0].mxu0 %v1865
      %v3539 = vpop.f32.mrb[0].mxu0
      %v3540 = vadd.f32 %v3475, %v3539
      %v3541 = vpop.f32.mrb[0].mxu0
      %v3542 = vpop.f32.mrb[0].mxu0
      %v3543 = vadd.f32 %v3478, %v3542
      %v3544 = vpop.f32.mrb[0].mxu0
      %3545 = vmatprep.mubr.bf16.mxu0 %v1872
      %3546 = vmatmul.mubr.bf16.gmra.mrb[0].mxu0 %v1871
      %v3547 = vpop.f32.mrb[0].mxu0
      %v3548 = vadd.f32 %v3483, %v3547
      %v3549 = vpop.f32.mrb[0].mxu0
      %v3550 = vpop.f32.mrb[0].mxu0
      %v3551 = vadd.f32 %v3486, %v3550
      %v3552 = vpop.f32.mrb[0].mxu0
      %3553 = vdwg.mxu0
      %3554 = vmatprep.subr.bf16.mxu0 0
      %3555 = vmatpush1.bf16.msra.mxu0 %v2874
      %3556 = vmatprep.subr.bf16.mxu0 0
      %3557 = vmatpush1.bf16.msra.mxu0 %v2875
      %3558 = vmatprep.subr.bf16.mxu0 0
      %3559 = vmatpush1.bf16.msra.mxu0 %v2876
      %3560 = vmatprep.subr.bf16.mxu0 0
      %3561 = vmatpush1.bf16.msra.mxu0 %v2877
      %3562 = vmatprep.subr.bf16.mxu0 0
      %3563 = vmatpush1.bf16.msra.mxu0 %v2878
      %3564 = vmatprep.subr.bf16.mxu0 0
      %3565 = vmatpush1.bf16.msra.mxu0 %v2879
      %3566 = vmatprep.subr.bf16.mxu0 0
      %3567 = vmatpush1.bf16.msra.mxu0 %v2880
      %3568 = vmatprep.subr.bf16.mxu0 0
      %3569 = vmatpush1.bf16.msra.mxu0 %v2881
      %3570 = vmatprep.subr.bf16.mxu0 0
      %3571 = vmatpush1.bf16.msra.mxu0 %v2882
      %3572 = vmatprep.subr.bf16.mxu0 0
      %3573 = vmatpush1.bf16.msra.mxu0 %v2883
      %3574 = vmatprep.subr.bf16.mxu0 0
      %3575 = vmatpush1.bf16.msra.mxu0 %v2884
      %3576 = vmatprep.subr.bf16.mxu0 0
      %3577 = vmatpush1.bf16.msra.mxu0 %v2885
      %3578 = vmatprep.subr.bf16.mxu0 0
      %3579 = vmatpush1.bf16.msra.mxu0 %v2886
      %3580 = vmatprep.subr.bf16.mxu0 0
      %3581 = vmatpush1.bf16.msra.mxu0 %v2887
      %3582 = vmatprep.subr.bf16.mxu0 0
      %3583 = vmatpush1.bf16.msra.mxu0 %v2888
      %3584 = vmatprep.subr.bf16.mxu0 0
      %3585 = vmatpush1.bf16.msra.mxu0 %v2889
      %3586 = vmatprep.mubr.bf16.mxu0 %v1856
      %3587 = vmatmul.mubr.bf16.gmra.mrb[0].mxu0 %v1855
      %v3588 = vpop.f32.mrb[0].mxu0
      %v3589 = vadd.f32 %v3524, %v3588
      %v3590 = vpop.f32.mrb[0].mxu0
      %v3591 = vpop.f32.mrb[0].mxu0
      %v3592 = vadd.f32 %v3527, %v3591
      %v3593 = vpop.f32.mrb[0].mxu0
      %3594 = vmatprep.mubr.bf16.mxu0 %v1862
      %3595 = vmatmul.mubr.bf16.gmra.mrb[0].mxu0 %v1861
      %v3596 = vpop.f32.mrb[0].mxu0
      %v3597 = vadd.f32 %v3532, %v3596
      %v3598 = vpop.f32.mrb[0].mxu0
      %v3599 = vpop.f32.mrb[0].mxu0
      %v3600 = vadd.f32 %v3535, %v3599
      %v3601 = vpop.f32.mrb[0].mxu0
      %3602 = vmatprep.mubr.bf16.mxu0 %v1868
      %3603 = vmatmul.mubr.bf16.gmra.mrb[0].mxu0 %v1867
      %v3604 = vpop.f32.mrb[0].mxu0
      %v3605 = vadd.f32 %v3540, %v3604
      %v3606 = vpop.f32.mrb[0].mxu0
      %v3607 = vpop.f32.mrb[0].mxu0
      %v3608 = vadd.f32 %v3543, %v3607
      %v3609 = vpop.f32.mrb[0].mxu0
      %3610 = vmatprep.mubr.bf16.mxu0 %v1874
      %3611 = vmatmul.mubr.bf16.gmra.mrb[0].mxu0 %v1873
      %v3612 = vpop.f32.mrb[0].mxu0
      %v3613 = vadd.f32 %v3548, %v3612
      %v3614 = vpop.f32.mrb[0].mxu0
      %v3615 = vpop.f32.mrb[0].mxu0
      %v3616 = vadd.f32 %v3551, %v3615
      %v3617 = vpop.f32.mrb[0].mxu0
      %3618 = vdwg.mxu0
      %vm3619 = vcmp.gt.f32.partialorder %v3589, 0.0
      %vm3620 = vcmp.gt.f32.partialorder %v3592, 0.0
      %vm3621 = vcmp.gt.f32.partialorder %v3597, 0.0
      %vm3622 = vcmp.gt.f32.partialorder %v3600, 0.0
      %vm3623 = vcmp.gt.f32.partialorder %v3605, 0.0
      %vm3624 = vcmp.gt.f32.partialorder %v3608, 0.0
      %vm3625 = vcmp.gt.f32.partialorder %v3613, 0.0
      %vm3626 = vcmp.gt.f32.partialorder %v3616, 0.0
      %v3627 = vmul.f32 %v3589, 0.01
      %v3628 = vmul.f32 %v3592, 0.01
      %v3629 = vmul.f32 %v3597, 0.01
      %v3630 = vmul.f32 %v3600, 0.01
      %v3631 = vmul.f32 %v3605, 0.01
      %v3632 = vmul.f32 %v3608, 0.01
      %v3633 = vmul.f32 %v3613, 0.01
      %v3634 = vmul.f32 %v3616, 0.01
      %v3635 = vsel %vm3619, %v3589, %v3627
      %v3636 = vsel %vm3620, %v3592, %v3628
      %v3637 = vsel %vm3621, %v3597, %v3629
      %v3638 = vsel %vm3622, %v3600, %v3630
      %v3639 = vsel %vm3623, %v3605, %v3631
      %v3640 = vsel %vm3624, %v3608, %v3632
      %v3641 = vsel %vm3625, %v3613, %v3633
      %v3642 = vsel %vm3626, %v3616, %v3634
      %3643 = vst [vmem:[%s779] sm:$0xff] %v3635
      %3644 = vst [vmem:[%s779 + $0x8] sm:$0xff] %v3636
      %3645 = vst [vmem:[%s779 + $0x10] sm:$0xff] %v3637
      %3646 = vst [vmem:[%s779 + $0x18] sm:$0xff] %v3638
      %3647 = vst [vmem:[%s779 + $0x20] sm:$0xff] %v3639
      %3648 = vst [vmem:[%s779 + $0x28] sm:$0xff] %v3640
      %3649 = vst [vmem:[%s779 + $0x30] sm:$0xff] %v3641
      %3650 = vst [vmem:[%s779 + $0x38] sm:$0xff] %v3642
      %v3651 = vadd.f32 %v3635, %v3636
      %v3652 = vadd.f32 %v3651, %v3637
      %v3653 = vadd.f32 %v3652, %v3638
      %v3654 = vadd.f32 %v3653, %v3639
      %v3655 = vadd.f32 %v3654, %v3640
      %v3656 = vadd.f32 %v3655, %v3641
      %v3657 = vadd.f32 %v3656, %v3642
      %v3658 = vrot.slane %v3657, 4
      %v3659 = vadd.f32 %v3657, %v3658
      %v3660 = vrot.slane %v3659, 2
      %v3661 = vadd.f32 %v3659, %v3660
      %v3662 = vrot.slane %v3661, 1
      %v3663 = vadd.f32 %v3661, %v3662
      %v3664 = vmul.f32 %v3635, %v3635
      %v3665 = vmul.f32 %v3636, %v3636
      %v3666 = vmul.f32 %v3637, %v3637
      %v3667 = vmul.f32 %v3638, %v3638
      %v3668 = vmul.f32 %v3639, %v3639
      %v3669 = vmul.f32 %v3640, %v3640
      %v3670 = vmul.f32 %v3641, %v3641
      %v3671 = vmul.f32 %v3642, %v3642
      %v3672 = vadd.f32 %v3664, %v3665
      %v3673 = vadd.f32 %v3672, %v3666
      %v3674 = vadd.f32 %v3673, %v3667
      %v3675 = vadd.f32 %v3674, %v3668
      %v3676 = vadd.f32 %v3675, %v3669
      %v3677 = vadd.f32 %v3676, %v3670
      %v3678 = vadd.f32 %v3677, %v3671
      %v3679 = vrot.slane %v3678, 4
      %v3680 = vadd.f32 %v3678, %v3679
      %v3681 = vrot.slane %v3680, 2
      %v3682 = vadd.f32 %v3680, %v3681
      %v3683 = vrot.slane %v3682, 1
      %v3684 = vadd.f32 %v3682, %v3683
      %v3685 = vsel %vm1548, %v3663, %v3684
      // Predicated region
      $region69: #{attention_block_forward.5} parent=67 // pred_check
        %p3686 = pneg %p1488
      $region70: #{attention_block_forward.5} parent=67 // pred_check_branch
        %3688 = sbr.rel (%p3686) target = $region72
      $region71: #{attention_block_forward.5} parent=67 // pred_region
        %3689 = vst [vmem:[%s784] sm:$0x3] 0.0
      $region72: #{attention_block_forward.5} parent=67 // pred_fallthru
        _
      %v3690 = vld [vmem:[%s784] sm:$0x3]
      %v3691 = vadd.f32 %v3690, %v3685
      %3692 = vst [vmem:[%s784] sm:$0x3] %v3691
      %s3693 = smul.u32 4, %s32
      %p3694 = scmp.lt.s32.totalorder %s31, 1
      %s3695 = scalar_select %p3694, %s31, 1
      %p3696 = scmp.lt.s32.totalorder %s3693, 15
      %s3697 = scalar_select %p3696, %s3693, 15
      %s3698 = smul.addr %s3697, 2
      %s3699 = smul.addr %s3695, 32
      %s3700 = sadd.s32 %s3698, %s3699
      %s3701 = smul.addr %s3700, 8
      %s3702 = scalar_lea.vmem %s12, %s3701
      %p3703 = scmp.lt.s32.totalorder %s31, 1
      %s3704 = scalar_select %p3703, %s31, 1
      %s3705 = smul.addr %s3704, 2
      %s3706 = scalar_lea.vmem %s13, %s3705
      // Predicated region
      $region73: #{attention_block_forward.5} parent=67 // pred_check
        %p3707 = pneg %p385
      $region74: #{attention_block_forward.5} parent=67 // pred_check_branch
        %3709 = sbr.rel (%p3707) target = $region76
      $region75: #{attention_block_forward.5} parent=67 // pred_region
        %s3710 = smul.u32 4, %s32
      $region76: #{attention_block_forward.5} parent=67 // pred_fallthru
        _
      // Predicated region
      $region77: #{attention_block_forward.5} parent=67 // pred_check
        %p3711 = pneg %p411
      $region78: #{attention_block_forward.5} parent=67 // pred_check_branch
        %3713 = sbr.rel (%p3711) target = $region80
      $region79: #{attention_block_forward.5} parent=67 // pred_region
        _
      $region80: #{attention_block_forward.5} parent=67 // pred_fallthru
        _
    $region68: #{attention_block_forward.5} parent=5 // pred_fallthru
      _
    %p3714 = scmp.le.s32.totalorder 2, %s22
    // Predicated region
    $region81: #{attention_block_forward.5} parent=5 // pred_check
      %p3715 = pneg %p3714
    $region82: #{attention_block_forward.5} parent=5 // pred_check_branch
      %3717 = sbr.rel (%p3715) target = $region84
    $region83: #{attention_block_forward.5} parent=5 // pred_region
      %s3718 = ssub.s32 %s22, 2
      // Predicated region
      $region85: #{attention_block_forward.5} parent=83 // pred_check
        %p3719 = pneg %p391
      $region86: #{attention_block_forward.5} parent=83 // pred_check_branch
        %3721 = sbr.rel (%p3719) target = $region88
      $region87: #{attention_block_forward.5} parent=83 // pred_region
        %s3722 = smul.u32 4, %s34
        %p3723 = scmp.lt.s32.totalorder %s33, 1
        %s3724 = scalar_select %p3723, %s33, 1
        %p3725 = scmp.lt.s32.totalorder %s3722, 15
        %s3726 = scalar_select %p3725, %s3722, 15
        %s3727 = smul.addr %s3726, 2
        %s3728 = smul.addr %s3724, 32
        %s3729 = sadd.s32 %s3727, %s3728
        %s3730 = smul.addr %s3729, 8
        %s3731 = scalar_lea.vmem %s12, %s3730
      $region88: #{attention_block_forward.5} parent=83 // pred_fallthru
        _
      // Predicated region
      $region89: #{attention_block_forward.5} parent=83 // pred_check
        %p3732 = pneg %p417
      $region90: #{attention_block_forward.5} parent=83 // pred_check_branch
        %3734 = sbr.rel (%p3732) target = $region92
      $region91: #{attention_block_forward.5} parent=83 // pred_region
        %p3735 = scmp.lt.s32.totalorder %s33, 1
        %s3736 = scalar_select %p3735, %s33, 1
        %s3737 = smul.addr %s3736, 2
        %s3738 = scalar_lea.vmem %s13, %s3737
      $region92: #{attention_block_forward.5} parent=83 // pred_fallthru
        _
    $region84: #{attention_block_forward.5} parent=5 // pred_fallthru
      _
  $region6: #{attention_block_forward.5} parent=0 // loop_footer
    %s26 = sadd.s32 1, %s22
  $region7: #{attention_block_forward.5} parent=0 // loop_footer_branch
    %21 = sbr.rel target = $region3
  $region8: #{attention_block_forward.5} parent=0 // loop_exit
    _

</llo_original>
